<compile_context>
chip_gen: v5e
topology: v5e:2x2
jax: 0.10.0
libtpu: 0.0.40
codegen_flags: <defaults>
</compile_context>

<pallas_src>
import jax
import jax.numpy as jnp
from jax.experimental import pallas as pl
from jax.experimental.pallas import tpu as pltpu


# --------------------------- fused Pallas kernel ---------------------------

def _make_fused_kernel(num_times, output_time, input_channels, soft):
    T = num_times
    C = input_channels
    OT = output_time

    def kernel(x_ref, dx_ref,
               wi_ref, bi_ref,
               fw1_ref, fb1_ref, fw2_ref, fb2_ref,
               few_ref, feb_ref,
               gw1_ref, gb1_ref, gw2_ref, gb2_ref,
               lw_ref, lb_ref,
               out_ref):
        # ---- hoist every weight out of the (unrolled) RK4 loops ----
        wi, bi = wi_ref[...], bi_ref[...]
        fw1, fb1 = fw1_ref[...], fb1_ref[...]
        fw2, fb2 = fw2_ref[...], fb2_ref[...]
        few, feb = few_ref[...], feb_ref[...]
        gw1, gb1 = gw1_ref[...], gb1_ref[...]
        gw2, gb2 = gw2_ref[...], gb2_ref[...]
        lw, lb = lw_ref[...], lb_ref[...]

        Hb = fw2.shape[1] // C          # bottom CDE hidden width (== C)
        Ht = gw2.shape[1] // C          # top CDE hidden width

        def x_at(g):                    # X(t_g)           -> (B, C)
            return x_ref[:, g * C:(g + 1) * C]

        def d_at(g):                    # dt * dX/dt(t_g)  -> (B, C)
            return dx_ref[:, g * C:(g + 1) * C]

        def vf(z, d, w1, b1, w2, b2, width):
            # FinalTanh vector field contracted with the control derivative.
            # One fused matmul over all C control channels, then a per-channel
            # VPU contraction with d (static lane slices, no MXU re-push).
            h1 = jnp.maximum(
                jnp.dot(z, w1, preferred_element_type=jnp.float32) + b1, 0.0)
            m = jnp.tanh(
                jnp.dot(h1, w2, preferred_element_type=jnp.float32) + b2)
            acc = m[:, 0:width] * d[:, 0:1]
            for c in range(1, C):
                acc = acc + m[:, c * width:(c + 1) * width] * d[:, c:c + 1]
            return acc

        def rk4_step(z, d0, dm, d1, w1, b1, w2, b2, width):
            # classical RK4 with dt already folded into the control derivative
            k1 = vf(z, d0, w1, b1, w2, b2, width)
            k2 = vf(z + 0.5 * k1, dm, w1, b1, w2, b2, width)
            k3 = vf(z + 0.5 * k2, dm, w1, b1, w2, b2, width)
            k4 = vf(z + k3, d1, w1, b1, w2, b2, width)
            return k1, z + (k1 + 2.0 * (k2 + k3) + k4) * (1.0 / 6.0)

        # ---- bottom CDE (ancde_bottom): h(t) and dt*h'(t) ----
        x0 = x_at(0)
        h = jnp.dot(x0, wi, preferred_element_type=jnp.float32) + bi   # z0
        hs, hps = [h], []
        for i in range(T - 1):
            k1, h = rk4_step(h, d_at(2 * i), d_at(2 * i + 1), d_at(2 * i + 2),
                             fw1, fb1, fw2, fb2, Hb)
            hps.append(k1)              # dt * dh/dt at t_i ("h_prime")
            hs.append(h)
        hps.append(vf(h, d_at(2 * (T - 1)), fw1, fb1, fw2, fb2, Hb))

        # ---- element-wise attention ----
        if soft:
            atts = [jax.nn.sigmoid(hh) for hh in hs]
        else:
            # binarizer (forward only; no straight-through estimator)
            atts = [jnp.where(jax.nn.sigmoid(hh) > 0.5, 1.0, 0.0) for hh in hs]

        # ---- y0 = feature_extractor(X(t0) * a(t0)) ----
        y = jnp.dot(x0 * atts[0], few,
                    preferred_element_type=jnp.float32) + feb

        # ---- dt * dY/dt on the RK4 grid ----
        # dY/dt = a * dX/dt + X * da/dt ,  da/dt = sigmoid'(h) * dh/dt
        def dY(g, i):
            a = atts[i]
            dadt = a * (1.0 - a) * hps[i]
            return a * d_at(g) + x_at(g) * dadt

        # ---- top CDE (ancde): z(t) driven by Y(t) = a(t) * X(t) ----
        zs = [y]
        for i in range(T - 1):
            _, y = rk4_step(y, dY(2 * i, i), dY(2 * i + 1, i),
                            dY(2 * i + 2, i + 1), gw1, gb1, gw2, gb2, Ht)
            zs.append(y)

        # ---- final readout on the last `output_time` states ----
        preds = []
        for j in range(OT):
            zt = zs[T - OT + j]
            preds.append(
                jnp.dot(zt, lw, preferred_element_type=jnp.float32) + lb)
        out_ref[...] = jnp.concatenate(preds, axis=1)    # (B, OT*C) lane-dense

    return kernel


def ancde_fused_call(x2d, d2d, params, *, num_times, output_time,
                     input_channels, soft=True, batch_block=None):
    """One pallas_call for the whole ANCDE forecasting forward."""
    B, GC = x2d.shape
    C = input_channels
    BB = B if batch_block is None else batch_block
    assert B % BB == 0
    # NOTE: batch tiles smaller than the full batch (v7x: split batch across
    # the two TensorCores) must keep BB == B or BB a multiple of 8.

    weights = (params['w_init'], params['b_init'],
               params['f_w1'], params['f_b1'], params['f_w2'], params['f_b2'],
               params['fe_w'], params['fe_b'],
               params['g_w1'], params['g_b1'], params['g_w2'], params['g_b2'],
               params['lin_w'], params['lin_b'])

    kernel = _make_fused_kernel(num_times, output_time, C, soft)

    in_specs = [pl.BlockSpec((BB, GC), lambda b: (b, 0)),
                pl.BlockSpec((BB, GC), lambda b: (b, 0))]
    in_specs += [pl.BlockSpec(w.shape, lambda b: (0, 0)) for w in weights]
    out_spec = pl.BlockSpec((BB, output_time * C), lambda b: (b, 0))

    out2d = pl.pallas_call(
        kernel,
        out_shape=jax.ShapeDtypeStruct((B, output_time * C), jnp.float32),
        grid=(B // BB,),
        in_specs=in_specs,
        out_specs=out_spec,
        compiler_params=pltpu.CompilerParams(
            dimension_semantics=("parallel",)),
    )(x2d, d2d, *weights)
    return out2d.reshape(B, output_time, C)


# ------------------------------- JAX glue ---------------------------------

def natural_cubic_spline_eval(times, coeffs, tq):
    """NaturalCubicSpline.evaluate / .derivative at query times tq -> (B,G,C)."""
    a, b, two_c, three_d = coeffs              # each (B, T-1, C)
    idx = jnp.clip(jnp.sum(tq[:, None] > times[None, :], axis=1) - 1,
                   0, times.shape[0] - 2)
    frac = (tq - times[idx])[None, :, None]    # (1, G, 1)
    ai = a[:, idx, :]
    bi = b[:, idx, :]
    ci = two_c[:, idx, :]
    di = three_d[:, idx, :]
    inner = 0.5 * ci + di * frac / 3.0
    inner = bi + inner * frac
    X = ai + inner * frac
    dX = bi + (ci + di * frac) * frac
    return X, dX


def ancde_forecasting_forward(times, coeffs, final_index, slope, params, *,
                              output_time, soft=True, timewise=False,
                              slope_check=False, stream=True,
                              batch_block=None):
    del final_index, slope          # stream=True ignores final_index; soft path
    del slope_check
    assert stream, "only the stream=True (forecasting) path is implemented"
    assert not timewise, "timewise attention not implemented"

    T = times.shape[0]
    B, _, C = coeffs[0].shape
    dt = times[1] - times[0]        # traced; uniform grid assumed (== min diff)

    # RK4 evaluation grid: t_0, t_0+dt/2, t_1, t_1+dt/2, ..., t_{T-1}
    t_pairs = jnp.stack([times[:-1], times[:-1] + 0.5 * dt], axis=1).reshape(-1)
    tq = jnp.concatenate([t_pairs, times[-1:]])          # (G,), G = 2T-1
    X_grid, dXdt_grid = natural_cubic_spline_eval(times, coeffs, tq)  # (B,G,C)

    # Fold dt into the control derivative so dt never enters the kernel.
    dXdt_scaled = dXdt_grid * dt

    G = 2 * T - 1
    x2d = X_grid.reshape(B, G * C)
    d2d = dXdt_scaled.reshape(B, G * C)

    return ancde_fused_call(x2d, d2d, params, num_times=T,
                            output_time=output_time, input_channels=C,
                            soft=soft, batch_block=batch_block)


# ---------------------------- parameter init -------------------------------

def _lin_init(key, fan_in, shape):
    bound = 1.0 / (fan_in ** 0.5)
    return jax.random.uniform(key, shape, jnp.float32, -bound, bound)


def init_params(key, input_channels, hidden_channels, hidden_hidden):
    C, H, HH = input_channels, hidden_channels, hidden_hidden
    ks = jax.random.split(key, 14)
    p = {}
    # initial_network: Linear(C, C)
    p['w_init'] = _lin_init(ks[0], C, (C, C))
    p['b_init'] = _lin_init(ks[1], C, (1, C))
    # func_f (bottom vector field): C -> HH -> (C x C), channel-blocked columns
    p['f_w1'] = _lin_init(ks[2], C, (C, HH))
    p['f_b1'] = _lin_init(ks[3], C, (1, HH))
    p['f_w2'] = _lin_init(ks[4], HH, (HH, C * C))
    p['f_b2'] = _lin_init(ks[5], HH, (1, C * C))
    # feature_extractor: Linear(C, H)
    p['fe_w'] = _lin_init(ks[6], C, (C, H))
    p['fe_b'] = _lin_init(ks[7], C, (1, H))
    # func_g (top vector field): H -> HH -> (H x C), channel-blocked columns
    p['g_w1'] = _lin_init(ks[8], H, (H, HH))
    p['g_b1'] = _lin_init(ks[9], H, (1, HH))
    p['g_w2'] = _lin_init(ks[10], HH, (HH, C * H))
    p['g_b2'] = _lin_init(ks[11], HH, (1, C * H))
    # final readout: Linear(H, C)
    p['lin_w'] = _lin_init(ks[12], H, (H, C))
    p['lin_b'] = _lin_init(ks[13], H, (1, C))
    return p


# --------------------------------- main -------------------------------------

if __name__ == "__main__":
    key = jax.random.PRNGKey(0)
    B, C_IN, T, HIDDEN, HH, OUT_T = 2, 4, 8, 16, 16, 4

    times = jnp.arange(T, dtype=jnp.float32)
    kc = jax.random.split(key, 5)
    # natural cubic spline coefficients (a, b, two_c, three_d), each (B, T-1, C)
    coeffs = tuple(0.1 * jax.random.normal(kc[i], (B, T - 1, C_IN), jnp.float32)
                   for i in range(4))
    final_index = jnp.full((B,), T - 1, dtype=jnp.int32)
    slope = 1.0

    params = init_params(kc[4], C_IN, HIDDEN, HH)

    fwd = jax.jit(ancde_forecasting_forward,
                  static_argnames=("output_time", "soft", "timewise",
                                   "slope_check", "stream", "batch_block"))
    pred = fwd(times, coeffs, final_index, slope, params,
               output_time=OUT_T, soft=True, timewise=False,
               slope_check=False, stream=True)
    jax.block_until_ready(pred)
    assert pred.shape == (B, OUT_T, C_IN), pred.shape
    assert pred.dtype == jnp.float32
    print("KERNEL_OK")
</pallas_src>

<mosaic_0001>
module attributes {stable_mosaic.version = 11 : i64} {
  func.func @kernel(%arg0: i32, %arg1: memref<2x60xf32, #tpu.memory_space<vmem>>, %arg2: memref<2x60xf32, #tpu.memory_space<vmem>>, %arg3: memref<4x4xf32, #tpu.memory_space<vmem>>, %arg4: memref<1x4xf32, #tpu.memory_space<vmem>>, %arg5: memref<4x16xf32, #tpu.memory_space<vmem>>, %arg6: memref<1x16xf32, #tpu.memory_space<vmem>>, %arg7: memref<16x16xf32, #tpu.memory_space<vmem>>, %arg8: memref<1x16xf32, #tpu.memory_space<vmem>>, %arg9: memref<4x16xf32, #tpu.memory_space<vmem>>, %arg10: memref<1x16xf32, #tpu.memory_space<vmem>>, %arg11: memref<16x16xf32, #tpu.memory_space<vmem>>, %arg12: memref<1x16xf32, #tpu.memory_space<vmem>>, %arg13: memref<16x64xf32, #tpu.memory_space<vmem>>, %arg14: memref<1x64xf32, #tpu.memory_space<vmem>>, %arg15: memref<16x4xf32, #tpu.memory_space<vmem>>, %arg16: memref<1x4xf32, #tpu.memory_space<vmem>>, %arg17: memref<2x16xf32, #tpu.memory_space<vmem>>) attributes {dimension_semantics = [#tpu.dimension_semantics<parallel>], iteration_bounds = array<i64: 1>, scalar_prefetch = 0 : i64, scratch_operands = 0 : i64, tpu.core_type = #tpu.core_type<tc>, window_params = [{transform_indices = @transform_0, window_bounds = array<i64: 2, 60>}, {transform_indices = @transform_1, window_bounds = array<i64: 2, 60>}, {pipeline_mode = #tpu.pipeline_mode<synchronous>, transform_indices = @transform_2, window_bounds = array<i64: 4, 4>}, {pipeline_mode = #tpu.pipeline_mode<synchronous>, transform_indices = @transform_3, window_bounds = array<i64: 1, 4>}, {pipeline_mode = #tpu.pipeline_mode<synchronous>, transform_indices = @transform_4, window_bounds = array<i64: 4, 16>}, {pipeline_mode = #tpu.pipeline_mode<synchronous>, transform_indices = @transform_5, window_bounds = array<i64: 1, 16>}, {pipeline_mode = #tpu.pipeline_mode<synchronous>, transform_indices = @transform_6, window_bounds = array<i64: 16, 16>}, {pipeline_mode = #tpu.pipeline_mode<synchronous>, transform_indices = @transform_7, window_bounds = array<i64: 1, 16>}, {pipeline_mode = #tpu.pipeline_mode<synchronous>, transform_indices = @transform_8, window_bounds = array<i64: 4, 16>}, {pipeline_mode = #tpu.pipeline_mode<synchronous>, transform_indices = @transform_9, window_bounds = array<i64: 1, 16>}, {pipeline_mode = #tpu.pipeline_mode<synchronous>, transform_indices = @transform_10, window_bounds = array<i64: 16, 16>}, {pipeline_mode = #tpu.pipeline_mode<synchronous>, transform_indices = @transform_11, window_bounds = array<i64: 1, 16>}, {pipeline_mode = #tpu.pipeline_mode<synchronous>, transform_indices = @transform_12, window_bounds = array<i64: 16, 64>}, {pipeline_mode = #tpu.pipeline_mode<synchronous>, transform_indices = @transform_13, window_bounds = array<i64: 1, 64>}, {pipeline_mode = #tpu.pipeline_mode<synchronous>, transform_indices = @transform_14, window_bounds = array<i64: 16, 4>}, {pipeline_mode = #tpu.pipeline_mode<synchronous>, transform_indices = @transform_15, window_bounds = array<i64: 1, 4>}, {transform_indices = @transform_16, window_bounds = array<i64: 2, 16>}]} {
    %c0 = arith.constant 0 : index
    %c0_0 = arith.constant 0 : index
    %0 = vector.load %arg3[%c0, %c0_0] : memref<4x4xf32, #tpu.memory_space<vmem>>, vector<4x4xf32>
    %c0_1 = arith.constant 0 : index
    %c0_2 = arith.constant 0 : index
    %1 = vector.load %arg4[%c0_1, %c0_2] : memref<1x4xf32, #tpu.memory_space<vmem>>, vector<1x4xf32>
    %c0_3 = arith.constant 0 : index
    %c0_4 = arith.constant 0 : index
    %2 = vector.load %arg5[%c0_3, %c0_4] : memref<4x16xf32, #tpu.memory_space<vmem>>, vector<4x16xf32>
    %c0_5 = arith.constant 0 : index
    %c0_6 = arith.constant 0 : index
    %3 = vector.load %arg6[%c0_5, %c0_6] : memref<1x16xf32, #tpu.memory_space<vmem>>, vector<1x16xf32>
    %c0_7 = arith.constant 0 : index
    %c0_8 = arith.constant 0 : index
    %4 = vector.load %arg7[%c0_7, %c0_8] : memref<16x16xf32, #tpu.memory_space<vmem>>, vector<16x16xf32>
    %c0_9 = arith.constant 0 : index
    %c0_10 = arith.constant 0 : index
    %5 = vector.load %arg8[%c0_9, %c0_10] : memref<1x16xf32, #tpu.memory_space<vmem>>, vector<1x16xf32>
    %c0_11 = arith.constant 0 : index
    %c0_12 = arith.constant 0 : index
    %6 = vector.load %arg9[%c0_11, %c0_12] : memref<4x16xf32, #tpu.memory_space<vmem>>, vector<4x16xf32>
    %c0_13 = arith.constant 0 : index
    %c0_14 = arith.constant 0 : index
    %7 = vector.load %arg10[%c0_13, %c0_14] : memref<1x16xf32, #tpu.memory_space<vmem>>, vector<1x16xf32>
    %c0_15 = arith.constant 0 : index
    %c0_16 = arith.constant 0 : index
    %8 = vector.load %arg11[%c0_15, %c0_16] : memref<16x16xf32, #tpu.memory_space<vmem>>, vector<16x16xf32>
    %c0_17 = arith.constant 0 : index
    %c0_18 = arith.constant 0 : index
    %9 = vector.load %arg12[%c0_17, %c0_18] : memref<1x16xf32, #tpu.memory_space<vmem>>, vector<1x16xf32>
    %c0_19 = arith.constant 0 : index
    %c0_20 = arith.constant 0 : index
    %10 = vector.load %arg13[%c0_19, %c0_20] : memref<16x64xf32, #tpu.memory_space<vmem>>, vector<16x64xf32>
    %c0_21 = arith.constant 0 : index
    %c0_22 = arith.constant 0 : index
    %11 = vector.load %arg14[%c0_21, %c0_22] : memref<1x64xf32, #tpu.memory_space<vmem>>, vector<1x64xf32>
    %c0_23 = arith.constant 0 : index
    %c0_24 = arith.constant 0 : index
    %12 = vector.load %arg15[%c0_23, %c0_24] : memref<16x4xf32, #tpu.memory_space<vmem>>, vector<16x4xf32>
    %c0_25 = arith.constant 0 : index
    %c0_26 = arith.constant 0 : index
    %13 = vector.load %arg16[%c0_25, %c0_26] : memref<1x4xf32, #tpu.memory_space<vmem>>, vector<1x4xf32>
    %c0_27 = arith.constant 0 : index
    %c0_28 = arith.constant 0 : index
    %14 = vector.load %arg1[%c0_27, %c0_28] : memref<2x60xf32, #tpu.memory_space<vmem>>, vector<2x4xf32>
    %cst = arith.constant dense<0.000000e+00> : vector<2x4xf32>
    %15 = tpu.matmul %14, %0, %cst {dimension_numbers = #tpu.dot_dimension_numbers<[1], [0], [0], [1], [0, 0, 1, 1], [], []>} : vector<2x4xf32>, vector<4x4xf32>, vector<2x4xf32> -> vector<2x4xf32>
    %16 = vector.broadcast %1 : vector<1x4xf32> to vector<2x4xf32>
    %17 = arith.addf %15, %16 : vector<2x4xf32>
    %c0_29 = arith.constant 0 : index
    %c0_30 = arith.constant 0 : index
    %18 = vector.load %arg2[%c0_29, %c0_30] : memref<2x60xf32, #tpu.memory_space<vmem>>, vector<2x4xf32>
    %c0_31 = arith.constant 0 : index
    %c4 = arith.constant 4 : index
    %19 = vector.load %arg2[%c0_31, %c4] : memref<2x60xf32, #tpu.memory_space<vmem>>, vector<2x4xf32>
    %c0_32 = arith.constant 0 : index
    %c8 = arith.constant 8 : index
    %20 = vector.load %arg2[%c0_32, %c8] : memref<2x60xf32, #tpu.memory_space<vmem>>, vector<2x4xf32>
    %cst_33 = arith.constant dense<0.000000e+00> : vector<2x16xf32>
    %21 = tpu.matmul %17, %2, %cst_33 {dimension_numbers = #tpu.dot_dimension_numbers<[1], [0], [0], [1], [0, 0, 1, 1], [], []>} : vector<2x4xf32>, vector<4x16xf32>, vector<2x16xf32> -> vector<2x16xf32>
    %22 = vector.broadcast %3 : vector<1x16xf32> to vector<2x16xf32>
    %23 = arith.addf %21, %22 : vector<2x16xf32>
    %cst_34 = arith.constant 0.000000e+00 : f32
    %24 = vector.broadcast %cst_34 : f32 to vector<2x16xf32>
    %25 = arith.maximumf %23, %24 : vector<2x16xf32>
    %cst_35 = arith.constant dense<0.000000e+00> : vector<2x16xf32>
    %26 = tpu.matmul %25, %4, %cst_35 {dimension_numbers = #tpu.dot_dimension_numbers<[1], [0], [0], [1], [0, 0, 1, 1], [], []>} : vector<2x16xf32>, vector<16x16xf32>, vector<2x16xf32> -> vector<2x16xf32>
    %27 = vector.broadcast %5 : vector<1x16xf32> to vector<2x16xf32>
    %28 = arith.addf %26, %27 : vector<2x16xf32>
    %29 = math.tanh %28 : vector<2x16xf32>
    %30 = vector.extract_strided_slice %29 {offsets = [0, 0], sizes = [2, 4], strides = [1, 1]} : vector<2x16xf32> to vector<2x4xf32>
    %31 = vector.extract_strided_slice %18 {offsets = [0, 0], sizes = [2, 1], strides = [1, 1]} : vector<2x4xf32> to vector<2x1xf32>
    %32 = vector.broadcast %31 : vector<2x1xf32> to vector<2x4xf32>
    %33 = arith.mulf %30, %32 : vector<2x4xf32>
    %34 = vector.extract_strided_slice %29 {offsets = [0, 4], sizes = [2, 4], strides = [1, 1]} : vector<2x16xf32> to vector<2x4xf32>
    %35 = vector.extract_strided_slice %18 {offsets = [0, 1], sizes = [2, 1], strides = [1, 1]} : vector<2x4xf32> to vector<2x1xf32>
    %36 = vector.broadcast %35 : vector<2x1xf32> to vector<2x4xf32>
    %37 = arith.mulf %34, %36 : vector<2x4xf32>
    %38 = arith.addf %33, %37 : vector<2x4xf32>
    %39 = vector.extract_strided_slice %29 {offsets = [0, 8], sizes = [2, 4], strides = [1, 1]} : vector<2x16xf32> to vector<2x4xf32>
    %40 = vector.extract_strided_slice %18 {offsets = [0, 2], sizes = [2, 1], strides = [1, 1]} : vector<2x4xf32> to vector<2x1xf32>
    %41 = vector.broadcast %40 : vector<2x1xf32> to vector<2x4xf32>
    %42 = arith.mulf %39, %41 : vector<2x4xf32>
    %43 = arith.addf %38, %42 : vector<2x4xf32>
    %44 = vector.extract_strided_slice %29 {offsets = [0, 12], sizes = [2, 4], strides = [1, 1]} : vector<2x16xf32> to vector<2x4xf32>
    %45 = vector.extract_strided_slice %18 {offsets = [0, 3], sizes = [2, 1], strides = [1, 1]} : vector<2x4xf32> to vector<2x1xf32>
    %46 = vector.broadcast %45 : vector<2x1xf32> to vector<2x4xf32>
    %47 = arith.mulf %44, %46 : vector<2x4xf32>
    %48 = arith.addf %43, %47 : vector<2x4xf32>
    %cst_36 = arith.constant 5.000000e-01 : f32
    %49 = vector.broadcast %cst_36 : f32 to vector<2x4xf32>
    %50 = arith.mulf %49, %48 : vector<2x4xf32>
    %51 = arith.addf %17, %50 : vector<2x4xf32>
    %cst_37 = arith.constant dense<0.000000e+00> : vector<2x16xf32>
    %52 = tpu.matmul %51, %2, %cst_37 {dimension_numbers = #tpu.dot_dimension_numbers<[1], [0], [0], [1], [0, 0, 1, 1], [], []>} : vector<2x4xf32>, vector<4x16xf32>, vector<2x16xf32> -> vector<2x16xf32>
    %53 = vector.broadcast %3 : vector<1x16xf32> to vector<2x16xf32>
    %54 = arith.addf %52, %53 : vector<2x16xf32>
    %cst_38 = arith.constant 0.000000e+00 : f32
    %55 = vector.broadcast %cst_38 : f32 to vector<2x16xf32>
    %56 = arith.maximumf %54, %55 : vector<2x16xf32>
    %cst_39 = arith.constant dense<0.000000e+00> : vector<2x16xf32>
    %57 = tpu.matmul %56, %4, %cst_39 {dimension_numbers = #tpu.dot_dimension_numbers<[1], [0], [0], [1], [0, 0, 1, 1], [], []>} : vector<2x16xf32>, vector<16x16xf32>, vector<2x16xf32> -> vector<2x16xf32>
    %58 = vector.broadcast %5 : vector<1x16xf32> to vector<2x16xf32>
    %59 = arith.addf %57, %58 : vector<2x16xf32>
    %60 = math.tanh %59 : vector<2x16xf32>
    %61 = vector.extract_strided_slice %60 {offsets = [0, 0], sizes = [2, 4], strides = [1, 1]} : vector<2x16xf32> to vector<2x4xf32>
    %62 = vector.extract_strided_slice %19 {offsets = [0, 0], sizes = [2, 1], strides = [1, 1]} : vector<2x4xf32> to vector<2x1xf32>
    %63 = vector.broadcast %62 : vector<2x1xf32> to vector<2x4xf32>
    %64 = arith.mulf %61, %63 : vector<2x4xf32>
    %65 = vector.extract_strided_slice %60 {offsets = [0, 4], sizes = [2, 4], strides = [1, 1]} : vector<2x16xf32> to vector<2x4xf32>
    %66 = vector.extract_strided_slice %19 {offsets = [0, 1], sizes = [2, 1], strides = [1, 1]} : vector<2x4xf32> to vector<2x1xf32>
    %67 = vector.broadcast %66 : vector<2x1xf32> to vector<2x4xf32>
    %68 = arith.mulf %65, %67 : vector<2x4xf32>
    %69 = arith.addf %64, %68 : vector<2x4xf32>
    %70 = vector.extract_strided_slice %60 {offsets = [0, 8], sizes = [2, 4], strides = [1, 1]} : vector<2x16xf32> to vector<2x4xf32>
    %71 = vector.extract_strided_slice %19 {offsets = [0, 2], sizes = [2, 1], strides = [1, 1]} : vector<2x4xf32> to vector<2x1xf32>
    %72 = vector.broadcast %71 : vector<2x1xf32> to vector<2x4xf32>
    %73 = arith.mulf %70, %72 : vector<2x4xf32>
    %74 = arith.addf %69, %73 : vector<2x4xf32>
    %75 = vector.extract_strided_slice %60 {offsets = [0, 12], sizes = [2, 4], strides = [1, 1]} : vector<2x16xf32> to vector<2x4xf32>
    %76 = vector.extract_strided_slice %19 {offsets = [0, 3], sizes = [2, 1], strides = [1, 1]} : vector<2x4xf32> to vector<2x1xf32>
    %77 = vector.broadcast %76 : vector<2x1xf32> to vector<2x4xf32>
    %78 = arith.mulf %75, %77 : vector<2x4xf32>
    %79 = arith.addf %74, %78 : vector<2x4xf32>
    %cst_40 = arith.constant 5.000000e-01 : f32
    %80 = vector.broadcast %cst_40 : f32 to vector<2x4xf32>
    %81 = arith.mulf %80, %79 : vector<2x4xf32>
    %82 = arith.addf %17, %81 : vector<2x4xf32>
    %cst_41 = arith.constant dense<0.000000e+00> : vector<2x16xf32>
    %83 = tpu.matmul %82, %2, %cst_41 {dimension_numbers = #tpu.dot_dimension_numbers<[1], [0], [0], [1], [0, 0, 1, 1], [], []>} : vector<2x4xf32>, vector<4x16xf32>, vector<2x16xf32> -> vector<2x16xf32>
    %84 = vector.broadcast %3 : vector<1x16xf32> to vector<2x16xf32>
    %85 = arith.addf %83, %84 : vector<2x16xf32>
    %cst_42 = arith.constant 0.000000e+00 : f32
    %86 = vector.broadcast %cst_42 : f32 to vector<2x16xf32>
    %87 = arith.maximumf %85, %86 : vector<2x16xf32>
    %cst_43 = arith.constant dense<0.000000e+00> : vector<2x16xf32>
    %88 = tpu.matmul %87, %4, %cst_43 {dimension_numbers = #tpu.dot_dimension_numbers<[1], [0], [0], [1], [0, 0, 1, 1], [], []>} : vector<2x16xf32>, vector<16x16xf32>, vector<2x16xf32> -> vector<2x16xf32>
    %89 = vector.broadcast %5 : vector<1x16xf32> to vector<2x16xf32>
    %90 = arith.addf %88, %89 : vector<2x16xf32>
    %91 = math.tanh %90 : vector<2x16xf32>
    %92 = vector.extract_strided_slice %91 {offsets = [0, 0], sizes = [2, 4], strides = [1, 1]} : vector<2x16xf32> to vector<2x4xf32>
    %93 = vector.extract_strided_slice %19 {offsets = [0, 0], sizes = [2, 1], strides = [1, 1]} : vector<2x4xf32> to vector<2x1xf32>
    %94 = vector.broadcast %93 : vector<2x1xf32> to vector<2x4xf32>
    %95 = arith.mulf %92, %94 : vector<2x4xf32>
    %96 = vector.extract_strided_slice %91 {offsets = [0, 4], sizes = [2, 4], strides = [1, 1]} : vector<2x16xf32> to vector<2x4xf32>
    %97 = vector.extract_strided_slice %19 {offsets = [0, 1], sizes = [2, 1], strides = [1, 1]} : vector<2x4xf32> to vector<2x1xf32>
    %98 = vector.broadcast %97 : vector<2x1xf32> to vector<2x4xf32>
    %99 = arith.mulf %96, %98 : vector<2x4xf32>
    %100 = arith.addf %95, %99 : vector<2x4xf32>
    %101 = vector.extract_strided_slice %91 {offsets = [0, 8], sizes = [2, 4], strides = [1, 1]} : vector<2x16xf32> to vector<2x4xf32>
    %102 = vector.extract_strided_slice %19 {offsets = [0, 2], sizes = [2, 1], strides = [1, 1]} : vector<2x4xf32> to vector<2x1xf32>
    %103 = vector.broadcast %102 : vector<2x1xf32> to vector<2x4xf32>
    %104 = arith.mulf %101, %103 : vector<2x4xf32>
    %105 = arith.addf %100, %104 : vector<2x4xf32>
    %106 = vector.extract_strided_slice %91 {offsets = [0, 12], sizes = [2, 4], strides = [1, 1]} : vector<2x16xf32> to vector<2x4xf32>
    %107 = vector.extract_strided_slice %19 {offsets = [0, 3], sizes = [2, 1], strides = [1, 1]} : vector<2x4xf32> to vector<2x1xf32>
    %108 = vector.broadcast %107 : vector<2x1xf32> to vector<2x4xf32>
    %109 = arith.mulf %106, %108 : vector<2x4xf32>
    %110 = arith.addf %105, %109 : vector<2x4xf32>
    %111 = arith.addf %17, %110 : vector<2x4xf32>
    %cst_44 = arith.constant dense<0.000000e+00> : vector<2x16xf32>
    %112 = tpu.matmul %111, %2, %cst_44 {dimension_numbers = #tpu.dot_dimension_numbers<[1], [0], [0], [1], [0, 0, 1, 1], [], []>} : vector<2x4xf32>, vector<4x16xf32>, vector<2x16xf32> -> vector<2x16xf32>
    %113 = vector.broadcast %3 : vector<1x16xf32> to vector<2x16xf32>
    %114 = arith.addf %112, %113 : vector<2x16xf32>
    %cst_45 = arith.constant 0.000000e+00 : f32
    %115 = vector.broadcast %cst_45 : f32 to vector<2x16xf32>
    %116 = arith.maximumf %114, %115 : vector<2x16xf32>
    %cst_46 = arith.constant dense<0.000000e+00> : vector<2x16xf32>
    %117 = tpu.matmul %116, %4, %cst_46 {dimension_numbers = #tpu.dot_dimension_numbers<[1], [0], [0], [1], [0, 0, 1, 1], [], []>} : vector<2x16xf32>, vector<16x16xf32>, vector<2x16xf32> -> vector<2x16xf32>
    %118 = vector.broadcast %5 : vector<1x16xf32> to vector<2x16xf32>
    %119 = arith.addf %117, %118 : vector<2x16xf32>
    %120 = math.tanh %119 : vector<2x16xf32>
    %121 = vector.extract_strided_slice %120 {offsets = [0, 0], sizes = [2, 4], strides = [1, 1]} : vector<2x16xf32> to vector<2x4xf32>
    %122 = vector.extract_strided_slice %20 {offsets = [0, 0], sizes = [2, 1], strides = [1, 1]} : vector<2x4xf32> to vector<2x1xf32>
    %123 = vector.broadcast %122 : vector<2x1xf32> to vector<2x4xf32>
    %124 = arith.mulf %121, %123 : vector<2x4xf32>
    %125 = vector.extract_strided_slice %120 {offsets = [0, 4], sizes = [2, 4], strides = [1, 1]} : vector<2x16xf32> to vector<2x4xf32>
    %126 = vector.extract_strided_slice %20 {offsets = [0, 1], sizes = [2, 1], strides = [1, 1]} : vector<2x4xf32> to vector<2x1xf32>
    %127 = vector.broadcast %126 : vector<2x1xf32> to vector<2x4xf32>
    %128 = arith.mulf %125, %127 : vector<2x4xf32>
    %129 = arith.addf %124, %128 : vector<2x4xf32>
    %130 = vector.extract_strided_slice %120 {offsets = [0, 8], sizes = [2, 4], strides = [1, 1]} : vector<2x16xf32> to vector<2x4xf32>
    %131 = vector.extract_strided_slice %20 {offsets = [0, 2], sizes = [2, 1], strides = [1, 1]} : vector<2x4xf32> to vector<2x1xf32>
    %132 = vector.broadcast %131 : vector<2x1xf32> to vector<2x4xf32>
    %133 = arith.mulf %130, %132 : vector<2x4xf32>
    %134 = arith.addf %129, %133 : vector<2x4xf32>
    %135 = vector.extract_strided_slice %120 {offsets = [0, 12], sizes = [2, 4], strides = [1, 1]} : vector<2x16xf32> to vector<2x4xf32>
    %136 = vector.extract_strided_slice %20 {offsets = [0, 3], sizes = [2, 1], strides = [1, 1]} : vector<2x4xf32> to vector<2x1xf32>
    %137 = vector.broadcast %136 : vector<2x1xf32> to vector<2x4xf32>
    %138 = arith.mulf %135, %137 : vector<2x4xf32>
    %139 = arith.addf %134, %138 : vector<2x4xf32>
    %140 = arith.addf %79, %110 : vector<2x4xf32>
    %cst_47 = arith.constant 2.000000e+00 : f32
    %141 = vector.broadcast %cst_47 : f32 to vector<2x4xf32>
    %142 = arith.mulf %141, %140 : vector<2x4xf32>
    %143 = arith.addf %48, %142 : vector<2x4xf32>
    %144 = arith.addf %143, %139 : vector<2x4xf32>
    %cst_48 = arith.constant 0.166666672 : f32
    %145 = vector.broadcast %cst_48 : f32 to vector<2x4xf32>
    %146 = arith.mulf %144, %145 : vector<2x4xf32>
    %147 = arith.addf %17, %146 : vector<2x4xf32>
    %c0_49 = arith.constant 0 : index
    %c8_50 = arith.constant 8 : index
    %148 = vector.load %arg2[%c0_49, %c8_50] : memref<2x60xf32, #tpu.memory_space<vmem>>, vector<2x4xf32>
    %c0_51 = arith.constant 0 : index
    %c12 = arith.constant 12 : index
    %149 = vector.load %arg2[%c0_51, %c12] : memref<2x60xf32, #tpu.memory_space<vmem>>, vector<2x4xf32>
    %c0_52 = arith.constant 0 : index
    %c16 = arith.constant 16 : index
    %150 = vector.load %arg2[%c0_52, %c16] : memref<2x60xf32, #tpu.memory_space<vmem>>, vector<2x4xf32>
    %cst_53 = arith.constant dense<0.000000e+00> : vector<2x16xf32>
    %151 = tpu.matmul %147, %2, %cst_53 {dimension_numbers = #tpu.dot_dimension_numbers<[1], [0], [0], [1], [0, 0, 1, 1], [], []>} : vector<2x4xf32>, vector<4x16xf32>, vector<2x16xf32> -> vector<2x16xf32>
    %152 = vector.broadcast %3 : vector<1x16xf32> to vector<2x16xf32>
    %153 = arith.addf %151, %152 : vector<2x16xf32>
    %cst_54 = arith.constant 0.000000e+00 : f32
    %154 = vector.broadcast %cst_54 : f32 to vector<2x16xf32>
    %155 = arith.maximumf %153, %154 : vector<2x16xf32>
    %cst_55 = arith.constant dense<0.000000e+00> : vector<2x16xf32>
    %156 = tpu.matmul %155, %4, %cst_55 {dimension_numbers = #tpu.dot_dimension_numbers<[1], [0], [0], [1], [0, 0, 1, 1], [], []>} : vector<2x16xf32>, vector<16x16xf32>, vector<2x16xf32> -> vector<2x16xf32>
    %157 = vector.broadcast %5 : vector<1x16xf32> to vector<2x16xf32>
    %158 = arith.addf %156, %157 : vector<2x16xf32>
    %159 = math.tanh %158 : vector<2x16xf32>
    %160 = vector.extract_strided_slice %159 {offsets = [0, 0], sizes = [2, 4], strides = [1, 1]} : vector<2x16xf32> to vector<2x4xf32>
    %161 = vector.extract_strided_slice %148 {offsets = [0, 0], sizes = [2, 1], strides = [1, 1]} : vector<2x4xf32> to vector<2x1xf32>
    %162 = vector.broadcast %161 : vector<2x1xf32> to vector<2x4xf32>
    %163 = arith.mulf %160, %162 : vector<2x4xf32>
    %164 = vector.extract_strided_slice %159 {offsets = [0, 4], sizes = [2, 4], strides = [1, 1]} : vector<2x16xf32> to vector<2x4xf32>
    %165 = vector.extract_strided_slice %148 {offsets = [0, 1], sizes = [2, 1], strides = [1, 1]} : vector<2x4xf32> to vector<2x1xf32>
    %166 = vector.broadcast %165 : vector<2x1xf32> to vector<2x4xf32>
    %167 = arith.mulf %164, %166 : vector<2x4xf32>
    %168 = arith.addf %163, %167 : vector<2x4xf32>
    %169 = vector.extract_strided_slice %159 {offsets = [0, 8], sizes = [2, 4], strides = [1, 1]} : vector<2x16xf32> to vector<2x4xf32>
    %170 = vector.extract_strided_slice %148 {offsets = [0, 2], sizes = [2, 1], strides = [1, 1]} : vector<2x4xf32> to vector<2x1xf32>
    %171 = vector.broadcast %170 : vector<2x1xf32> to vector<2x4xf32>
    %172 = arith.mulf %169, %171 : vector<2x4xf32>
    %173 = arith.addf %168, %172 : vector<2x4xf32>
    %174 = vector.extract_strided_slice %159 {offsets = [0, 12], sizes = [2, 4], strides = [1, 1]} : vector<2x16xf32> to vector<2x4xf32>
    %175 = vector.extract_strided_slice %148 {offsets = [0, 3], sizes = [2, 1], strides = [1, 1]} : vector<2x4xf32> to vector<2x1xf32>
    %176 = vector.broadcast %175 : vector<2x1xf32> to vector<2x4xf32>
    %177 = arith.mulf %174, %176 : vector<2x4xf32>
    %178 = arith.addf %173, %177 : vector<2x4xf32>
    %cst_56 = arith.constant 5.000000e-01 : f32
    %179 = vector.broadcast %cst_56 : f32 to vector<2x4xf32>
    %180 = arith.mulf %179, %178 : vector<2x4xf32>
    %181 = arith.addf %147, %180 : vector<2x4xf32>
    %cst_57 = arith.constant dense<0.000000e+00> : vector<2x16xf32>
    %182 = tpu.matmul %181, %2, %cst_57 {dimension_numbers = #tpu.dot_dimension_numbers<[1], [0], [0], [1], [0, 0, 1, 1], [], []>} : vector<2x4xf32>, vector<4x16xf32>, vector<2x16xf32> -> vector<2x16xf32>
    %183 = vector.broadcast %3 : vector<1x16xf32> to vector<2x16xf32>
    %184 = arith.addf %182, %183 : vector<2x16xf32>
    %cst_58 = arith.constant 0.000000e+00 : f32
    %185 = vector.broadcast %cst_58 : f32 to vector<2x16xf32>
    %186 = arith.maximumf %184, %185 : vector<2x16xf32>
    %cst_59 = arith.constant dense<0.000000e+00> : vector<2x16xf32>
    %187 = tpu.matmul %186, %4, %cst_59 {dimension_numbers = #tpu.dot_dimension_numbers<[1], [0], [0], [1], [0, 0, 1, 1], [], []>} : vector<2x16xf32>, vector<16x16xf32>, vector<2x16xf32> -> vector<2x16xf32>
    %188 = vector.broadcast %5 : vector<1x16xf32> to vector<2x16xf32>
    %189 = arith.addf %187, %188 : vector<2x16xf32>
    %190 = math.tanh %189 : vector<2x16xf32>
    %191 = vector.extract_strided_slice %190 {offsets = [0, 0], sizes = [2, 4], strides = [1, 1]} : vector<2x16xf32> to vector<2x4xf32>
    %192 = vector.extract_strided_slice %149 {offsets = [0, 0], sizes = [2, 1], strides = [1, 1]} : vector<2x4xf32> to vector<2x1xf32>
    %193 = vector.broadcast %192 : vector<2x1xf32> to vector<2x4xf32>
    %194 = arith.mulf %191, %193 : vector<2x4xf32>
    %195 = vector.extract_strided_slice %190 {offsets = [0, 4], sizes = [2, 4], strides = [1, 1]} : vector<2x16xf32> to vector<2x4xf32>
    %196 = vector.extract_strided_slice %149 {offsets = [0, 1], sizes = [2, 1], strides = [1, 1]} : vector<2x4xf32> to vector<2x1xf32>
    %197 = vector.broadcast %196 : vector<2x1xf32> to vector<2x4xf32>
    %198 = arith.mulf %195, %197 : vector<2x4xf32>
    %199 = arith.addf %194, %198 : vector<2x4xf32>
    %200 = vector.extract_strided_slice %190 {offsets = [0, 8], sizes = [2, 4], strides = [1, 1]} : vector<2x16xf32> to vector<2x4xf32>
    %201 = vector.extract_strided_slice %149 {offsets = [0, 2], sizes = [2, 1], strides = [1, 1]} : vector<2x4xf32> to vector<2x1xf32>
    %202 = vector.broadcast %201 : vector<2x1xf32> to vector<2x4xf32>
    %203 = arith.mulf %200, %202 : vector<2x4xf32>
    %204 = arith.addf %199, %203 : vector<2x4xf32>
    %205 = vector.extract_strided_slice %190 {offsets = [0, 12], sizes = [2, 4], strides = [1, 1]} : vector<2x16xf32> to vector<2x4xf32>
    %206 = vector.extract_strided_slice %149 {offsets = [0, 3], sizes = [2, 1], strides = [1, 1]} : vector<2x4xf32> to vector<2x1xf32>
    %207 = vector.broadcast %206 : vector<2x1xf32> to vector<2x4xf32>
    %208 = arith.mulf %205, %207 : vector<2x4xf32>
    %209 = arith.addf %204, %208 : vector<2x4xf32>
    %cst_60 = arith.constant 5.000000e-01 : f32
    %210 = vector.broadcast %cst_60 : f32 to vector<2x4xf32>
    %211 = arith.mulf %210, %209 : vector<2x4xf32>
    %212 = arith.addf %147, %211 : vector<2x4xf32>
    %cst_61 = arith.constant dense<0.000000e+00> : vector<2x16xf32>
    %213 = tpu.matmul %212, %2, %cst_61 {dimension_numbers = #tpu.dot_dimension_numbers<[1], [0], [0], [1], [0, 0, 1, 1], [], []>} : vector<2x4xf32>, vector<4x16xf32>, vector<2x16xf32> -> vector<2x16xf32>
    %214 = vector.broadcast %3 : vector<1x16xf32> to vector<2x16xf32>
    %215 = arith.addf %213, %214 : vector<2x16xf32>
    %cst_62 = arith.constant 0.000000e+00 : f32
    %216 = vector.broadcast %cst_62 : f32 to vector<2x16xf32>
    %217 = arith.maximumf %215, %216 : vector<2x16xf32>
    %cst_63 = arith.constant dense<0.000000e+00> : vector<2x16xf32>
    %218 = tpu.matmul %217, %4, %cst_63 {dimension_numbers = #tpu.dot_dimension_numbers<[1], [0], [0], [1], [0, 0, 1, 1], [], []>} : vector<2x16xf32>, vector<16x16xf32>, vector<2x16xf32> -> vector<2x16xf32>
    %219 = vector.broadcast %5 : vector<1x16xf32> to vector<2x16xf32>
    %220 = arith.addf %218, %219 : vector<2x16xf32>
    %221 = math.tanh %220 : vector<2x16xf32>
    %222 = vector.extract_strided_slice %221 {offsets = [0, 0], sizes = [2, 4], strides = [1, 1]} : vector<2x16xf32> to vector<2x4xf32>
    %223 = vector.extract_strided_slice %149 {offsets = [0, 0], sizes = [2, 1], strides = [1, 1]} : vector<2x4xf32> to vector<2x1xf32>
    %224 = vector.broadcast %223 : vector<2x1xf32> to vector<2x4xf32>
    %225 = arith.mulf %222, %224 : vector<2x4xf32>
    %226 = vector.extract_strided_slice %221 {offsets = [0, 4], sizes = [2, 4], strides = [1, 1]} : vector<2x16xf32> to vector<2x4xf32>
    %227 = vector.extract_strided_slice %149 {offsets = [0, 1], sizes = [2, 1], strides = [1, 1]} : vector<2x4xf32> to vector<2x1xf32>
    %228 = vector.broadcast %227 : vector<2x1xf32> to vector<2x4xf32>
    %229 = arith.mulf %226, %228 : vector<2x4xf32>
    %230 = arith.addf %225, %229 : vector<2x4xf32>
    %231 = vector.extract_strided_slice %221 {offsets = [0, 8], sizes = [2, 4], strides = [1, 1]} : vector<2x16xf32> to vector<2x4xf32>
    %232 = vector.extract_strided_slice %149 {offsets = [0, 2], sizes = [2, 1], strides = [1, 1]} : vector<2x4xf32> to vector<2x1xf32>
    %233 = vector.broadcast %232 : vector<2x1xf32> to vector<2x4xf32>
    %234 = arith.mulf %231, %233 : vector<2x4xf32>
    %235 = arith.addf %230, %234 : vector<2x4xf32>
    %236 = vector.extract_strided_slice %221 {offsets = [0, 12], sizes = [2, 4], strides = [1, 1]} : vector<2x16xf32> to vector<2x4xf32>
    %237 = vector.extract_strided_slice %149 {offsets = [0, 3], sizes = [2, 1], strides = [1, 1]} : vector<2x4xf32> to vector<2x1xf32>
    %238 = vector.broadcast %237 : vector<2x1xf32> to vector<2x4xf32>
    %239 = arith.mulf %236, %238 : vector<2x4xf32>
    %240 = arith.addf %235, %239 : vector<2x4xf32>
    %241 = arith.addf %147, %240 : vector<2x4xf32>
    %cst_64 = arith.constant dense<0.000000e+00> : vector<2x16xf32>
    %242 = tpu.matmul %241, %2, %cst_64 {dimension_numbers = #tpu.dot_dimension_numbers<[1], [0], [0], [1], [0, 0, 1, 1], [], []>} : vector<2x4xf32>, vector<4x16xf32>, vector<2x16xf32> -> vector<2x16xf32>
    %243 = vector.broadcast %3 : vector<1x16xf32> to vector<2x16xf32>
    %244 = arith.addf %242, %243 : vector<2x16xf32>
    %cst_65 = arith.constant 0.000000e+00 : f32
    %245 = vector.broadcast %cst_65 : f32 to vector<2x16xf32>
    %246 = arith.maximumf %244, %245 : vector<2x16xf32>
    %cst_66 = arith.constant dense<0.000000e+00> : vector<2x16xf32>
    %247 = tpu.matmul %246, %4, %cst_66 {dimension_numbers = #tpu.dot_dimension_numbers<[1], [0], [0], [1], [0, 0, 1, 1], [], []>} : vector<2x16xf32>, vector<16x16xf32>, vector<2x16xf32> -> vector<2x16xf32>
    %248 = vector.broadcast %5 : vector<1x16xf32> to vector<2x16xf32>
    %249 = arith.addf %247, %248 : vector<2x16xf32>
    %250 = math.tanh %249 : vector<2x16xf32>
    %251 = vector.extract_strided_slice %250 {offsets = [0, 0], sizes = [2, 4], strides = [1, 1]} : vector<2x16xf32> to vector<2x4xf32>
    %252 = vector.extract_strided_slice %150 {offsets = [0, 0], sizes = [2, 1], strides = [1, 1]} : vector<2x4xf32> to vector<2x1xf32>
    %253 = vector.broadcast %252 : vector<2x1xf32> to vector<2x4xf32>
    %254 = arith.mulf %251, %253 : vector<2x4xf32>
    %255 = vector.extract_strided_slice %250 {offsets = [0, 4], sizes = [2, 4], strides = [1, 1]} : vector<2x16xf32> to vector<2x4xf32>
    %256 = vector.extract_strided_slice %150 {offsets = [0, 1], sizes = [2, 1], strides = [1, 1]} : vector<2x4xf32> to vector<2x1xf32>
    %257 = vector.broadcast %256 : vector<2x1xf32> to vector<2x4xf32>
    %258 = arith.mulf %255, %257 : vector<2x4xf32>
    %259 = arith.addf %254, %258 : vector<2x4xf32>
    %260 = vector.extract_strided_slice %250 {offsets = [0, 8], sizes = [2, 4], strides = [1, 1]} : vector<2x16xf32> to vector<2x4xf32>
    %261 = vector.extract_strided_slice %150 {offsets = [0, 2], sizes = [2, 1], strides = [1, 1]} : vector<2x4xf32> to vector<2x1xf32>
    %262 = vector.broadcast %261 : vector<2x1xf32> to vector<2x4xf32>
    %263 = arith.mulf %260, %262 : vector<2x4xf32>
    %264 = arith.addf %259, %263 : vector<2x4xf32>
    %265 = vector.extract_strided_slice %250 {offsets = [0, 12], sizes = [2, 4], strides = [1, 1]} : vector<2x16xf32> to vector<2x4xf32>
    %266 = vector.extract_strided_slice %150 {offsets = [0, 3], sizes = [2, 1], strides = [1, 1]} : vector<2x4xf32> to vector<2x1xf32>
    %267 = vector.broadcast %266 : vector<2x1xf32> to vector<2x4xf32>
    %268 = arith.mulf %265, %267 : vector<2x4xf32>
    %269 = arith.addf %264, %268 : vector<2x4xf32>
    %270 = arith.addf %209, %240 : vector<2x4xf32>
    %cst_67 = arith.constant 2.000000e+00 : f32
    %271 = vector.broadcast %cst_67 : f32 to vector<2x4xf32>
    %272 = arith.mulf %271, %270 : vector<2x4xf32>
    %273 = arith.addf %178, %272 : vector<2x4xf32>
    %274 = arith.addf %273, %269 : vector<2x4xf32>
    %cst_68 = arith.constant 0.166666672 : f32
    %275 = vector.broadcast %cst_68 : f32 to vector<2x4xf32>
    %276 = arith.mulf %274, %275 : vector<2x4xf32>
    %277 = arith.addf %147, %276 : vector<2x4xf32>
    %c0_69 = arith.constant 0 : index
    %c16_70 = arith.constant 16 : index
    %278 = vector.load %arg2[%c0_69, %c16_70] : memref<2x60xf32, #tpu.memory_space<vmem>>, vector<2x4xf32>
    %c0_71 = arith.constant 0 : index
    %c20 = arith.constant 20 : index
    %279 = vector.load %arg2[%c0_71, %c20] : memref<2x60xf32, #tpu.memory_space<vmem>>, vector<2x4xf32>
    %c0_72 = arith.constant 0 : index
    %c24 = arith.constant 24 : index
    %280 = vector.load %arg2[%c0_72, %c24] : memref<2x60xf32, #tpu.memory_space<vmem>>, vector<2x4xf32>
    %cst_73 = arith.constant dense<0.000000e+00> : vector<2x16xf32>
    %281 = tpu.matmul %277, %2, %cst_73 {dimension_numbers = #tpu.dot_dimension_numbers<[1], [0], [0], [1], [0, 0, 1, 1], [], []>} : vector<2x4xf32>, vector<4x16xf32>, vector<2x16xf32> -> vector<2x16xf32>
    %282 = vector.broadcast %3 : vector<1x16xf32> to vector<2x16xf32>
    %283 = arith.addf %281, %282 : vector<2x16xf32>
    %cst_74 = arith.constant 0.000000e+00 : f32
    %284 = vector.broadcast %cst_74 : f32 to vector<2x16xf32>
    %285 = arith.maximumf %283, %284 : vector<2x16xf32>
    %cst_75 = arith.constant dense<0.000000e+00> : vector<2x16xf32>
    %286 = tpu.matmul %285, %4, %cst_75 {dimension_numbers = #tpu.dot_dimension_numbers<[1], [0], [0], [1], [0, 0, 1, 1], [], []>} : vector<2x16xf32>, vector<16x16xf32>, vector<2x16xf32> -> vector<2x16xf32>
    %287 = vector.broadcast %5 : vector<1x16xf32> to vector<2x16xf32>
    %288 = arith.addf %286, %287 : vector<2x16xf32>
    %289 = math.tanh %288 : vector<2x16xf32>
    %290 = vector.extract_strided_slice %289 {offsets = [0, 0], sizes = [2, 4], strides = [1, 1]} : vector<2x16xf32> to vector<2x4xf32>
    %291 = vector.extract_strided_slice %278 {offsets = [0, 0], sizes = [2, 1], strides = [1, 1]} : vector<2x4xf32> to vector<2x1xf32>
    %292 = vector.broadcast %291 : vector<2x1xf32> to vector<2x4xf32>
    %293 = arith.mulf %290, %292 : vector<2x4xf32>
    %294 = vector.extract_strided_slice %289 {offsets = [0, 4], sizes = [2, 4], strides = [1, 1]} : vector<2x16xf32> to vector<2x4xf32>
    %295 = vector.extract_strided_slice %278 {offsets = [0, 1], sizes = [2, 1], strides = [1, 1]} : vector<2x4xf32> to vector<2x1xf32>
    %296 = vector.broadcast %295 : vector<2x1xf32> to vector<2x4xf32>
    %297 = arith.mulf %294, %296 : vector<2x4xf32>
    %298 = arith.addf %293, %297 : vector<2x4xf32>
    %299 = vector.extract_strided_slice %289 {offsets = [0, 8], sizes = [2, 4], strides = [1, 1]} : vector<2x16xf32> to vector<2x4xf32>
    %300 = vector.extract_strided_slice %278 {offsets = [0, 2], sizes = [2, 1], strides = [1, 1]} : vector<2x4xf32> to vector<2x1xf32>
    %301 = vector.broadcast %300 : vector<2x1xf32> to vector<2x4xf32>
    %302 = arith.mulf %299, %301 : vector<2x4xf32>
    %303 = arith.addf %298, %302 : vector<2x4xf32>
    %304 = vector.extract_strided_slice %289 {offsets = [0, 12], sizes = [2, 4], strides = [1, 1]} : vector<2x16xf32> to vector<2x4xf32>
    %305 = vector.extract_strided_slice %278 {offsets = [0, 3], sizes = [2, 1], strides = [1, 1]} : vector<2x4xf32> to vector<2x1xf32>
    %306 = vector.broadcast %305 : vector<2x1xf32> to vector<2x4xf32>
    %307 = arith.mulf %304, %306 : vector<2x4xf32>
    %308 = arith.addf %303, %307 : vector<2x4xf32>
    %cst_76 = arith.constant 5.000000e-01 : f32
    %309 = vector.broadcast %cst_76 : f32 to vector<2x4xf32>
    %310 = arith.mulf %309, %308 : vector<2x4xf32>
    %311 = arith.addf %277, %310 : vector<2x4xf32>
    %cst_77 = arith.constant dense<0.000000e+00> : vector<2x16xf32>
    %312 = tpu.matmul %311, %2, %cst_77 {dimension_numbers = #tpu.dot_dimension_numbers<[1], [0], [0], [1], [0, 0, 1, 1], [], []>} : vector<2x4xf32>, vector<4x16xf32>, vector<2x16xf32> -> vector<2x16xf32>
    %313 = vector.broadcast %3 : vector<1x16xf32> to vector<2x16xf32>
    %314 = arith.addf %312, %313 : vector<2x16xf32>
    %cst_78 = arith.constant 0.000000e+00 : f32
    %315 = vector.broadcast %cst_78 : f32 to vector<2x16xf32>
    %316 = arith.maximumf %314, %315 : vector<2x16xf32>
    %cst_79 = arith.constant dense<0.000000e+00> : vector<2x16xf32>
    %317 = tpu.matmul %316, %4, %cst_79 {dimension_numbers = #tpu.dot_dimension_numbers<[1], [0], [0], [1], [0, 0, 1, 1], [], []>} : vector<2x16xf32>, vector<16x16xf32>, vector<2x16xf32> -> vector<2x16xf32>
    %318 = vector.broadcast %5 : vector<1x16xf32> to vector<2x16xf32>
    %319 = arith.addf %317, %318 : vector<2x16xf32>
    %320 = math.tanh %319 : vector<2x16xf32>
    %321 = vector.extract_strided_slice %320 {offsets = [0, 0], sizes = [2, 4], strides = [1, 1]} : vector<2x16xf32> to vector<2x4xf32>
    %322 = vector.extract_strided_slice %279 {offsets = [0, 0], sizes = [2, 1], strides = [1, 1]} : vector<2x4xf32> to vector<2x1xf32>
    %323 = vector.broadcast %322 : vector<2x1xf32> to vector<2x4xf32>
    %324 = arith.mulf %321, %323 : vector<2x4xf32>
    %325 = vector.extract_strided_slice %320 {offsets = [0, 4], sizes = [2, 4], strides = [1, 1]} : vector<2x16xf32> to vector<2x4xf32>
    %326 = vector.extract_strided_slice %279 {offsets = [0, 1], sizes = [2, 1], strides = [1, 1]} : vector<2x4xf32> to vector<2x1xf32>
    %327 = vector.broadcast %326 : vector<2x1xf32> to vector<2x4xf32>
    %328 = arith.mulf %325, %327 : vector<2x4xf32>
    %329 = arith.addf %324, %328 : vector<2x4xf32>
    %330 = vector.extract_strided_slice %320 {offsets = [0, 8], sizes = [2, 4], strides = [1, 1]} : vector<2x16xf32> to vector<2x4xf32>
    %331 = vector.extract_strided_slice %279 {offsets = [0, 2], sizes = [2, 1], strides = [1, 1]} : vector<2x4xf32> to vector<2x1xf32>
    %332 = vector.broadcast %331 : vector<2x1xf32> to vector<2x4xf32>
    %333 = arith.mulf %330, %332 : vector<2x4xf32>
    %334 = arith.addf %329, %333 : vector<2x4xf32>
    %335 = vector.extract_strided_slice %320 {offsets = [0, 12], sizes = [2, 4], strides = [1, 1]} : vector<2x16xf32> to vector<2x4xf32>
    %336 = vector.extract_strided_slice %279 {offsets = [0, 3], sizes = [2, 1], strides = [1, 1]} : vector<2x4xf32> to vector<2x1xf32>
    %337 = vector.broadcast %336 : vector<2x1xf32> to vector<2x4xf32>
    %338 = arith.mulf %335, %337 : vector<2x4xf32>
    %339 = arith.addf %334, %338 : vector<2x4xf32>
    %cst_80 = arith.constant 5.000000e-01 : f32
    %340 = vector.broadcast %cst_80 : f32 to vector<2x4xf32>
    %341 = arith.mulf %340, %339 : vector<2x4xf32>
    %342 = arith.addf %277, %341 : vector<2x4xf32>
    %cst_81 = arith.constant dense<0.000000e+00> : vector<2x16xf32>
    %343 = tpu.matmul %342, %2, %cst_81 {dimension_numbers = #tpu.dot_dimension_numbers<[1], [0], [0], [1], [0, 0, 1, 1], [], []>} : vector<2x4xf32>, vector<4x16xf32>, vector<2x16xf32> -> vector<2x16xf32>
    %344 = vector.broadcast %3 : vector<1x16xf32> to vector<2x16xf32>
    %345 = arith.addf %343, %344 : vector<2x16xf32>
    %cst_82 = arith.constant 0.000000e+00 : f32
    %346 = vector.broadcast %cst_82 : f32 to vector<2x16xf32>
    %347 = arith.maximumf %345, %346 : vector<2x16xf32>
    %cst_83 = arith.constant dense<0.000000e+00> : vector<2x16xf32>
    %348 = tpu.matmul %347, %4, %cst_83 {dimension_numbers = #tpu.dot_dimension_numbers<[1], [0], [0], [1], [0, 0, 1, 1], [], []>} : vector<2x16xf32>, vector<16x16xf32>, vector<2x16xf32> -> vector<2x16xf32>
    %349 = vector.broadcast %5 : vector<1x16xf32> to vector<2x16xf32>
    %350 = arith.addf %348, %349 : vector<2x16xf32>
    %351 = math.tanh %350 : vector<2x16xf32>
    %352 = vector.extract_strided_slice %351 {offsets = [0, 0], sizes = [2, 4], strides = [1, 1]} : vector<2x16xf32> to vector<2x4xf32>
    %353 = vector.extract_strided_slice %279 {offsets = [0, 0], sizes = [2, 1], strides = [1, 1]} : vector<2x4xf32> to vector<2x1xf32>
    %354 = vector.broadcast %353 : vector<2x1xf32> to vector<2x4xf32>
    %355 = arith.mulf %352, %354 : vector<2x4xf32>
    %356 = vector.extract_strided_slice %351 {offsets = [0, 4], sizes = [2, 4], strides = [1, 1]} : vector<2x16xf32> to vector<2x4xf32>
    %357 = vector.extract_strided_slice %279 {offsets = [0, 1], sizes = [2, 1], strides = [1, 1]} : vector<2x4xf32> to vector<2x1xf32>
    %358 = vector.broadcast %357 : vector<2x1xf32> to vector<2x4xf32>
    %359 = arith.mulf %356, %358 : vector<2x4xf32>
    %360 = arith.addf %355, %359 : vector<2x4xf32>
    %361 = vector.extract_strided_slice %351 {offsets = [0, 8], sizes = [2, 4], strides = [1, 1]} : vector<2x16xf32> to vector<2x4xf32>
    %362 = vector.extract_strided_slice %279 {offsets = [0, 2], sizes = [2, 1], strides = [1, 1]} : vector<2x4xf32> to vector<2x1xf32>
    %363 = vector.broadcast %362 : vector<2x1xf32> to vector<2x4xf32>
    %364 = arith.mulf %361, %363 : vector<2x4xf32>
    %365 = arith.addf %360, %364 : vector<2x4xf32>
    %366 = vector.extract_strided_slice %351 {offsets = [0, 12], sizes = [2, 4], strides = [1, 1]} : vector<2x16xf32> to vector<2x4xf32>
    %367 = vector.extract_strided_slice %279 {offsets = [0, 3], sizes = [2, 1], strides = [1, 1]} : vector<2x4xf32> to vector<2x1xf32>
    %368 = vector.broadcast %367 : vector<2x1xf32> to vector<2x4xf32>
    %369 = arith.mulf %366, %368 : vector<2x4xf32>
    %370 = arith.addf %365, %369 : vector<2x4xf32>
    %371 = arith.addf %277, %370 : vector<2x4xf32>
    %cst_84 = arith.constant dense<0.000000e+00> : vector<2x16xf32>
    %372 = tpu.matmul %371, %2, %cst_84 {dimension_numbers = #tpu.dot_dimension_numbers<[1], [0], [0], [1], [0, 0, 1, 1], [], []>} : vector<2x4xf32>, vector<4x16xf32>, vector<2x16xf32> -> vector<2x16xf32>
    %373 = vector.broadcast %3 : vector<1x16xf32> to vector<2x16xf32>
    %374 = arith.addf %372, %373 : vector<2x16xf32>
    %cst_85 = arith.constant 0.000000e+00 : f32
    %375 = vector.broadcast %cst_85 : f32 to vector<2x16xf32>
    %376 = arith.maximumf %374, %375 : vector<2x16xf32>
    %cst_86 = arith.constant dense<0.000000e+00> : vector<2x16xf32>
    %377 = tpu.matmul %376, %4, %cst_86 {dimension_numbers = #tpu.dot_dimension_numbers<[1], [0], [0], [1], [0, 0, 1, 1], [], []>} : vector<2x16xf32>, vector<16x16xf32>, vector<2x16xf32> -> vector<2x16xf32>
    %378 = vector.broadcast %5 : vector<1x16xf32> to vector<2x16xf32>
    %379 = arith.addf %377, %378 : vector<2x16xf32>
    %380 = math.tanh %379 : vector<2x16xf32>
    %381 = vector.extract_strided_slice %380 {offsets = [0, 0], sizes = [2, 4], strides = [1, 1]} : vector<2x16xf32> to vector<2x4xf32>
    %382 = vector.extract_strided_slice %280 {offsets = [0, 0], sizes = [2, 1], strides = [1, 1]} : vector<2x4xf32> to vector<2x1xf32>
    %383 = vector.broadcast %382 : vector<2x1xf32> to vector<2x4xf32>
    %384 = arith.mulf %381, %383 : vector<2x4xf32>
    %385 = vector.extract_strided_slice %380 {offsets = [0, 4], sizes = [2, 4], strides = [1, 1]} : vector<2x16xf32> to vector<2x4xf32>
    %386 = vector.extract_strided_slice %280 {offsets = [0, 1], sizes = [2, 1], strides = [1, 1]} : vector<2x4xf32> to vector<2x1xf32>
    %387 = vector.broadcast %386 : vector<2x1xf32> to vector<2x4xf32>
    %388 = arith.mulf %385, %387 : vector<2x4xf32>
    %389 = arith.addf %384, %388 : vector<2x4xf32>
    %390 = vector.extract_strided_slice %380 {offsets = [0, 8], sizes = [2, 4], strides = [1, 1]} : vector<2x16xf32> to vector<2x4xf32>
    %391 = vector.extract_strided_slice %280 {offsets = [0, 2], sizes = [2, 1], strides = [1, 1]} : vector<2x4xf32> to vector<2x1xf32>
    %392 = vector.broadcast %391 : vector<2x1xf32> to vector<2x4xf32>
    %393 = arith.mulf %390, %392 : vector<2x4xf32>
    %394 = arith.addf %389, %393 : vector<2x4xf32>
    %395 = vector.extract_strided_slice %380 {offsets = [0, 12], sizes = [2, 4], strides = [1, 1]} : vector<2x16xf32> to vector<2x4xf32>
    %396 = vector.extract_strided_slice %280 {offsets = [0, 3], sizes = [2, 1], strides = [1, 1]} : vector<2x4xf32> to vector<2x1xf32>
    %397 = vector.broadcast %396 : vector<2x1xf32> to vector<2x4xf32>
    %398 = arith.mulf %395, %397 : vector<2x4xf32>
    %399 = arith.addf %394, %398 : vector<2x4xf32>
    %400 = arith.addf %339, %370 : vector<2x4xf32>
    %cst_87 = arith.constant 2.000000e+00 : f32
    %401 = vector.broadcast %cst_87 : f32 to vector<2x4xf32>
    %402 = arith.mulf %401, %400 : vector<2x4xf32>
    %403 = arith.addf %308, %402 : vector<2x4xf32>
    %404 = arith.addf %403, %399 : vector<2x4xf32>
    %cst_88 = arith.constant 0.166666672 : f32
    %405 = vector.broadcast %cst_88 : f32 to vector<2x4xf32>
    %406 = arith.mulf %404, %405 : vector<2x4xf32>
    %407 = arith.addf %277, %406 : vector<2x4xf32>
    %c0_89 = arith.constant 0 : index
    %c24_90 = arith.constant 24 : index
    %408 = vector.load %arg2[%c0_89, %c24_90] : memref<2x60xf32, #tpu.memory_space<vmem>>, vector<2x4xf32>
    %c0_91 = arith.constant 0 : index
    %c28 = arith.constant 28 : index
    %409 = vector.load %arg2[%c0_91, %c28] : memref<2x60xf32, #tpu.memory_space<vmem>>, vector<2x4xf32>
    %c0_92 = arith.constant 0 : index
    %c32 = arith.constant 32 : index
    %410 = vector.load %arg2[%c0_92, %c32] : memref<2x60xf32, #tpu.memory_space<vmem>>, vector<2x4xf32>
    %cst_93 = arith.constant dense<0.000000e+00> : vector<2x16xf32>
    %411 = tpu.matmul %407, %2, %cst_93 {dimension_numbers = #tpu.dot_dimension_numbers<[1], [0], [0], [1], [0, 0, 1, 1], [], []>} : vector<2x4xf32>, vector<4x16xf32>, vector<2x16xf32> -> vector<2x16xf32>
    %412 = vector.broadcast %3 : vector<1x16xf32> to vector<2x16xf32>
    %413 = arith.addf %411, %412 : vector<2x16xf32>
    %cst_94 = arith.constant 0.000000e+00 : f32
    %414 = vector.broadcast %cst_94 : f32 to vector<2x16xf32>
    %415 = arith.maximumf %413, %414 : vector<2x16xf32>
    %cst_95 = arith.constant dense<0.000000e+00> : vector<2x16xf32>
    %416 = tpu.matmul %415, %4, %cst_95 {dimension_numbers = #tpu.dot_dimension_numbers<[1], [0], [0], [1], [0, 0, 1, 1], [], []>} : vector<2x16xf32>, vector<16x16xf32>, vector<2x16xf32> -> vector<2x16xf32>
    %417 = vector.broadcast %5 : vector<1x16xf32> to vector<2x16xf32>
    %418 = arith.addf %416, %417 : vector<2x16xf32>
    %419 = math.tanh %418 : vector<2x16xf32>
    %420 = vector.extract_strided_slice %419 {offsets = [0, 0], sizes = [2, 4], strides = [1, 1]} : vector<2x16xf32> to vector<2x4xf32>
    %421 = vector.extract_strided_slice %408 {offsets = [0, 0], sizes = [2, 1], strides = [1, 1]} : vector<2x4xf32> to vector<2x1xf32>
    %422 = vector.broadcast %421 : vector<2x1xf32> to vector<2x4xf32>
    %423 = arith.mulf %420, %422 : vector<2x4xf32>
    %424 = vector.extract_strided_slice %419 {offsets = [0, 4], sizes = [2, 4], strides = [1, 1]} : vector<2x16xf32> to vector<2x4xf32>
    %425 = vector.extract_strided_slice %408 {offsets = [0, 1], sizes = [2, 1], strides = [1, 1]} : vector<2x4xf32> to vector<2x1xf32>
    %426 = vector.broadcast %425 : vector<2x1xf32> to vector<2x4xf32>
    %427 = arith.mulf %424, %426 : vector<2x4xf32>
    %428 = arith.addf %423, %427 : vector<2x4xf32>
    %429 = vector.extract_strided_slice %419 {offsets = [0, 8], sizes = [2, 4], strides = [1, 1]} : vector<2x16xf32> to vector<2x4xf32>
    %430 = vector.extract_strided_slice %408 {offsets = [0, 2], sizes = [2, 1], strides = [1, 1]} : vector<2x4xf32> to vector<2x1xf32>
    %431 = vector.broadcast %430 : vector<2x1xf32> to vector<2x4xf32>
    %432 = arith.mulf %429, %431 : vector<2x4xf32>
    %433 = arith.addf %428, %432 : vector<2x4xf32>
    %434 = vector.extract_strided_slice %419 {offsets = [0, 12], sizes = [2, 4], strides = [1, 1]} : vector<2x16xf32> to vector<2x4xf32>
    %435 = vector.extract_strided_slice %408 {offsets = [0, 3], sizes = [2, 1], strides = [1, 1]} : vector<2x4xf32> to vector<2x1xf32>
    %436 = vector.broadcast %435 : vector<2x1xf32> to vector<2x4xf32>
    %437 = arith.mulf %434, %436 : vector<2x4xf32>
    %438 = arith.addf %433, %437 : vector<2x4xf32>
    %cst_96 = arith.constant 5.000000e-01 : f32
    %439 = vector.broadcast %cst_96 : f32 to vector<2x4xf32>
    %440 = arith.mulf %439, %438 : vector<2x4xf32>
    %441 = arith.addf %407, %440 : vector<2x4xf32>
    %cst_97 = arith.constant dense<0.000000e+00> : vector<2x16xf32>
    %442 = tpu.matmul %441, %2, %cst_97 {dimension_numbers = #tpu.dot_dimension_numbers<[1], [0], [0], [1], [0, 0, 1, 1], [], []>} : vector<2x4xf32>, vector<4x16xf32>, vector<2x16xf32> -> vector<2x16xf32>
    %443 = vector.broadcast %3 : vector<1x16xf32> to vector<2x16xf32>
    %444 = arith.addf %442, %443 : vector<2x16xf32>
    %cst_98 = arith.constant 0.000000e+00 : f32
    %445 = vector.broadcast %cst_98 : f32 to vector<2x16xf32>
    %446 = arith.maximumf %444, %445 : vector<2x16xf32>
    %cst_99 = arith.constant dense<0.000000e+00> : vector<2x16xf32>
    %447 = tpu.matmul %446, %4, %cst_99 {dimension_numbers = #tpu.dot_dimension_numbers<[1], [0], [0], [1], [0, 0, 1, 1], [], []>} : vector<2x16xf32>, vector<16x16xf32>, vector<2x16xf32> -> vector<2x16xf32>
    %448 = vector.broadcast %5 : vector<1x16xf32> to vector<2x16xf32>
    %449 = arith.addf %447, %448 : vector<2x16xf32>
    %450 = math.tanh %449 : vector<2x16xf32>
    %451 = vector.extract_strided_slice %450 {offsets = [0, 0], sizes = [2, 4], strides = [1, 1]} : vector<2x16xf32> to vector<2x4xf32>
    %452 = vector.extract_strided_slice %409 {offsets = [0, 0], sizes = [2, 1], strides = [1, 1]} : vector<2x4xf32> to vector<2x1xf32>
    %453 = vector.broadcast %452 : vector<2x1xf32> to vector<2x4xf32>
    %454 = arith.mulf %451, %453 : vector<2x4xf32>
    %455 = vector.extract_strided_slice %450 {offsets = [0, 4], sizes = [2, 4], strides = [1, 1]} : vector<2x16xf32> to vector<2x4xf32>
    %456 = vector.extract_strided_slice %409 {offsets = [0, 1], sizes = [2, 1], strides = [1, 1]} : vector<2x4xf32> to vector<2x1xf32>
    %457 = vector.broadcast %456 : vector<2x1xf32> to vector<2x4xf32>
    %458 = arith.mulf %455, %457 : vector<2x4xf32>
    %459 = arith.addf %454, %458 : vector<2x4xf32>
    %460 = vector.extract_strided_slice %450 {offsets = [0, 8], sizes = [2, 4], strides = [1, 1]} : vector<2x16xf32> to vector<2x4xf32>
    %461 = vector.extract_strided_slice %409 {offsets = [0, 2], sizes = [2, 1], strides = [1, 1]} : vector<2x4xf32> to vector<2x1xf32>
    %462 = vector.broadcast %461 : vector<2x1xf32> to vector<2x4xf32>
    %463 = arith.mulf %460, %462 : vector<2x4xf32>
    %464 = arith.addf %459, %463 : vector<2x4xf32>
    %465 = vector.extract_strided_slice %450 {offsets = [0, 12], sizes = [2, 4], strides = [1, 1]} : vector<2x16xf32> to vector<2x4xf32>
    %466 = vector.extract_strided_slice %409 {offsets = [0, 3], sizes = [2, 1], strides = [1, 1]} : vector<2x4xf32> to vector<2x1xf32>
    %467 = vector.broadcast %466 : vector<2x1xf32> to vector<2x4xf32>
    %468 = arith.mulf %465, %467 : vector<2x4xf32>
    %469 = arith.addf %464, %468 : vector<2x4xf32>
    %cst_100 = arith.constant 5.000000e-01 : f32
    %470 = vector.broadcast %cst_100 : f32 to vector<2x4xf32>
    %471 = arith.mulf %470, %469 : vector<2x4xf32>
    %472 = arith.addf %407, %471 : vector<2x4xf32>
    %cst_101 = arith.constant dense<0.000000e+00> : vector<2x16xf32>
    %473 = tpu.matmul %472, %2, %cst_101 {dimension_numbers = #tpu.dot_dimension_numbers<[1], [0], [0], [1], [0, 0, 1, 1], [], []>} : vector<2x4xf32>, vector<4x16xf32>, vector<2x16xf32> -> vector<2x16xf32>
    %474 = vector.broadcast %3 : vector<1x16xf32> to vector<2x16xf32>
    %475 = arith.addf %473, %474 : vector<2x16xf32>
    %cst_102 = arith.constant 0.000000e+00 : f32
    %476 = vector.broadcast %cst_102 : f32 to vector<2x16xf32>
    %477 = arith.maximumf %475, %476 : vector<2x16xf32>
    %cst_103 = arith.constant dense<0.000000e+00> : vector<2x16xf32>
    %478 = tpu.matmul %477, %4, %cst_103 {dimension_numbers = #tpu.dot_dimension_numbers<[1], [0], [0], [1], [0, 0, 1, 1], [], []>} : vector<2x16xf32>, vector<16x16xf32>, vector<2x16xf32> -> vector<2x16xf32>
    %479 = vector.broadcast %5 : vector<1x16xf32> to vector<2x16xf32>
    %480 = arith.addf %478, %479 : vector<2x16xf32>
    %481 = math.tanh %480 : vector<2x16xf32>
    %482 = vector.extract_strided_slice %481 {offsets = [0, 0], sizes = [2, 4], strides = [1, 1]} : vector<2x16xf32> to vector<2x4xf32>
    %483 = vector.extract_strided_slice %409 {offsets = [0, 0], sizes = [2, 1], strides = [1, 1]} : vector<2x4xf32> to vector<2x1xf32>
    %484 = vector.broadcast %483 : vector<2x1xf32> to vector<2x4xf32>
    %485 = arith.mulf %482, %484 : vector<2x4xf32>
    %486 = vector.extract_strided_slice %481 {offsets = [0, 4], sizes = [2, 4], strides = [1, 1]} : vector<2x16xf32> to vector<2x4xf32>
    %487 = vector.extract_strided_slice %409 {offsets = [0, 1], sizes = [2, 1], strides = [1, 1]} : vector<2x4xf32> to vector<2x1xf32>
    %488 = vector.broadcast %487 : vector<2x1xf32> to vector<2x4xf32>
    %489 = arith.mulf %486, %488 : vector<2x4xf32>
    %490 = arith.addf %485, %489 : vector<2x4xf32>
    %491 = vector.extract_strided_slice %481 {offsets = [0, 8], sizes = [2, 4], strides = [1, 1]} : vector<2x16xf32> to vector<2x4xf32>
    %492 = vector.extract_strided_slice %409 {offsets = [0, 2], sizes = [2, 1], strides = [1, 1]} : vector<2x4xf32> to vector<2x1xf32>
    %493 = vector.broadcast %492 : vector<2x1xf32> to vector<2x4xf32>
    %494 = arith.mulf %491, %493 : vector<2x4xf32>
    %495 = arith.addf %490, %494 : vector<2x4xf32>
    %496 = vector.extract_strided_slice %481 {offsets = [0, 12], sizes = [2, 4], strides = [1, 1]} : vector<2x16xf32> to vector<2x4xf32>
    %497 = vector.extract_strided_slice %409 {offsets = [0, 3], sizes = [2, 1], strides = [1, 1]} : vector<2x4xf32> to vector<2x1xf32>
    %498 = vector.broadcast %497 : vector<2x1xf32> to vector<2x4xf32>
    %499 = arith.mulf %496, %498 : vector<2x4xf32>
    %500 = arith.addf %495, %499 : vector<2x4xf32>
    %501 = arith.addf %407, %500 : vector<2x4xf32>
    %cst_104 = arith.constant dense<0.000000e+00> : vector<2x16xf32>
    %502 = tpu.matmul %501, %2, %cst_104 {dimension_numbers = #tpu.dot_dimension_numbers<[1], [0], [0], [1], [0, 0, 1, 1], [], []>} : vector<2x4xf32>, vector<4x16xf32>, vector<2x16xf32> -> vector<2x16xf32>
    %503 = vector.broadcast %3 : vector<1x16xf32> to vector<2x16xf32>
    %504 = arith.addf %502, %503 : vector<2x16xf32>
    %cst_105 = arith.constant 0.000000e+00 : f32
    %505 = vector.broadcast %cst_105 : f32 to vector<2x16xf32>
    %506 = arith.maximumf %504, %505 : vector<2x16xf32>
    %cst_106 = arith.constant dense<0.000000e+00> : vector<2x16xf32>
    %507 = tpu.matmul %506, %4, %cst_106 {dimension_numbers = #tpu.dot_dimension_numbers<[1], [0], [0], [1], [0, 0, 1, 1], [], []>} : vector<2x16xf32>, vector<16x16xf32>, vector<2x16xf32> -> vector<2x16xf32>
    %508 = vector.broadcast %5 : vector<1x16xf32> to vector<2x16xf32>
    %509 = arith.addf %507, %508 : vector<2x16xf32>
    %510 = math.tanh %509 : vector<2x16xf32>
    %511 = vector.extract_strided_slice %510 {offsets = [0, 0], sizes = [2, 4], strides = [1, 1]} : vector<2x16xf32> to vector<2x4xf32>
    %512 = vector.extract_strided_slice %410 {offsets = [0, 0], sizes = [2, 1], strides = [1, 1]} : vector<2x4xf32> to vector<2x1xf32>
    %513 = vector.broadcast %512 : vector<2x1xf32> to vector<2x4xf32>
    %514 = arith.mulf %511, %513 : vector<2x4xf32>
    %515 = vector.extract_strided_slice %510 {offsets = [0, 4], sizes = [2, 4], strides = [1, 1]} : vector<2x16xf32> to vector<2x4xf32>
    %516 = vector.extract_strided_slice %410 {offsets = [0, 1], sizes = [2, 1], strides = [1, 1]} : vector<2x4xf32> to vector<2x1xf32>
    %517 = vector.broadcast %516 : vector<2x1xf32> to vector<2x4xf32>
    %518 = arith.mulf %515, %517 : vector<2x4xf32>
    %519 = arith.addf %514, %518 : vector<2x4xf32>
    %520 = vector.extract_strided_slice %510 {offsets = [0, 8], sizes = [2, 4], strides = [1, 1]} : vector<2x16xf32> to vector<2x4xf32>
    %521 = vector.extract_strided_slice %410 {offsets = [0, 2], sizes = [2, 1], strides = [1, 1]} : vector<2x4xf32> to vector<2x1xf32>
    %522 = vector.broadcast %521 : vector<2x1xf32> to vector<2x4xf32>
    %523 = arith.mulf %520, %522 : vector<2x4xf32>
    %524 = arith.addf %519, %523 : vector<2x4xf32>
    %525 = vector.extract_strided_slice %510 {offsets = [0, 12], sizes = [2, 4], strides = [1, 1]} : vector<2x16xf32> to vector<2x4xf32>
    %526 = vector.extract_strided_slice %410 {offsets = [0, 3], sizes = [2, 1], strides = [1, 1]} : vector<2x4xf32> to vector<2x1xf32>
    %527 = vector.broadcast %526 : vector<2x1xf32> to vector<2x4xf32>
    %528 = arith.mulf %525, %527 : vector<2x4xf32>
    %529 = arith.addf %524, %528 : vector<2x4xf32>
    %530 = arith.addf %469, %500 : vector<2x4xf32>
    %cst_107 = arith.constant 2.000000e+00 : f32
    %531 = vector.broadcast %cst_107 : f32 to vector<2x4xf32>
    %532 = arith.mulf %531, %530 : vector<2x4xf32>
    %533 = arith.addf %438, %532 : vector<2x4xf32>
    %534 = arith.addf %533, %529 : vector<2x4xf32>
    %cst_108 = arith.constant 0.166666672 : f32
    %535 = vector.broadcast %cst_108 : f32 to vector<2x4xf32>
    %536 = arith.mulf %534, %535 : vector<2x4xf32>
    %537 = arith.addf %407, %536 : vector<2x4xf32>
    %c0_109 = arith.constant 0 : index
    %c32_110 = arith.constant 32 : index
    %538 = vector.load %arg2[%c0_109, %c32_110] : memref<2x60xf32, #tpu.memory_space<vmem>>, vector<2x4xf32>
    %c0_111 = arith.constant 0 : index
    %c36 = arith.constant 36 : index
    %539 = vector.load %arg2[%c0_111, %c36] : memref<2x60xf32, #tpu.memory_space<vmem>>, vector<2x4xf32>
    %c0_112 = arith.constant 0 : index
    %c40 = arith.constant 40 : index
    %540 = vector.load %arg2[%c0_112, %c40] : memref<2x60xf32, #tpu.memory_space<vmem>>, vector<2x4xf32>
    %cst_113 = arith.constant dense<0.000000e+00> : vector<2x16xf32>
    %541 = tpu.matmul %537, %2, %cst_113 {dimension_numbers = #tpu.dot_dimension_numbers<[1], [0], [0], [1], [0, 0, 1, 1], [], []>} : vector<2x4xf32>, vector<4x16xf32>, vector<2x16xf32> -> vector<2x16xf32>
    %542 = vector.broadcast %3 : vector<1x16xf32> to vector<2x16xf32>
    %543 = arith.addf %541, %542 : vector<2x16xf32>
    %cst_114 = arith.constant 0.000000e+00 : f32
    %544 = vector.broadcast %cst_114 : f32 to vector<2x16xf32>
    %545 = arith.maximumf %543, %544 : vector<2x16xf32>
    %cst_115 = arith.constant dense<0.000000e+00> : vector<2x16xf32>
    %546 = tpu.matmul %545, %4, %cst_115 {dimension_numbers = #tpu.dot_dimension_numbers<[1], [0], [0], [1], [0, 0, 1, 1], [], []>} : vector<2x16xf32>, vector<16x16xf32>, vector<2x16xf32> -> vector<2x16xf32>
    %547 = vector.broadcast %5 : vector<1x16xf32> to vector<2x16xf32>
    %548 = arith.addf %546, %547 : vector<2x16xf32>
    %549 = math.tanh %548 : vector<2x16xf32>
    %550 = vector.extract_strided_slice %549 {offsets = [0, 0], sizes = [2, 4], strides = [1, 1]} : vector<2x16xf32> to vector<2x4xf32>
    %551 = vector.extract_strided_slice %538 {offsets = [0, 0], sizes = [2, 1], strides = [1, 1]} : vector<2x4xf32> to vector<2x1xf32>
    %552 = vector.broadcast %551 : vector<2x1xf32> to vector<2x4xf32>
    %553 = arith.mulf %550, %552 : vector<2x4xf32>
    %554 = vector.extract_strided_slice %549 {offsets = [0, 4], sizes = [2, 4], strides = [1, 1]} : vector<2x16xf32> to vector<2x4xf32>
    %555 = vector.extract_strided_slice %538 {offsets = [0, 1], sizes = [2, 1], strides = [1, 1]} : vector<2x4xf32> to vector<2x1xf32>
    %556 = vector.broadcast %555 : vector<2x1xf32> to vector<2x4xf32>
    %557 = arith.mulf %554, %556 : vector<2x4xf32>
    %558 = arith.addf %553, %557 : vector<2x4xf32>
    %559 = vector.extract_strided_slice %549 {offsets = [0, 8], sizes = [2, 4], strides = [1, 1]} : vector<2x16xf32> to vector<2x4xf32>
    %560 = vector.extract_strided_slice %538 {offsets = [0, 2], sizes = [2, 1], strides = [1, 1]} : vector<2x4xf32> to vector<2x1xf32>
    %561 = vector.broadcast %560 : vector<2x1xf32> to vector<2x4xf32>
    %562 = arith.mulf %559, %561 : vector<2x4xf32>
    %563 = arith.addf %558, %562 : vector<2x4xf32>
    %564 = vector.extract_strided_slice %549 {offsets = [0, 12], sizes = [2, 4], strides = [1, 1]} : vector<2x16xf32> to vector<2x4xf32>
    %565 = vector.extract_strided_slice %538 {offsets = [0, 3], sizes = [2, 1], strides = [1, 1]} : vector<2x4xf32> to vector<2x1xf32>
    %566 = vector.broadcast %565 : vector<2x1xf32> to vector<2x4xf32>
    %567 = arith.mulf %564, %566 : vector<2x4xf32>
    %568 = arith.addf %563, %567 : vector<2x4xf32>
    %cst_116 = arith.constant 5.000000e-01 : f32
    %569 = vector.broadcast %cst_116 : f32 to vector<2x4xf32>
    %570 = arith.mulf %569, %568 : vector<2x4xf32>
    %571 = arith.addf %537, %570 : vector<2x4xf32>
    %cst_117 = arith.constant dense<0.000000e+00> : vector<2x16xf32>
    %572 = tpu.matmul %571, %2, %cst_117 {dimension_numbers = #tpu.dot_dimension_numbers<[1], [0], [0], [1], [0, 0, 1, 1], [], []>} : vector<2x4xf32>, vector<4x16xf32>, vector<2x16xf32> -> vector<2x16xf32>
    %573 = vector.broadcast %3 : vector<1x16xf32> to vector<2x16xf32>
    %574 = arith.addf %572, %573 : vector<2x16xf32>
    %cst_118 = arith.constant 0.000000e+00 : f32
    %575 = vector.broadcast %cst_118 : f32 to vector<2x16xf32>
    %576 = arith.maximumf %574, %575 : vector<2x16xf32>
    %cst_119 = arith.constant dense<0.000000e+00> : vector<2x16xf32>
    %577 = tpu.matmul %576, %4, %cst_119 {dimension_numbers = #tpu.dot_dimension_numbers<[1], [0], [0], [1], [0, 0, 1, 1], [], []>} : vector<2x16xf32>, vector<16x16xf32>, vector<2x16xf32> -> vector<2x16xf32>
    %578 = vector.broadcast %5 : vector<1x16xf32> to vector<2x16xf32>
    %579 = arith.addf %577, %578 : vector<2x16xf32>
    %580 = math.tanh %579 : vector<2x16xf32>
    %581 = vector.extract_strided_slice %580 {offsets = [0, 0], sizes = [2, 4], strides = [1, 1]} : vector<2x16xf32> to vector<2x4xf32>
    %582 = vector.extract_strided_slice %539 {offsets = [0, 0], sizes = [2, 1], strides = [1, 1]} : vector<2x4xf32> to vector<2x1xf32>
    %583 = vector.broadcast %582 : vector<2x1xf32> to vector<2x4xf32>
    %584 = arith.mulf %581, %583 : vector<2x4xf32>
    %585 = vector.extract_strided_slice %580 {offsets = [0, 4], sizes = [2, 4], strides = [1, 1]} : vector<2x16xf32> to vector<2x4xf32>
    %586 = vector.extract_strided_slice %539 {offsets = [0, 1], sizes = [2, 1], strides = [1, 1]} : vector<2x4xf32> to vector<2x1xf32>
    %587 = vector.broadcast %586 : vector<2x1xf32> to vector<2x4xf32>
    %588 = arith.mulf %585, %587 : vector<2x4xf32>
    %589 = arith.addf %584, %588 : vector<2x4xf32>
    %590 = vector.extract_strided_slice %580 {offsets = [0, 8], sizes = [2, 4], strides = [1, 1]} : vector<2x16xf32> to vector<2x4xf32>
    %591 = vector.extract_strided_slice %539 {offsets = [0, 2], sizes = [2, 1], strides = [1, 1]} : vector<2x4xf32> to vector<2x1xf32>
    %592 = vector.broadcast %591 : vector<2x1xf32> to vector<2x4xf32>
    %593 = arith.mulf %590, %592 : vector<2x4xf32>
    %594 = arith.addf %589, %593 : vector<2x4xf32>
    %595 = vector.extract_strided_slice %580 {offsets = [0, 12], sizes = [2, 4], strides = [1, 1]} : vector<2x16xf32> to vector<2x4xf32>
    %596 = vector.extract_strided_slice %539 {offsets = [0, 3], sizes = [2, 1], strides = [1, 1]} : vector<2x4xf32> to vector<2x1xf32>
    %597 = vector.broadcast %596 : vector<2x1xf32> to vector<2x4xf32>
    %598 = arith.mulf %595, %597 : vector<2x4xf32>
    %599 = arith.addf %594, %598 : vector<2x4xf32>
    %cst_120 = arith.constant 5.000000e-01 : f32
    %600 = vector.broadcast %cst_120 : f32 to vector<2x4xf32>
    %601 = arith.mulf %600, %599 : vector<2x4xf32>
    %602 = arith.addf %537, %601 : vector<2x4xf32>
    %cst_121 = arith.constant dense<0.000000e+00> : vector<2x16xf32>
    %603 = tpu.matmul %602, %2, %cst_121 {dimension_numbers = #tpu.dot_dimension_numbers<[1], [0], [0], [1], [0, 0, 1, 1], [], []>} : vector<2x4xf32>, vector<4x16xf32>, vector<2x16xf32> -> vector<2x16xf32>
    %604 = vector.broadcast %3 : vector<1x16xf32> to vector<2x16xf32>
    %605 = arith.addf %603, %604 : vector<2x16xf32>
    %cst_122 = arith.constant 0.000000e+00 : f32
    %606 = vector.broadcast %cst_122 : f32 to vector<2x16xf32>
    %607 = arith.maximumf %605, %606 : vector<2x16xf32>
    %cst_123 = arith.constant dense<0.000000e+00> : vector<2x16xf32>
    %608 = tpu.matmul %607, %4, %cst_123 {dimension_numbers = #tpu.dot_dimension_numbers<[1], [0], [0], [1], [0, 0, 1, 1], [], []>} : vector<2x16xf32>, vector<16x16xf32>, vector<2x16xf32> -> vector<2x16xf32>
    %609 = vector.broadcast %5 : vector<1x16xf32> to vector<2x16xf32>
    %610 = arith.addf %608, %609 : vector<2x16xf32>
    %611 = math.tanh %610 : vector<2x16xf32>
    %612 = vector.extract_strided_slice %611 {offsets = [0, 0], sizes = [2, 4], strides = [1, 1]} : vector<2x16xf32> to vector<2x4xf32>
    %613 = vector.extract_strided_slice %539 {offsets = [0, 0], sizes = [2, 1], strides = [1, 1]} : vector<2x4xf32> to vector<2x1xf32>
    %614 = vector.broadcast %613 : vector<2x1xf32> to vector<2x4xf32>
    %615 = arith.mulf %612, %614 : vector<2x4xf32>
    %616 = vector.extract_strided_slice %611 {offsets = [0, 4], sizes = [2, 4], strides = [1, 1]} : vector<2x16xf32> to vector<2x4xf32>
    %617 = vector.extract_strided_slice %539 {offsets = [0, 1], sizes = [2, 1], strides = [1, 1]} : vector<2x4xf32> to vector<2x1xf32>
    %618 = vector.broadcast %617 : vector<2x1xf32> to vector<2x4xf32>
    %619 = arith.mulf %616, %618 : vector<2x4xf32>
    %620 = arith.addf %615, %619 : vector<2x4xf32>
    %621 = vector.extract_strided_slice %611 {offsets = [0, 8], sizes = [2, 4], strides = [1, 1]} : vector<2x16xf32> to vector<2x4xf32>
    %622 = vector.extract_strided_slice %539 {offsets = [0, 2], sizes = [2, 1], strides = [1, 1]} : vector<2x4xf32> to vector<2x1xf32>
    %623 = vector.broadcast %622 : vector<2x1xf32> to vector<2x4xf32>
    %624 = arith.mulf %621, %623 : vector<2x4xf32>
    %625 = arith.addf %620, %624 : vector<2x4xf32>
    %626 = vector.extract_strided_slice %611 {offsets = [0, 12], sizes = [2, 4], strides = [1, 1]} : vector<2x16xf32> to vector<2x4xf32>
    %627 = vector.extract_strided_slice %539 {offsets = [0, 3], sizes = [2, 1], strides = [1, 1]} : vector<2x4xf32> to vector<2x1xf32>
    %628 = vector.broadcast %627 : vector<2x1xf32> to vector<2x4xf32>
    %629 = arith.mulf %626, %628 : vector<2x4xf32>
    %630 = arith.addf %625, %629 : vector<2x4xf32>
    %631 = arith.addf %537, %630 : vector<2x4xf32>
    %cst_124 = arith.constant dense<0.000000e+00> : vector<2x16xf32>
    %632 = tpu.matmul %631, %2, %cst_124 {dimension_numbers = #tpu.dot_dimension_numbers<[1], [0], [0], [1], [0, 0, 1, 1], [], []>} : vector<2x4xf32>, vector<4x16xf32>, vector<2x16xf32> -> vector<2x16xf32>
    %633 = vector.broadcast %3 : vector<1x16xf32> to vector<2x16xf32>
    %634 = arith.addf %632, %633 : vector<2x16xf32>
    %cst_125 = arith.constant 0.000000e+00 : f32
    %635 = vector.broadcast %cst_125 : f32 to vector<2x16xf32>
    %636 = arith.maximumf %634, %635 : vector<2x16xf32>
    %cst_126 = arith.constant dense<0.000000e+00> : vector<2x16xf32>
    %637 = tpu.matmul %636, %4, %cst_126 {dimension_numbers = #tpu.dot_dimension_numbers<[1], [0], [0], [1], [0, 0, 1, 1], [], []>} : vector<2x16xf32>, vector<16x16xf32>, vector<2x16xf32> -> vector<2x16xf32>
    %638 = vector.broadcast %5 : vector<1x16xf32> to vector<2x16xf32>
    %639 = arith.addf %637, %638 : vector<2x16xf32>
    %640 = math.tanh %639 : vector<2x16xf32>
    %641 = vector.extract_strided_slice %640 {offsets = [0, 0], sizes = [2, 4], strides = [1, 1]} : vector<2x16xf32> to vector<2x4xf32>
    %642 = vector.extract_strided_slice %540 {offsets = [0, 0], sizes = [2, 1], strides = [1, 1]} : vector<2x4xf32> to vector<2x1xf32>
    %643 = vector.broadcast %642 : vector<2x1xf32> to vector<2x4xf32>
    %644 = arith.mulf %641, %643 : vector<2x4xf32>
    %645 = vector.extract_strided_slice %640 {offsets = [0, 4], sizes = [2, 4], strides = [1, 1]} : vector<2x16xf32> to vector<2x4xf32>
    %646 = vector.extract_strided_slice %540 {offsets = [0, 1], sizes = [2, 1], strides = [1, 1]} : vector<2x4xf32> to vector<2x1xf32>
    %647 = vector.broadcast %646 : vector<2x1xf32> to vector<2x4xf32>
    %648 = arith.mulf %645, %647 : vector<2x4xf32>
    %649 = arith.addf %644, %648 : vector<2x4xf32>
    %650 = vector.extract_strided_slice %640 {offsets = [0, 8], sizes = [2, 4], strides = [1, 1]} : vector<2x16xf32> to vector<2x4xf32>
    %651 = vector.extract_strided_slice %540 {offsets = [0, 2], sizes = [2, 1], strides = [1, 1]} : vector<2x4xf32> to vector<2x1xf32>
    %652 = vector.broadcast %651 : vector<2x1xf32> to vector<2x4xf32>
    %653 = arith.mulf %650, %652 : vector<2x4xf32>
    %654 = arith.addf %649, %653 : vector<2x4xf32>
    %655 = vector.extract_strided_slice %640 {offsets = [0, 12], sizes = [2, 4], strides = [1, 1]} : vector<2x16xf32> to vector<2x4xf32>
    %656 = vector.extract_strided_slice %540 {offsets = [0, 3], sizes = [2, 1], strides = [1, 1]} : vector<2x4xf32> to vector<2x1xf32>
    %657 = vector.broadcast %656 : vector<2x1xf32> to vector<2x4xf32>
    %658 = arith.mulf %655, %657 : vector<2x4xf32>
    %659 = arith.addf %654, %658 : vector<2x4xf32>
    %660 = arith.addf %599, %630 : vector<2x4xf32>
    %cst_127 = arith.constant 2.000000e+00 : f32
    %661 = vector.broadcast %cst_127 : f32 to vector<2x4xf32>
    %662 = arith.mulf %661, %660 : vector<2x4xf32>
    %663 = arith.addf %568, %662 : vector<2x4xf32>
    %664 = arith.addf %663, %659 : vector<2x4xf32>
    %cst_128 = arith.constant 0.166666672 : f32
    %665 = vector.broadcast %cst_128 : f32 to vector<2x4xf32>
    %666 = arith.mulf %664, %665 : vector<2x4xf32>
    %667 = arith.addf %537, %666 : vector<2x4xf32>
    %c0_129 = arith.constant 0 : index
    %c40_130 = arith.constant 40 : index
    %668 = vector.load %arg2[%c0_129, %c40_130] : memref<2x60xf32, #tpu.memory_space<vmem>>, vector<2x4xf32>
    %c0_131 = arith.constant 0 : index
    %c44 = arith.constant 44 : index
    %669 = vector.load %arg2[%c0_131, %c44] : memref<2x60xf32, #tpu.memory_space<vmem>>, vector<2x4xf32>
    %c0_132 = arith.constant 0 : index
    %c48 = arith.constant 48 : index
    %670 = vector.load %arg2[%c0_132, %c48] : memref<2x60xf32, #tpu.memory_space<vmem>>, vector<2x4xf32>
    %cst_133 = arith.constant dense<0.000000e+00> : vector<2x16xf32>
    %671 = tpu.matmul %667, %2, %cst_133 {dimension_numbers = #tpu.dot_dimension_numbers<[1], [0], [0], [1], [0, 0, 1, 1], [], []>} : vector<2x4xf32>, vector<4x16xf32>, vector<2x16xf32> -> vector<2x16xf32>
    %672 = vector.broadcast %3 : vector<1x16xf32> to vector<2x16xf32>
    %673 = arith.addf %671, %672 : vector<2x16xf32>
    %cst_134 = arith.constant 0.000000e+00 : f32
    %674 = vector.broadcast %cst_134 : f32 to vector<2x16xf32>
    %675 = arith.maximumf %673, %674 : vector<2x16xf32>
    %cst_135 = arith.constant dense<0.000000e+00> : vector<2x16xf32>
    %676 = tpu.matmul %675, %4, %cst_135 {dimension_numbers = #tpu.dot_dimension_numbers<[1], [0], [0], [1], [0, 0, 1, 1], [], []>} : vector<2x16xf32>, vector<16x16xf32>, vector<2x16xf32> -> vector<2x16xf32>
    %677 = vector.broadcast %5 : vector<1x16xf32> to vector<2x16xf32>
    %678 = arith.addf %676, %677 : vector<2x16xf32>
    %679 = math.tanh %678 : vector<2x16xf32>
    %680 = vector.extract_strided_slice %679 {offsets = [0, 0], sizes = [2, 4], strides = [1, 1]} : vector<2x16xf32> to vector<2x4xf32>
    %681 = vector.extract_strided_slice %668 {offsets = [0, 0], sizes = [2, 1], strides = [1, 1]} : vector<2x4xf32> to vector<2x1xf32>
    %682 = vector.broadcast %681 : vector<2x1xf32> to vector<2x4xf32>
    %683 = arith.mulf %680, %682 : vector<2x4xf32>
    %684 = vector.extract_strided_slice %679 {offsets = [0, 4], sizes = [2, 4], strides = [1, 1]} : vector<2x16xf32> to vector<2x4xf32>
    %685 = vector.extract_strided_slice %668 {offsets = [0, 1], sizes = [2, 1], strides = [1, 1]} : vector<2x4xf32> to vector<2x1xf32>
    %686 = vector.broadcast %685 : vector<2x1xf32> to vector<2x4xf32>
    %687 = arith.mulf %684, %686 : vector<2x4xf32>
    %688 = arith.addf %683, %687 : vector<2x4xf32>
    %689 = vector.extract_strided_slice %679 {offsets = [0, 8], sizes = [2, 4], strides = [1, 1]} : vector<2x16xf32> to vector<2x4xf32>
    %690 = vector.extract_strided_slice %668 {offsets = [0, 2], sizes = [2, 1], strides = [1, 1]} : vector<2x4xf32> to vector<2x1xf32>
    %691 = vector.broadcast %690 : vector<2x1xf32> to vector<2x4xf32>
    %692 = arith.mulf %689, %691 : vector<2x4xf32>
    %693 = arith.addf %688, %692 : vector<2x4xf32>
    %694 = vector.extract_strided_slice %679 {offsets = [0, 12], sizes = [2, 4], strides = [1, 1]} : vector<2x16xf32> to vector<2x4xf32>
    %695 = vector.extract_strided_slice %668 {offsets = [0, 3], sizes = [2, 1], strides = [1, 1]} : vector<2x4xf32> to vector<2x1xf32>
    %696 = vector.broadcast %695 : vector<2x1xf32> to vector<2x4xf32>
    %697 = arith.mulf %694, %696 : vector<2x4xf32>
    %698 = arith.addf %693, %697 : vector<2x4xf32>
    %cst_136 = arith.constant 5.000000e-01 : f32
    %699 = vector.broadcast %cst_136 : f32 to vector<2x4xf32>
    %700 = arith.mulf %699, %698 : vector<2x4xf32>
    %701 = arith.addf %667, %700 : vector<2x4xf32>
    %cst_137 = arith.constant dense<0.000000e+00> : vector<2x16xf32>
    %702 = tpu.matmul %701, %2, %cst_137 {dimension_numbers = #tpu.dot_dimension_numbers<[1], [0], [0], [1], [0, 0, 1, 1], [], []>} : vector<2x4xf32>, vector<4x16xf32>, vector<2x16xf32> -> vector<2x16xf32>
    %703 = vector.broadcast %3 : vector<1x16xf32> to vector<2x16xf32>
    %704 = arith.addf %702, %703 : vector<2x16xf32>
    %cst_138 = arith.constant 0.000000e+00 : f32
    %705 = vector.broadcast %cst_138 : f32 to vector<2x16xf32>
    %706 = arith.maximumf %704, %705 : vector<2x16xf32>
    %cst_139 = arith.constant dense<0.000000e+00> : vector<2x16xf32>
    %707 = tpu.matmul %706, %4, %cst_139 {dimension_numbers = #tpu.dot_dimension_numbers<[1], [0], [0], [1], [0, 0, 1, 1], [], []>} : vector<2x16xf32>, vector<16x16xf32>, vector<2x16xf32> -> vector<2x16xf32>
    %708 = vector.broadcast %5 : vector<1x16xf32> to vector<2x16xf32>
    %709 = arith.addf %707, %708 : vector<2x16xf32>
    %710 = math.tanh %709 : vector<2x16xf32>
    %711 = vector.extract_strided_slice %710 {offsets = [0, 0], sizes = [2, 4], strides = [1, 1]} : vector<2x16xf32> to vector<2x4xf32>
    %712 = vector.extract_strided_slice %669 {offsets = [0, 0], sizes = [2, 1], strides = [1, 1]} : vector<2x4xf32> to vector<2x1xf32>
    %713 = vector.broadcast %712 : vector<2x1xf32> to vector<2x4xf32>
    %714 = arith.mulf %711, %713 : vector<2x4xf32>
    %715 = vector.extract_strided_slice %710 {offsets = [0, 4], sizes = [2, 4], strides = [1, 1]} : vector<2x16xf32> to vector<2x4xf32>
    %716 = vector.extract_strided_slice %669 {offsets = [0, 1], sizes = [2, 1], strides = [1, 1]} : vector<2x4xf32> to vector<2x1xf32>
    %717 = vector.broadcast %716 : vector<2x1xf32> to vector<2x4xf32>
    %718 = arith.mulf %715, %717 : vector<2x4xf32>
    %719 = arith.addf %714, %718 : vector<2x4xf32>
    %720 = vector.extract_strided_slice %710 {offsets = [0, 8], sizes = [2, 4], strides = [1, 1]} : vector<2x16xf32> to vector<2x4xf32>
    %721 = vector.extract_strided_slice %669 {offsets = [0, 2], sizes = [2, 1], strides = [1, 1]} : vector<2x4xf32> to vector<2x1xf32>
    %722 = vector.broadcast %721 : vector<2x1xf32> to vector<2x4xf32>
    %723 = arith.mulf %720, %722 : vector<2x4xf32>
    %724 = arith.addf %719, %723 : vector<2x4xf32>
    %725 = vector.extract_strided_slice %710 {offsets = [0, 12], sizes = [2, 4], strides = [1, 1]} : vector<2x16xf32> to vector<2x4xf32>
    %726 = vector.extract_strided_slice %669 {offsets = [0, 3], sizes = [2, 1], strides = [1, 1]} : vector<2x4xf32> to vector<2x1xf32>
    %727 = vector.broadcast %726 : vector<2x1xf32> to vector<2x4xf32>
    %728 = arith.mulf %725, %727 : vector<2x4xf32>
    %729 = arith.addf %724, %728 : vector<2x4xf32>
    %cst_140 = arith.constant 5.000000e-01 : f32
    %730 = vector.broadcast %cst_140 : f32 to vector<2x4xf32>
    %731 = arith.mulf %730, %729 : vector<2x4xf32>
    %732 = arith.addf %667, %731 : vector<2x4xf32>
    %cst_141 = arith.constant dense<0.000000e+00> : vector<2x16xf32>
    %733 = tpu.matmul %732, %2, %cst_141 {dimension_numbers = #tpu.dot_dimension_numbers<[1], [0], [0], [1], [0, 0, 1, 1], [], []>} : vector<2x4xf32>, vector<4x16xf32>, vector<2x16xf32> -> vector<2x16xf32>
    %734 = vector.broadcast %3 : vector<1x16xf32> to vector<2x16xf32>
    %735 = arith.addf %733, %734 : vector<2x16xf32>
    %cst_142 = arith.constant 0.000000e+00 : f32
    %736 = vector.broadcast %cst_142 : f32 to vector<2x16xf32>
    %737 = arith.maximumf %735, %736 : vector<2x16xf32>
    %cst_143 = arith.constant dense<0.000000e+00> : vector<2x16xf32>
    %738 = tpu.matmul %737, %4, %cst_143 {dimension_numbers = #tpu.dot_dimension_numbers<[1], [0], [0], [1], [0, 0, 1, 1], [], []>} : vector<2x16xf32>, vector<16x16xf32>, vector<2x16xf32> -> vector<2x16xf32>
    %739 = vector.broadcast %5 : vector<1x16xf32> to vector<2x16xf32>
    %740 = arith.addf %738, %739 : vector<2x16xf32>
    %741 = math.tanh %740 : vector<2x16xf32>
    %742 = vector.extract_strided_slice %741 {offsets = [0, 0], sizes = [2, 4], strides = [1, 1]} : vector<2x16xf32> to vector<2x4xf32>
    %743 = vector.extract_strided_slice %669 {offsets = [0, 0], sizes = [2, 1], strides = [1, 1]} : vector<2x4xf32> to vector<2x1xf32>
    %744 = vector.broadcast %743 : vector<2x1xf32> to vector<2x4xf32>
    %745 = arith.mulf %742, %744 : vector<2x4xf32>
    %746 = vector.extract_strided_slice %741 {offsets = [0, 4], sizes = [2, 4], strides = [1, 1]} : vector<2x16xf32> to vector<2x4xf32>
    %747 = vector.extract_strided_slice %669 {offsets = [0, 1], sizes = [2, 1], strides = [1, 1]} : vector<2x4xf32> to vector<2x1xf32>
    %748 = vector.broadcast %747 : vector<2x1xf32> to vector<2x4xf32>
    %749 = arith.mulf %746, %748 : vector<2x4xf32>
    %750 = arith.addf %745, %749 : vector<2x4xf32>
    %751 = vector.extract_strided_slice %741 {offsets = [0, 8], sizes = [2, 4], strides = [1, 1]} : vector<2x16xf32> to vector<2x4xf32>
    %752 = vector.extract_strided_slice %669 {offsets = [0, 2], sizes = [2, 1], strides = [1, 1]} : vector<2x4xf32> to vector<2x1xf32>
    %753 = vector.broadcast %752 : vector<2x1xf32> to vector<2x4xf32>
    %754 = arith.mulf %751, %753 : vector<2x4xf32>
    %755 = arith.addf %750, %754 : vector<2x4xf32>
    %756 = vector.extract_strided_slice %741 {offsets = [0, 12], sizes = [2, 4], strides = [1, 1]} : vector<2x16xf32> to vector<2x4xf32>
    %757 = vector.extract_strided_slice %669 {offsets = [0, 3], sizes = [2, 1], strides = [1, 1]} : vector<2x4xf32> to vector<2x1xf32>
    %758 = vector.broadcast %757 : vector<2x1xf32> to vector<2x4xf32>
    %759 = arith.mulf %756, %758 : vector<2x4xf32>
    %760 = arith.addf %755, %759 : vector<2x4xf32>
    %761 = arith.addf %667, %760 : vector<2x4xf32>
    %cst_144 = arith.constant dense<0.000000e+00> : vector<2x16xf32>
    %762 = tpu.matmul %761, %2, %cst_144 {dimension_numbers = #tpu.dot_dimension_numbers<[1], [0], [0], [1], [0, 0, 1, 1], [], []>} : vector<2x4xf32>, vector<4x16xf32>, vector<2x16xf32> -> vector<2x16xf32>
    %763 = vector.broadcast %3 : vector<1x16xf32> to vector<2x16xf32>
    %764 = arith.addf %762, %763 : vector<2x16xf32>
    %cst_145 = arith.constant 0.000000e+00 : f32
    %765 = vector.broadcast %cst_145 : f32 to vector<2x16xf32>
    %766 = arith.maximumf %764, %765 : vector<2x16xf32>
    %cst_146 = arith.constant dense<0.000000e+00> : vector<2x16xf32>
    %767 = tpu.matmul %766, %4, %cst_146 {dimension_numbers = #tpu.dot_dimension_numbers<[1], [0], [0], [1], [0, 0, 1, 1], [], []>} : vector<2x16xf32>, vector<16x16xf32>, vector<2x16xf32> -> vector<2x16xf32>
    %768 = vector.broadcast %5 : vector<1x16xf32> to vector<2x16xf32>
    %769 = arith.addf %767, %768 : vector<2x16xf32>
    %770 = math.tanh %769 : vector<2x16xf32>
    %771 = vector.extract_strided_slice %770 {offsets = [0, 0], sizes = [2, 4], strides = [1, 1]} : vector<2x16xf32> to vector<2x4xf32>
    %772 = vector.extract_strided_slice %670 {offsets = [0, 0], sizes = [2, 1], strides = [1, 1]} : vector<2x4xf32> to vector<2x1xf32>
    %773 = vector.broadcast %772 : vector<2x1xf32> to vector<2x4xf32>
    %774 = arith.mulf %771, %773 : vector<2x4xf32>
    %775 = vector.extract_strided_slice %770 {offsets = [0, 4], sizes = [2, 4], strides = [1, 1]} : vector<2x16xf32> to vector<2x4xf32>
    %776 = vector.extract_strided_slice %670 {offsets = [0, 1], sizes = [2, 1], strides = [1, 1]} : vector<2x4xf32> to vector<2x1xf32>
    %777 = vector.broadcast %776 : vector<2x1xf32> to vector<2x4xf32>
    %778 = arith.mulf %775, %777 : vector<2x4xf32>
    %779 = arith.addf %774, %778 : vector<2x4xf32>
    %780 = vector.extract_strided_slice %770 {offsets = [0, 8], sizes = [2, 4], strides = [1, 1]} : vector<2x16xf32> to vector<2x4xf32>
    %781 = vector.extract_strided_slice %670 {offsets = [0, 2], sizes = [2, 1], strides = [1, 1]} : vector<2x4xf32> to vector<2x1xf32>
    %782 = vector.broadcast %781 : vector<2x1xf32> to vector<2x4xf32>
    %783 = arith.mulf %780, %782 : vector<2x4xf32>
    %784 = arith.addf %779, %783 : vector<2x4xf32>
    %785 = vector.extract_strided_slice %770 {offsets = [0, 12], sizes = [2, 4], strides = [1, 1]} : vector<2x16xf32> to vector<2x4xf32>
    %786 = vector.extract_strided_slice %670 {offsets = [0, 3], sizes = [2, 1], strides = [1, 1]} : vector<2x4xf32> to vector<2x1xf32>
    %787 = vector.broadcast %786 : vector<2x1xf32> to vector<2x4xf32>
    %788 = arith.mulf %785, %787 : vector<2x4xf32>
    %789 = arith.addf %784, %788 : vector<2x4xf32>
    %790 = arith.addf %729, %760 : vector<2x4xf32>
    %cst_147 = arith.constant 2.000000e+00 : f32
    %791 = vector.broadcast %cst_147 : f32 to vector<2x4xf32>
    %792 = arith.mulf %791, %790 : vector<2x4xf32>
    %793 = arith.addf %698, %792 : vector<2x4xf32>
    %794 = arith.addf %793, %789 : vector<2x4xf32>
    %cst_148 = arith.constant 0.166666672 : f32
    %795 = vector.broadcast %cst_148 : f32 to vector<2x4xf32>
    %796 = arith.mulf %794, %795 : vector<2x4xf32>
    %797 = arith.addf %667, %796 : vector<2x4xf32>
    %c0_149 = arith.constant 0 : index
    %c48_150 = arith.constant 48 : index
    %798 = vector.load %arg2[%c0_149, %c48_150] : memref<2x60xf32, #tpu.memory_space<vmem>>, vector<2x4xf32>
    %c0_151 = arith.constant 0 : index
    %c52 = arith.constant 52 : index
    %799 = vector.load %arg2[%c0_151, %c52] : memref<2x60xf32, #tpu.memory_space<vmem>>, vector<2x4xf32>
    %c0_152 = arith.constant 0 : index
    %c56 = arith.constant 56 : index
    %800 = vector.load %arg2[%c0_152, %c56] : memref<2x60xf32, #tpu.memory_space<vmem>>, vector<2x4xf32>
    %cst_153 = arith.constant dense<0.000000e+00> : vector<2x16xf32>
    %801 = tpu.matmul %797, %2, %cst_153 {dimension_numbers = #tpu.dot_dimension_numbers<[1], [0], [0], [1], [0, 0, 1, 1], [], []>} : vector<2x4xf32>, vector<4x16xf32>, vector<2x16xf32> -> vector<2x16xf32>
    %802 = vector.broadcast %3 : vector<1x16xf32> to vector<2x16xf32>
    %803 = arith.addf %801, %802 : vector<2x16xf32>
    %cst_154 = arith.constant 0.000000e+00 : f32
    %804 = vector.broadcast %cst_154 : f32 to vector<2x16xf32>
    %805 = arith.maximumf %803, %804 : vector<2x16xf32>
    %cst_155 = arith.constant dense<0.000000e+00> : vector<2x16xf32>
    %806 = tpu.matmul %805, %4, %cst_155 {dimension_numbers = #tpu.dot_dimension_numbers<[1], [0], [0], [1], [0, 0, 1, 1], [], []>} : vector<2x16xf32>, vector<16x16xf32>, vector<2x16xf32> -> vector<2x16xf32>
    %807 = vector.broadcast %5 : vector<1x16xf32> to vector<2x16xf32>
    %808 = arith.addf %806, %807 : vector<2x16xf32>
    %809 = math.tanh %808 : vector<2x16xf32>
    %810 = vector.extract_strided_slice %809 {offsets = [0, 0], sizes = [2, 4], strides = [1, 1]} : vector<2x16xf32> to vector<2x4xf32>
    %811 = vector.extract_strided_slice %798 {offsets = [0, 0], sizes = [2, 1], strides = [1, 1]} : vector<2x4xf32> to vector<2x1xf32>
    %812 = vector.broadcast %811 : vector<2x1xf32> to vector<2x4xf32>
    %813 = arith.mulf %810, %812 : vector<2x4xf32>
    %814 = vector.extract_strided_slice %809 {offsets = [0, 4], sizes = [2, 4], strides = [1, 1]} : vector<2x16xf32> to vector<2x4xf32>
    %815 = vector.extract_strided_slice %798 {offsets = [0, 1], sizes = [2, 1], strides = [1, 1]} : vector<2x4xf32> to vector<2x1xf32>
    %816 = vector.broadcast %815 : vector<2x1xf32> to vector<2x4xf32>
    %817 = arith.mulf %814, %816 : vector<2x4xf32>
    %818 = arith.addf %813, %817 : vector<2x4xf32>
    %819 = vector.extract_strided_slice %809 {offsets = [0, 8], sizes = [2, 4], strides = [1, 1]} : vector<2x16xf32> to vector<2x4xf32>
    %820 = vector.extract_strided_slice %798 {offsets = [0, 2], sizes = [2, 1], strides = [1, 1]} : vector<2x4xf32> to vector<2x1xf32>
    %821 = vector.broadcast %820 : vector<2x1xf32> to vector<2x4xf32>
    %822 = arith.mulf %819, %821 : vector<2x4xf32>
    %823 = arith.addf %818, %822 : vector<2x4xf32>
    %824 = vector.extract_strided_slice %809 {offsets = [0, 12], sizes = [2, 4], strides = [1, 1]} : vector<2x16xf32> to vector<2x4xf32>
    %825 = vector.extract_strided_slice %798 {offsets = [0, 3], sizes = [2, 1], strides = [1, 1]} : vector<2x4xf32> to vector<2x1xf32>
    %826 = vector.broadcast %825 : vector<2x1xf32> to vector<2x4xf32>
    %827 = arith.mulf %824, %826 : vector<2x4xf32>
    %828 = arith.addf %823, %827 : vector<2x4xf32>
    %cst_156 = arith.constant 5.000000e-01 : f32
    %829 = vector.broadcast %cst_156 : f32 to vector<2x4xf32>
    %830 = arith.mulf %829, %828 : vector<2x4xf32>
    %831 = arith.addf %797, %830 : vector<2x4xf32>
    %cst_157 = arith.constant dense<0.000000e+00> : vector<2x16xf32>
    %832 = tpu.matmul %831, %2, %cst_157 {dimension_numbers = #tpu.dot_dimension_numbers<[1], [0], [0], [1], [0, 0, 1, 1], [], []>} : vector<2x4xf32>, vector<4x16xf32>, vector<2x16xf32> -> vector<2x16xf32>
    %833 = vector.broadcast %3 : vector<1x16xf32> to vector<2x16xf32>
    %834 = arith.addf %832, %833 : vector<2x16xf32>
    %cst_158 = arith.constant 0.000000e+00 : f32
    %835 = vector.broadcast %cst_158 : f32 to vector<2x16xf32>
    %836 = arith.maximumf %834, %835 : vector<2x16xf32>
    %cst_159 = arith.constant dense<0.000000e+00> : vector<2x16xf32>
    %837 = tpu.matmul %836, %4, %cst_159 {dimension_numbers = #tpu.dot_dimension_numbers<[1], [0], [0], [1], [0, 0, 1, 1], [], []>} : vector<2x16xf32>, vector<16x16xf32>, vector<2x16xf32> -> vector<2x16xf32>
    %838 = vector.broadcast %5 : vector<1x16xf32> to vector<2x16xf32>
    %839 = arith.addf %837, %838 : vector<2x16xf32>
    %840 = math.tanh %839 : vector<2x16xf32>
    %841 = vector.extract_strided_slice %840 {offsets = [0, 0], sizes = [2, 4], strides = [1, 1]} : vector<2x16xf32> to vector<2x4xf32>
    %842 = vector.extract_strided_slice %799 {offsets = [0, 0], sizes = [2, 1], strides = [1, 1]} : vector<2x4xf32> to vector<2x1xf32>
    %843 = vector.broadcast %842 : vector<2x1xf32> to vector<2x4xf32>
    %844 = arith.mulf %841, %843 : vector<2x4xf32>
    %845 = vector.extract_strided_slice %840 {offsets = [0, 4], sizes = [2, 4], strides = [1, 1]} : vector<2x16xf32> to vector<2x4xf32>
    %846 = vector.extract_strided_slice %799 {offsets = [0, 1], sizes = [2, 1], strides = [1, 1]} : vector<2x4xf32> to vector<2x1xf32>
    %847 = vector.broadcast %846 : vector<2x1xf32> to vector<2x4xf32>
    %848 = arith.mulf %845, %847 : vector<2x4xf32>
    %849 = arith.addf %844, %848 : vector<2x4xf32>
    %850 = vector.extract_strided_slice %840 {offsets = [0, 8], sizes = [2, 4], strides = [1, 1]} : vector<2x16xf32> to vector<2x4xf32>
    %851 = vector.extract_strided_slice %799 {offsets = [0, 2], sizes = [2, 1], strides = [1, 1]} : vector<2x4xf32> to vector<2x1xf32>
    %852 = vector.broadcast %851 : vector<2x1xf32> to vector<2x4xf32>
    %853 = arith.mulf %850, %852 : vector<2x4xf32>
    %854 = arith.addf %849, %853 : vector<2x4xf32>
    %855 = vector.extract_strided_slice %840 {offsets = [0, 12], sizes = [2, 4], strides = [1, 1]} : vector<2x16xf32> to vector<2x4xf32>
    %856 = vector.extract_strided_slice %799 {offsets = [0, 3], sizes = [2, 1], strides = [1, 1]} : vector<2x4xf32> to vector<2x1xf32>
    %857 = vector.broadcast %856 : vector<2x1xf32> to vector<2x4xf32>
    %858 = arith.mulf %855, %857 : vector<2x4xf32>
    %859 = arith.addf %854, %858 : vector<2x4xf32>
    %cst_160 = arith.constant 5.000000e-01 : f32
    %860 = vector.broadcast %cst_160 : f32 to vector<2x4xf32>
    %861 = arith.mulf %860, %859 : vector<2x4xf32>
    %862 = arith.addf %797, %861 : vector<2x4xf32>
    %cst_161 = arith.constant dense<0.000000e+00> : vector<2x16xf32>
    %863 = tpu.matmul %862, %2, %cst_161 {dimension_numbers = #tpu.dot_dimension_numbers<[1], [0], [0], [1], [0, 0, 1, 1], [], []>} : vector<2x4xf32>, vector<4x16xf32>, vector<2x16xf32> -> vector<2x16xf32>
    %864 = vector.broadcast %3 : vector<1x16xf32> to vector<2x16xf32>
    %865 = arith.addf %863, %864 : vector<2x16xf32>
    %cst_162 = arith.constant 0.000000e+00 : f32
    %866 = vector.broadcast %cst_162 : f32 to vector<2x16xf32>
    %867 = arith.maximumf %865, %866 : vector<2x16xf32>
    %cst_163 = arith.constant dense<0.000000e+00> : vector<2x16xf32>
    %868 = tpu.matmul %867, %4, %cst_163 {dimension_numbers = #tpu.dot_dimension_numbers<[1], [0], [0], [1], [0, 0, 1, 1], [], []>} : vector<2x16xf32>, vector<16x16xf32>, vector<2x16xf32> -> vector<2x16xf32>
    %869 = vector.broadcast %5 : vector<1x16xf32> to vector<2x16xf32>
    %870 = arith.addf %868, %869 : vector<2x16xf32>
    %871 = math.tanh %870 : vector<2x16xf32>
    %872 = vector.extract_strided_slice %871 {offsets = [0, 0], sizes = [2, 4], strides = [1, 1]} : vector<2x16xf32> to vector<2x4xf32>
    %873 = vector.extract_strided_slice %799 {offsets = [0, 0], sizes = [2, 1], strides = [1, 1]} : vector<2x4xf32> to vector<2x1xf32>
    %874 = vector.broadcast %873 : vector<2x1xf32> to vector<2x4xf32>
    %875 = arith.mulf %872, %874 : vector<2x4xf32>
    %876 = vector.extract_strided_slice %871 {offsets = [0, 4], sizes = [2, 4], strides = [1, 1]} : vector<2x16xf32> to vector<2x4xf32>
    %877 = vector.extract_strided_slice %799 {offsets = [0, 1], sizes = [2, 1], strides = [1, 1]} : vector<2x4xf32> to vector<2x1xf32>
    %878 = vector.broadcast %877 : vector<2x1xf32> to vector<2x4xf32>
    %879 = arith.mulf %876, %878 : vector<2x4xf32>
    %880 = arith.addf %875, %879 : vector<2x4xf32>
    %881 = vector.extract_strided_slice %871 {offsets = [0, 8], sizes = [2, 4], strides = [1, 1]} : vector<2x16xf32> to vector<2x4xf32>
    %882 = vector.extract_strided_slice %799 {offsets = [0, 2], sizes = [2, 1], strides = [1, 1]} : vector<2x4xf32> to vector<2x1xf32>
    %883 = vector.broadcast %882 : vector<2x1xf32> to vector<2x4xf32>
    %884 = arith.mulf %881, %883 : vector<2x4xf32>
    %885 = arith.addf %880, %884 : vector<2x4xf32>
    %886 = vector.extract_strided_slice %871 {offsets = [0, 12], sizes = [2, 4], strides = [1, 1]} : vector<2x16xf32> to vector<2x4xf32>
    %887 = vector.extract_strided_slice %799 {offsets = [0, 3], sizes = [2, 1], strides = [1, 1]} : vector<2x4xf32> to vector<2x1xf32>
    %888 = vector.broadcast %887 : vector<2x1xf32> to vector<2x4xf32>
    %889 = arith.mulf %886, %888 : vector<2x4xf32>
    %890 = arith.addf %885, %889 : vector<2x4xf32>
    %891 = arith.addf %797, %890 : vector<2x4xf32>
    %cst_164 = arith.constant dense<0.000000e+00> : vector<2x16xf32>
    %892 = tpu.matmul %891, %2, %cst_164 {dimension_numbers = #tpu.dot_dimension_numbers<[1], [0], [0], [1], [0, 0, 1, 1], [], []>} : vector<2x4xf32>, vector<4x16xf32>, vector<2x16xf32> -> vector<2x16xf32>
    %893 = vector.broadcast %3 : vector<1x16xf32> to vector<2x16xf32>
    %894 = arith.addf %892, %893 : vector<2x16xf32>
    %cst_165 = arith.constant 0.000000e+00 : f32
    %895 = vector.broadcast %cst_165 : f32 to vector<2x16xf32>
    %896 = arith.maximumf %894, %895 : vector<2x16xf32>
    %cst_166 = arith.constant dense<0.000000e+00> : vector<2x16xf32>
    %897 = tpu.matmul %896, %4, %cst_166 {dimension_numbers = #tpu.dot_dimension_numbers<[1], [0], [0], [1], [0, 0, 1, 1], [], []>} : vector<2x16xf32>, vector<16x16xf32>, vector<2x16xf32> -> vector<2x16xf32>
    %898 = vector.broadcast %5 : vector<1x16xf32> to vector<2x16xf32>
    %899 = arith.addf %897, %898 : vector<2x16xf32>
    %900 = math.tanh %899 : vector<2x16xf32>
    %901 = vector.extract_strided_slice %900 {offsets = [0, 0], sizes = [2, 4], strides = [1, 1]} : vector<2x16xf32> to vector<2x4xf32>
    %902 = vector.extract_strided_slice %800 {offsets = [0, 0], sizes = [2, 1], strides = [1, 1]} : vector<2x4xf32> to vector<2x1xf32>
    %903 = vector.broadcast %902 : vector<2x1xf32> to vector<2x4xf32>
    %904 = arith.mulf %901, %903 : vector<2x4xf32>
    %905 = vector.extract_strided_slice %900 {offsets = [0, 4], sizes = [2, 4], strides = [1, 1]} : vector<2x16xf32> to vector<2x4xf32>
    %906 = vector.extract_strided_slice %800 {offsets = [0, 1], sizes = [2, 1], strides = [1, 1]} : vector<2x4xf32> to vector<2x1xf32>
    %907 = vector.broadcast %906 : vector<2x1xf32> to vector<2x4xf32>
    %908 = arith.mulf %905, %907 : vector<2x4xf32>
    %909 = arith.addf %904, %908 : vector<2x4xf32>
    %910 = vector.extract_strided_slice %900 {offsets = [0, 8], sizes = [2, 4], strides = [1, 1]} : vector<2x16xf32> to vector<2x4xf32>
    %911 = vector.extract_strided_slice %800 {offsets = [0, 2], sizes = [2, 1], strides = [1, 1]} : vector<2x4xf32> to vector<2x1xf32>
    %912 = vector.broadcast %911 : vector<2x1xf32> to vector<2x4xf32>
    %913 = arith.mulf %910, %912 : vector<2x4xf32>
    %914 = arith.addf %909, %913 : vector<2x4xf32>
    %915 = vector.extract_strided_slice %900 {offsets = [0, 12], sizes = [2, 4], strides = [1, 1]} : vector<2x16xf32> to vector<2x4xf32>
    %916 = vector.extract_strided_slice %800 {offsets = [0, 3], sizes = [2, 1], strides = [1, 1]} : vector<2x4xf32> to vector<2x1xf32>
    %917 = vector.broadcast %916 : vector<2x1xf32> to vector<2x4xf32>
    %918 = arith.mulf %915, %917 : vector<2x4xf32>
    %919 = arith.addf %914, %918 : vector<2x4xf32>
    %920 = arith.addf %859, %890 : vector<2x4xf32>
    %cst_167 = arith.constant 2.000000e+00 : f32
    %921 = vector.broadcast %cst_167 : f32 to vector<2x4xf32>
    %922 = arith.mulf %921, %920 : vector<2x4xf32>
    %923 = arith.addf %828, %922 : vector<2x4xf32>
    %924 = arith.addf %923, %919 : vector<2x4xf32>
    %cst_168 = arith.constant 0.166666672 : f32
    %925 = vector.broadcast %cst_168 : f32 to vector<2x4xf32>
    %926 = arith.mulf %924, %925 : vector<2x4xf32>
    %927 = arith.addf %797, %926 : vector<2x4xf32>
    %c0_169 = arith.constant 0 : index
    %c56_170 = arith.constant 56 : index
    %928 = vector.load %arg2[%c0_169, %c56_170] : memref<2x60xf32, #tpu.memory_space<vmem>>, vector<2x4xf32>
    %cst_171 = arith.constant dense<0.000000e+00> : vector<2x16xf32>
    %929 = tpu.matmul %927, %2, %cst_171 {dimension_numbers = #tpu.dot_dimension_numbers<[1], [0], [0], [1], [0, 0, 1, 1], [], []>} : vector<2x4xf32>, vector<4x16xf32>, vector<2x16xf32> -> vector<2x16xf32>
    %930 = vector.broadcast %3 : vector<1x16xf32> to vector<2x16xf32>
    %931 = arith.addf %929, %930 : vector<2x16xf32>
    %cst_172 = arith.constant 0.000000e+00 : f32
    %932 = vector.broadcast %cst_172 : f32 to vector<2x16xf32>
    %933 = arith.maximumf %931, %932 : vector<2x16xf32>
    %cst_173 = arith.constant dense<0.000000e+00> : vector<2x16xf32>
    %934 = tpu.matmul %933, %4, %cst_173 {dimension_numbers = #tpu.dot_dimension_numbers<[1], [0], [0], [1], [0, 0, 1, 1], [], []>} : vector<2x16xf32>, vector<16x16xf32>, vector<2x16xf32> -> vector<2x16xf32>
    %935 = vector.broadcast %5 : vector<1x16xf32> to vector<2x16xf32>
    %936 = arith.addf %934, %935 : vector<2x16xf32>
    %937 = math.tanh %936 : vector<2x16xf32>
    %938 = vector.extract_strided_slice %937 {offsets = [0, 0], sizes = [2, 4], strides = [1, 1]} : vector<2x16xf32> to vector<2x4xf32>
    %939 = vector.extract_strided_slice %928 {offsets = [0, 0], sizes = [2, 1], strides = [1, 1]} : vector<2x4xf32> to vector<2x1xf32>
    %940 = vector.broadcast %939 : vector<2x1xf32> to vector<2x4xf32>
    %941 = arith.mulf %938, %940 : vector<2x4xf32>
    %942 = vector.extract_strided_slice %937 {offsets = [0, 4], sizes = [2, 4], strides = [1, 1]} : vector<2x16xf32> to vector<2x4xf32>
    %943 = vector.extract_strided_slice %928 {offsets = [0, 1], sizes = [2, 1], strides = [1, 1]} : vector<2x4xf32> to vector<2x1xf32>
    %944 = vector.broadcast %943 : vector<2x1xf32> to vector<2x4xf32>
    %945 = arith.mulf %942, %944 : vector<2x4xf32>
    %946 = arith.addf %941, %945 : vector<2x4xf32>
    %947 = vector.extract_strided_slice %937 {offsets = [0, 8], sizes = [2, 4], strides = [1, 1]} : vector<2x16xf32> to vector<2x4xf32>
    %948 = vector.extract_strided_slice %928 {offsets = [0, 2], sizes = [2, 1], strides = [1, 1]} : vector<2x4xf32> to vector<2x1xf32>
    %949 = vector.broadcast %948 : vector<2x1xf32> to vector<2x4xf32>
    %950 = arith.mulf %947, %949 : vector<2x4xf32>
    %951 = arith.addf %946, %950 : vector<2x4xf32>
    %952 = vector.extract_strided_slice %937 {offsets = [0, 12], sizes = [2, 4], strides = [1, 1]} : vector<2x16xf32> to vector<2x4xf32>
    %953 = vector.extract_strided_slice %928 {offsets = [0, 3], sizes = [2, 1], strides = [1, 1]} : vector<2x4xf32> to vector<2x1xf32>
    %954 = vector.broadcast %953 : vector<2x1xf32> to vector<2x4xf32>
    %955 = arith.mulf %952, %954 : vector<2x4xf32>
    %956 = arith.addf %951, %955 : vector<2x4xf32>
    %957 = arith.negf %17 : vector<2x4xf32>
    %958 = math.exp %957 : vector<2x4xf32>
    %cst_174 = arith.constant 1.000000e+00 : f32
    %959 = vector.broadcast %cst_174 : f32 to vector<2x4xf32>
    %960 = arith.addf %959, %958 : vector<2x4xf32>
    %961 = arith.divf %959, %960 : vector<2x4xf32>
    %962 = arith.negf %147 : vector<2x4xf32>
    %963 = math.exp %962 : vector<2x4xf32>
    %cst_175 = arith.constant 1.000000e+00 : f32
    %964 = vector.broadcast %cst_175 : f32 to vector<2x4xf32>
    %965 = arith.addf %964, %963 : vector<2x4xf32>
    %966 = arith.divf %964, %965 : vector<2x4xf32>
    %967 = arith.negf %277 : vector<2x4xf32>
    %968 = math.exp %967 : vector<2x4xf32>
    %cst_176 = arith.constant 1.000000e+00 : f32
    %969 = vector.broadcast %cst_176 : f32 to vector<2x4xf32>
    %970 = arith.addf %969, %968 : vector<2x4xf32>
    %971 = arith.divf %969, %970 : vector<2x4xf32>
    %972 = arith.negf %407 : vector<2x4xf32>
    %973 = math.exp %972 : vector<2x4xf32>
    %cst_177 = arith.constant 1.000000e+00 : f32
    %974 = vector.broadcast %cst_177 : f32 to vector<2x4xf32>
    %975 = arith.addf %974, %973 : vector<2x4xf32>
    %976 = arith.divf %974, %975 : vector<2x4xf32>
    %977 = arith.negf %537 : vector<2x4xf32>
    %978 = math.exp %977 : vector<2x4xf32>
    %cst_178 = arith.constant 1.000000e+00 : f32
    %979 = vector.broadcast %cst_178 : f32 to vector<2x4xf32>
    %980 = arith.addf %979, %978 : vector<2x4xf32>
    %981 = arith.divf %979, %980 : vector<2x4xf32>
    %982 = arith.negf %667 : vector<2x4xf32>
    %983 = math.exp %982 : vector<2x4xf32>
    %cst_179 = arith.constant 1.000000e+00 : f32
    %984 = vector.broadcast %cst_179 : f32 to vector<2x4xf32>
    %985 = arith.addf %984, %983 : vector<2x4xf32>
    %986 = arith.divf %984, %985 : vector<2x4xf32>
    %987 = arith.negf %797 : vector<2x4xf32>
    %988 = math.exp %987 : vector<2x4xf32>
    %cst_180 = arith.constant 1.000000e+00 : f32
    %989 = vector.broadcast %cst_180 : f32 to vector<2x4xf32>
    %990 = arith.addf %989, %988 : vector<2x4xf32>
    %991 = arith.divf %989, %990 : vector<2x4xf32>
    %992 = arith.negf %927 : vector<2x4xf32>
    %993 = math.exp %992 : vector<2x4xf32>
    %cst_181 = arith.constant 1.000000e+00 : f32
    %994 = vector.broadcast %cst_181 : f32 to vector<2x4xf32>
    %995 = arith.addf %994, %993 : vector<2x4xf32>
    %996 = arith.divf %994, %995 : vector<2x4xf32>
    %997 = arith.mulf %14, %961 : vector<2x4xf32>
    %cst_182 = arith.constant dense<0.000000e+00> : vector<2x16xf32>
    %998 = tpu.matmul %997, %6, %cst_182 {dimension_numbers = #tpu.dot_dimension_numbers<[1], [0], [0], [1], [0, 0, 1, 1], [], []>} : vector<2x4xf32>, vector<4x16xf32>, vector<2x16xf32> -> vector<2x16xf32>
    %999 = vector.broadcast %7 : vector<1x16xf32> to vector<2x16xf32>
    %1000 = arith.addf %998, %999 : vector<2x16xf32>
    %cst_183 = arith.constant 1.000000e+00 : f32
    %1001 = vector.broadcast %cst_183 : f32 to vector<2x4xf32>
    %1002 = arith.subf %1001, %961 : vector<2x4xf32>
    %1003 = arith.mulf %961, %1002 : vector<2x4xf32>
    %1004 = arith.mulf %1003, %48 : vector<2x4xf32>
    %c0_184 = arith.constant 0 : index
    %c0_185 = arith.constant 0 : index
    %1005 = vector.load %arg2[%c0_184, %c0_185] : memref<2x60xf32, #tpu.memory_space<vmem>>, vector<2x4xf32>
    %1006 = arith.mulf %961, %1005 : vector<2x4xf32>
    %c0_186 = arith.constant 0 : index
    %c0_187 = arith.constant 0 : index
    %1007 = vector.load %arg1[%c0_186, %c0_187] : memref<2x60xf32, #tpu.memory_space<vmem>>, vector<2x4xf32>
    %1008 = arith.mulf %1007, %1004 : vector<2x4xf32>
    %1009 = arith.addf %1006, %1008 : vector<2x4xf32>
    %cst_188 = arith.constant 1.000000e+00 : f32
    %1010 = vector.broadcast %cst_188 : f32 to vector<2x4xf32>
    %1011 = arith.subf %1010, %961 : vector<2x4xf32>
    %1012 = arith.mulf %961, %1011 : vector<2x4xf32>
    %1013 = arith.mulf %1012, %48 : vector<2x4xf32>
    %c0_189 = arith.constant 0 : index
    %c4_190 = arith.constant 4 : index
    %1014 = vector.load %arg2[%c0_189, %c4_190] : memref<2x60xf32, #tpu.memory_space<vmem>>, vector<2x4xf32>
    %1015 = arith.mulf %961, %1014 : vector<2x4xf32>
    %c0_191 = arith.constant 0 : index
    %c4_192 = arith.constant 4 : index
    %1016 = vector.load %arg1[%c0_191, %c4_192] : memref<2x60xf32, #tpu.memory_space<vmem>>, vector<2x4xf32>
    %1017 = arith.mulf %1016, %1013 : vector<2x4xf32>
    %1018 = arith.addf %1015, %1017 : vector<2x4xf32>
    %cst_193 = arith.constant 1.000000e+00 : f32
    %1019 = vector.broadcast %cst_193 : f32 to vector<2x4xf32>
    %1020 = arith.subf %1019, %966 : vector<2x4xf32>
    %1021 = arith.mulf %966, %1020 : vector<2x4xf32>
    %1022 = arith.mulf %1021, %178 : vector<2x4xf32>
    %c0_194 = arith.constant 0 : index
    %c8_195 = arith.constant 8 : index
    %1023 = vector.load %arg2[%c0_194, %c8_195] : memref<2x60xf32, #tpu.memory_space<vmem>>, vector<2x4xf32>
    %1024 = arith.mulf %966, %1023 : vector<2x4xf32>
    %c0_196 = arith.constant 0 : index
    %c8_197 = arith.constant 8 : index
    %1025 = vector.load %arg1[%c0_196, %c8_197] : memref<2x60xf32, #tpu.memory_space<vmem>>, vector<2x4xf32>
    %1026 = arith.mulf %1025, %1022 : vector<2x4xf32>
    %1027 = arith.addf %1024, %1026 : vector<2x4xf32>
    %cst_198 = arith.constant dense<0.000000e+00> : vector<2x16xf32>
    %1028 = tpu.matmul %1000, %8, %cst_198 {dimension_numbers = #tpu.dot_dimension_numbers<[1], [0], [0], [1], [0, 0, 1, 1], [], []>} : vector<2x16xf32>, vector<16x16xf32>, vector<2x16xf32> -> vector<2x16xf32>
    %1029 = vector.broadcast %9 : vector<1x16xf32> to vector<2x16xf32>
    %1030 = arith.addf %1028, %1029 : vector<2x16xf32>
    %cst_199 = arith.constant 0.000000e+00 : f32
    %1031 = vector.broadcast %cst_199 : f32 to vector<2x16xf32>
    %1032 = arith.maximumf %1030, %1031 : vector<2x16xf32>
    %cst_200 = arith.constant dense<0.000000e+00> : vector<2x64xf32>
    %1033 = tpu.matmul %1032, %10, %cst_200 {dimension_numbers = #tpu.dot_dimension_numbers<[1], [0], [0], [1], [0, 0, 1, 1], [], []>} : vector<2x16xf32>, vector<16x64xf32>, vector<2x64xf32> -> vector<2x64xf32>
    %1034 = vector.broadcast %11 : vector<1x64xf32> to vector<2x64xf32>
    %1035 = arith.addf %1033, %1034 : vector<2x64xf32>
    %1036 = math.tanh %1035 : vector<2x64xf32>
    %1037 = vector.extract_strided_slice %1036 {offsets = [0, 0], sizes = [2, 16], strides = [1, 1]} : vector<2x64xf32> to vector<2x16xf32>
    %1038 = vector.extract_strided_slice %1009 {offsets = [0, 0], sizes = [2, 1], strides = [1, 1]} : vector<2x4xf32> to vector<2x1xf32>
    %1039 = vector.broadcast %1038 : vector<2x1xf32> to vector<2x16xf32>
    %1040 = arith.mulf %1037, %1039 : vector<2x16xf32>
    %1041 = vector.extract_strided_slice %1036 {offsets = [0, 16], sizes = [2, 16], strides = [1, 1]} : vector<2x64xf32> to vector<2x16xf32>
    %1042 = vector.extract_strided_slice %1009 {offsets = [0, 1], sizes = [2, 1], strides = [1, 1]} : vector<2x4xf32> to vector<2x1xf32>
    %1043 = vector.broadcast %1042 : vector<2x1xf32> to vector<2x16xf32>
    %1044 = arith.mulf %1041, %1043 : vector<2x16xf32>
    %1045 = arith.addf %1040, %1044 : vector<2x16xf32>
    %1046 = vector.extract_strided_slice %1036 {offsets = [0, 32], sizes = [2, 16], strides = [1, 1]} : vector<2x64xf32> to vector<2x16xf32>
    %1047 = vector.extract_strided_slice %1009 {offsets = [0, 2], sizes = [2, 1], strides = [1, 1]} : vector<2x4xf32> to vector<2x1xf32>
    %1048 = vector.broadcast %1047 : vector<2x1xf32> to vector<2x16xf32>
    %1049 = arith.mulf %1046, %1048 : vector<2x16xf32>
    %1050 = arith.addf %1045, %1049 : vector<2x16xf32>
    %1051 = vector.extract_strided_slice %1036 {offsets = [0, 48], sizes = [2, 16], strides = [1, 1]} : vector<2x64xf32> to vector<2x16xf32>
    %1052 = vector.extract_strided_slice %1009 {offsets = [0, 3], sizes = [2, 1], strides = [1, 1]} : vector<2x4xf32> to vector<2x1xf32>
    %1053 = vector.broadcast %1052 : vector<2x1xf32> to vector<2x16xf32>
    %1054 = arith.mulf %1051, %1053 : vector<2x16xf32>
    %1055 = arith.addf %1050, %1054 : vector<2x16xf32>
    %cst_201 = arith.constant 5.000000e-01 : f32
    %1056 = vector.broadcast %cst_201 : f32 to vector<2x16xf32>
    %1057 = arith.mulf %1056, %1055 : vector<2x16xf32>
    %1058 = arith.addf %1000, %1057 : vector<2x16xf32>
    %cst_202 = arith.constant dense<0.000000e+00> : vector<2x16xf32>
    %1059 = tpu.matmul %1058, %8, %cst_202 {dimension_numbers = #tpu.dot_dimension_numbers<[1], [0], [0], [1], [0, 0, 1, 1], [], []>} : vector<2x16xf32>, vector<16x16xf32>, vector<2x16xf32> -> vector<2x16xf32>
    %1060 = vector.broadcast %9 : vector<1x16xf32> to vector<2x16xf32>
    %1061 = arith.addf %1059, %1060 : vector<2x16xf32>
    %cst_203 = arith.constant 0.000000e+00 : f32
    %1062 = vector.broadcast %cst_203 : f32 to vector<2x16xf32>
    %1063 = arith.maximumf %1061, %1062 : vector<2x16xf32>
    %cst_204 = arith.constant dense<0.000000e+00> : vector<2x64xf32>
    %1064 = tpu.matmul %1063, %10, %cst_204 {dimension_numbers = #tpu.dot_dimension_numbers<[1], [0], [0], [1], [0, 0, 1, 1], [], []>} : vector<2x16xf32>, vector<16x64xf32>, vector<2x64xf32> -> vector<2x64xf32>
    %1065 = vector.broadcast %11 : vector<1x64xf32> to vector<2x64xf32>
    %1066 = arith.addf %1064, %1065 : vector<2x64xf32>
    %1067 = math.tanh %1066 : vector<2x64xf32>
    %1068 = vector.extract_strided_slice %1067 {offsets = [0, 0], sizes = [2, 16], strides = [1, 1]} : vector<2x64xf32> to vector<2x16xf32>
    %1069 = vector.extract_strided_slice %1018 {offsets = [0, 0], sizes = [2, 1], strides = [1, 1]} : vector<2x4xf32> to vector<2x1xf32>
    %1070 = vector.broadcast %1069 : vector<2x1xf32> to vector<2x16xf32>
    %1071 = arith.mulf %1068, %1070 : vector<2x16xf32>
    %1072 = vector.extract_strided_slice %1067 {offsets = [0, 16], sizes = [2, 16], strides = [1, 1]} : vector<2x64xf32> to vector<2x16xf32>
    %1073 = vector.extract_strided_slice %1018 {offsets = [0, 1], sizes = [2, 1], strides = [1, 1]} : vector<2x4xf32> to vector<2x1xf32>
    %1074 = vector.broadcast %1073 : vector<2x1xf32> to vector<2x16xf32>
    %1075 = arith.mulf %1072, %1074 : vector<2x16xf32>
    %1076 = arith.addf %1071, %1075 : vector<2x16xf32>
    %1077 = vector.extract_strided_slice %1067 {offsets = [0, 32], sizes = [2, 16], strides = [1, 1]} : vector<2x64xf32> to vector<2x16xf32>
    %1078 = vector.extract_strided_slice %1018 {offsets = [0, 2], sizes = [2, 1], strides = [1, 1]} : vector<2x4xf32> to vector<2x1xf32>
    %1079 = vector.broadcast %1078 : vector<2x1xf32> to vector<2x16xf32>
    %1080 = arith.mulf %1077, %1079 : vector<2x16xf32>
    %1081 = arith.addf %1076, %1080 : vector<2x16xf32>
    %1082 = vector.extract_strided_slice %1067 {offsets = [0, 48], sizes = [2, 16], strides = [1, 1]} : vector<2x64xf32> to vector<2x16xf32>
    %1083 = vector.extract_strided_slice %1018 {offsets = [0, 3], sizes = [2, 1], strides = [1, 1]} : vector<2x4xf32> to vector<2x1xf32>
    %1084 = vector.broadcast %1083 : vector<2x1xf32> to vector<2x16xf32>
    %1085 = arith.mulf %1082, %1084 : vector<2x16xf32>
    %1086 = arith.addf %1081, %1085 : vector<2x16xf32>
    %cst_205 = arith.constant 5.000000e-01 : f32
    %1087 = vector.broadcast %cst_205 : f32 to vector<2x16xf32>
    %1088 = arith.mulf %1087, %1086 : vector<2x16xf32>
    %1089 = arith.addf %1000, %1088 : vector<2x16xf32>
    %cst_206 = arith.constant dense<0.000000e+00> : vector<2x16xf32>
    %1090 = tpu.matmul %1089, %8, %cst_206 {dimension_numbers = #tpu.dot_dimension_numbers<[1], [0], [0], [1], [0, 0, 1, 1], [], []>} : vector<2x16xf32>, vector<16x16xf32>, vector<2x16xf32> -> vector<2x16xf32>
    %1091 = vector.broadcast %9 : vector<1x16xf32> to vector<2x16xf32>
    %1092 = arith.addf %1090, %1091 : vector<2x16xf32>
    %cst_207 = arith.constant 0.000000e+00 : f32
    %1093 = vector.broadcast %cst_207 : f32 to vector<2x16xf32>
    %1094 = arith.maximumf %1092, %1093 : vector<2x16xf32>
    %cst_208 = arith.constant dense<0.000000e+00> : vector<2x64xf32>
    %1095 = tpu.matmul %1094, %10, %cst_208 {dimension_numbers = #tpu.dot_dimension_numbers<[1], [0], [0], [1], [0, 0, 1, 1], [], []>} : vector<2x16xf32>, vector<16x64xf32>, vector<2x64xf32> -> vector<2x64xf32>
    %1096 = vector.broadcast %11 : vector<1x64xf32> to vector<2x64xf32>
    %1097 = arith.addf %1095, %1096 : vector<2x64xf32>
    %1098 = math.tanh %1097 : vector<2x64xf32>
    %1099 = vector.extract_strided_slice %1098 {offsets = [0, 0], sizes = [2, 16], strides = [1, 1]} : vector<2x64xf32> to vector<2x16xf32>
    %1100 = vector.extract_strided_slice %1018 {offsets = [0, 0], sizes = [2, 1], strides = [1, 1]} : vector<2x4xf32> to vector<2x1xf32>
    %1101 = vector.broadcast %1100 : vector<2x1xf32> to vector<2x16xf32>
    %1102 = arith.mulf %1099, %1101 : vector<2x16xf32>
    %1103 = vector.extract_strided_slice %1098 {offsets = [0, 16], sizes = [2, 16], strides = [1, 1]} : vector<2x64xf32> to vector<2x16xf32>
    %1104 = vector.extract_strided_slice %1018 {offsets = [0, 1], sizes = [2, 1], strides = [1, 1]} : vector<2x4xf32> to vector<2x1xf32>
    %1105 = vector.broadcast %1104 : vector<2x1xf32> to vector<2x16xf32>
    %1106 = arith.mulf %1103, %1105 : vector<2x16xf32>
    %1107 = arith.addf %1102, %1106 : vector<2x16xf32>
    %1108 = vector.extract_strided_slice %1098 {offsets = [0, 32], sizes = [2, 16], strides = [1, 1]} : vector<2x64xf32> to vector<2x16xf32>
    %1109 = vector.extract_strided_slice %1018 {offsets = [0, 2], sizes = [2, 1], strides = [1, 1]} : vector<2x4xf32> to vector<2x1xf32>
    %1110 = vector.broadcast %1109 : vector<2x1xf32> to vector<2x16xf32>
    %1111 = arith.mulf %1108, %1110 : vector<2x16xf32>
    %1112 = arith.addf %1107, %1111 : vector<2x16xf32>
    %1113 = vector.extract_strided_slice %1098 {offsets = [0, 48], sizes = [2, 16], strides = [1, 1]} : vector<2x64xf32> to vector<2x16xf32>
    %1114 = vector.extract_strided_slice %1018 {offsets = [0, 3], sizes = [2, 1], strides = [1, 1]} : vector<2x4xf32> to vector<2x1xf32>
    %1115 = vector.broadcast %1114 : vector<2x1xf32> to vector<2x16xf32>
    %1116 = arith.mulf %1113, %1115 : vector<2x16xf32>
    %1117 = arith.addf %1112, %1116 : vector<2x16xf32>
    %1118 = arith.addf %1000, %1117 : vector<2x16xf32>
    %cst_209 = arith.constant dense<0.000000e+00> : vector<2x16xf32>
    %1119 = tpu.matmul %1118, %8, %cst_209 {dimension_numbers = #tpu.dot_dimension_numbers<[1], [0], [0], [1], [0, 0, 1, 1], [], []>} : vector<2x16xf32>, vector<16x16xf32>, vector<2x16xf32> -> vector<2x16xf32>
    %1120 = vector.broadcast %9 : vector<1x16xf32> to vector<2x16xf32>
    %1121 = arith.addf %1119, %1120 : vector<2x16xf32>
    %cst_210 = arith.constant 0.000000e+00 : f32
    %1122 = vector.broadcast %cst_210 : f32 to vector<2x16xf32>
    %1123 = arith.maximumf %1121, %1122 : vector<2x16xf32>
    %cst_211 = arith.constant dense<0.000000e+00> : vector<2x64xf32>
    %1124 = tpu.matmul %1123, %10, %cst_211 {dimension_numbers = #tpu.dot_dimension_numbers<[1], [0], [0], [1], [0, 0, 1, 1], [], []>} : vector<2x16xf32>, vector<16x64xf32>, vector<2x64xf32> -> vector<2x64xf32>
    %1125 = vector.broadcast %11 : vector<1x64xf32> to vector<2x64xf32>
    %1126 = arith.addf %1124, %1125 : vector<2x64xf32>
    %1127 = math.tanh %1126 : vector<2x64xf32>
    %1128 = vector.extract_strided_slice %1127 {offsets = [0, 0], sizes = [2, 16], strides = [1, 1]} : vector<2x64xf32> to vector<2x16xf32>
    %1129 = vector.extract_strided_slice %1027 {offsets = [0, 0], sizes = [2, 1], strides = [1, 1]} : vector<2x4xf32> to vector<2x1xf32>
    %1130 = vector.broadcast %1129 : vector<2x1xf32> to vector<2x16xf32>
    %1131 = arith.mulf %1128, %1130 : vector<2x16xf32>
    %1132 = vector.extract_strided_slice %1127 {offsets = [0, 16], sizes = [2, 16], strides = [1, 1]} : vector<2x64xf32> to vector<2x16xf32>
    %1133 = vector.extract_strided_slice %1027 {offsets = [0, 1], sizes = [2, 1], strides = [1, 1]} : vector<2x4xf32> to vector<2x1xf32>
    %1134 = vector.broadcast %1133 : vector<2x1xf32> to vector<2x16xf32>
    %1135 = arith.mulf %1132, %1134 : vector<2x16xf32>
    %1136 = arith.addf %1131, %1135 : vector<2x16xf32>
    %1137 = vector.extract_strided_slice %1127 {offsets = [0, 32], sizes = [2, 16], strides = [1, 1]} : vector<2x64xf32> to vector<2x16xf32>
    %1138 = vector.extract_strided_slice %1027 {offsets = [0, 2], sizes = [2, 1], strides = [1, 1]} : vector<2x4xf32> to vector<2x1xf32>
    %1139 = vector.broadcast %1138 : vector<2x1xf32> to vector<2x16xf32>
    %1140 = arith.mulf %1137, %1139 : vector<2x16xf32>
    %1141 = arith.addf %1136, %1140 : vector<2x16xf32>
    %1142 = vector.extract_strided_slice %1127 {offsets = [0, 48], sizes = [2, 16], strides = [1, 1]} : vector<2x64xf32> to vector<2x16xf32>
    %1143 = vector.extract_strided_slice %1027 {offsets = [0, 3], sizes = [2, 1], strides = [1, 1]} : vector<2x4xf32> to vector<2x1xf32>
    %1144 = vector.broadcast %1143 : vector<2x1xf32> to vector<2x16xf32>
    %1145 = arith.mulf %1142, %1144 : vector<2x16xf32>
    %1146 = arith.addf %1141, %1145 : vector<2x16xf32>
    %1147 = arith.addf %1086, %1117 : vector<2x16xf32>
    %cst_212 = arith.constant 2.000000e+00 : f32
    %1148 = vector.broadcast %cst_212 : f32 to vector<2x16xf32>
    %1149 = arith.mulf %1148, %1147 : vector<2x16xf32>
    %1150 = arith.addf %1055, %1149 : vector<2x16xf32>
    %1151 = arith.addf %1150, %1146 : vector<2x16xf32>
    %cst_213 = arith.constant 0.166666672 : f32
    %1152 = vector.broadcast %cst_213 : f32 to vector<2x16xf32>
    %1153 = arith.mulf %1151, %1152 : vector<2x16xf32>
    %1154 = arith.addf %1000, %1153 : vector<2x16xf32>
    %cst_214 = arith.constant 1.000000e+00 : f32
    %1155 = vector.broadcast %cst_214 : f32 to vector<2x4xf32>
    %1156 = arith.subf %1155, %966 : vector<2x4xf32>
    %1157 = arith.mulf %966, %1156 : vector<2x4xf32>
    %1158 = arith.mulf %1157, %178 : vector<2x4xf32>
    %c0_215 = arith.constant 0 : index
    %c8_216 = arith.constant 8 : index
    %1159 = vector.load %arg2[%c0_215, %c8_216] : memref<2x60xf32, #tpu.memory_space<vmem>>, vector<2x4xf32>
    %1160 = arith.mulf %966, %1159 : vector<2x4xf32>
    %c0_217 = arith.constant 0 : index
    %c8_218 = arith.constant 8 : index
    %1161 = vector.load %arg1[%c0_217, %c8_218] : memref<2x60xf32, #tpu.memory_space<vmem>>, vector<2x4xf32>
    %1162 = arith.mulf %1161, %1158 : vector<2x4xf32>
    %1163 = arith.addf %1160, %1162 : vector<2x4xf32>
    %cst_219 = arith.constant 1.000000e+00 : f32
    %1164 = vector.broadcast %cst_219 : f32 to vector<2x4xf32>
    %1165 = arith.subf %1164, %966 : vector<2x4xf32>
    %1166 = arith.mulf %966, %1165 : vector<2x4xf32>
    %1167 = arith.mulf %1166, %178 : vector<2x4xf32>
    %c0_220 = arith.constant 0 : index
    %c12_221 = arith.constant 12 : index
    %1168 = vector.load %arg2[%c0_220, %c12_221] : memref<2x60xf32, #tpu.memory_space<vmem>>, vector<2x4xf32>
    %1169 = arith.mulf %966, %1168 : vector<2x4xf32>
    %c0_222 = arith.constant 0 : index
    %c12_223 = arith.constant 12 : index
    %1170 = vector.load %arg1[%c0_222, %c12_223] : memref<2x60xf32, #tpu.memory_space<vmem>>, vector<2x4xf32>
    %1171 = arith.mulf %1170, %1167 : vector<2x4xf32>
    %1172 = arith.addf %1169, %1171 : vector<2x4xf32>
    %cst_224 = arith.constant 1.000000e+00 : f32
    %1173 = vector.broadcast %cst_224 : f32 to vector<2x4xf32>
    %1174 = arith.subf %1173, %971 : vector<2x4xf32>
    %1175 = arith.mulf %971, %1174 : vector<2x4xf32>
    %1176 = arith.mulf %1175, %308 : vector<2x4xf32>
    %c0_225 = arith.constant 0 : index
    %c16_226 = arith.constant 16 : index
    %1177 = vector.load %arg2[%c0_225, %c16_226] : memref<2x60xf32, #tpu.memory_space<vmem>>, vector<2x4xf32>
    %1178 = arith.mulf %971, %1177 : vector<2x4xf32>
    %c0_227 = arith.constant 0 : index
    %c16_228 = arith.constant 16 : index
    %1179 = vector.load %arg1[%c0_227, %c16_228] : memref<2x60xf32, #tpu.memory_space<vmem>>, vector<2x4xf32>
    %1180 = arith.mulf %1179, %1176 : vector<2x4xf32>
    %1181 = arith.addf %1178, %1180 : vector<2x4xf32>
    %cst_229 = arith.constant dense<0.000000e+00> : vector<2x16xf32>
    %1182 = tpu.matmul %1154, %8, %cst_229 {dimension_numbers = #tpu.dot_dimension_numbers<[1], [0], [0], [1], [0, 0, 1, 1], [], []>} : vector<2x16xf32>, vector<16x16xf32>, vector<2x16xf32> -> vector<2x16xf32>
    %1183 = vector.broadcast %9 : vector<1x16xf32> to vector<2x16xf32>
    %1184 = arith.addf %1182, %1183 : vector<2x16xf32>
    %cst_230 = arith.constant 0.000000e+00 : f32
    %1185 = vector.broadcast %cst_230 : f32 to vector<2x16xf32>
    %1186 = arith.maximumf %1184, %1185 : vector<2x16xf32>
    %cst_231 = arith.constant dense<0.000000e+00> : vector<2x64xf32>
    %1187 = tpu.matmul %1186, %10, %cst_231 {dimension_numbers = #tpu.dot_dimension_numbers<[1], [0], [0], [1], [0, 0, 1, 1], [], []>} : vector<2x16xf32>, vector<16x64xf32>, vector<2x64xf32> -> vector<2x64xf32>
    %1188 = vector.broadcast %11 : vector<1x64xf32> to vector<2x64xf32>
    %1189 = arith.addf %1187, %1188 : vector<2x64xf32>
    %1190 = math.tanh %1189 : vector<2x64xf32>
    %1191 = vector.extract_strided_slice %1190 {offsets = [0, 0], sizes = [2, 16], strides = [1, 1]} : vector<2x64xf32> to vector<2x16xf32>
    %1192 = vector.extract_strided_slice %1163 {offsets = [0, 0], sizes = [2, 1], strides = [1, 1]} : vector<2x4xf32> to vector<2x1xf32>
    %1193 = vector.broadcast %1192 : vector<2x1xf32> to vector<2x16xf32>
    %1194 = arith.mulf %1191, %1193 : vector<2x16xf32>
    %1195 = vector.extract_strided_slice %1190 {offsets = [0, 16], sizes = [2, 16], strides = [1, 1]} : vector<2x64xf32> to vector<2x16xf32>
    %1196 = vector.extract_strided_slice %1163 {offsets = [0, 1], sizes = [2, 1], strides = [1, 1]} : vector<2x4xf32> to vector<2x1xf32>
    %1197 = vector.broadcast %1196 : vector<2x1xf32> to vector<2x16xf32>
    %1198 = arith.mulf %1195, %1197 : vector<2x16xf32>
    %1199 = arith.addf %1194, %1198 : vector<2x16xf32>
    %1200 = vector.extract_strided_slice %1190 {offsets = [0, 32], sizes = [2, 16], strides = [1, 1]} : vector<2x64xf32> to vector<2x16xf32>
    %1201 = vector.extract_strided_slice %1163 {offsets = [0, 2], sizes = [2, 1], strides = [1, 1]} : vector<2x4xf32> to vector<2x1xf32>
    %1202 = vector.broadcast %1201 : vector<2x1xf32> to vector<2x16xf32>
    %1203 = arith.mulf %1200, %1202 : vector<2x16xf32>
    %1204 = arith.addf %1199, %1203 : vector<2x16xf32>
    %1205 = vector.extract_strided_slice %1190 {offsets = [0, 48], sizes = [2, 16], strides = [1, 1]} : vector<2x64xf32> to vector<2x16xf32>
    %1206 = vector.extract_strided_slice %1163 {offsets = [0, 3], sizes = [2, 1], strides = [1, 1]} : vector<2x4xf32> to vector<2x1xf32>
    %1207 = vector.broadcast %1206 : vector<2x1xf32> to vector<2x16xf32>
    %1208 = arith.mulf %1205, %1207 : vector<2x16xf32>
    %1209 = arith.addf %1204, %1208 : vector<2x16xf32>
    %cst_232 = arith.constant 5.000000e-01 : f32
    %1210 = vector.broadcast %cst_232 : f32 to vector<2x16xf32>
    %1211 = arith.mulf %1210, %1209 : vector<2x16xf32>
    %1212 = arith.addf %1154, %1211 : vector<2x16xf32>
    %cst_233 = arith.constant dense<0.000000e+00> : vector<2x16xf32>
    %1213 = tpu.matmul %1212, %8, %cst_233 {dimension_numbers = #tpu.dot_dimension_numbers<[1], [0], [0], [1], [0, 0, 1, 1], [], []>} : vector<2x16xf32>, vector<16x16xf32>, vector<2x16xf32> -> vector<2x16xf32>
    %1214 = vector.broadcast %9 : vector<1x16xf32> to vector<2x16xf32>
    %1215 = arith.addf %1213, %1214 : vector<2x16xf32>
    %cst_234 = arith.constant 0.000000e+00 : f32
    %1216 = vector.broadcast %cst_234 : f32 to vector<2x16xf32>
    %1217 = arith.maximumf %1215, %1216 : vector<2x16xf32>
    %cst_235 = arith.constant dense<0.000000e+00> : vector<2x64xf32>
    %1218 = tpu.matmul %1217, %10, %cst_235 {dimension_numbers = #tpu.dot_dimension_numbers<[1], [0], [0], [1], [0, 0, 1, 1], [], []>} : vector<2x16xf32>, vector<16x64xf32>, vector<2x64xf32> -> vector<2x64xf32>
    %1219 = vector.broadcast %11 : vector<1x64xf32> to vector<2x64xf32>
    %1220 = arith.addf %1218, %1219 : vector<2x64xf32>
    %1221 = math.tanh %1220 : vector<2x64xf32>
    %1222 = vector.extract_strided_slice %1221 {offsets = [0, 0], sizes = [2, 16], strides = [1, 1]} : vector<2x64xf32> to vector<2x16xf32>
    %1223 = vector.extract_strided_slice %1172 {offsets = [0, 0], sizes = [2, 1], strides = [1, 1]} : vector<2x4xf32> to vector<2x1xf32>
    %1224 = vector.broadcast %1223 : vector<2x1xf32> to vector<2x16xf32>
    %1225 = arith.mulf %1222, %1224 : vector<2x16xf32>
    %1226 = vector.extract_strided_slice %1221 {offsets = [0, 16], sizes = [2, 16], strides = [1, 1]} : vector<2x64xf32> to vector<2x16xf32>
    %1227 = vector.extract_strided_slice %1172 {offsets = [0, 1], sizes = [2, 1], strides = [1, 1]} : vector<2x4xf32> to vector<2x1xf32>
    %1228 = vector.broadcast %1227 : vector<2x1xf32> to vector<2x16xf32>
    %1229 = arith.mulf %1226, %1228 : vector<2x16xf32>
    %1230 = arith.addf %1225, %1229 : vector<2x16xf32>
    %1231 = vector.extract_strided_slice %1221 {offsets = [0, 32], sizes = [2, 16], strides = [1, 1]} : vector<2x64xf32> to vector<2x16xf32>
    %1232 = vector.extract_strided_slice %1172 {offsets = [0, 2], sizes = [2, 1], strides = [1, 1]} : vector<2x4xf32> to vector<2x1xf32>
    %1233 = vector.broadcast %1232 : vector<2x1xf32> to vector<2x16xf32>
    %1234 = arith.mulf %1231, %1233 : vector<2x16xf32>
    %1235 = arith.addf %1230, %1234 : vector<2x16xf32>
    %1236 = vector.extract_strided_slice %1221 {offsets = [0, 48], sizes = [2, 16], strides = [1, 1]} : vector<2x64xf32> to vector<2x16xf32>
    %1237 = vector.extract_strided_slice %1172 {offsets = [0, 3], sizes = [2, 1], strides = [1, 1]} : vector<2x4xf32> to vector<2x1xf32>
    %1238 = vector.broadcast %1237 : vector<2x1xf32> to vector<2x16xf32>
    %1239 = arith.mulf %1236, %1238 : vector<2x16xf32>
    %1240 = arith.addf %1235, %1239 : vector<2x16xf32>
    %cst_236 = arith.constant 5.000000e-01 : f32
    %1241 = vector.broadcast %cst_236 : f32 to vector<2x16xf32>
    %1242 = arith.mulf %1241, %1240 : vector<2x16xf32>
    %1243 = arith.addf %1154, %1242 : vector<2x16xf32>
    %cst_237 = arith.constant dense<0.000000e+00> : vector<2x16xf32>
    %1244 = tpu.matmul %1243, %8, %cst_237 {dimension_numbers = #tpu.dot_dimension_numbers<[1], [0], [0], [1], [0, 0, 1, 1], [], []>} : vector<2x16xf32>, vector<16x16xf32>, vector<2x16xf32> -> vector<2x16xf32>
    %1245 = vector.broadcast %9 : vector<1x16xf32> to vector<2x16xf32>
    %1246 = arith.addf %1244, %1245 : vector<2x16xf32>
    %cst_238 = arith.constant 0.000000e+00 : f32
    %1247 = vector.broadcast %cst_238 : f32 to vector<2x16xf32>
    %1248 = arith.maximumf %1246, %1247 : vector<2x16xf32>
    %cst_239 = arith.constant dense<0.000000e+00> : vector<2x64xf32>
    %1249 = tpu.matmul %1248, %10, %cst_239 {dimension_numbers = #tpu.dot_dimension_numbers<[1], [0], [0], [1], [0, 0, 1, 1], [], []>} : vector<2x16xf32>, vector<16x64xf32>, vector<2x64xf32> -> vector<2x64xf32>
    %1250 = vector.broadcast %11 : vector<1x64xf32> to vector<2x64xf32>
    %1251 = arith.addf %1249, %1250 : vector<2x64xf32>
    %1252 = math.tanh %1251 : vector<2x64xf32>
    %1253 = vector.extract_strided_slice %1252 {offsets = [0, 0], sizes = [2, 16], strides = [1, 1]} : vector<2x64xf32> to vector<2x16xf32>
    %1254 = vector.extract_strided_slice %1172 {offsets = [0, 0], sizes = [2, 1], strides = [1, 1]} : vector<2x4xf32> to vector<2x1xf32>
    %1255 = vector.broadcast %1254 : vector<2x1xf32> to vector<2x16xf32>
    %1256 = arith.mulf %1253, %1255 : vector<2x16xf32>
    %1257 = vector.extract_strided_slice %1252 {offsets = [0, 16], sizes = [2, 16], strides = [1, 1]} : vector<2x64xf32> to vector<2x16xf32>
    %1258 = vector.extract_strided_slice %1172 {offsets = [0, 1], sizes = [2, 1], strides = [1, 1]} : vector<2x4xf32> to vector<2x1xf32>
    %1259 = vector.broadcast %1258 : vector<2x1xf32> to vector<2x16xf32>
    %1260 = arith.mulf %1257, %1259 : vector<2x16xf32>
    %1261 = arith.addf %1256, %1260 : vector<2x16xf32>
    %1262 = vector.extract_strided_slice %1252 {offsets = [0, 32], sizes = [2, 16], strides = [1, 1]} : vector<2x64xf32> to vector<2x16xf32>
    %1263 = vector.extract_strided_slice %1172 {offsets = [0, 2], sizes = [2, 1], strides = [1, 1]} : vector<2x4xf32> to vector<2x1xf32>
    %1264 = vector.broadcast %1263 : vector<2x1xf32> to vector<2x16xf32>
    %1265 = arith.mulf %1262, %1264 : vector<2x16xf32>
    %1266 = arith.addf %1261, %1265 : vector<2x16xf32>
    %1267 = vector.extract_strided_slice %1252 {offsets = [0, 48], sizes = [2, 16], strides = [1, 1]} : vector<2x64xf32> to vector<2x16xf32>
    %1268 = vector.extract_strided_slice %1172 {offsets = [0, 3], sizes = [2, 1], strides = [1, 1]} : vector<2x4xf32> to vector<2x1xf32>
    %1269 = vector.broadcast %1268 : vector<2x1xf32> to vector<2x16xf32>
    %1270 = arith.mulf %1267, %1269 : vector<2x16xf32>
    %1271 = arith.addf %1266, %1270 : vector<2x16xf32>
    %1272 = arith.addf %1154, %1271 : vector<2x16xf32>
    %cst_240 = arith.constant dense<0.000000e+00> : vector<2x16xf32>
    %1273 = tpu.matmul %1272, %8, %cst_240 {dimension_numbers = #tpu.dot_dimension_numbers<[1], [0], [0], [1], [0, 0, 1, 1], [], []>} : vector<2x16xf32>, vector<16x16xf32>, vector<2x16xf32> -> vector<2x16xf32>
    %1274 = vector.broadcast %9 : vector<1x16xf32> to vector<2x16xf32>
    %1275 = arith.addf %1273, %1274 : vector<2x16xf32>
    %cst_241 = arith.constant 0.000000e+00 : f32
    %1276 = vector.broadcast %cst_241 : f32 to vector<2x16xf32>
    %1277 = arith.maximumf %1275, %1276 : vector<2x16xf32>
    %cst_242 = arith.constant dense<0.000000e+00> : vector<2x64xf32>
    %1278 = tpu.matmul %1277, %10, %cst_242 {dimension_numbers = #tpu.dot_dimension_numbers<[1], [0], [0], [1], [0, 0, 1, 1], [], []>} : vector<2x16xf32>, vector<16x64xf32>, vector<2x64xf32> -> vector<2x64xf32>
    %1279 = vector.broadcast %11 : vector<1x64xf32> to vector<2x64xf32>
    %1280 = arith.addf %1278, %1279 : vector<2x64xf32>
    %1281 = math.tanh %1280 : vector<2x64xf32>
    %1282 = vector.extract_strided_slice %1281 {offsets = [0, 0], sizes = [2, 16], strides = [1, 1]} : vector<2x64xf32> to vector<2x16xf32>
    %1283 = vector.extract_strided_slice %1181 {offsets = [0, 0], sizes = [2, 1], strides = [1, 1]} : vector<2x4xf32> to vector<2x1xf32>
    %1284 = vector.broadcast %1283 : vector<2x1xf32> to vector<2x16xf32>
    %1285 = arith.mulf %1282, %1284 : vector<2x16xf32>
    %1286 = vector.extract_strided_slice %1281 {offsets = [0, 16], sizes = [2, 16], strides = [1, 1]} : vector<2x64xf32> to vector<2x16xf32>
    %1287 = vector.extract_strided_slice %1181 {offsets = [0, 1], sizes = [2, 1], strides = [1, 1]} : vector<2x4xf32> to vector<2x1xf32>
    %1288 = vector.broadcast %1287 : vector<2x1xf32> to vector<2x16xf32>
    %1289 = arith.mulf %1286, %1288 : vector<2x16xf32>
    %1290 = arith.addf %1285, %1289 : vector<2x16xf32>
    %1291 = vector.extract_strided_slice %1281 {offsets = [0, 32], sizes = [2, 16], strides = [1, 1]} : vector<2x64xf32> to vector<2x16xf32>
    %1292 = vector.extract_strided_slice %1181 {offsets = [0, 2], sizes = [2, 1], strides = [1, 1]} : vector<2x4xf32> to vector<2x1xf32>
    %1293 = vector.broadcast %1292 : vector<2x1xf32> to vector<2x16xf32>
    %1294 = arith.mulf %1291, %1293 : vector<2x16xf32>
    %1295 = arith.addf %1290, %1294 : vector<2x16xf32>
    %1296 = vector.extract_strided_slice %1281 {offsets = [0, 48], sizes = [2, 16], strides = [1, 1]} : vector<2x64xf32> to vector<2x16xf32>
    %1297 = vector.extract_strided_slice %1181 {offsets = [0, 3], sizes = [2, 1], strides = [1, 1]} : vector<2x4xf32> to vector<2x1xf32>
    %1298 = vector.broadcast %1297 : vector<2x1xf32> to vector<2x16xf32>
    %1299 = arith.mulf %1296, %1298 : vector<2x16xf32>
    %1300 = arith.addf %1295, %1299 : vector<2x16xf32>
    %1301 = arith.addf %1240, %1271 : vector<2x16xf32>
    %cst_243 = arith.constant 2.000000e+00 : f32
    %1302 = vector.broadcast %cst_243 : f32 to vector<2x16xf32>
    %1303 = arith.mulf %1302, %1301 : vector<2x16xf32>
    %1304 = arith.addf %1209, %1303 : vector<2x16xf32>
    %1305 = arith.addf %1304, %1300 : vector<2x16xf32>
    %cst_244 = arith.constant 0.166666672 : f32
    %1306 = vector.broadcast %cst_244 : f32 to vector<2x16xf32>
    %1307 = arith.mulf %1305, %1306 : vector<2x16xf32>
    %1308 = arith.addf %1154, %1307 : vector<2x16xf32>
    %cst_245 = arith.constant 1.000000e+00 : f32
    %1309 = vector.broadcast %cst_245 : f32 to vector<2x4xf32>
    %1310 = arith.subf %1309, %971 : vector<2x4xf32>
    %1311 = arith.mulf %971, %1310 : vector<2x4xf32>
    %1312 = arith.mulf %1311, %308 : vector<2x4xf32>
    %c0_246 = arith.constant 0 : index
    %c16_247 = arith.constant 16 : index
    %1313 = vector.load %arg2[%c0_246, %c16_247] : memref<2x60xf32, #tpu.memory_space<vmem>>, vector<2x4xf32>
    %1314 = arith.mulf %971, %1313 : vector<2x4xf32>
    %c0_248 = arith.constant 0 : index
    %c16_249 = arith.constant 16 : index
    %1315 = vector.load %arg1[%c0_248, %c16_249] : memref<2x60xf32, #tpu.memory_space<vmem>>, vector<2x4xf32>
    %1316 = arith.mulf %1315, %1312 : vector<2x4xf32>
    %1317 = arith.addf %1314, %1316 : vector<2x4xf32>
    %cst_250 = arith.constant 1.000000e+00 : f32
    %1318 = vector.broadcast %cst_250 : f32 to vector<2x4xf32>
    %1319 = arith.subf %1318, %971 : vector<2x4xf32>
    %1320 = arith.mulf %971, %1319 : vector<2x4xf32>
    %1321 = arith.mulf %1320, %308 : vector<2x4xf32>
    %c0_251 = arith.constant 0 : index
    %c20_252 = arith.constant 20 : index
    %1322 = vector.load %arg2[%c0_251, %c20_252] : memref<2x60xf32, #tpu.memory_space<vmem>>, vector<2x4xf32>
    %1323 = arith.mulf %971, %1322 : vector<2x4xf32>
    %c0_253 = arith.constant 0 : index
    %c20_254 = arith.constant 20 : index
    %1324 = vector.load %arg1[%c0_253, %c20_254] : memref<2x60xf32, #tpu.memory_space<vmem>>, vector<2x4xf32>
    %1325 = arith.mulf %1324, %1321 : vector<2x4xf32>
    %1326 = arith.addf %1323, %1325 : vector<2x4xf32>
    %cst_255 = arith.constant 1.000000e+00 : f32
    %1327 = vector.broadcast %cst_255 : f32 to vector<2x4xf32>
    %1328 = arith.subf %1327, %976 : vector<2x4xf32>
    %1329 = arith.mulf %976, %1328 : vector<2x4xf32>
    %1330 = arith.mulf %1329, %438 : vector<2x4xf32>
    %c0_256 = arith.constant 0 : index
    %c24_257 = arith.constant 24 : index
    %1331 = vector.load %arg2[%c0_256, %c24_257] : memref<2x60xf32, #tpu.memory_space<vmem>>, vector<2x4xf32>
    %1332 = arith.mulf %976, %1331 : vector<2x4xf32>
    %c0_258 = arith.constant 0 : index
    %c24_259 = arith.constant 24 : index
    %1333 = vector.load %arg1[%c0_258, %c24_259] : memref<2x60xf32, #tpu.memory_space<vmem>>, vector<2x4xf32>
    %1334 = arith.mulf %1333, %1330 : vector<2x4xf32>
    %1335 = arith.addf %1332, %1334 : vector<2x4xf32>
    %cst_260 = arith.constant dense<0.000000e+00> : vector<2x16xf32>
    %1336 = tpu.matmul %1308, %8, %cst_260 {dimension_numbers = #tpu.dot_dimension_numbers<[1], [0], [0], [1], [0, 0, 1, 1], [], []>} : vector<2x16xf32>, vector<16x16xf32>, vector<2x16xf32> -> vector<2x16xf32>
    %1337 = vector.broadcast %9 : vector<1x16xf32> to vector<2x16xf32>
    %1338 = arith.addf %1336, %1337 : vector<2x16xf32>
    %cst_261 = arith.constant 0.000000e+00 : f32
    %1339 = vector.broadcast %cst_261 : f32 to vector<2x16xf32>
    %1340 = arith.maximumf %1338, %1339 : vector<2x16xf32>
    %cst_262 = arith.constant dense<0.000000e+00> : vector<2x64xf32>
    %1341 = tpu.matmul %1340, %10, %cst_262 {dimension_numbers = #tpu.dot_dimension_numbers<[1], [0], [0], [1], [0, 0, 1, 1], [], []>} : vector<2x16xf32>, vector<16x64xf32>, vector<2x64xf32> -> vector<2x64xf32>
    %1342 = vector.broadcast %11 : vector<1x64xf32> to vector<2x64xf32>
    %1343 = arith.addf %1341, %1342 : vector<2x64xf32>
    %1344 = math.tanh %1343 : vector<2x64xf32>
    %1345 = vector.extract_strided_slice %1344 {offsets = [0, 0], sizes = [2, 16], strides = [1, 1]} : vector<2x64xf32> to vector<2x16xf32>
    %1346 = vector.extract_strided_slice %1317 {offsets = [0, 0], sizes = [2, 1], strides = [1, 1]} : vector<2x4xf32> to vector<2x1xf32>
    %1347 = vector.broadcast %1346 : vector<2x1xf32> to vector<2x16xf32>
    %1348 = arith.mulf %1345, %1347 : vector<2x16xf32>
    %1349 = vector.extract_strided_slice %1344 {offsets = [0, 16], sizes = [2, 16], strides = [1, 1]} : vector<2x64xf32> to vector<2x16xf32>
    %1350 = vector.extract_strided_slice %1317 {offsets = [0, 1], sizes = [2, 1], strides = [1, 1]} : vector<2x4xf32> to vector<2x1xf32>
    %1351 = vector.broadcast %1350 : vector<2x1xf32> to vector<2x16xf32>
    %1352 = arith.mulf %1349, %1351 : vector<2x16xf32>
    %1353 = arith.addf %1348, %1352 : vector<2x16xf32>
    %1354 = vector.extract_strided_slice %1344 {offsets = [0, 32], sizes = [2, 16], strides = [1, 1]} : vector<2x64xf32> to vector<2x16xf32>
    %1355 = vector.extract_strided_slice %1317 {offsets = [0, 2], sizes = [2, 1], strides = [1, 1]} : vector<2x4xf32> to vector<2x1xf32>
    %1356 = vector.broadcast %1355 : vector<2x1xf32> to vector<2x16xf32>
    %1357 = arith.mulf %1354, %1356 : vector<2x16xf32>
    %1358 = arith.addf %1353, %1357 : vector<2x16xf32>
    %1359 = vector.extract_strided_slice %1344 {offsets = [0, 48], sizes = [2, 16], strides = [1, 1]} : vector<2x64xf32> to vector<2x16xf32>
    %1360 = vector.extract_strided_slice %1317 {offsets = [0, 3], sizes = [2, 1], strides = [1, 1]} : vector<2x4xf32> to vector<2x1xf32>
    %1361 = vector.broadcast %1360 : vector<2x1xf32> to vector<2x16xf32>
    %1362 = arith.mulf %1359, %1361 : vector<2x16xf32>
    %1363 = arith.addf %1358, %1362 : vector<2x16xf32>
    %cst_263 = arith.constant 5.000000e-01 : f32
    %1364 = vector.broadcast %cst_263 : f32 to vector<2x16xf32>
    %1365 = arith.mulf %1364, %1363 : vector<2x16xf32>
    %1366 = arith.addf %1308, %1365 : vector<2x16xf32>
    %cst_264 = arith.constant dense<0.000000e+00> : vector<2x16xf32>
    %1367 = tpu.matmul %1366, %8, %cst_264 {dimension_numbers = #tpu.dot_dimension_numbers<[1], [0], [0], [1], [0, 0, 1, 1], [], []>} : vector<2x16xf32>, vector<16x16xf32>, vector<2x16xf32> -> vector<2x16xf32>
    %1368 = vector.broadcast %9 : vector<1x16xf32> to vector<2x16xf32>
    %1369 = arith.addf %1367, %1368 : vector<2x16xf32>
    %cst_265 = arith.constant 0.000000e+00 : f32
    %1370 = vector.broadcast %cst_265 : f32 to vector<2x16xf32>
    %1371 = arith.maximumf %1369, %1370 : vector<2x16xf32>
    %cst_266 = arith.constant dense<0.000000e+00> : vector<2x64xf32>
    %1372 = tpu.matmul %1371, %10, %cst_266 {dimension_numbers = #tpu.dot_dimension_numbers<[1], [0], [0], [1], [0, 0, 1, 1], [], []>} : vector<2x16xf32>, vector<16x64xf32>, vector<2x64xf32> -> vector<2x64xf32>
    %1373 = vector.broadcast %11 : vector<1x64xf32> to vector<2x64xf32>
    %1374 = arith.addf %1372, %1373 : vector<2x64xf32>
    %1375 = math.tanh %1374 : vector<2x64xf32>
    %1376 = vector.extract_strided_slice %1375 {offsets = [0, 0], sizes = [2, 16], strides = [1, 1]} : vector<2x64xf32> to vector<2x16xf32>
    %1377 = vector.extract_strided_slice %1326 {offsets = [0, 0], sizes = [2, 1], strides = [1, 1]} : vector<2x4xf32> to vector<2x1xf32>
    %1378 = vector.broadcast %1377 : vector<2x1xf32> to vector<2x16xf32>
    %1379 = arith.mulf %1376, %1378 : vector<2x16xf32>
    %1380 = vector.extract_strided_slice %1375 {offsets = [0, 16], sizes = [2, 16], strides = [1, 1]} : vector<2x64xf32> to vector<2x16xf32>
    %1381 = vector.extract_strided_slice %1326 {offsets = [0, 1], sizes = [2, 1], strides = [1, 1]} : vector<2x4xf32> to vector<2x1xf32>
    %1382 = vector.broadcast %1381 : vector<2x1xf32> to vector<2x16xf32>
    %1383 = arith.mulf %1380, %1382 : vector<2x16xf32>
    %1384 = arith.addf %1379, %1383 : vector<2x16xf32>
    %1385 = vector.extract_strided_slice %1375 {offsets = [0, 32], sizes = [2, 16], strides = [1, 1]} : vector<2x64xf32> to vector<2x16xf32>
    %1386 = vector.extract_strided_slice %1326 {offsets = [0, 2], sizes = [2, 1], strides = [1, 1]} : vector<2x4xf32> to vector<2x1xf32>
    %1387 = vector.broadcast %1386 : vector<2x1xf32> to vector<2x16xf32>
    %1388 = arith.mulf %1385, %1387 : vector<2x16xf32>
    %1389 = arith.addf %1384, %1388 : vector<2x16xf32>
    %1390 = vector.extract_strided_slice %1375 {offsets = [0, 48], sizes = [2, 16], strides = [1, 1]} : vector<2x64xf32> to vector<2x16xf32>
    %1391 = vector.extract_strided_slice %1326 {offsets = [0, 3], sizes = [2, 1], strides = [1, 1]} : vector<2x4xf32> to vector<2x1xf32>
    %1392 = vector.broadcast %1391 : vector<2x1xf32> to vector<2x16xf32>
    %1393 = arith.mulf %1390, %1392 : vector<2x16xf32>
    %1394 = arith.addf %1389, %1393 : vector<2x16xf32>
    %cst_267 = arith.constant 5.000000e-01 : f32
    %1395 = vector.broadcast %cst_267 : f32 to vector<2x16xf32>
    %1396 = arith.mulf %1395, %1394 : vector<2x16xf32>
    %1397 = arith.addf %1308, %1396 : vector<2x16xf32>
    %cst_268 = arith.constant dense<0.000000e+00> : vector<2x16xf32>
    %1398 = tpu.matmul %1397, %8, %cst_268 {dimension_numbers = #tpu.dot_dimension_numbers<[1], [0], [0], [1], [0, 0, 1, 1], [], []>} : vector<2x16xf32>, vector<16x16xf32>, vector<2x16xf32> -> vector<2x16xf32>
    %1399 = vector.broadcast %9 : vector<1x16xf32> to vector<2x16xf32>
    %1400 = arith.addf %1398, %1399 : vector<2x16xf32>
    %cst_269 = arith.constant 0.000000e+00 : f32
    %1401 = vector.broadcast %cst_269 : f32 to vector<2x16xf32>
    %1402 = arith.maximumf %1400, %1401 : vector<2x16xf32>
    %cst_270 = arith.constant dense<0.000000e+00> : vector<2x64xf32>
    %1403 = tpu.matmul %1402, %10, %cst_270 {dimension_numbers = #tpu.dot_dimension_numbers<[1], [0], [0], [1], [0, 0, 1, 1], [], []>} : vector<2x16xf32>, vector<16x64xf32>, vector<2x64xf32> -> vector<2x64xf32>
    %1404 = vector.broadcast %11 : vector<1x64xf32> to vector<2x64xf32>
    %1405 = arith.addf %1403, %1404 : vector<2x64xf32>
    %1406 = math.tanh %1405 : vector<2x64xf32>
    %1407 = vector.extract_strided_slice %1406 {offsets = [0, 0], sizes = [2, 16], strides = [1, 1]} : vector<2x64xf32> to vector<2x16xf32>
    %1408 = vector.extract_strided_slice %1326 {offsets = [0, 0], sizes = [2, 1], strides = [1, 1]} : vector<2x4xf32> to vector<2x1xf32>
    %1409 = vector.broadcast %1408 : vector<2x1xf32> to vector<2x16xf32>
    %1410 = arith.mulf %1407, %1409 : vector<2x16xf32>
    %1411 = vector.extract_strided_slice %1406 {offsets = [0, 16], sizes = [2, 16], strides = [1, 1]} : vector<2x64xf32> to vector<2x16xf32>
    %1412 = vector.extract_strided_slice %1326 {offsets = [0, 1], sizes = [2, 1], strides = [1, 1]} : vector<2x4xf32> to vector<2x1xf32>
    %1413 = vector.broadcast %1412 : vector<2x1xf32> to vector<2x16xf32>
    %1414 = arith.mulf %1411, %1413 : vector<2x16xf32>
    %1415 = arith.addf %1410, %1414 : vector<2x16xf32>
    %1416 = vector.extract_strided_slice %1406 {offsets = [0, 32], sizes = [2, 16], strides = [1, 1]} : vector<2x64xf32> to vector<2x16xf32>
    %1417 = vector.extract_strided_slice %1326 {offsets = [0, 2], sizes = [2, 1], strides = [1, 1]} : vector<2x4xf32> to vector<2x1xf32>
    %1418 = vector.broadcast %1417 : vector<2x1xf32> to vector<2x16xf32>
    %1419 = arith.mulf %1416, %1418 : vector<2x16xf32>
    %1420 = arith.addf %1415, %1419 : vector<2x16xf32>
    %1421 = vector.extract_strided_slice %1406 {offsets = [0, 48], sizes = [2, 16], strides = [1, 1]} : vector<2x64xf32> to vector<2x16xf32>
    %1422 = vector.extract_strided_slice %1326 {offsets = [0, 3], sizes = [2, 1], strides = [1, 1]} : vector<2x4xf32> to vector<2x1xf32>
    %1423 = vector.broadcast %1422 : vector<2x1xf32> to vector<2x16xf32>
    %1424 = arith.mulf %1421, %1423 : vector<2x16xf32>
    %1425 = arith.addf %1420, %1424 : vector<2x16xf32>
    %1426 = arith.addf %1308, %1425 : vector<2x16xf32>
    %cst_271 = arith.constant dense<0.000000e+00> : vector<2x16xf32>
    %1427 = tpu.matmul %1426, %8, %cst_271 {dimension_numbers = #tpu.dot_dimension_numbers<[1], [0], [0], [1], [0, 0, 1, 1], [], []>} : vector<2x16xf32>, vector<16x16xf32>, vector<2x16xf32> -> vector<2x16xf32>
    %1428 = vector.broadcast %9 : vector<1x16xf32> to vector<2x16xf32>
    %1429 = arith.addf %1427, %1428 : vector<2x16xf32>
    %cst_272 = arith.constant 0.000000e+00 : f32
    %1430 = vector.broadcast %cst_272 : f32 to vector<2x16xf32>
    %1431 = arith.maximumf %1429, %1430 : vector<2x16xf32>
    %cst_273 = arith.constant dense<0.000000e+00> : vector<2x64xf32>
    %1432 = tpu.matmul %1431, %10, %cst_273 {dimension_numbers = #tpu.dot_dimension_numbers<[1], [0], [0], [1], [0, 0, 1, 1], [], []>} : vector<2x16xf32>, vector<16x64xf32>, vector<2x64xf32> -> vector<2x64xf32>
    %1433 = vector.broadcast %11 : vector<1x64xf32> to vector<2x64xf32>
    %1434 = arith.addf %1432, %1433 : vector<2x64xf32>
    %1435 = math.tanh %1434 : vector<2x64xf32>
    %1436 = vector.extract_strided_slice %1435 {offsets = [0, 0], sizes = [2, 16], strides = [1, 1]} : vector<2x64xf32> to vector<2x16xf32>
    %1437 = vector.extract_strided_slice %1335 {offsets = [0, 0], sizes = [2, 1], strides = [1, 1]} : vector<2x4xf32> to vector<2x1xf32>
    %1438 = vector.broadcast %1437 : vector<2x1xf32> to vector<2x16xf32>
    %1439 = arith.mulf %1436, %1438 : vector<2x16xf32>
    %1440 = vector.extract_strided_slice %1435 {offsets = [0, 16], sizes = [2, 16], strides = [1, 1]} : vector<2x64xf32> to vector<2x16xf32>
    %1441 = vector.extract_strided_slice %1335 {offsets = [0, 1], sizes = [2, 1], strides = [1, 1]} : vector<2x4xf32> to vector<2x1xf32>
    %1442 = vector.broadcast %1441 : vector<2x1xf32> to vector<2x16xf32>
    %1443 = arith.mulf %1440, %1442 : vector<2x16xf32>
    %1444 = arith.addf %1439, %1443 : vector<2x16xf32>
    %1445 = vector.extract_strided_slice %1435 {offsets = [0, 32], sizes = [2, 16], strides = [1, 1]} : vector<2x64xf32> to vector<2x16xf32>
    %1446 = vector.extract_strided_slice %1335 {offsets = [0, 2], sizes = [2, 1], strides = [1, 1]} : vector<2x4xf32> to vector<2x1xf32>
    %1447 = vector.broadcast %1446 : vector<2x1xf32> to vector<2x16xf32>
    %1448 = arith.mulf %1445, %1447 : vector<2x16xf32>
    %1449 = arith.addf %1444, %1448 : vector<2x16xf32>
    %1450 = vector.extract_strided_slice %1435 {offsets = [0, 48], sizes = [2, 16], strides = [1, 1]} : vector<2x64xf32> to vector<2x16xf32>
    %1451 = vector.extract_strided_slice %1335 {offsets = [0, 3], sizes = [2, 1], strides = [1, 1]} : vector<2x4xf32> to vector<2x1xf32>
    %1452 = vector.broadcast %1451 : vector<2x1xf32> to vector<2x16xf32>
    %1453 = arith.mulf %1450, %1452 : vector<2x16xf32>
    %1454 = arith.addf %1449, %1453 : vector<2x16xf32>
    %1455 = arith.addf %1394, %1425 : vector<2x16xf32>
    %cst_274 = arith.constant 2.000000e+00 : f32
    %1456 = vector.broadcast %cst_274 : f32 to vector<2x16xf32>
    %1457 = arith.mulf %1456, %1455 : vector<2x16xf32>
    %1458 = arith.addf %1363, %1457 : vector<2x16xf32>
    %1459 = arith.addf %1458, %1454 : vector<2x16xf32>
    %cst_275 = arith.constant 0.166666672 : f32
    %1460 = vector.broadcast %cst_275 : f32 to vector<2x16xf32>
    %1461 = arith.mulf %1459, %1460 : vector<2x16xf32>
    %1462 = arith.addf %1308, %1461 : vector<2x16xf32>
    %cst_276 = arith.constant 1.000000e+00 : f32
    %1463 = vector.broadcast %cst_276 : f32 to vector<2x4xf32>
    %1464 = arith.subf %1463, %976 : vector<2x4xf32>
    %1465 = arith.mulf %976, %1464 : vector<2x4xf32>
    %1466 = arith.mulf %1465, %438 : vector<2x4xf32>
    %c0_277 = arith.constant 0 : index
    %c24_278 = arith.constant 24 : index
    %1467 = vector.load %arg2[%c0_277, %c24_278] : memref<2x60xf32, #tpu.memory_space<vmem>>, vector<2x4xf32>
    %1468 = arith.mulf %976, %1467 : vector<2x4xf32>
    %c0_279 = arith.constant 0 : index
    %c24_280 = arith.constant 24 : index
    %1469 = vector.load %arg1[%c0_279, %c24_280] : memref<2x60xf32, #tpu.memory_space<vmem>>, vector<2x4xf32>
    %1470 = arith.mulf %1469, %1466 : vector<2x4xf32>
    %1471 = arith.addf %1468, %1470 : vector<2x4xf32>
    %cst_281 = arith.constant 1.000000e+00 : f32
    %1472 = vector.broadcast %cst_281 : f32 to vector<2x4xf32>
    %1473 = arith.subf %1472, %976 : vector<2x4xf32>
    %1474 = arith.mulf %976, %1473 : vector<2x4xf32>
    %1475 = arith.mulf %1474, %438 : vector<2x4xf32>
    %c0_282 = arith.constant 0 : index
    %c28_283 = arith.constant 28 : index
    %1476 = vector.load %arg2[%c0_282, %c28_283] : memref<2x60xf32, #tpu.memory_space<vmem>>, vector<2x4xf32>
    %1477 = arith.mulf %976, %1476 : vector<2x4xf32>
    %c0_284 = arith.constant 0 : index
    %c28_285 = arith.constant 28 : index
    %1478 = vector.load %arg1[%c0_284, %c28_285] : memref<2x60xf32, #tpu.memory_space<vmem>>, vector<2x4xf32>
    %1479 = arith.mulf %1478, %1475 : vector<2x4xf32>
    %1480 = arith.addf %1477, %1479 : vector<2x4xf32>
    %cst_286 = arith.constant 1.000000e+00 : f32
    %1481 = vector.broadcast %cst_286 : f32 to vector<2x4xf32>
    %1482 = arith.subf %1481, %981 : vector<2x4xf32>
    %1483 = arith.mulf %981, %1482 : vector<2x4xf32>
    %1484 = arith.mulf %1483, %568 : vector<2x4xf32>
    %c0_287 = arith.constant 0 : index
    %c32_288 = arith.constant 32 : index
    %1485 = vector.load %arg2[%c0_287, %c32_288] : memref<2x60xf32, #tpu.memory_space<vmem>>, vector<2x4xf32>
    %1486 = arith.mulf %981, %1485 : vector<2x4xf32>
    %c0_289 = arith.constant 0 : index
    %c32_290 = arith.constant 32 : index
    %1487 = vector.load %arg1[%c0_289, %c32_290] : memref<2x60xf32, #tpu.memory_space<vmem>>, vector<2x4xf32>
    %1488 = arith.mulf %1487, %1484 : vector<2x4xf32>
    %1489 = arith.addf %1486, %1488 : vector<2x4xf32>
    %cst_291 = arith.constant dense<0.000000e+00> : vector<2x16xf32>
    %1490 = tpu.matmul %1462, %8, %cst_291 {dimension_numbers = #tpu.dot_dimension_numbers<[1], [0], [0], [1], [0, 0, 1, 1], [], []>} : vector<2x16xf32>, vector<16x16xf32>, vector<2x16xf32> -> vector<2x16xf32>
    %1491 = vector.broadcast %9 : vector<1x16xf32> to vector<2x16xf32>
    %1492 = arith.addf %1490, %1491 : vector<2x16xf32>
    %cst_292 = arith.constant 0.000000e+00 : f32
    %1493 = vector.broadcast %cst_292 : f32 to vector<2x16xf32>
    %1494 = arith.maximumf %1492, %1493 : vector<2x16xf32>
    %cst_293 = arith.constant dense<0.000000e+00> : vector<2x64xf32>
    %1495 = tpu.matmul %1494, %10, %cst_293 {dimension_numbers = #tpu.dot_dimension_numbers<[1], [0], [0], [1], [0, 0, 1, 1], [], []>} : vector<2x16xf32>, vector<16x64xf32>, vector<2x64xf32> -> vector<2x64xf32>
    %1496 = vector.broadcast %11 : vector<1x64xf32> to vector<2x64xf32>
    %1497 = arith.addf %1495, %1496 : vector<2x64xf32>
    %1498 = math.tanh %1497 : vector<2x64xf32>
    %1499 = vector.extract_strided_slice %1498 {offsets = [0, 0], sizes = [2, 16], strides = [1, 1]} : vector<2x64xf32> to vector<2x16xf32>
    %1500 = vector.extract_strided_slice %1471 {offsets = [0, 0], sizes = [2, 1], strides = [1, 1]} : vector<2x4xf32> to vector<2x1xf32>
    %1501 = vector.broadcast %1500 : vector<2x1xf32> to vector<2x16xf32>
    %1502 = arith.mulf %1499, %1501 : vector<2x16xf32>
    %1503 = vector.extract_strided_slice %1498 {offsets = [0, 16], sizes = [2, 16], strides = [1, 1]} : vector<2x64xf32> to vector<2x16xf32>
    %1504 = vector.extract_strided_slice %1471 {offsets = [0, 1], sizes = [2, 1], strides = [1, 1]} : vector<2x4xf32> to vector<2x1xf32>
    %1505 = vector.broadcast %1504 : vector<2x1xf32> to vector<2x16xf32>
    %1506 = arith.mulf %1503, %1505 : vector<2x16xf32>
    %1507 = arith.addf %1502, %1506 : vector<2x16xf32>
    %1508 = vector.extract_strided_slice %1498 {offsets = [0, 32], sizes = [2, 16], strides = [1, 1]} : vector<2x64xf32> to vector<2x16xf32>
    %1509 = vector.extract_strided_slice %1471 {offsets = [0, 2], sizes = [2, 1], strides = [1, 1]} : vector<2x4xf32> to vector<2x1xf32>
    %1510 = vector.broadcast %1509 : vector<2x1xf32> to vector<2x16xf32>
    %1511 = arith.mulf %1508, %1510 : vector<2x16xf32>
    %1512 = arith.addf %1507, %1511 : vector<2x16xf32>
    %1513 = vector.extract_strided_slice %1498 {offsets = [0, 48], sizes = [2, 16], strides = [1, 1]} : vector<2x64xf32> to vector<2x16xf32>
    %1514 = vector.extract_strided_slice %1471 {offsets = [0, 3], sizes = [2, 1], strides = [1, 1]} : vector<2x4xf32> to vector<2x1xf32>
    %1515 = vector.broadcast %1514 : vector<2x1xf32> to vector<2x16xf32>
    %1516 = arith.mulf %1513, %1515 : vector<2x16xf32>
    %1517 = arith.addf %1512, %1516 : vector<2x16xf32>
    %cst_294 = arith.constant 5.000000e-01 : f32
    %1518 = vector.broadcast %cst_294 : f32 to vector<2x16xf32>
    %1519 = arith.mulf %1518, %1517 : vector<2x16xf32>
    %1520 = arith.addf %1462, %1519 : vector<2x16xf32>
    %cst_295 = arith.constant dense<0.000000e+00> : vector<2x16xf32>
    %1521 = tpu.matmul %1520, %8, %cst_295 {dimension_numbers = #tpu.dot_dimension_numbers<[1], [0], [0], [1], [0, 0, 1, 1], [], []>} : vector<2x16xf32>, vector<16x16xf32>, vector<2x16xf32> -> vector<2x16xf32>
    %1522 = vector.broadcast %9 : vector<1x16xf32> to vector<2x16xf32>
    %1523 = arith.addf %1521, %1522 : vector<2x16xf32>
    %cst_296 = arith.constant 0.000000e+00 : f32
    %1524 = vector.broadcast %cst_296 : f32 to vector<2x16xf32>
    %1525 = arith.maximumf %1523, %1524 : vector<2x16xf32>
    %cst_297 = arith.constant dense<0.000000e+00> : vector<2x64xf32>
    %1526 = tpu.matmul %1525, %10, %cst_297 {dimension_numbers = #tpu.dot_dimension_numbers<[1], [0], [0], [1], [0, 0, 1, 1], [], []>} : vector<2x16xf32>, vector<16x64xf32>, vector<2x64xf32> -> vector<2x64xf32>
    %1527 = vector.broadcast %11 : vector<1x64xf32> to vector<2x64xf32>
    %1528 = arith.addf %1526, %1527 : vector<2x64xf32>
    %1529 = math.tanh %1528 : vector<2x64xf32>
    %1530 = vector.extract_strided_slice %1529 {offsets = [0, 0], sizes = [2, 16], strides = [1, 1]} : vector<2x64xf32> to vector<2x16xf32>
    %1531 = vector.extract_strided_slice %1480 {offsets = [0, 0], sizes = [2, 1], strides = [1, 1]} : vector<2x4xf32> to vector<2x1xf32>
    %1532 = vector.broadcast %1531 : vector<2x1xf32> to vector<2x16xf32>
    %1533 = arith.mulf %1530, %1532 : vector<2x16xf32>
    %1534 = vector.extract_strided_slice %1529 {offsets = [0, 16], sizes = [2, 16], strides = [1, 1]} : vector<2x64xf32> to vector<2x16xf32>
    %1535 = vector.extract_strided_slice %1480 {offsets = [0, 1], sizes = [2, 1], strides = [1, 1]} : vector<2x4xf32> to vector<2x1xf32>
    %1536 = vector.broadcast %1535 : vector<2x1xf32> to vector<2x16xf32>
    %1537 = arith.mulf %1534, %1536 : vector<2x16xf32>
    %1538 = arith.addf %1533, %1537 : vector<2x16xf32>
    %1539 = vector.extract_strided_slice %1529 {offsets = [0, 32], sizes = [2, 16], strides = [1, 1]} : vector<2x64xf32> to vector<2x16xf32>
    %1540 = vector.extract_strided_slice %1480 {offsets = [0, 2], sizes = [2, 1], strides = [1, 1]} : vector<2x4xf32> to vector<2x1xf32>
    %1541 = vector.broadcast %1540 : vector<2x1xf32> to vector<2x16xf32>
    %1542 = arith.mulf %1539, %1541 : vector<2x16xf32>
    %1543 = arith.addf %1538, %1542 : vector<2x16xf32>
    %1544 = vector.extract_strided_slice %1529 {offsets = [0, 48], sizes = [2, 16], strides = [1, 1]} : vector<2x64xf32> to vector<2x16xf32>
    %1545 = vector.extract_strided_slice %1480 {offsets = [0, 3], sizes = [2, 1], strides = [1, 1]} : vector<2x4xf32> to vector<2x1xf32>
    %1546 = vector.broadcast %1545 : vector<2x1xf32> to vector<2x16xf32>
    %1547 = arith.mulf %1544, %1546 : vector<2x16xf32>
    %1548 = arith.addf %1543, %1547 : vector<2x16xf32>
    %cst_298 = arith.constant 5.000000e-01 : f32
    %1549 = vector.broadcast %cst_298 : f32 to vector<2x16xf32>
    %1550 = arith.mulf %1549, %1548 : vector<2x16xf32>
    %1551 = arith.addf %1462, %1550 : vector<2x16xf32>
    %cst_299 = arith.constant dense<0.000000e+00> : vector<2x16xf32>
    %1552 = tpu.matmul %1551, %8, %cst_299 {dimension_numbers = #tpu.dot_dimension_numbers<[1], [0], [0], [1], [0, 0, 1, 1], [], []>} : vector<2x16xf32>, vector<16x16xf32>, vector<2x16xf32> -> vector<2x16xf32>
    %1553 = vector.broadcast %9 : vector<1x16xf32> to vector<2x16xf32>
    %1554 = arith.addf %1552, %1553 : vector<2x16xf32>
    %cst_300 = arith.constant 0.000000e+00 : f32
    %1555 = vector.broadcast %cst_300 : f32 to vector<2x16xf32>
    %1556 = arith.maximumf %1554, %1555 : vector<2x16xf32>
    %cst_301 = arith.constant dense<0.000000e+00> : vector<2x64xf32>
    %1557 = tpu.matmul %1556, %10, %cst_301 {dimension_numbers = #tpu.dot_dimension_numbers<[1], [0], [0], [1], [0, 0, 1, 1], [], []>} : vector<2x16xf32>, vector<16x64xf32>, vector<2x64xf32> -> vector<2x64xf32>
    %1558 = vector.broadcast %11 : vector<1x64xf32> to vector<2x64xf32>
    %1559 = arith.addf %1557, %1558 : vector<2x64xf32>
    %1560 = math.tanh %1559 : vector<2x64xf32>
    %1561 = vector.extract_strided_slice %1560 {offsets = [0, 0], sizes = [2, 16], strides = [1, 1]} : vector<2x64xf32> to vector<2x16xf32>
    %1562 = vector.extract_strided_slice %1480 {offsets = [0, 0], sizes = [2, 1], strides = [1, 1]} : vector<2x4xf32> to vector<2x1xf32>
    %1563 = vector.broadcast %1562 : vector<2x1xf32> to vector<2x16xf32>
    %1564 = arith.mulf %1561, %1563 : vector<2x16xf32>
    %1565 = vector.extract_strided_slice %1560 {offsets = [0, 16], sizes = [2, 16], strides = [1, 1]} : vector<2x64xf32> to vector<2x16xf32>
    %1566 = vector.extract_strided_slice %1480 {offsets = [0, 1], sizes = [2, 1], strides = [1, 1]} : vector<2x4xf32> to vector<2x1xf32>
    %1567 = vector.broadcast %1566 : vector<2x1xf32> to vector<2x16xf32>
    %1568 = arith.mulf %1565, %1567 : vector<2x16xf32>
    %1569 = arith.addf %1564, %1568 : vector<2x16xf32>
    %1570 = vector.extract_strided_slice %1560 {offsets = [0, 32], sizes = [2, 16], strides = [1, 1]} : vector<2x64xf32> to vector<2x16xf32>
    %1571 = vector.extract_strided_slice %1480 {offsets = [0, 2], sizes = [2, 1], strides = [1, 1]} : vector<2x4xf32> to vector<2x1xf32>
    %1572 = vector.broadcast %1571 : vector<2x1xf32> to vector<2x16xf32>
    %1573 = arith.mulf %1570, %1572 : vector<2x16xf32>
    %1574 = arith.addf %1569, %1573 : vector<2x16xf32>
    %1575 = vector.extract_strided_slice %1560 {offsets = [0, 48], sizes = [2, 16], strides = [1, 1]} : vector<2x64xf32> to vector<2x16xf32>
    %1576 = vector.extract_strided_slice %1480 {offsets = [0, 3], sizes = [2, 1], strides = [1, 1]} : vector<2x4xf32> to vector<2x1xf32>
    %1577 = vector.broadcast %1576 : vector<2x1xf32> to vector<2x16xf32>
    %1578 = arith.mulf %1575, %1577 : vector<2x16xf32>
    %1579 = arith.addf %1574, %1578 : vector<2x16xf32>
    %1580 = arith.addf %1462, %1579 : vector<2x16xf32>
    %cst_302 = arith.constant dense<0.000000e+00> : vector<2x16xf32>
    %1581 = tpu.matmul %1580, %8, %cst_302 {dimension_numbers = #tpu.dot_dimension_numbers<[1], [0], [0], [1], [0, 0, 1, 1], [], []>} : vector<2x16xf32>, vector<16x16xf32>, vector<2x16xf32> -> vector<2x16xf32>
    %1582 = vector.broadcast %9 : vector<1x16xf32> to vector<2x16xf32>
    %1583 = arith.addf %1581, %1582 : vector<2x16xf32>
    %cst_303 = arith.constant 0.000000e+00 : f32
    %1584 = vector.broadcast %cst_303 : f32 to vector<2x16xf32>
    %1585 = arith.maximumf %1583, %1584 : vector<2x16xf32>
    %cst_304 = arith.constant dense<0.000000e+00> : vector<2x64xf32>
    %1586 = tpu.matmul %1585, %10, %cst_304 {dimension_numbers = #tpu.dot_dimension_numbers<[1], [0], [0], [1], [0, 0, 1, 1], [], []>} : vector<2x16xf32>, vector<16x64xf32>, vector<2x64xf32> -> vector<2x64xf32>
    %1587 = vector.broadcast %11 : vector<1x64xf32> to vector<2x64xf32>
    %1588 = arith.addf %1586, %1587 : vector<2x64xf32>
    %1589 = math.tanh %1588 : vector<2x64xf32>
    %1590 = vector.extract_strided_slice %1589 {offsets = [0, 0], sizes = [2, 16], strides = [1, 1]} : vector<2x64xf32> to vector<2x16xf32>
    %1591 = vector.extract_strided_slice %1489 {offsets = [0, 0], sizes = [2, 1], strides = [1, 1]} : vector<2x4xf32> to vector<2x1xf32>
    %1592 = vector.broadcast %1591 : vector<2x1xf32> to vector<2x16xf32>
    %1593 = arith.mulf %1590, %1592 : vector<2x16xf32>
    %1594 = vector.extract_strided_slice %1589 {offsets = [0, 16], sizes = [2, 16], strides = [1, 1]} : vector<2x64xf32> to vector<2x16xf32>
    %1595 = vector.extract_strided_slice %1489 {offsets = [0, 1], sizes = [2, 1], strides = [1, 1]} : vector<2x4xf32> to vector<2x1xf32>
    %1596 = vector.broadcast %1595 : vector<2x1xf32> to vector<2x16xf32>
    %1597 = arith.mulf %1594, %1596 : vector<2x16xf32>
    %1598 = arith.addf %1593, %1597 : vector<2x16xf32>
    %1599 = vector.extract_strided_slice %1589 {offsets = [0, 32], sizes = [2, 16], strides = [1, 1]} : vector<2x64xf32> to vector<2x16xf32>
    %1600 = vector.extract_strided_slice %1489 {offsets = [0, 2], sizes = [2, 1], strides = [1, 1]} : vector<2x4xf32> to vector<2x1xf32>
    %1601 = vector.broadcast %1600 : vector<2x1xf32> to vector<2x16xf32>
    %1602 = arith.mulf %1599, %1601 : vector<2x16xf32>
    %1603 = arith.addf %1598, %1602 : vector<2x16xf32>
    %1604 = vector.extract_strided_slice %1589 {offsets = [0, 48], sizes = [2, 16], strides = [1, 1]} : vector<2x64xf32> to vector<2x16xf32>
    %1605 = vector.extract_strided_slice %1489 {offsets = [0, 3], sizes = [2, 1], strides = [1, 1]} : vector<2x4xf32> to vector<2x1xf32>
    %1606 = vector.broadcast %1605 : vector<2x1xf32> to vector<2x16xf32>
    %1607 = arith.mulf %1604, %1606 : vector<2x16xf32>
    %1608 = arith.addf %1603, %1607 : vector<2x16xf32>
    %1609 = arith.addf %1548, %1579 : vector<2x16xf32>
    %cst_305 = arith.constant 2.000000e+00 : f32
    %1610 = vector.broadcast %cst_305 : f32 to vector<2x16xf32>
    %1611 = arith.mulf %1610, %1609 : vector<2x16xf32>
    %1612 = arith.addf %1517, %1611 : vector<2x16xf32>
    %1613 = arith.addf %1612, %1608 : vector<2x16xf32>
    %cst_306 = arith.constant 0.166666672 : f32
    %1614 = vector.broadcast %cst_306 : f32 to vector<2x16xf32>
    %1615 = arith.mulf %1613, %1614 : vector<2x16xf32>
    %1616 = arith.addf %1462, %1615 : vector<2x16xf32>
    %cst_307 = arith.constant 1.000000e+00 : f32
    %1617 = vector.broadcast %cst_307 : f32 to vector<2x4xf32>
    %1618 = arith.subf %1617, %981 : vector<2x4xf32>
    %1619 = arith.mulf %981, %1618 : vector<2x4xf32>
    %1620 = arith.mulf %1619, %568 : vector<2x4xf32>
    %c0_308 = arith.constant 0 : index
    %c32_309 = arith.constant 32 : index
    %1621 = vector.load %arg2[%c0_308, %c32_309] : memref<2x60xf32, #tpu.memory_space<vmem>>, vector<2x4xf32>
    %1622 = arith.mulf %981, %1621 : vector<2x4xf32>
    %c0_310 = arith.constant 0 : index
    %c32_311 = arith.constant 32 : index
    %1623 = vector.load %arg1[%c0_310, %c32_311] : memref<2x60xf32, #tpu.memory_space<vmem>>, vector<2x4xf32>
    %1624 = arith.mulf %1623, %1620 : vector<2x4xf32>
    %1625 = arith.addf %1622, %1624 : vector<2x4xf32>
    %cst_312 = arith.constant 1.000000e+00 : f32
    %1626 = vector.broadcast %cst_312 : f32 to vector<2x4xf32>
    %1627 = arith.subf %1626, %981 : vector<2x4xf32>
    %1628 = arith.mulf %981, %1627 : vector<2x4xf32>
    %1629 = arith.mulf %1628, %568 : vector<2x4xf32>
    %c0_313 = arith.constant 0 : index
    %c36_314 = arith.constant 36 : index
    %1630 = vector.load %arg2[%c0_313, %c36_314] : memref<2x60xf32, #tpu.memory_space<vmem>>, vector<2x4xf32>
    %1631 = arith.mulf %981, %1630 : vector<2x4xf32>
    %c0_315 = arith.constant 0 : index
    %c36_316 = arith.constant 36 : index
    %1632 = vector.load %arg1[%c0_315, %c36_316] : memref<2x60xf32, #tpu.memory_space<vmem>>, vector<2x4xf32>
    %1633 = arith.mulf %1632, %1629 : vector<2x4xf32>
    %1634 = arith.addf %1631, %1633 : vector<2x4xf32>
    %cst_317 = arith.constant 1.000000e+00 : f32
    %1635 = vector.broadcast %cst_317 : f32 to vector<2x4xf32>
    %1636 = arith.subf %1635, %986 : vector<2x4xf32>
    %1637 = arith.mulf %986, %1636 : vector<2x4xf32>
    %1638 = arith.mulf %1637, %698 : vector<2x4xf32>
    %c0_318 = arith.constant 0 : index
    %c40_319 = arith.constant 40 : index
    %1639 = vector.load %arg2[%c0_318, %c40_319] : memref<2x60xf32, #tpu.memory_space<vmem>>, vector<2x4xf32>
    %1640 = arith.mulf %986, %1639 : vector<2x4xf32>
    %c0_320 = arith.constant 0 : index
    %c40_321 = arith.constant 40 : index
    %1641 = vector.load %arg1[%c0_320, %c40_321] : memref<2x60xf32, #tpu.memory_space<vmem>>, vector<2x4xf32>
    %1642 = arith.mulf %1641, %1638 : vector<2x4xf32>
    %1643 = arith.addf %1640, %1642 : vector<2x4xf32>
    %cst_322 = arith.constant dense<0.000000e+00> : vector<2x16xf32>
    %1644 = tpu.matmul %1616, %8, %cst_322 {dimension_numbers = #tpu.dot_dimension_numbers<[1], [0], [0], [1], [0, 0, 1, 1], [], []>} : vector<2x16xf32>, vector<16x16xf32>, vector<2x16xf32> -> vector<2x16xf32>
    %1645 = vector.broadcast %9 : vector<1x16xf32> to vector<2x16xf32>
    %1646 = arith.addf %1644, %1645 : vector<2x16xf32>
    %cst_323 = arith.constant 0.000000e+00 : f32
    %1647 = vector.broadcast %cst_323 : f32 to vector<2x16xf32>
    %1648 = arith.maximumf %1646, %1647 : vector<2x16xf32>
    %cst_324 = arith.constant dense<0.000000e+00> : vector<2x64xf32>
    %1649 = tpu.matmul %1648, %10, %cst_324 {dimension_numbers = #tpu.dot_dimension_numbers<[1], [0], [0], [1], [0, 0, 1, 1], [], []>} : vector<2x16xf32>, vector<16x64xf32>, vector<2x64xf32> -> vector<2x64xf32>
    %1650 = vector.broadcast %11 : vector<1x64xf32> to vector<2x64xf32>
    %1651 = arith.addf %1649, %1650 : vector<2x64xf32>
    %1652 = math.tanh %1651 : vector<2x64xf32>
    %1653 = vector.extract_strided_slice %1652 {offsets = [0, 0], sizes = [2, 16], strides = [1, 1]} : vector<2x64xf32> to vector<2x16xf32>
    %1654 = vector.extract_strided_slice %1625 {offsets = [0, 0], sizes = [2, 1], strides = [1, 1]} : vector<2x4xf32> to vector<2x1xf32>
    %1655 = vector.broadcast %1654 : vector<2x1xf32> to vector<2x16xf32>
    %1656 = arith.mulf %1653, %1655 : vector<2x16xf32>
    %1657 = vector.extract_strided_slice %1652 {offsets = [0, 16], sizes = [2, 16], strides = [1, 1]} : vector<2x64xf32> to vector<2x16xf32>
    %1658 = vector.extract_strided_slice %1625 {offsets = [0, 1], sizes = [2, 1], strides = [1, 1]} : vector<2x4xf32> to vector<2x1xf32>
    %1659 = vector.broadcast %1658 : vector<2x1xf32> to vector<2x16xf32>
    %1660 = arith.mulf %1657, %1659 : vector<2x16xf32>
    %1661 = arith.addf %1656, %1660 : vector<2x16xf32>
    %1662 = vector.extract_strided_slice %1652 {offsets = [0, 32], sizes = [2, 16], strides = [1, 1]} : vector<2x64xf32> to vector<2x16xf32>
    %1663 = vector.extract_strided_slice %1625 {offsets = [0, 2], sizes = [2, 1], strides = [1, 1]} : vector<2x4xf32> to vector<2x1xf32>
    %1664 = vector.broadcast %1663 : vector<2x1xf32> to vector<2x16xf32>
    %1665 = arith.mulf %1662, %1664 : vector<2x16xf32>
    %1666 = arith.addf %1661, %1665 : vector<2x16xf32>
    %1667 = vector.extract_strided_slice %1652 {offsets = [0, 48], sizes = [2, 16], strides = [1, 1]} : vector<2x64xf32> to vector<2x16xf32>
    %1668 = vector.extract_strided_slice %1625 {offsets = [0, 3], sizes = [2, 1], strides = [1, 1]} : vector<2x4xf32> to vector<2x1xf32>
    %1669 = vector.broadcast %1668 : vector<2x1xf32> to vector<2x16xf32>
    %1670 = arith.mulf %1667, %1669 : vector<2x16xf32>
    %1671 = arith.addf %1666, %1670 : vector<2x16xf32>
    %cst_325 = arith.constant 5.000000e-01 : f32
    %1672 = vector.broadcast %cst_325 : f32 to vector<2x16xf32>
    %1673 = arith.mulf %1672, %1671 : vector<2x16xf32>
    %1674 = arith.addf %1616, %1673 : vector<2x16xf32>
    %cst_326 = arith.constant dense<0.000000e+00> : vector<2x16xf32>
    %1675 = tpu.matmul %1674, %8, %cst_326 {dimension_numbers = #tpu.dot_dimension_numbers<[1], [0], [0], [1], [0, 0, 1, 1], [], []>} : vector<2x16xf32>, vector<16x16xf32>, vector<2x16xf32> -> vector<2x16xf32>
    %1676 = vector.broadcast %9 : vector<1x16xf32> to vector<2x16xf32>
    %1677 = arith.addf %1675, %1676 : vector<2x16xf32>
    %cst_327 = arith.constant 0.000000e+00 : f32
    %1678 = vector.broadcast %cst_327 : f32 to vector<2x16xf32>
    %1679 = arith.maximumf %1677, %1678 : vector<2x16xf32>
    %cst_328 = arith.constant dense<0.000000e+00> : vector<2x64xf32>
    %1680 = tpu.matmul %1679, %10, %cst_328 {dimension_numbers = #tpu.dot_dimension_numbers<[1], [0], [0], [1], [0, 0, 1, 1], [], []>} : vector<2x16xf32>, vector<16x64xf32>, vector<2x64xf32> -> vector<2x64xf32>
    %1681 = vector.broadcast %11 : vector<1x64xf32> to vector<2x64xf32>
    %1682 = arith.addf %1680, %1681 : vector<2x64xf32>
    %1683 = math.tanh %1682 : vector<2x64xf32>
    %1684 = vector.extract_strided_slice %1683 {offsets = [0, 0], sizes = [2, 16], strides = [1, 1]} : vector<2x64xf32> to vector<2x16xf32>
    %1685 = vector.extract_strided_slice %1634 {offsets = [0, 0], sizes = [2, 1], strides = [1, 1]} : vector<2x4xf32> to vector<2x1xf32>
    %1686 = vector.broadcast %1685 : vector<2x1xf32> to vector<2x16xf32>
    %1687 = arith.mulf %1684, %1686 : vector<2x16xf32>
    %1688 = vector.extract_strided_slice %1683 {offsets = [0, 16], sizes = [2, 16], strides = [1, 1]} : vector<2x64xf32> to vector<2x16xf32>
    %1689 = vector.extract_strided_slice %1634 {offsets = [0, 1], sizes = [2, 1], strides = [1, 1]} : vector<2x4xf32> to vector<2x1xf32>
    %1690 = vector.broadcast %1689 : vector<2x1xf32> to vector<2x16xf32>
    %1691 = arith.mulf %1688, %1690 : vector<2x16xf32>
    %1692 = arith.addf %1687, %1691 : vector<2x16xf32>
    %1693 = vector.extract_strided_slice %1683 {offsets = [0, 32], sizes = [2, 16], strides = [1, 1]} : vector<2x64xf32> to vector<2x16xf32>
    %1694 = vector.extract_strided_slice %1634 {offsets = [0, 2], sizes = [2, 1], strides = [1, 1]} : vector<2x4xf32> to vector<2x1xf32>
    %1695 = vector.broadcast %1694 : vector<2x1xf32> to vector<2x16xf32>
    %1696 = arith.mulf %1693, %1695 : vector<2x16xf32>
    %1697 = arith.addf %1692, %1696 : vector<2x16xf32>
    %1698 = vector.extract_strided_slice %1683 {offsets = [0, 48], sizes = [2, 16], strides = [1, 1]} : vector<2x64xf32> to vector<2x16xf32>
    %1699 = vector.extract_strided_slice %1634 {offsets = [0, 3], sizes = [2, 1], strides = [1, 1]} : vector<2x4xf32> to vector<2x1xf32>
    %1700 = vector.broadcast %1699 : vector<2x1xf32> to vector<2x16xf32>
    %1701 = arith.mulf %1698, %1700 : vector<2x16xf32>
    %1702 = arith.addf %1697, %1701 : vector<2x16xf32>
    %cst_329 = arith.constant 5.000000e-01 : f32
    %1703 = vector.broadcast %cst_329 : f32 to vector<2x16xf32>
    %1704 = arith.mulf %1703, %1702 : vector<2x16xf32>
    %1705 = arith.addf %1616, %1704 : vector<2x16xf32>
    %cst_330 = arith.constant dense<0.000000e+00> : vector<2x16xf32>
    %1706 = tpu.matmul %1705, %8, %cst_330 {dimension_numbers = #tpu.dot_dimension_numbers<[1], [0], [0], [1], [0, 0, 1, 1], [], []>} : vector<2x16xf32>, vector<16x16xf32>, vector<2x16xf32> -> vector<2x16xf32>
    %1707 = vector.broadcast %9 : vector<1x16xf32> to vector<2x16xf32>
    %1708 = arith.addf %1706, %1707 : vector<2x16xf32>
    %cst_331 = arith.constant 0.000000e+00 : f32
    %1709 = vector.broadcast %cst_331 : f32 to vector<2x16xf32>
    %1710 = arith.maximumf %1708, %1709 : vector<2x16xf32>
    %cst_332 = arith.constant dense<0.000000e+00> : vector<2x64xf32>
    %1711 = tpu.matmul %1710, %10, %cst_332 {dimension_numbers = #tpu.dot_dimension_numbers<[1], [0], [0], [1], [0, 0, 1, 1], [], []>} : vector<2x16xf32>, vector<16x64xf32>, vector<2x64xf32> -> vector<2x64xf32>
    %1712 = vector.broadcast %11 : vector<1x64xf32> to vector<2x64xf32>
    %1713 = arith.addf %1711, %1712 : vector<2x64xf32>
    %1714 = math.tanh %1713 : vector<2x64xf32>
    %1715 = vector.extract_strided_slice %1714 {offsets = [0, 0], sizes = [2, 16], strides = [1, 1]} : vector<2x64xf32> to vector<2x16xf32>
    %1716 = vector.extract_strided_slice %1634 {offsets = [0, 0], sizes = [2, 1], strides = [1, 1]} : vector<2x4xf32> to vector<2x1xf32>
    %1717 = vector.broadcast %1716 : vector<2x1xf32> to vector<2x16xf32>
    %1718 = arith.mulf %1715, %1717 : vector<2x16xf32>
    %1719 = vector.extract_strided_slice %1714 {offsets = [0, 16], sizes = [2, 16], strides = [1, 1]} : vector<2x64xf32> to vector<2x16xf32>
    %1720 = vector.extract_strided_slice %1634 {offsets = [0, 1], sizes = [2, 1], strides = [1, 1]} : vector<2x4xf32> to vector<2x1xf32>
    %1721 = vector.broadcast %1720 : vector<2x1xf32> to vector<2x16xf32>
    %1722 = arith.mulf %1719, %1721 : vector<2x16xf32>
    %1723 = arith.addf %1718, %1722 : vector<2x16xf32>
    %1724 = vector.extract_strided_slice %1714 {offsets = [0, 32], sizes = [2, 16], strides = [1, 1]} : vector<2x64xf32> to vector<2x16xf32>
    %1725 = vector.extract_strided_slice %1634 {offsets = [0, 2], sizes = [2, 1], strides = [1, 1]} : vector<2x4xf32> to vector<2x1xf32>
    %1726 = vector.broadcast %1725 : vector<2x1xf32> to vector<2x16xf32>
    %1727 = arith.mulf %1724, %1726 : vector<2x16xf32>
    %1728 = arith.addf %1723, %1727 : vector<2x16xf32>
    %1729 = vector.extract_strided_slice %1714 {offsets = [0, 48], sizes = [2, 16], strides = [1, 1]} : vector<2x64xf32> to vector<2x16xf32>
    %1730 = vector.extract_strided_slice %1634 {offsets = [0, 3], sizes = [2, 1], strides = [1, 1]} : vector<2x4xf32> to vector<2x1xf32>
    %1731 = vector.broadcast %1730 : vector<2x1xf32> to vector<2x16xf32>
    %1732 = arith.mulf %1729, %1731 : vector<2x16xf32>
    %1733 = arith.addf %1728, %1732 : vector<2x16xf32>
    %1734 = arith.addf %1616, %1733 : vector<2x16xf32>
    %cst_333 = arith.constant dense<0.000000e+00> : vector<2x16xf32>
    %1735 = tpu.matmul %1734, %8, %cst_333 {dimension_numbers = #tpu.dot_dimension_numbers<[1], [0], [0], [1], [0, 0, 1, 1], [], []>} : vector<2x16xf32>, vector<16x16xf32>, vector<2x16xf32> -> vector<2x16xf32>
    %1736 = vector.broadcast %9 : vector<1x16xf32> to vector<2x16xf32>
    %1737 = arith.addf %1735, %1736 : vector<2x16xf32>
    %cst_334 = arith.constant 0.000000e+00 : f32
    %1738 = vector.broadcast %cst_334 : f32 to vector<2x16xf32>
    %1739 = arith.maximumf %1737, %1738 : vector<2x16xf32>
    %cst_335 = arith.constant dense<0.000000e+00> : vector<2x64xf32>
    %1740 = tpu.matmul %1739, %10, %cst_335 {dimension_numbers = #tpu.dot_dimension_numbers<[1], [0], [0], [1], [0, 0, 1, 1], [], []>} : vector<2x16xf32>, vector<16x64xf32>, vector<2x64xf32> -> vector<2x64xf32>
    %1741 = vector.broadcast %11 : vector<1x64xf32> to vector<2x64xf32>
    %1742 = arith.addf %1740, %1741 : vector<2x64xf32>
    %1743 = math.tanh %1742 : vector<2x64xf32>
    %1744 = vector.extract_strided_slice %1743 {offsets = [0, 0], sizes = [2, 16], strides = [1, 1]} : vector<2x64xf32> to vector<2x16xf32>
    %1745 = vector.extract_strided_slice %1643 {offsets = [0, 0], sizes = [2, 1], strides = [1, 1]} : vector<2x4xf32> to vector<2x1xf32>
    %1746 = vector.broadcast %1745 : vector<2x1xf32> to vector<2x16xf32>
    %1747 = arith.mulf %1744, %1746 : vector<2x16xf32>
    %1748 = vector.extract_strided_slice %1743 {offsets = [0, 16], sizes = [2, 16], strides = [1, 1]} : vector<2x64xf32> to vector<2x16xf32>
    %1749 = vector.extract_strided_slice %1643 {offsets = [0, 1], sizes = [2, 1], strides = [1, 1]} : vector<2x4xf32> to vector<2x1xf32>
    %1750 = vector.broadcast %1749 : vector<2x1xf32> to vector<2x16xf32>
    %1751 = arith.mulf %1748, %1750 : vector<2x16xf32>
    %1752 = arith.addf %1747, %1751 : vector<2x16xf32>
    %1753 = vector.extract_strided_slice %1743 {offsets = [0, 32], sizes = [2, 16], strides = [1, 1]} : vector<2x64xf32> to vector<2x16xf32>
    %1754 = vector.extract_strided_slice %1643 {offsets = [0, 2], sizes = [2, 1], strides = [1, 1]} : vector<2x4xf32> to vector<2x1xf32>
    %1755 = vector.broadcast %1754 : vector<2x1xf32> to vector<2x16xf32>
    %1756 = arith.mulf %1753, %1755 : vector<2x16xf32>
    %1757 = arith.addf %1752, %1756 : vector<2x16xf32>
    %1758 = vector.extract_strided_slice %1743 {offsets = [0, 48], sizes = [2, 16], strides = [1, 1]} : vector<2x64xf32> to vector<2x16xf32>
    %1759 = vector.extract_strided_slice %1643 {offsets = [0, 3], sizes = [2, 1], strides = [1, 1]} : vector<2x4xf32> to vector<2x1xf32>
    %1760 = vector.broadcast %1759 : vector<2x1xf32> to vector<2x16xf32>
    %1761 = arith.mulf %1758, %1760 : vector<2x16xf32>
    %1762 = arith.addf %1757, %1761 : vector<2x16xf32>
    %1763 = arith.addf %1702, %1733 : vector<2x16xf32>
    %cst_336 = arith.constant 2.000000e+00 : f32
    %1764 = vector.broadcast %cst_336 : f32 to vector<2x16xf32>
    %1765 = arith.mulf %1764, %1763 : vector<2x16xf32>
    %1766 = arith.addf %1671, %1765 : vector<2x16xf32>
    %1767 = arith.addf %1766, %1762 : vector<2x16xf32>
    %cst_337 = arith.constant 0.166666672 : f32
    %1768 = vector.broadcast %cst_337 : f32 to vector<2x16xf32>
    %1769 = arith.mulf %1767, %1768 : vector<2x16xf32>
    %1770 = arith.addf %1616, %1769 : vector<2x16xf32>
    %cst_338 = arith.constant 1.000000e+00 : f32
    %1771 = vector.broadcast %cst_338 : f32 to vector<2x4xf32>
    %1772 = arith.subf %1771, %986 : vector<2x4xf32>
    %1773 = arith.mulf %986, %1772 : vector<2x4xf32>
    %1774 = arith.mulf %1773, %698 : vector<2x4xf32>
    %c0_339 = arith.constant 0 : index
    %c40_340 = arith.constant 40 : index
    %1775 = vector.load %arg2[%c0_339, %c40_340] : memref<2x60xf32, #tpu.memory_space<vmem>>, vector<2x4xf32>
    %1776 = arith.mulf %986, %1775 : vector<2x4xf32>
    %c0_341 = arith.constant 0 : index
    %c40_342 = arith.constant 40 : index
    %1777 = vector.load %arg1[%c0_341, %c40_342] : memref<2x60xf32, #tpu.memory_space<vmem>>, vector<2x4xf32>
    %1778 = arith.mulf %1777, %1774 : vector<2x4xf32>
    %1779 = arith.addf %1776, %1778 : vector<2x4xf32>
    %cst_343 = arith.constant 1.000000e+00 : f32
    %1780 = vector.broadcast %cst_343 : f32 to vector<2x4xf32>
    %1781 = arith.subf %1780, %986 : vector<2x4xf32>
    %1782 = arith.mulf %986, %1781 : vector<2x4xf32>
    %1783 = arith.mulf %1782, %698 : vector<2x4xf32>
    %c0_344 = arith.constant 0 : index
    %c44_345 = arith.constant 44 : index
    %1784 = vector.load %arg2[%c0_344, %c44_345] : memref<2x60xf32, #tpu.memory_space<vmem>>, vector<2x4xf32>
    %1785 = arith.mulf %986, %1784 : vector<2x4xf32>
    %c0_346 = arith.constant 0 : index
    %c44_347 = arith.constant 44 : index
    %1786 = vector.load %arg1[%c0_346, %c44_347] : memref<2x60xf32, #tpu.memory_space<vmem>>, vector<2x4xf32>
    %1787 = arith.mulf %1786, %1783 : vector<2x4xf32>
    %1788 = arith.addf %1785, %1787 : vector<2x4xf32>
    %cst_348 = arith.constant 1.000000e+00 : f32
    %1789 = vector.broadcast %cst_348 : f32 to vector<2x4xf32>
    %1790 = arith.subf %1789, %991 : vector<2x4xf32>
    %1791 = arith.mulf %991, %1790 : vector<2x4xf32>
    %1792 = arith.mulf %1791, %828 : vector<2x4xf32>
    %c0_349 = arith.constant 0 : index
    %c48_350 = arith.constant 48 : index
    %1793 = vector.load %arg2[%c0_349, %c48_350] : memref<2x60xf32, #tpu.memory_space<vmem>>, vector<2x4xf32>
    %1794 = arith.mulf %991, %1793 : vector<2x4xf32>
    %c0_351 = arith.constant 0 : index
    %c48_352 = arith.constant 48 : index
    %1795 = vector.load %arg1[%c0_351, %c48_352] : memref<2x60xf32, #tpu.memory_space<vmem>>, vector<2x4xf32>
    %1796 = arith.mulf %1795, %1792 : vector<2x4xf32>
    %1797 = arith.addf %1794, %1796 : vector<2x4xf32>
    %cst_353 = arith.constant dense<0.000000e+00> : vector<2x16xf32>
    %1798 = tpu.matmul %1770, %8, %cst_353 {dimension_numbers = #tpu.dot_dimension_numbers<[1], [0], [0], [1], [0, 0, 1, 1], [], []>} : vector<2x16xf32>, vector<16x16xf32>, vector<2x16xf32> -> vector<2x16xf32>
    %1799 = vector.broadcast %9 : vector<1x16xf32> to vector<2x16xf32>
    %1800 = arith.addf %1798, %1799 : vector<2x16xf32>
    %cst_354 = arith.constant 0.000000e+00 : f32
    %1801 = vector.broadcast %cst_354 : f32 to vector<2x16xf32>
    %1802 = arith.maximumf %1800, %1801 : vector<2x16xf32>
    %cst_355 = arith.constant dense<0.000000e+00> : vector<2x64xf32>
    %1803 = tpu.matmul %1802, %10, %cst_355 {dimension_numbers = #tpu.dot_dimension_numbers<[1], [0], [0], [1], [0, 0, 1, 1], [], []>} : vector<2x16xf32>, vector<16x64xf32>, vector<2x64xf32> -> vector<2x64xf32>
    %1804 = vector.broadcast %11 : vector<1x64xf32> to vector<2x64xf32>
    %1805 = arith.addf %1803, %1804 : vector<2x64xf32>
    %1806 = math.tanh %1805 : vector<2x64xf32>
    %1807 = vector.extract_strided_slice %1806 {offsets = [0, 0], sizes = [2, 16], strides = [1, 1]} : vector<2x64xf32> to vector<2x16xf32>
    %1808 = vector.extract_strided_slice %1779 {offsets = [0, 0], sizes = [2, 1], strides = [1, 1]} : vector<2x4xf32> to vector<2x1xf32>
    %1809 = vector.broadcast %1808 : vector<2x1xf32> to vector<2x16xf32>
    %1810 = arith.mulf %1807, %1809 : vector<2x16xf32>
    %1811 = vector.extract_strided_slice %1806 {offsets = [0, 16], sizes = [2, 16], strides = [1, 1]} : vector<2x64xf32> to vector<2x16xf32>
    %1812 = vector.extract_strided_slice %1779 {offsets = [0, 1], sizes = [2, 1], strides = [1, 1]} : vector<2x4xf32> to vector<2x1xf32>
    %1813 = vector.broadcast %1812 : vector<2x1xf32> to vector<2x16xf32>
    %1814 = arith.mulf %1811, %1813 : vector<2x16xf32>
    %1815 = arith.addf %1810, %1814 : vector<2x16xf32>
    %1816 = vector.extract_strided_slice %1806 {offsets = [0, 32], sizes = [2, 16], strides = [1, 1]} : vector<2x64xf32> to vector<2x16xf32>
    %1817 = vector.extract_strided_slice %1779 {offsets = [0, 2], sizes = [2, 1], strides = [1, 1]} : vector<2x4xf32> to vector<2x1xf32>
    %1818 = vector.broadcast %1817 : vector<2x1xf32> to vector<2x16xf32>
    %1819 = arith.mulf %1816, %1818 : vector<2x16xf32>
    %1820 = arith.addf %1815, %1819 : vector<2x16xf32>
    %1821 = vector.extract_strided_slice %1806 {offsets = [0, 48], sizes = [2, 16], strides = [1, 1]} : vector<2x64xf32> to vector<2x16xf32>
    %1822 = vector.extract_strided_slice %1779 {offsets = [0, 3], sizes = [2, 1], strides = [1, 1]} : vector<2x4xf32> to vector<2x1xf32>
    %1823 = vector.broadcast %1822 : vector<2x1xf32> to vector<2x16xf32>
    %1824 = arith.mulf %1821, %1823 : vector<2x16xf32>
    %1825 = arith.addf %1820, %1824 : vector<2x16xf32>
    %cst_356 = arith.constant 5.000000e-01 : f32
    %1826 = vector.broadcast %cst_356 : f32 to vector<2x16xf32>
    %1827 = arith.mulf %1826, %1825 : vector<2x16xf32>
    %1828 = arith.addf %1770, %1827 : vector<2x16xf32>
    %cst_357 = arith.constant dense<0.000000e+00> : vector<2x16xf32>
    %1829 = tpu.matmul %1828, %8, %cst_357 {dimension_numbers = #tpu.dot_dimension_numbers<[1], [0], [0], [1], [0, 0, 1, 1], [], []>} : vector<2x16xf32>, vector<16x16xf32>, vector<2x16xf32> -> vector<2x16xf32>
    %1830 = vector.broadcast %9 : vector<1x16xf32> to vector<2x16xf32>
    %1831 = arith.addf %1829, %1830 : vector<2x16xf32>
    %cst_358 = arith.constant 0.000000e+00 : f32
    %1832 = vector.broadcast %cst_358 : f32 to vector<2x16xf32>
    %1833 = arith.maximumf %1831, %1832 : vector<2x16xf32>
    %cst_359 = arith.constant dense<0.000000e+00> : vector<2x64xf32>
    %1834 = tpu.matmul %1833, %10, %cst_359 {dimension_numbers = #tpu.dot_dimension_numbers<[1], [0], [0], [1], [0, 0, 1, 1], [], []>} : vector<2x16xf32>, vector<16x64xf32>, vector<2x64xf32> -> vector<2x64xf32>
    %1835 = vector.broadcast %11 : vector<1x64xf32> to vector<2x64xf32>
    %1836 = arith.addf %1834, %1835 : vector<2x64xf32>
    %1837 = math.tanh %1836 : vector<2x64xf32>
    %1838 = vector.extract_strided_slice %1837 {offsets = [0, 0], sizes = [2, 16], strides = [1, 1]} : vector<2x64xf32> to vector<2x16xf32>
    %1839 = vector.extract_strided_slice %1788 {offsets = [0, 0], sizes = [2, 1], strides = [1, 1]} : vector<2x4xf32> to vector<2x1xf32>
    %1840 = vector.broadcast %1839 : vector<2x1xf32> to vector<2x16xf32>
    %1841 = arith.mulf %1838, %1840 : vector<2x16xf32>
    %1842 = vector.extract_strided_slice %1837 {offsets = [0, 16], sizes = [2, 16], strides = [1, 1]} : vector<2x64xf32> to vector<2x16xf32>
    %1843 = vector.extract_strided_slice %1788 {offsets = [0, 1], sizes = [2, 1], strides = [1, 1]} : vector<2x4xf32> to vector<2x1xf32>
    %1844 = vector.broadcast %1843 : vector<2x1xf32> to vector<2x16xf32>
    %1845 = arith.mulf %1842, %1844 : vector<2x16xf32>
    %1846 = arith.addf %1841, %1845 : vector<2x16xf32>
    %1847 = vector.extract_strided_slice %1837 {offsets = [0, 32], sizes = [2, 16], strides = [1, 1]} : vector<2x64xf32> to vector<2x16xf32>
    %1848 = vector.extract_strided_slice %1788 {offsets = [0, 2], sizes = [2, 1], strides = [1, 1]} : vector<2x4xf32> to vector<2x1xf32>
    %1849 = vector.broadcast %1848 : vector<2x1xf32> to vector<2x16xf32>
    %1850 = arith.mulf %1847, %1849 : vector<2x16xf32>
    %1851 = arith.addf %1846, %1850 : vector<2x16xf32>
    %1852 = vector.extract_strided_slice %1837 {offsets = [0, 48], sizes = [2, 16], strides = [1, 1]} : vector<2x64xf32> to vector<2x16xf32>
    %1853 = vector.extract_strided_slice %1788 {offsets = [0, 3], sizes = [2, 1], strides = [1, 1]} : vector<2x4xf32> to vector<2x1xf32>
    %1854 = vector.broadcast %1853 : vector<2x1xf32> to vector<2x16xf32>
    %1855 = arith.mulf %1852, %1854 : vector<2x16xf32>
    %1856 = arith.addf %1851, %1855 : vector<2x16xf32>
    %cst_360 = arith.constant 5.000000e-01 : f32
    %1857 = vector.broadcast %cst_360 : f32 to vector<2x16xf32>
    %1858 = arith.mulf %1857, %1856 : vector<2x16xf32>
    %1859 = arith.addf %1770, %1858 : vector<2x16xf32>
    %cst_361 = arith.constant dense<0.000000e+00> : vector<2x16xf32>
    %1860 = tpu.matmul %1859, %8, %cst_361 {dimension_numbers = #tpu.dot_dimension_numbers<[1], [0], [0], [1], [0, 0, 1, 1], [], []>} : vector<2x16xf32>, vector<16x16xf32>, vector<2x16xf32> -> vector<2x16xf32>
    %1861 = vector.broadcast %9 : vector<1x16xf32> to vector<2x16xf32>
    %1862 = arith.addf %1860, %1861 : vector<2x16xf32>
    %cst_362 = arith.constant 0.000000e+00 : f32
    %1863 = vector.broadcast %cst_362 : f32 to vector<2x16xf32>
    %1864 = arith.maximumf %1862, %1863 : vector<2x16xf32>
    %cst_363 = arith.constant dense<0.000000e+00> : vector<2x64xf32>
    %1865 = tpu.matmul %1864, %10, %cst_363 {dimension_numbers = #tpu.dot_dimension_numbers<[1], [0], [0], [1], [0, 0, 1, 1], [], []>} : vector<2x16xf32>, vector<16x64xf32>, vector<2x64xf32> -> vector<2x64xf32>
    %1866 = vector.broadcast %11 : vector<1x64xf32> to vector<2x64xf32>
    %1867 = arith.addf %1865, %1866 : vector<2x64xf32>
    %1868 = math.tanh %1867 : vector<2x64xf32>
    %1869 = vector.extract_strided_slice %1868 {offsets = [0, 0], sizes = [2, 16], strides = [1, 1]} : vector<2x64xf32> to vector<2x16xf32>
    %1870 = vector.extract_strided_slice %1788 {offsets = [0, 0], sizes = [2, 1], strides = [1, 1]} : vector<2x4xf32> to vector<2x1xf32>
    %1871 = vector.broadcast %1870 : vector<2x1xf32> to vector<2x16xf32>
    %1872 = arith.mulf %1869, %1871 : vector<2x16xf32>
    %1873 = vector.extract_strided_slice %1868 {offsets = [0, 16], sizes = [2, 16], strides = [1, 1]} : vector<2x64xf32> to vector<2x16xf32>
    %1874 = vector.extract_strided_slice %1788 {offsets = [0, 1], sizes = [2, 1], strides = [1, 1]} : vector<2x4xf32> to vector<2x1xf32>
    %1875 = vector.broadcast %1874 : vector<2x1xf32> to vector<2x16xf32>
    %1876 = arith.mulf %1873, %1875 : vector<2x16xf32>
    %1877 = arith.addf %1872, %1876 : vector<2x16xf32>
    %1878 = vector.extract_strided_slice %1868 {offsets = [0, 32], sizes = [2, 16], strides = [1, 1]} : vector<2x64xf32> to vector<2x16xf32>
    %1879 = vector.extract_strided_slice %1788 {offsets = [0, 2], sizes = [2, 1], strides = [1, 1]} : vector<2x4xf32> to vector<2x1xf32>
    %1880 = vector.broadcast %1879 : vector<2x1xf32> to vector<2x16xf32>
    %1881 = arith.mulf %1878, %1880 : vector<2x16xf32>
    %1882 = arith.addf %1877, %1881 : vector<2x16xf32>
    %1883 = vector.extract_strided_slice %1868 {offsets = [0, 48], sizes = [2, 16], strides = [1, 1]} : vector<2x64xf32> to vector<2x16xf32>
    %1884 = vector.extract_strided_slice %1788 {offsets = [0, 3], sizes = [2, 1], strides = [1, 1]} : vector<2x4xf32> to vector<2x1xf32>
    %1885 = vector.broadcast %1884 : vector<2x1xf32> to vector<2x16xf32>
    %1886 = arith.mulf %1883, %1885 : vector<2x16xf32>
    %1887 = arith.addf %1882, %1886 : vector<2x16xf32>
    %1888 = arith.addf %1770, %1887 : vector<2x16xf32>
    %cst_364 = arith.constant dense<0.000000e+00> : vector<2x16xf32>
    %1889 = tpu.matmul %1888, %8, %cst_364 {dimension_numbers = #tpu.dot_dimension_numbers<[1], [0], [0], [1], [0, 0, 1, 1], [], []>} : vector<2x16xf32>, vector<16x16xf32>, vector<2x16xf32> -> vector<2x16xf32>
    %1890 = vector.broadcast %9 : vector<1x16xf32> to vector<2x16xf32>
    %1891 = arith.addf %1889, %1890 : vector<2x16xf32>
    %cst_365 = arith.constant 0.000000e+00 : f32
    %1892 = vector.broadcast %cst_365 : f32 to vector<2x16xf32>
    %1893 = arith.maximumf %1891, %1892 : vector<2x16xf32>
    %cst_366 = arith.constant dense<0.000000e+00> : vector<2x64xf32>
    %1894 = tpu.matmul %1893, %10, %cst_366 {dimension_numbers = #tpu.dot_dimension_numbers<[1], [0], [0], [1], [0, 0, 1, 1], [], []>} : vector<2x16xf32>, vector<16x64xf32>, vector<2x64xf32> -> vector<2x64xf32>
    %1895 = vector.broadcast %11 : vector<1x64xf32> to vector<2x64xf32>
    %1896 = arith.addf %1894, %1895 : vector<2x64xf32>
    %1897 = math.tanh %1896 : vector<2x64xf32>
    %1898 = vector.extract_strided_slice %1897 {offsets = [0, 0], sizes = [2, 16], strides = [1, 1]} : vector<2x64xf32> to vector<2x16xf32>
    %1899 = vector.extract_strided_slice %1797 {offsets = [0, 0], sizes = [2, 1], strides = [1, 1]} : vector<2x4xf32> to vector<2x1xf32>
    %1900 = vector.broadcast %1899 : vector<2x1xf32> to vector<2x16xf32>
    %1901 = arith.mulf %1898, %1900 : vector<2x16xf32>
    %1902 = vector.extract_strided_slice %1897 {offsets = [0, 16], sizes = [2, 16], strides = [1, 1]} : vector<2x64xf32> to vector<2x16xf32>
    %1903 = vector.extract_strided_slice %1797 {offsets = [0, 1], sizes = [2, 1], strides = [1, 1]} : vector<2x4xf32> to vector<2x1xf32>
    %1904 = vector.broadcast %1903 : vector<2x1xf32> to vector<2x16xf32>
    %1905 = arith.mulf %1902, %1904 : vector<2x16xf32>
    %1906 = arith.addf %1901, %1905 : vector<2x16xf32>
    %1907 = vector.extract_strided_slice %1897 {offsets = [0, 32], sizes = [2, 16], strides = [1, 1]} : vector<2x64xf32> to vector<2x16xf32>
    %1908 = vector.extract_strided_slice %1797 {offsets = [0, 2], sizes = [2, 1], strides = [1, 1]} : vector<2x4xf32> to vector<2x1xf32>
    %1909 = vector.broadcast %1908 : vector<2x1xf32> to vector<2x16xf32>
    %1910 = arith.mulf %1907, %1909 : vector<2x16xf32>
    %1911 = arith.addf %1906, %1910 : vector<2x16xf32>
    %1912 = vector.extract_strided_slice %1897 {offsets = [0, 48], sizes = [2, 16], strides = [1, 1]} : vector<2x64xf32> to vector<2x16xf32>
    %1913 = vector.extract_strided_slice %1797 {offsets = [0, 3], sizes = [2, 1], strides = [1, 1]} : vector<2x4xf32> to vector<2x1xf32>
    %1914 = vector.broadcast %1913 : vector<2x1xf32> to vector<2x16xf32>
    %1915 = arith.mulf %1912, %1914 : vector<2x16xf32>
    %1916 = arith.addf %1911, %1915 : vector<2x16xf32>
    %1917 = arith.addf %1856, %1887 : vector<2x16xf32>
    %cst_367 = arith.constant 2.000000e+00 : f32
    %1918 = vector.broadcast %cst_367 : f32 to vector<2x16xf32>
    %1919 = arith.mulf %1918, %1917 : vector<2x16xf32>
    %1920 = arith.addf %1825, %1919 : vector<2x16xf32>
    %1921 = arith.addf %1920, %1916 : vector<2x16xf32>
    %cst_368 = arith.constant 0.166666672 : f32
    %1922 = vector.broadcast %cst_368 : f32 to vector<2x16xf32>
    %1923 = arith.mulf %1921, %1922 : vector<2x16xf32>
    %1924 = arith.addf %1770, %1923 : vector<2x16xf32>
    %cst_369 = arith.constant 1.000000e+00 : f32
    %1925 = vector.broadcast %cst_369 : f32 to vector<2x4xf32>
    %1926 = arith.subf %1925, %991 : vector<2x4xf32>
    %1927 = arith.mulf %991, %1926 : vector<2x4xf32>
    %1928 = arith.mulf %1927, %828 : vector<2x4xf32>
    %c0_370 = arith.constant 0 : index
    %c48_371 = arith.constant 48 : index
    %1929 = vector.load %arg2[%c0_370, %c48_371] : memref<2x60xf32, #tpu.memory_space<vmem>>, vector<2x4xf32>
    %1930 = arith.mulf %991, %1929 : vector<2x4xf32>
    %c0_372 = arith.constant 0 : index
    %c48_373 = arith.constant 48 : index
    %1931 = vector.load %arg1[%c0_372, %c48_373] : memref<2x60xf32, #tpu.memory_space<vmem>>, vector<2x4xf32>
    %1932 = arith.mulf %1931, %1928 : vector<2x4xf32>
    %1933 = arith.addf %1930, %1932 : vector<2x4xf32>
    %cst_374 = arith.constant 1.000000e+00 : f32
    %1934 = vector.broadcast %cst_374 : f32 to vector<2x4xf32>
    %1935 = arith.subf %1934, %991 : vector<2x4xf32>
    %1936 = arith.mulf %991, %1935 : vector<2x4xf32>
    %1937 = arith.mulf %1936, %828 : vector<2x4xf32>
    %c0_375 = arith.constant 0 : index
    %c52_376 = arith.constant 52 : index
    %1938 = vector.load %arg2[%c0_375, %c52_376] : memref<2x60xf32, #tpu.memory_space<vmem>>, vector<2x4xf32>
    %1939 = arith.mulf %991, %1938 : vector<2x4xf32>
    %c0_377 = arith.constant 0 : index
    %c52_378 = arith.constant 52 : index
    %1940 = vector.load %arg1[%c0_377, %c52_378] : memref<2x60xf32, #tpu.memory_space<vmem>>, vector<2x4xf32>
    %1941 = arith.mulf %1940, %1937 : vector<2x4xf32>
    %1942 = arith.addf %1939, %1941 : vector<2x4xf32>
    %cst_379 = arith.constant 1.000000e+00 : f32
    %1943 = vector.broadcast %cst_379 : f32 to vector<2x4xf32>
    %1944 = arith.subf %1943, %996 : vector<2x4xf32>
    %1945 = arith.mulf %996, %1944 : vector<2x4xf32>
    %1946 = arith.mulf %1945, %956 : vector<2x4xf32>
    %c0_380 = arith.constant 0 : index
    %c56_381 = arith.constant 56 : index
    %1947 = vector.load %arg2[%c0_380, %c56_381] : memref<2x60xf32, #tpu.memory_space<vmem>>, vector<2x4xf32>
    %1948 = arith.mulf %996, %1947 : vector<2x4xf32>
    %c0_382 = arith.constant 0 : index
    %c56_383 = arith.constant 56 : index
    %1949 = vector.load %arg1[%c0_382, %c56_383] : memref<2x60xf32, #tpu.memory_space<vmem>>, vector<2x4xf32>
    %1950 = arith.mulf %1949, %1946 : vector<2x4xf32>
    %1951 = arith.addf %1948, %1950 : vector<2x4xf32>
    %cst_384 = arith.constant dense<0.000000e+00> : vector<2x16xf32>
    %1952 = tpu.matmul %1924, %8, %cst_384 {dimension_numbers = #tpu.dot_dimension_numbers<[1], [0], [0], [1], [0, 0, 1, 1], [], []>} : vector<2x16xf32>, vector<16x16xf32>, vector<2x16xf32> -> vector<2x16xf32>
    %1953 = vector.broadcast %9 : vector<1x16xf32> to vector<2x16xf32>
    %1954 = arith.addf %1952, %1953 : vector<2x16xf32>
    %cst_385 = arith.constant 0.000000e+00 : f32
    %1955 = vector.broadcast %cst_385 : f32 to vector<2x16xf32>
    %1956 = arith.maximumf %1954, %1955 : vector<2x16xf32>
    %cst_386 = arith.constant dense<0.000000e+00> : vector<2x64xf32>
    %1957 = tpu.matmul %1956, %10, %cst_386 {dimension_numbers = #tpu.dot_dimension_numbers<[1], [0], [0], [1], [0, 0, 1, 1], [], []>} : vector<2x16xf32>, vector<16x64xf32>, vector<2x64xf32> -> vector<2x64xf32>
    %1958 = vector.broadcast %11 : vector<1x64xf32> to vector<2x64xf32>
    %1959 = arith.addf %1957, %1958 : vector<2x64xf32>
    %1960 = math.tanh %1959 : vector<2x64xf32>
    %1961 = vector.extract_strided_slice %1960 {offsets = [0, 0], sizes = [2, 16], strides = [1, 1]} : vector<2x64xf32> to vector<2x16xf32>
    %1962 = vector.extract_strided_slice %1933 {offsets = [0, 0], sizes = [2, 1], strides = [1, 1]} : vector<2x4xf32> to vector<2x1xf32>
    %1963 = vector.broadcast %1962 : vector<2x1xf32> to vector<2x16xf32>
    %1964 = arith.mulf %1961, %1963 : vector<2x16xf32>
    %1965 = vector.extract_strided_slice %1960 {offsets = [0, 16], sizes = [2, 16], strides = [1, 1]} : vector<2x64xf32> to vector<2x16xf32>
    %1966 = vector.extract_strided_slice %1933 {offsets = [0, 1], sizes = [2, 1], strides = [1, 1]} : vector<2x4xf32> to vector<2x1xf32>
    %1967 = vector.broadcast %1966 : vector<2x1xf32> to vector<2x16xf32>
    %1968 = arith.mulf %1965, %1967 : vector<2x16xf32>
    %1969 = arith.addf %1964, %1968 : vector<2x16xf32>
    %1970 = vector.extract_strided_slice %1960 {offsets = [0, 32], sizes = [2, 16], strides = [1, 1]} : vector<2x64xf32> to vector<2x16xf32>
    %1971 = vector.extract_strided_slice %1933 {offsets = [0, 2], sizes = [2, 1], strides = [1, 1]} : vector<2x4xf32> to vector<2x1xf32>
    %1972 = vector.broadcast %1971 : vector<2x1xf32> to vector<2x16xf32>
    %1973 = arith.mulf %1970, %1972 : vector<2x16xf32>
    %1974 = arith.addf %1969, %1973 : vector<2x16xf32>
    %1975 = vector.extract_strided_slice %1960 {offsets = [0, 48], sizes = [2, 16], strides = [1, 1]} : vector<2x64xf32> to vector<2x16xf32>
    %1976 = vector.extract_strided_slice %1933 {offsets = [0, 3], sizes = [2, 1], strides = [1, 1]} : vector<2x4xf32> to vector<2x1xf32>
    %1977 = vector.broadcast %1976 : vector<2x1xf32> to vector<2x16xf32>
    %1978 = arith.mulf %1975, %1977 : vector<2x16xf32>
    %1979 = arith.addf %1974, %1978 : vector<2x16xf32>
    %cst_387 = arith.constant 5.000000e-01 : f32
    %1980 = vector.broadcast %cst_387 : f32 to vector<2x16xf32>
    %1981 = arith.mulf %1980, %1979 : vector<2x16xf32>
    %1982 = arith.addf %1924, %1981 : vector<2x16xf32>
    %cst_388 = arith.constant dense<0.000000e+00> : vector<2x16xf32>
    %1983 = tpu.matmul %1982, %8, %cst_388 {dimension_numbers = #tpu.dot_dimension_numbers<[1], [0], [0], [1], [0, 0, 1, 1], [], []>} : vector<2x16xf32>, vector<16x16xf32>, vector<2x16xf32> -> vector<2x16xf32>
    %1984 = vector.broadcast %9 : vector<1x16xf32> to vector<2x16xf32>
    %1985 = arith.addf %1983, %1984 : vector<2x16xf32>
    %cst_389 = arith.constant 0.000000e+00 : f32
    %1986 = vector.broadcast %cst_389 : f32 to vector<2x16xf32>
    %1987 = arith.maximumf %1985, %1986 : vector<2x16xf32>
    %cst_390 = arith.constant dense<0.000000e+00> : vector<2x64xf32>
    %1988 = tpu.matmul %1987, %10, %cst_390 {dimension_numbers = #tpu.dot_dimension_numbers<[1], [0], [0], [1], [0, 0, 1, 1], [], []>} : vector<2x16xf32>, vector<16x64xf32>, vector<2x64xf32> -> vector<2x64xf32>
    %1989 = vector.broadcast %11 : vector<1x64xf32> to vector<2x64xf32>
    %1990 = arith.addf %1988, %1989 : vector<2x64xf32>
    %1991 = math.tanh %1990 : vector<2x64xf32>
    %1992 = vector.extract_strided_slice %1991 {offsets = [0, 0], sizes = [2, 16], strides = [1, 1]} : vector<2x64xf32> to vector<2x16xf32>
    %1993 = vector.extract_strided_slice %1942 {offsets = [0, 0], sizes = [2, 1], strides = [1, 1]} : vector<2x4xf32> to vector<2x1xf32>
    %1994 = vector.broadcast %1993 : vector<2x1xf32> to vector<2x16xf32>
    %1995 = arith.mulf %1992, %1994 : vector<2x16xf32>
    %1996 = vector.extract_strided_slice %1991 {offsets = [0, 16], sizes = [2, 16], strides = [1, 1]} : vector<2x64xf32> to vector<2x16xf32>
    %1997 = vector.extract_strided_slice %1942 {offsets = [0, 1], sizes = [2, 1], strides = [1, 1]} : vector<2x4xf32> to vector<2x1xf32>
    %1998 = vector.broadcast %1997 : vector<2x1xf32> to vector<2x16xf32>
    %1999 = arith.mulf %1996, %1998 : vector<2x16xf32>
    %2000 = arith.addf %1995, %1999 : vector<2x16xf32>
    %2001 = vector.extract_strided_slice %1991 {offsets = [0, 32], sizes = [2, 16], strides = [1, 1]} : vector<2x64xf32> to vector<2x16xf32>
    %2002 = vector.extract_strided_slice %1942 {offsets = [0, 2], sizes = [2, 1], strides = [1, 1]} : vector<2x4xf32> to vector<2x1xf32>
    %2003 = vector.broadcast %2002 : vector<2x1xf32> to vector<2x16xf32>
    %2004 = arith.mulf %2001, %2003 : vector<2x16xf32>
    %2005 = arith.addf %2000, %2004 : vector<2x16xf32>
    %2006 = vector.extract_strided_slice %1991 {offsets = [0, 48], sizes = [2, 16], strides = [1, 1]} : vector<2x64xf32> to vector<2x16xf32>
    %2007 = vector.extract_strided_slice %1942 {offsets = [0, 3], sizes = [2, 1], strides = [1, 1]} : vector<2x4xf32> to vector<2x1xf32>
    %2008 = vector.broadcast %2007 : vector<2x1xf32> to vector<2x16xf32>
    %2009 = arith.mulf %2006, %2008 : vector<2x16xf32>
    %2010 = arith.addf %2005, %2009 : vector<2x16xf32>
    %cst_391 = arith.constant 5.000000e-01 : f32
    %2011 = vector.broadcast %cst_391 : f32 to vector<2x16xf32>
    %2012 = arith.mulf %2011, %2010 : vector<2x16xf32>
    %2013 = arith.addf %1924, %2012 : vector<2x16xf32>
    %cst_392 = arith.constant dense<0.000000e+00> : vector<2x16xf32>
    %2014 = tpu.matmul %2013, %8, %cst_392 {dimension_numbers = #tpu.dot_dimension_numbers<[1], [0], [0], [1], [0, 0, 1, 1], [], []>} : vector<2x16xf32>, vector<16x16xf32>, vector<2x16xf32> -> vector<2x16xf32>
    %2015 = vector.broadcast %9 : vector<1x16xf32> to vector<2x16xf32>
    %2016 = arith.addf %2014, %2015 : vector<2x16xf32>
    %cst_393 = arith.constant 0.000000e+00 : f32
    %2017 = vector.broadcast %cst_393 : f32 to vector<2x16xf32>
    %2018 = arith.maximumf %2016, %2017 : vector<2x16xf32>
    %cst_394 = arith.constant dense<0.000000e+00> : vector<2x64xf32>
    %2019 = tpu.matmul %2018, %10, %cst_394 {dimension_numbers = #tpu.dot_dimension_numbers<[1], [0], [0], [1], [0, 0, 1, 1], [], []>} : vector<2x16xf32>, vector<16x64xf32>, vector<2x64xf32> -> vector<2x64xf32>
    %2020 = vector.broadcast %11 : vector<1x64xf32> to vector<2x64xf32>
    %2021 = arith.addf %2019, %2020 : vector<2x64xf32>
    %2022 = math.tanh %2021 : vector<2x64xf32>
    %2023 = vector.extract_strided_slice %2022 {offsets = [0, 0], sizes = [2, 16], strides = [1, 1]} : vector<2x64xf32> to vector<2x16xf32>
    %2024 = vector.extract_strided_slice %1942 {offsets = [0, 0], sizes = [2, 1], strides = [1, 1]} : vector<2x4xf32> to vector<2x1xf32>
    %2025 = vector.broadcast %2024 : vector<2x1xf32> to vector<2x16xf32>
    %2026 = arith.mulf %2023, %2025 : vector<2x16xf32>
    %2027 = vector.extract_strided_slice %2022 {offsets = [0, 16], sizes = [2, 16], strides = [1, 1]} : vector<2x64xf32> to vector<2x16xf32>
    %2028 = vector.extract_strided_slice %1942 {offsets = [0, 1], sizes = [2, 1], strides = [1, 1]} : vector<2x4xf32> to vector<2x1xf32>
    %2029 = vector.broadcast %2028 : vector<2x1xf32> to vector<2x16xf32>
    %2030 = arith.mulf %2027, %2029 : vector<2x16xf32>
    %2031 = arith.addf %2026, %2030 : vector<2x16xf32>
    %2032 = vector.extract_strided_slice %2022 {offsets = [0, 32], sizes = [2, 16], strides = [1, 1]} : vector<2x64xf32> to vector<2x16xf32>
    %2033 = vector.extract_strided_slice %1942 {offsets = [0, 2], sizes = [2, 1], strides = [1, 1]} : vector<2x4xf32> to vector<2x1xf32>
    %2034 = vector.broadcast %2033 : vector<2x1xf32> to vector<2x16xf32>
    %2035 = arith.mulf %2032, %2034 : vector<2x16xf32>
    %2036 = arith.addf %2031, %2035 : vector<2x16xf32>
    %2037 = vector.extract_strided_slice %2022 {offsets = [0, 48], sizes = [2, 16], strides = [1, 1]} : vector<2x64xf32> to vector<2x16xf32>
    %2038 = vector.extract_strided_slice %1942 {offsets = [0, 3], sizes = [2, 1], strides = [1, 1]} : vector<2x4xf32> to vector<2x1xf32>
    %2039 = vector.broadcast %2038 : vector<2x1xf32> to vector<2x16xf32>
    %2040 = arith.mulf %2037, %2039 : vector<2x16xf32>
    %2041 = arith.addf %2036, %2040 : vector<2x16xf32>
    %2042 = arith.addf %1924, %2041 : vector<2x16xf32>
    %cst_395 = arith.constant dense<0.000000e+00> : vector<2x16xf32>
    %2043 = tpu.matmul %2042, %8, %cst_395 {dimension_numbers = #tpu.dot_dimension_numbers<[1], [0], [0], [1], [0, 0, 1, 1], [], []>} : vector<2x16xf32>, vector<16x16xf32>, vector<2x16xf32> -> vector<2x16xf32>
    %2044 = vector.broadcast %9 : vector<1x16xf32> to vector<2x16xf32>
    %2045 = arith.addf %2043, %2044 : vector<2x16xf32>
    %cst_396 = arith.constant 0.000000e+00 : f32
    %2046 = vector.broadcast %cst_396 : f32 to vector<2x16xf32>
    %2047 = arith.maximumf %2045, %2046 : vector<2x16xf32>
    %cst_397 = arith.constant dense<0.000000e+00> : vector<2x64xf32>
    %2048 = tpu.matmul %2047, %10, %cst_397 {dimension_numbers = #tpu.dot_dimension_numbers<[1], [0], [0], [1], [0, 0, 1, 1], [], []>} : vector<2x16xf32>, vector<16x64xf32>, vector<2x64xf32> -> vector<2x64xf32>
    %2049 = vector.broadcast %11 : vector<1x64xf32> to vector<2x64xf32>
    %2050 = arith.addf %2048, %2049 : vector<2x64xf32>
    %2051 = math.tanh %2050 : vector<2x64xf32>
    %2052 = vector.extract_strided_slice %2051 {offsets = [0, 0], sizes = [2, 16], strides = [1, 1]} : vector<2x64xf32> to vector<2x16xf32>
    %2053 = vector.extract_strided_slice %1951 {offsets = [0, 0], sizes = [2, 1], strides = [1, 1]} : vector<2x4xf32> to vector<2x1xf32>
    %2054 = vector.broadcast %2053 : vector<2x1xf32> to vector<2x16xf32>
    %2055 = arith.mulf %2052, %2054 : vector<2x16xf32>
    %2056 = vector.extract_strided_slice %2051 {offsets = [0, 16], sizes = [2, 16], strides = [1, 1]} : vector<2x64xf32> to vector<2x16xf32>
    %2057 = vector.extract_strided_slice %1951 {offsets = [0, 1], sizes = [2, 1], strides = [1, 1]} : vector<2x4xf32> to vector<2x1xf32>
    %2058 = vector.broadcast %2057 : vector<2x1xf32> to vector<2x16xf32>
    %2059 = arith.mulf %2056, %2058 : vector<2x16xf32>
    %2060 = arith.addf %2055, %2059 : vector<2x16xf32>
    %2061 = vector.extract_strided_slice %2051 {offsets = [0, 32], sizes = [2, 16], strides = [1, 1]} : vector<2x64xf32> to vector<2x16xf32>
    %2062 = vector.extract_strided_slice %1951 {offsets = [0, 2], sizes = [2, 1], strides = [1, 1]} : vector<2x4xf32> to vector<2x1xf32>
    %2063 = vector.broadcast %2062 : vector<2x1xf32> to vector<2x16xf32>
    %2064 = arith.mulf %2061, %2063 : vector<2x16xf32>
    %2065 = arith.addf %2060, %2064 : vector<2x16xf32>
    %2066 = vector.extract_strided_slice %2051 {offsets = [0, 48], sizes = [2, 16], strides = [1, 1]} : vector<2x64xf32> to vector<2x16xf32>
    %2067 = vector.extract_strided_slice %1951 {offsets = [0, 3], sizes = [2, 1], strides = [1, 1]} : vector<2x4xf32> to vector<2x1xf32>
    %2068 = vector.broadcast %2067 : vector<2x1xf32> to vector<2x16xf32>
    %2069 = arith.mulf %2066, %2068 : vector<2x16xf32>
    %2070 = arith.addf %2065, %2069 : vector<2x16xf32>
    %2071 = arith.addf %2010, %2041 : vector<2x16xf32>
    %cst_398 = arith.constant 2.000000e+00 : f32
    %2072 = vector.broadcast %cst_398 : f32 to vector<2x16xf32>
    %2073 = arith.mulf %2072, %2071 : vector<2x16xf32>
    %2074 = arith.addf %1979, %2073 : vector<2x16xf32>
    %2075 = arith.addf %2074, %2070 : vector<2x16xf32>
    %cst_399 = arith.constant 0.166666672 : f32
    %2076 = vector.broadcast %cst_399 : f32 to vector<2x16xf32>
    %2077 = arith.mulf %2075, %2076 : vector<2x16xf32>
    %2078 = arith.addf %1924, %2077 : vector<2x16xf32>
    %cst_400 = arith.constant dense<0.000000e+00> : vector<2x4xf32>
    %2079 = tpu.matmul %1616, %12, %cst_400 {dimension_numbers = #tpu.dot_dimension_numbers<[1], [0], [0], [1], [0, 0, 1, 1], [], []>} : vector<2x16xf32>, vector<16x4xf32>, vector<2x4xf32> -> vector<2x4xf32>
    %2080 = vector.broadcast %13 : vector<1x4xf32> to vector<2x4xf32>
    %2081 = arith.addf %2079, %2080 : vector<2x4xf32>
    %cst_401 = arith.constant dense<0.000000e+00> : vector<2x4xf32>
    %2082 = tpu.matmul %1770, %12, %cst_401 {dimension_numbers = #tpu.dot_dimension_numbers<[1], [0], [0], [1], [0, 0, 1, 1], [], []>} : vector<2x16xf32>, vector<16x4xf32>, vector<2x4xf32> -> vector<2x4xf32>
    %2083 = vector.broadcast %13 : vector<1x4xf32> to vector<2x4xf32>
    %2084 = arith.addf %2082, %2083 : vector<2x4xf32>
    %cst_402 = arith.constant dense<0.000000e+00> : vector<2x4xf32>
    %2085 = tpu.matmul %1924, %12, %cst_402 {dimension_numbers = #tpu.dot_dimension_numbers<[1], [0], [0], [1], [0, 0, 1, 1], [], []>} : vector<2x16xf32>, vector<16x4xf32>, vector<2x4xf32> -> vector<2x4xf32>
    %2086 = vector.broadcast %13 : vector<1x4xf32> to vector<2x4xf32>
    %2087 = arith.addf %2085, %2086 : vector<2x4xf32>
    %cst_403 = arith.constant dense<0.000000e+00> : vector<2x4xf32>
    %2088 = tpu.matmul %2078, %12, %cst_403 {dimension_numbers = #tpu.dot_dimension_numbers<[1], [0], [0], [1], [0, 0, 1, 1], [], []>} : vector<2x16xf32>, vector<16x4xf32>, vector<2x4xf32> -> vector<2x4xf32>
    %2089 = vector.broadcast %13 : vector<1x4xf32> to vector<2x4xf32>
    %2090 = arith.addf %2088, %2089 : vector<2x4xf32>
    %2091 = tpu.concatenate %2081, %2084, %2087, %2090 in 1 : vector<2x4xf32>, vector<2x4xf32>, vector<2x4xf32>, vector<2x4xf32> -> vector<2x16xf32>
    %c0_404 = arith.constant 0 : index
    %c0_405 = arith.constant 0 : index
    %2092 = vector.load %arg17[%c0_404, %c0_405] : memref<2x16xf32, #tpu.memory_space<vmem>>, vector<2x16xf32>
    tpu.vector_store %arg17[%c0_404, %c0_405], %2091 {strides = array<i32>} : memref<2x16xf32, #tpu.memory_space<vmem>>, vector<2x16xf32>,
    return
  }
  func.func @transform_0(%arg0: i32) -> (i32, i32) {
    %c0_i32 = arith.constant 0 : i32
    %c0_i32_0 = arith.constant 0 : i32
    return %arg0, %c0_i32 : i32, i32
  }
  func.func @transform_1(%arg0: i32) -> (i32, i32) {
    %c0_i32 = arith.constant 0 : i32
    %c0_i32_0 = arith.constant 0 : i32
    return %arg0, %c0_i32 : i32, i32
  }
  func.func @transform_2(%arg0: i32) -> (i32, i32) {
    %c0_i32 = arith.constant 0 : i32
    %c0_i32_0 = arith.constant 0 : i32
    %c0_i32_1 = arith.constant 0 : i32
    return %c0_i32, %c0_i32_0 : i32, i32
  }
  func.func @transform_3(%arg0: i32) -> (i32, i32) {
    %c0_i32 = arith.constant 0 : i32
    %c0_i32_0 = arith.constant 0 : i32
    %c0_i32_1 = arith.constant 0 : i32
    return %c0_i32, %c0_i32_0 : i32, i32
  }
  func.func @transform_4(%arg0: i32) -> (i32, i32) {
    %c0_i32 = arith.constant 0 : i32
    %c0_i32_0 = arith.constant 0 : i32
    %c0_i32_1 = arith.constant 0 : i32
    return %c0_i32, %c0_i32_0 : i32, i32
  }
  func.func @transform_5(%arg0: i32) -> (i32, i32) {
    %c0_i32 = arith.constant 0 : i32
    %c0_i32_0 = arith.constant 0 : i32
    %c0_i32_1 = arith.constant 0 : i32
    return %c0_i32, %c0_i32_0 : i32, i32
  }
  func.func @transform_6(%arg0: i32) -> (i32, i32) {
    %c0_i32 = arith.constant 0 : i32
    %c0_i32_0 = arith.constant 0 : i32
    %c0_i32_1 = arith.constant 0 : i32
    return %c0_i32, %c0_i32_0 : i32, i32
  }
  func.func @transform_7(%arg0: i32) -> (i32, i32) {
    %c0_i32 = arith.constant 0 : i32
    %c0_i32_0 = arith.constant 0 : i32
    %c0_i32_1 = arith.constant 0 : i32
    return %c0_i32, %c0_i32_0 : i32, i32
  }
  func.func @transform_8(%arg0: i32) -> (i32, i32) {
    %c0_i32 = arith.constant 0 : i32
    %c0_i32_0 = arith.constant 0 : i32
    %c0_i32_1 = arith.constant 0 : i32
    return %c0_i32, %c0_i32_0 : i32, i32
  }
  func.func @transform_9(%arg0: i32) -> (i32, i32) {
    %c0_i32 = arith.constant 0 : i32
    %c0_i32_0 = arith.constant 0 : i32
    %c0_i32_1 = arith.constant 0 : i32
    return %c0_i32, %c0_i32_0 : i32, i32
  }
  func.func @transform_10(%arg0: i32) -> (i32, i32) {
    %c0_i32 = arith.constant 0 : i32
    %c0_i32_0 = arith.constant 0 : i32
    %c0_i32_1 = arith.constant 0 : i32
    return %c0_i32, %c0_i32_0 : i32, i32
  }
  func.func @transform_11(%arg0: i32) -> (i32, i32) {
    %c0_i32 = arith.constant 0 : i32
    %c0_i32_0 = arith.constant 0 : i32
    %c0_i32_1 = arith.constant 0 : i32
    return %c0_i32, %c0_i32_0 : i32, i32
  }
  func.func @transform_12(%arg0: i32) -> (i32, i32) {
    %c0_i32 = arith.constant 0 : i32
    %c0_i32_0 = arith.constant 0 : i32
    %c0_i32_1 = arith.constant 0 : i32
    return %c0_i32, %c0_i32_0 : i32, i32
  }
  func.func @transform_13(%arg0: i32) -> (i32, i32) {
    %c0_i32 = arith.constant 0 : i32
    %c0_i32_0 = arith.constant 0 : i32
    %c0_i32_1 = arith.constant 0 : i32
    return %c0_i32, %c0_i32_0 : i32, i32
  }
  func.func @transform_14(%arg0: i32) -> (i32, i32) {
    %c0_i32 = arith.constant 0 : i32
    %c0_i32_0 = arith.constant 0 : i32
    %c0_i32_1 = arith.constant 0 : i32
    return %c0_i32, %c0_i32_0 : i32, i32
  }
  func.func @transform_15(%arg0: i32) -> (i32, i32) {
    %c0_i32 = arith.constant 0 : i32
    %c0_i32_0 = arith.constant 0 : i32
    %c0_i32_1 = arith.constant 0 : i32
    return %c0_i32, %c0_i32_0 : i32, i32
  }
  func.func @transform_16(%arg0: i32) -> (i32, i32) {
    %c0_i32 = arith.constant 0 : i32
    %c0_i32_0 = arith.constant 0 : i32
    return %arg0, %c0_i32 : i32, i32
  }
}

</mosaic_0001>

<llo_original>
// kernel: ancde_forecasting_forward.1
$region0: #{ancde_forecasting_forward.1}
  #allocation0 [shape = 'u32[]', space=smem, size = 0x4, offset = 0x4, fixed_abs, tag = 'smem constant byte address 0x4 - core index']
  #allocation1 [shape = 'u32[72,128]{1,0:T(1,128)}', space=vmem, size = 0x9000, scoped, tag = 'internal scratch']
  %s0 = inlined_call_operand.vmem [shape: f32[2,60], index: 0, kind: input, shape index: {}]
  %s1 = inlined_call_operand.vmem [shape: f32[2,60], index: 1, kind: input, shape index: {}]
  %s2 = inlined_call_operand.vmem [shape: f32[4,4], index: 2, kind: input, shape index: {}]
  %s3 = inlined_call_operand.vmem [shape: f32[1,4], index: 3, kind: input, shape index: {}]
  %s4 = inlined_call_operand.vmem [shape: f32[4,16], index: 4, kind: input, shape index: {}]
  %s5 = inlined_call_operand.vmem [shape: f32[1,16], index: 5, kind: input, shape index: {}]
  %s6 = inlined_call_operand.vmem [shape: f32[16,16], index: 6, kind: input, shape index: {}]
  %s7 = inlined_call_operand.vmem [shape: f32[1,16], index: 7, kind: input, shape index: {}]
  %s8 = inlined_call_operand.vmem [shape: f32[4,16], index: 8, kind: input, shape index: {}]
  %s9 = inlined_call_operand.vmem [shape: f32[1,16], index: 9, kind: input, shape index: {}]
  %s10 = inlined_call_operand.vmem [shape: f32[16,16], index: 10, kind: input, shape index: {}]
  %s11 = inlined_call_operand.vmem [shape: f32[1,16], index: 11, kind: input, shape index: {}]
  %s12 = inlined_call_operand.vmem [shape: f32[16,64], index: 12, kind: input, shape index: {}]
  %s13 = inlined_call_operand.vmem [shape: f32[1,64], index: 13, kind: input, shape index: {}]
  %s14 = inlined_call_operand.vmem [shape: f32[16,4], index: 14, kind: input, shape index: {}]
  %s15 = inlined_call_operand.vmem [shape: f32[1,4], index: 15, kind: input, shape index: {}]
  %s16 = inlined_call_operand.vmem [shape: f32[2,16], index: 16, kind: output, shape index: {}]
  %s17 = sld [smem:[#allocation0]]
  $region74: #{ancde_forecasting_forward.1} parent=0
    _
  %s19 = ssub.s32 1, %s17
  %s20 = scalar_select 0, %s19, %s17
  // Predicated region
  $region2: #{ancde_forecasting_forward.1} parent=0 // pred_check
    _
  $region3: #{ancde_forecasting_forward.1} parent=0 // pred_check_branch
    %22 = sbr.rel (0) target = $region5
  $region4: #{ancde_forecasting_forward.1} parent=0 // pred_region
    _
  $region5: #{ancde_forecasting_forward.1} parent=0 // pred_fallthru
    _
  // Predicated region
  $region6: #{ancde_forecasting_forward.1} parent=0 // pred_check
    _
  $region7: #{ancde_forecasting_forward.1} parent=0 // pred_check_branch
    %24 = sbr.rel (0) target = $region9
  $region8: #{ancde_forecasting_forward.1} parent=0 // pred_region
    _
  $region9: #{ancde_forecasting_forward.1} parent=0 // pred_fallthru
    _
  // Predicated region
  $region10: #{ancde_forecasting_forward.1} parent=0 // pred_check
    _
  $region11: #{ancde_forecasting_forward.1} parent=0 // pred_check_branch
    %26 = sbr.rel (0) target = $region13
  $region12: #{ancde_forecasting_forward.1} parent=0 // pred_region
    _
  $region13: #{ancde_forecasting_forward.1} parent=0 // pred_fallthru
    _
  // Predicated region
  $region14: #{ancde_forecasting_forward.1} parent=0 // pred_check
    _
  $region15: #{ancde_forecasting_forward.1} parent=0 // pred_check_branch
    %28 = sbr.rel (0) target = $region17
  $region16: #{ancde_forecasting_forward.1} parent=0 // pred_region
    _
  $region17: #{ancde_forecasting_forward.1} parent=0 // pred_fallthru
    _
  // Predicated region
  $region18: #{ancde_forecasting_forward.1} parent=0 // pred_check
    _
  $region19: #{ancde_forecasting_forward.1} parent=0 // pred_check_branch
    %30 = sbr.rel (0) target = $region21
  $region20: #{ancde_forecasting_forward.1} parent=0 // pred_region
    _
  $region21: #{ancde_forecasting_forward.1} parent=0 // pred_fallthru
    _
  // Predicated region
  $region22: #{ancde_forecasting_forward.1} parent=0 // pred_check
    _
  $region23: #{ancde_forecasting_forward.1} parent=0 // pred_check_branch
    %32 = sbr.rel (0) target = $region25
  $region24: #{ancde_forecasting_forward.1} parent=0 // pred_region
    _
  $region25: #{ancde_forecasting_forward.1} parent=0 // pred_fallthru
    _
  // Predicated region
  $region26: #{ancde_forecasting_forward.1} parent=0 // pred_check
    _
  $region27: #{ancde_forecasting_forward.1} parent=0 // pred_check_branch
    %34 = sbr.rel (0) target = $region29
  $region28: #{ancde_forecasting_forward.1} parent=0 // pred_region
    _
  $region29: #{ancde_forecasting_forward.1} parent=0 // pred_fallthru
    _
  // Predicated region
  $region30: #{ancde_forecasting_forward.1} parent=0 // pred_check
    _
  $region31: #{ancde_forecasting_forward.1} parent=0 // pred_check_branch
    %36 = sbr.rel (0) target = $region33
  $region32: #{ancde_forecasting_forward.1} parent=0 // pred_region
    _
  $region33: #{ancde_forecasting_forward.1} parent=0 // pred_fallthru
    _
  // Predicated region
  $region34: #{ancde_forecasting_forward.1} parent=0 // pred_check
    _
  $region35: #{ancde_forecasting_forward.1} parent=0 // pred_check_branch
    %38 = sbr.rel (0) target = $region37
  $region36: #{ancde_forecasting_forward.1} parent=0 // pred_region
    _
  $region37: #{ancde_forecasting_forward.1} parent=0 // pred_fallthru
    _
  // Predicated region
  $region38: #{ancde_forecasting_forward.1} parent=0 // pred_check
    _
  $region39: #{ancde_forecasting_forward.1} parent=0 // pred_check_branch
    %40 = sbr.rel (0) target = $region41
  $region40: #{ancde_forecasting_forward.1} parent=0 // pred_region
    _
  $region41: #{ancde_forecasting_forward.1} parent=0 // pred_fallthru
    _
  // Predicated region
  $region42: #{ancde_forecasting_forward.1} parent=0 // pred_check
    _
  $region43: #{ancde_forecasting_forward.1} parent=0 // pred_check_branch
    %42 = sbr.rel (0) target = $region45
  $region44: #{ancde_forecasting_forward.1} parent=0 // pred_region
    _
  $region45: #{ancde_forecasting_forward.1} parent=0 // pred_fallthru
    _
  // Predicated region
  $region46: #{ancde_forecasting_forward.1} parent=0 // pred_check
    _
  $region47: #{ancde_forecasting_forward.1} parent=0 // pred_check_branch
    %44 = sbr.rel (0) target = $region49
  $region48: #{ancde_forecasting_forward.1} parent=0 // pred_region
    _
  $region49: #{ancde_forecasting_forward.1} parent=0 // pred_fallthru
    _
  // Predicated region
  $region50: #{ancde_forecasting_forward.1} parent=0 // pred_check
    _
  $region51: #{ancde_forecasting_forward.1} parent=0 // pred_check_branch
    %46 = sbr.rel (0) target = $region53
  $region52: #{ancde_forecasting_forward.1} parent=0 // pred_region
    _
  $region53: #{ancde_forecasting_forward.1} parent=0 // pred_fallthru
    _
  // Predicated region
  $region54: #{ancde_forecasting_forward.1} parent=0 // pred_check
    _
  $region55: #{ancde_forecasting_forward.1} parent=0 // pred_check_branch
    %48 = sbr.rel (0) target = $region57
  $region56: #{ancde_forecasting_forward.1} parent=0 // pred_region
    _
  $region57: #{ancde_forecasting_forward.1} parent=0 // pred_fallthru
    _
  // Predicated region
  $region58: #{ancde_forecasting_forward.1} parent=0 // pred_check
    _
  $region59: #{ancde_forecasting_forward.1} parent=0 // pred_check_branch
    %50 = sbr.rel (0) target = $region61
  $region60: #{ancde_forecasting_forward.1} parent=0 // pred_region
    _
  $region61: #{ancde_forecasting_forward.1} parent=0 // pred_fallthru
    _
  // Predicated region
  $region62: #{ancde_forecasting_forward.1} parent=0 // pred_check
    _
  $region63: #{ancde_forecasting_forward.1} parent=0 // pred_check_branch
    %52 = sbr.rel (0) target = $region65
  $region64: #{ancde_forecasting_forward.1} parent=0 // pred_region
    _
  $region65: #{ancde_forecasting_forward.1} parent=0 // pred_fallthru
    _
  %v53 = vld [vmem:[%s2] sm:$0xf]
  %v54 = vld [vmem:[%s3] sm:$0x1]
  %v55 = vld [vmem:[%s4] sm:$0xf]
  %v56 = vld [vmem:[%s5] sm:$0x1]
  %v57 = vld [vmem:[%s6] sm:$0xff]
  %v58 = vld [vmem:[%s6 + $0x8] sm:$0xff]
  %v59 = vld [vmem:[%s7] sm:$0x1]
  %v60 = vld [vmem:[%s8] sm:$0xf]
  %v61 = vld [vmem:[%s9] sm:$0x1]
  %v62 = vld [vmem:[%s10] sm:$0xff]
  %v63 = vld [vmem:[%s10 + $0x8] sm:$0xff]
  %v64 = vld [vmem:[%s11] sm:$0x1]
  %v65 = vld [vmem:[%s12] sm:$0xff]
  %v66 = vld [vmem:[%s12 + $0x8] sm:$0xff]
  %v67 = vld [vmem:[%s13] sm:$0x1]
  %v68 = vld [vmem:[%s14] sm:$0xff]
  %v69 = vld [vmem:[%s14 + $0x8] sm:$0xff]
  %v70 = vld [vmem:[%s15] sm:$0x1]
  %v71 = vld [vmem:[%s0] sm:$0x3]
  %v73 = vperm.slane %v54, 0
  %vm75 = vcmask 31744
  %v77 = vsel %vm75, %v71, 0
  %vm79 = vcmask 1043456
  %v81 = vsel %vm79, %v53, 0
  %83 = vmatpush.msra.mxu0 0.0
  %84 = vmatpush.msra.mxu0 0.0
  %85 = vmatpush.msra.mxu0 0.0
  %86 = vmatpush.msra.mxu0 0.0
  %87 = vmatpush.msra.mxu0 0.0
  %88 = vmatpush.msra.mxu0 0.0
  %89 = vmatpush.msra.mxu0 0.0
  %90 = vmatpush.msra.mxu0 0.0
  %91 = vmatpush.msra.mxu0 0.0
  %92 = vmatpush.msra.mxu0 0.0
  %93 = vmatpush.msra.mxu0 0.0
  %94 = vmatpush.msra.mxu0 0.0
  %95 = vmatpush.msra.mxu0 0.0
  %96 = vmatpush.msra.mxu0 0.0
  %97 = vmatpush.msra.mxu0 0.0
  %98 = vmatpush.msra.mxu0 %v81
  %99 = vmatmul.f32.gmra.mxu0 %v77
  %v100 = vpop.f32.mrf.mxu0
  %v101 = vadd.f32 %v73, %v100
  %102 = vdwg.mxu0
  %v103 = vld [vmem:[%s1] sm:$0x3]
  %v105 = vperm.slane %v56, 0
  %v108 = vsel %vm75, %v101, 0
  %v111 = vsel %vm79, %v55, 0
  %113 = vmatpush.msra.mxu0 0.0
  %114 = vmatpush.msra.mxu0 0.0
  %115 = vmatpush.msra.mxu0 0.0
  %116 = vmatpush.msra.mxu0 0.0
  %117 = vmatpush.msra.mxu0 0.0
  %118 = vmatpush.msra.mxu0 0.0
  %119 = vmatpush.msra.mxu0 0.0
  %120 = vmatpush.msra.mxu0 0.0
  %121 = vmatpush.msra.mxu0 0.0
  %122 = vmatpush.msra.mxu0 0.0
  %123 = vmatpush.msra.mxu0 0.0
  %124 = vmatpush.msra.mxu0 0.0
  %125 = vmatpush.msra.mxu0 0.0
  %126 = vmatpush.msra.mxu0 0.0
  %127 = vmatpush.msra.mxu0 0.0
  %128 = vmatpush.msra.mxu0 %v111
  %129 = vmatmul.f32.gmra.mxu0 %v108
  %v130 = vpop.f32.mrf.mxu0
  %v131 = vadd.f32 %v105, %v130
  %132 = vdwg.mxu0
  %v133 = vmax.f32 %v131, 0.0
  %v135 = vperm.slane %v59, 0
  %vm137 = vcmask 130048
  %v139 = vsel %vm137, %v133, 0
  %141 = vmatpush.msra.mxu0 0.0
  %142 = vmatpush.msra.mxu0 0.0
  %143 = vmatpush.msra.mxu0 0.0
  %144 = vmatpush.msra.mxu0 0.0
  %145 = vmatpush.msra.mxu0 0.0
  %146 = vmatpush.msra.mxu0 0.0
  %147 = vmatpush.msra.mxu0 0.0
  %148 = vmatpush.msra.mxu0 0.0
  %149 = vmatpush.msra.mxu0 0.0
  %150 = vmatpush.msra.mxu0 0.0
  %151 = vmatpush.msra.mxu0 0.0
  %152 = vmatpush.msra.mxu0 0.0
  %153 = vmatpush.msra.mxu0 0.0
  %154 = vmatpush.msra.mxu0 0.0
  %155 = vmatpush.msra.mxu0 %v58
  %156 = vmatpush.msra.mxu0 %v57
  %157 = vmatmul.f32.gmra.mxu0 %v139
  %v158 = vpop.f32.mrf.mxu0
  %v159 = vadd.f32 %v135, %v158
  %160 = vdwg.mxu0
  %v161 = vtanh.pop %v159
  %163 = vset.pattern.permute.xlu0 0
  %164 = vperm.xlu0 %163, %v103
  %v165 = vpop.permute.xlu0 %164
  %v167 = vmul.f32 %v161, %v165
  %168 = vset.pattern.permute.xlu0 1
  %169 = vperm.xlu0 %168, %v103
  %v170 = vpop.permute.xlu0 %169
  %v172 = vmul.f32 %v161, %v170
  %174 = vrot.lane.b32.xlu0 %v172, 124
  %v175 = vpop.permute.xlu0 %174
  %v177 = vadd.f32 %v167, %v175
  %178 = vset.pattern.permute.xlu0 2
  %179 = vperm.xlu0 %178, %v103
  %v180 = vpop.permute.xlu0 %179
  %v182 = vmul.f32 %v161, %v180
  %184 = vrot.lane.b32.xlu0 %v182, 120
  %v185 = vpop.permute.xlu0 %184
  %v187 = vadd.f32 %v177, %v185
  %188 = vset.pattern.permute.xlu0 3
  %189 = vperm.xlu0 %188, %v103
  %v190 = vpop.permute.xlu0 %189
  %v192 = vmul.f32 %v161, %v190
  %194 = vrot.lane.b32.xlu0 %v192, 116
  %v195 = vpop.permute.xlu0 %194
  %v197 = vadd.f32 %v187, %v195
  %v198 = vmul.f32 %v197, 0.5
  %v199 = vadd.f32 %v101, %v198
  %v201 = vsel %vm75, %v199, 0
  %203 = vmatpush.msra.mxu0 0.0
  %204 = vmatpush.msra.mxu0 0.0
  %205 = vmatpush.msra.mxu0 0.0
  %206 = vmatpush.msra.mxu0 0.0
  %207 = vmatpush.msra.mxu0 0.0
  %208 = vmatpush.msra.mxu0 0.0
  %209 = vmatpush.msra.mxu0 0.0
  %210 = vmatpush.msra.mxu0 0.0
  %211 = vmatpush.msra.mxu0 0.0
  %212 = vmatpush.msra.mxu0 0.0
  %213 = vmatpush.msra.mxu0 0.0
  %214 = vmatpush.msra.mxu0 0.0
  %215 = vmatpush.msra.mxu0 0.0
  %216 = vmatpush.msra.mxu0 0.0
  %217 = vmatpush.msra.mxu0 0.0
  %218 = vmatpush.msra.mxu0 %v111
  %219 = vmatmul.f32.gmra.mxu0 %v201
  %v220 = vpop.f32.mrf.mxu0
  %v221 = vadd.f32 %v105, %v220
  %222 = vdwg.mxu0
  %v223 = vmax.f32 %v221, 0.0
  %v225 = vsel %vm137, %v223, 0
  %227 = vmatpush.msra.mxu0 0.0
  %228 = vmatpush.msra.mxu0 0.0
  %229 = vmatpush.msra.mxu0 0.0
  %230 = vmatpush.msra.mxu0 0.0
  %231 = vmatpush.msra.mxu0 0.0
  %232 = vmatpush.msra.mxu0 0.0
  %233 = vmatpush.msra.mxu0 0.0
  %234 = vmatpush.msra.mxu0 0.0
  %235 = vmatpush.msra.mxu0 0.0
  %236 = vmatpush.msra.mxu0 0.0
  %237 = vmatpush.msra.mxu0 0.0
  %238 = vmatpush.msra.mxu0 0.0
  %239 = vmatpush.msra.mxu0 0.0
  %240 = vmatpush.msra.mxu0 0.0
  %241 = vmatpush.msra.mxu0 %v58
  %242 = vmatpush.msra.mxu0 %v57
  %243 = vmatmul.f32.gmra.mxu0 %v225
  %v244 = vpop.f32.mrf.mxu0
  %v245 = vadd.f32 %v135, %v244
  %246 = vdwg.mxu0
  %v247 = vtanh.pop %v245
  %248 = vset.pattern.permute.xlu0 4
  %249 = vperm.xlu0 %248, %v103
  %v250 = vpop.permute.xlu0 %249
  %v252 = vmul.f32 %v247, %v250
  %253 = vset.pattern.permute.xlu0 5
  %254 = vperm.xlu0 %253, %v103
  %v255 = vpop.permute.xlu0 %254
  %v257 = vmul.f32 %v247, %v255
  %259 = vrot.lane.b32.xlu0 %v257, 124
  %v260 = vpop.permute.xlu0 %259
  %v262 = vadd.f32 %v252, %v260
  %263 = vset.pattern.permute.xlu0 6
  %264 = vperm.xlu0 %263, %v103
  %v265 = vpop.permute.xlu0 %264
  %v267 = vmul.f32 %v247, %v265
  %269 = vrot.lane.b32.xlu0 %v267, 120
  %v270 = vpop.permute.xlu0 %269
  %v272 = vadd.f32 %v262, %v270
  %273 = vset.pattern.permute.xlu0 7
  %274 = vperm.xlu0 %273, %v103
  %v275 = vpop.permute.xlu0 %274
  %v277 = vmul.f32 %v247, %v275
  %279 = vrot.lane.b32.xlu0 %v277, 116
  %v280 = vpop.permute.xlu0 %279
  %v282 = vadd.f32 %v272, %v280
  %v283 = vmul.f32 %v282, 0.5
  %v284 = vadd.f32 %v101, %v283
  %v286 = vsel %vm75, %v284, 0
  %288 = vmatpush.msra.mxu0 0.0
  %289 = vmatpush.msra.mxu0 0.0
  %290 = vmatpush.msra.mxu0 0.0
  %291 = vmatpush.msra.mxu0 0.0
  %292 = vmatpush.msra.mxu0 0.0
  %293 = vmatpush.msra.mxu0 0.0
  %294 = vmatpush.msra.mxu0 0.0
  %295 = vmatpush.msra.mxu0 0.0
  %296 = vmatpush.msra.mxu0 0.0
  %297 = vmatpush.msra.mxu0 0.0
  %298 = vmatpush.msra.mxu0 0.0
  %299 = vmatpush.msra.mxu0 0.0
  %300 = vmatpush.msra.mxu0 0.0
  %301 = vmatpush.msra.mxu0 0.0
  %302 = vmatpush.msra.mxu0 0.0
  %303 = vmatpush.msra.mxu0 %v111
  %304 = vmatmul.f32.gmra.mxu0 %v286
  %v305 = vpop.f32.mrf.mxu0
  %v306 = vadd.f32 %v105, %v305
  %307 = vdwg.mxu0
  %v308 = vmax.f32 %v306, 0.0
  %v310 = vsel %vm137, %v308, 0
  %312 = vmatpush.msra.mxu0 0.0
  %313 = vmatpush.msra.mxu0 0.0
  %314 = vmatpush.msra.mxu0 0.0
  %315 = vmatpush.msra.mxu0 0.0
  %316 = vmatpush.msra.mxu0 0.0
  %317 = vmatpush.msra.mxu0 0.0
  %318 = vmatpush.msra.mxu0 0.0
  %319 = vmatpush.msra.mxu0 0.0
  %320 = vmatpush.msra.mxu0 0.0
  %321 = vmatpush.msra.mxu0 0.0
  %322 = vmatpush.msra.mxu0 0.0
  %323 = vmatpush.msra.mxu0 0.0
  %324 = vmatpush.msra.mxu0 0.0
  %325 = vmatpush.msra.mxu0 0.0
  %326 = vmatpush.msra.mxu0 %v58
  %327 = vmatpush.msra.mxu0 %v57
  %328 = vmatmul.f32.gmra.mxu0 %v310
  %v329 = vpop.f32.mrf.mxu0
  %v330 = vadd.f32 %v135, %v329
  %331 = vdwg.mxu0
  %v332 = vtanh.pop %v330
  %v333 = vmul.f32 %v332, %v250
  %v334 = vmul.f32 %v332, %v255
  %336 = vrot.lane.b32.xlu0 %v334, 124
  %v337 = vpop.permute.xlu0 %336
  %v339 = vadd.f32 %v333, %v337
  %v340 = vmul.f32 %v332, %v265
  %342 = vrot.lane.b32.xlu0 %v340, 120
  %v343 = vpop.permute.xlu0 %342
  %v345 = vadd.f32 %v339, %v343
  %v346 = vmul.f32 %v332, %v275
  %348 = vrot.lane.b32.xlu0 %v346, 116
  %v349 = vpop.permute.xlu0 %348
  %v351 = vadd.f32 %v345, %v349
  %v352 = vadd.f32 %v101, %v351
  %v354 = vsel %vm75, %v352, 0
  %356 = vmatpush.msra.mxu0 0.0
  %357 = vmatpush.msra.mxu0 0.0
  %358 = vmatpush.msra.mxu0 0.0
  %359 = vmatpush.msra.mxu0 0.0
  %360 = vmatpush.msra.mxu0 0.0
  %361 = vmatpush.msra.mxu0 0.0
  %362 = vmatpush.msra.mxu0 0.0
  %363 = vmatpush.msra.mxu0 0.0
  %364 = vmatpush.msra.mxu0 0.0
  %365 = vmatpush.msra.mxu0 0.0
  %366 = vmatpush.msra.mxu0 0.0
  %367 = vmatpush.msra.mxu0 0.0
  %368 = vmatpush.msra.mxu0 0.0
  %369 = vmatpush.msra.mxu0 0.0
  %370 = vmatpush.msra.mxu0 0.0
  %371 = vmatpush.msra.mxu0 %v111
  %372 = vmatmul.f32.gmra.mxu0 %v354
  %v373 = vpop.f32.mrf.mxu0
  %v374 = vadd.f32 %v105, %v373
  %375 = vdwg.mxu0
  %v376 = vmax.f32 %v374, 0.0
  %v378 = vsel %vm137, %v376, 0
  %380 = vmatpush.msra.mxu0 0.0
  %381 = vmatpush.msra.mxu0 0.0
  %382 = vmatpush.msra.mxu0 0.0
  %383 = vmatpush.msra.mxu0 0.0
  %384 = vmatpush.msra.mxu0 0.0
  %385 = vmatpush.msra.mxu0 0.0
  %386 = vmatpush.msra.mxu0 0.0
  %387 = vmatpush.msra.mxu0 0.0
  %388 = vmatpush.msra.mxu0 0.0
  %389 = vmatpush.msra.mxu0 0.0
  %390 = vmatpush.msra.mxu0 0.0
  %391 = vmatpush.msra.mxu0 0.0
  %392 = vmatpush.msra.mxu0 0.0
  %393 = vmatpush.msra.mxu0 0.0
  %394 = vmatpush.msra.mxu0 %v58
  %395 = vmatpush.msra.mxu0 %v57
  %396 = vmatmul.f32.gmra.mxu0 %v378
  %v397 = vpop.f32.mrf.mxu0
  %v398 = vadd.f32 %v135, %v397
  %399 = vdwg.mxu0
  %v400 = vtanh.pop %v398
  %401 = vset.pattern.permute.xlu0 8
  %402 = vperm.xlu0 %401, %v103
  %v403 = vpop.permute.xlu0 %402
  %v405 = vmul.f32 %v400, %v403
  %406 = vset.pattern.permute.xlu0 9
  %407 = vperm.xlu0 %406, %v103
  %v408 = vpop.permute.xlu0 %407
  %v410 = vmul.f32 %v400, %v408
  %412 = vrot.lane.b32.xlu0 %v410, 124
  %v413 = vpop.permute.xlu0 %412
  %v415 = vadd.f32 %v405, %v413
  %416 = vset.pattern.permute.xlu0 10
  %417 = vperm.xlu0 %416, %v103
  %v418 = vpop.permute.xlu0 %417
  %v420 = vmul.f32 %v400, %v418
  %422 = vrot.lane.b32.xlu0 %v420, 120
  %v423 = vpop.permute.xlu0 %422
  %v425 = vadd.f32 %v415, %v423
  %426 = vset.pattern.permute.xlu0 11
  %427 = vperm.xlu0 %426, %v103
  %v428 = vpop.permute.xlu0 %427
  %v430 = vmul.f32 %v400, %v428
  %432 = vrot.lane.b32.xlu0 %v430, 116
  %v433 = vpop.permute.xlu0 %432
  %v435 = vadd.f32 %v425, %v433
  %v436 = vadd.f32 %v282, %v351
  %v437 = vmul.f32 %v436, 2.0
  %v438 = vadd.f32 %v197, %v437
  %v439 = vadd.f32 %v438, %v435
  %v440 = vmul.f32 %v439, 0.16666667
  %v441 = vadd.f32 %v101, %v440
  %v443 = vsel %vm75, %v441, 0
  %445 = vmatpush.msra.mxu0 0.0
  %446 = vmatpush.msra.mxu0 0.0
  %447 = vmatpush.msra.mxu0 0.0
  %448 = vmatpush.msra.mxu0 0.0
  %449 = vmatpush.msra.mxu0 0.0
  %450 = vmatpush.msra.mxu0 0.0
  %451 = vmatpush.msra.mxu0 0.0
  %452 = vmatpush.msra.mxu0 0.0
  %453 = vmatpush.msra.mxu0 0.0
  %454 = vmatpush.msra.mxu0 0.0
  %455 = vmatpush.msra.mxu0 0.0
  %456 = vmatpush.msra.mxu0 0.0
  %457 = vmatpush.msra.mxu0 0.0
  %458 = vmatpush.msra.mxu0 0.0
  %459 = vmatpush.msra.mxu0 0.0
  %460 = vmatpush.msra.mxu0 %v111
  %461 = vmatmul.f32.gmra.mxu0 %v443
  %v462 = vpop.f32.mrf.mxu0
  %v463 = vadd.f32 %v105, %v462
  %464 = vdwg.mxu0
  %v465 = vmax.f32 %v463, 0.0
  %v467 = vsel %vm137, %v465, 0
  %469 = vmatpush.msra.mxu0 0.0
  %470 = vmatpush.msra.mxu0 0.0
  %471 = vmatpush.msra.mxu0 0.0
  %472 = vmatpush.msra.mxu0 0.0
  %473 = vmatpush.msra.mxu0 0.0
  %474 = vmatpush.msra.mxu0 0.0
  %475 = vmatpush.msra.mxu0 0.0
  %476 = vmatpush.msra.mxu0 0.0
  %477 = vmatpush.msra.mxu0 0.0
  %478 = vmatpush.msra.mxu0 0.0
  %479 = vmatpush.msra.mxu0 0.0
  %480 = vmatpush.msra.mxu0 0.0
  %481 = vmatpush.msra.mxu0 0.0
  %482 = vmatpush.msra.mxu0 0.0
  %483 = vmatpush.msra.mxu0 %v58
  %484 = vmatpush.msra.mxu0 %v57
  %485 = vmatmul.f32.gmra.mxu0 %v467
  %v486 = vpop.f32.mrf.mxu0
  %v487 = vadd.f32 %v135, %v486
  %488 = vdwg.mxu0
  %v489 = vtanh.pop %v487
  %v490 = vmul.f32 %v489, %v403
  %v491 = vmul.f32 %v489, %v408
  %493 = vrot.lane.b32.xlu0 %v491, 124
  %v494 = vpop.permute.xlu0 %493
  %v496 = vadd.f32 %v490, %v494
  %v497 = vmul.f32 %v489, %v418
  %499 = vrot.lane.b32.xlu0 %v497, 120
  %v500 = vpop.permute.xlu0 %499
  %v502 = vadd.f32 %v496, %v500
  %v503 = vmul.f32 %v489, %v428
  %505 = vrot.lane.b32.xlu0 %v503, 116
  %v506 = vpop.permute.xlu0 %505
  %v508 = vadd.f32 %v502, %v506
  %v509 = vmul.f32 %v508, 0.5
  %v510 = vadd.f32 %v441, %v509
  %v512 = vsel %vm75, %v510, 0
  %514 = vmatpush.msra.mxu0 0.0
  %515 = vmatpush.msra.mxu0 0.0
  %516 = vmatpush.msra.mxu0 0.0
  %517 = vmatpush.msra.mxu0 0.0
  %518 = vmatpush.msra.mxu0 0.0
  %519 = vmatpush.msra.mxu0 0.0
  %520 = vmatpush.msra.mxu0 0.0
  %521 = vmatpush.msra.mxu0 0.0
  %522 = vmatpush.msra.mxu0 0.0
  %523 = vmatpush.msra.mxu0 0.0
  %524 = vmatpush.msra.mxu0 0.0
  %525 = vmatpush.msra.mxu0 0.0
  %526 = vmatpush.msra.mxu0 0.0
  %527 = vmatpush.msra.mxu0 0.0
  %528 = vmatpush.msra.mxu0 0.0
  %529 = vmatpush.msra.mxu0 %v111
  %530 = vmatmul.f32.gmra.mxu0 %v512
  %v531 = vpop.f32.mrf.mxu0
  %v532 = vadd.f32 %v105, %v531
  %533 = vdwg.mxu0
  %v534 = vmax.f32 %v532, 0.0
  %v536 = vsel %vm137, %v534, 0
  %538 = vmatpush.msra.mxu0 0.0
  %539 = vmatpush.msra.mxu0 0.0
  %540 = vmatpush.msra.mxu0 0.0
  %541 = vmatpush.msra.mxu0 0.0
  %542 = vmatpush.msra.mxu0 0.0
  %543 = vmatpush.msra.mxu0 0.0
  %544 = vmatpush.msra.mxu0 0.0
  %545 = vmatpush.msra.mxu0 0.0
  %546 = vmatpush.msra.mxu0 0.0
  %547 = vmatpush.msra.mxu0 0.0
  %548 = vmatpush.msra.mxu0 0.0
  %549 = vmatpush.msra.mxu0 0.0
  %550 = vmatpush.msra.mxu0 0.0
  %551 = vmatpush.msra.mxu0 0.0
  %552 = vmatpush.msra.mxu0 %v58
  %553 = vmatpush.msra.mxu0 %v57
  %554 = vmatmul.f32.gmra.mxu0 %v536
  %v555 = vpop.f32.mrf.mxu0
  %v556 = vadd.f32 %v135, %v555
  %557 = vdwg.mxu0
  %v558 = vtanh.pop %v556
  %559 = vset.pattern.permute.xlu0 12
  %560 = vperm.xlu0 %559, %v103
  %v561 = vpop.permute.xlu0 %560
  %v563 = vmul.f32 %v558, %v561
  %564 = vset.pattern.permute.xlu0 13
  %565 = vperm.xlu0 %564, %v103
  %v566 = vpop.permute.xlu0 %565
  %v568 = vmul.f32 %v558, %v566
  %570 = vrot.lane.b32.xlu0 %v568, 124
  %v571 = vpop.permute.xlu0 %570
  %v573 = vadd.f32 %v563, %v571
  %574 = vset.pattern.permute.xlu0 14
  %575 = vperm.xlu0 %574, %v103
  %v576 = vpop.permute.xlu0 %575
  %v578 = vmul.f32 %v558, %v576
  %580 = vrot.lane.b32.xlu0 %v578, 120
  %v581 = vpop.permute.xlu0 %580
  %v583 = vadd.f32 %v573, %v581
  %584 = vset.pattern.permute.xlu0 15
  %585 = vperm.xlu0 %584, %v103
  %v586 = vpop.permute.xlu0 %585
  %v588 = vmul.f32 %v558, %v586
  %590 = vrot.lane.b32.xlu0 %v588, 116
  %v591 = vpop.permute.xlu0 %590
  %v593 = vadd.f32 %v583, %v591
  %v594 = vmul.f32 %v593, 0.5
  %v595 = vadd.f32 %v441, %v594
  %v597 = vsel %vm75, %v595, 0
  %599 = vmatpush.msra.mxu0 0.0
  %600 = vmatpush.msra.mxu0 0.0
  %601 = vmatpush.msra.mxu0 0.0
  %602 = vmatpush.msra.mxu0 0.0
  %603 = vmatpush.msra.mxu0 0.0
  %604 = vmatpush.msra.mxu0 0.0
  %605 = vmatpush.msra.mxu0 0.0
  %606 = vmatpush.msra.mxu0 0.0
  %607 = vmatpush.msra.mxu0 0.0
  %608 = vmatpush.msra.mxu0 0.0
  %609 = vmatpush.msra.mxu0 0.0
  %610 = vmatpush.msra.mxu0 0.0
  %611 = vmatpush.msra.mxu0 0.0
  %612 = vmatpush.msra.mxu0 0.0
  %613 = vmatpush.msra.mxu0 0.0
  %614 = vmatpush.msra.mxu0 %v111
  %615 = vmatmul.f32.gmra.mxu0 %v597
  %v616 = vpop.f32.mrf.mxu0
  %v617 = vadd.f32 %v105, %v616
  %618 = vdwg.mxu0
  %v619 = vmax.f32 %v617, 0.0
  %v621 = vsel %vm137, %v619, 0
  %623 = vmatpush.msra.mxu0 0.0
  %624 = vmatpush.msra.mxu0 0.0
  %625 = vmatpush.msra.mxu0 0.0
  %626 = vmatpush.msra.mxu0 0.0
  %627 = vmatpush.msra.mxu0 0.0
  %628 = vmatpush.msra.mxu0 0.0
  %629 = vmatpush.msra.mxu0 0.0
  %630 = vmatpush.msra.mxu0 0.0
  %631 = vmatpush.msra.mxu0 0.0
  %632 = vmatpush.msra.mxu0 0.0
  %633 = vmatpush.msra.mxu0 0.0
  %634 = vmatpush.msra.mxu0 0.0
  %635 = vmatpush.msra.mxu0 0.0
  %636 = vmatpush.msra.mxu0 0.0
  %637 = vmatpush.msra.mxu0 %v58
  %638 = vmatpush.msra.mxu0 %v57
  %639 = vmatmul.f32.gmra.mxu0 %v621
  %v640 = vpop.f32.mrf.mxu0
  %v641 = vadd.f32 %v135, %v640
  %642 = vdwg.mxu0
  %v643 = vtanh.pop %v641
  %v644 = vmul.f32 %v643, %v561
  %v645 = vmul.f32 %v643, %v566
  %647 = vrot.lane.b32.xlu0 %v645, 124
  %v648 = vpop.permute.xlu0 %647
  %v650 = vadd.f32 %v644, %v648
  %v651 = vmul.f32 %v643, %v576
  %653 = vrot.lane.b32.xlu0 %v651, 120
  %v654 = vpop.permute.xlu0 %653
  %v656 = vadd.f32 %v650, %v654
  %v657 = vmul.f32 %v643, %v586
  %659 = vrot.lane.b32.xlu0 %v657, 116
  %v660 = vpop.permute.xlu0 %659
  %v662 = vadd.f32 %v656, %v660
  %v663 = vadd.f32 %v441, %v662
  %v665 = vsel %vm75, %v663, 0
  %667 = vmatpush.msra.mxu0 0.0
  %668 = vmatpush.msra.mxu0 0.0
  %669 = vmatpush.msra.mxu0 0.0
  %670 = vmatpush.msra.mxu0 0.0
  %671 = vmatpush.msra.mxu0 0.0
  %672 = vmatpush.msra.mxu0 0.0
  %673 = vmatpush.msra.mxu0 0.0
  %674 = vmatpush.msra.mxu0 0.0
  %675 = vmatpush.msra.mxu0 0.0
  %676 = vmatpush.msra.mxu0 0.0
  %677 = vmatpush.msra.mxu0 0.0
  %678 = vmatpush.msra.mxu0 0.0
  %679 = vmatpush.msra.mxu0 0.0
  %680 = vmatpush.msra.mxu0 0.0
  %681 = vmatpush.msra.mxu0 0.0
  %682 = vmatpush.msra.mxu0 %v111
  %683 = vmatmul.f32.gmra.mxu0 %v665
  %v684 = vpop.f32.mrf.mxu0
  %v685 = vadd.f32 %v105, %v684
  %686 = vdwg.mxu0
  %v687 = vmax.f32 %v685, 0.0
  %v689 = vsel %vm137, %v687, 0
  %691 = vmatpush.msra.mxu0 0.0
  %692 = vmatpush.msra.mxu0 0.0
  %693 = vmatpush.msra.mxu0 0.0
  %694 = vmatpush.msra.mxu0 0.0
  %695 = vmatpush.msra.mxu0 0.0
  %696 = vmatpush.msra.mxu0 0.0
  %697 = vmatpush.msra.mxu0 0.0
  %698 = vmatpush.msra.mxu0 0.0
  %699 = vmatpush.msra.mxu0 0.0
  %700 = vmatpush.msra.mxu0 0.0
  %701 = vmatpush.msra.mxu0 0.0
  %702 = vmatpush.msra.mxu0 0.0
  %703 = vmatpush.msra.mxu0 0.0
  %704 = vmatpush.msra.mxu0 0.0
  %705 = vmatpush.msra.mxu0 %v58
  %706 = vmatpush.msra.mxu0 %v57
  %707 = vmatmul.f32.gmra.mxu0 %v689
  %v708 = vpop.f32.mrf.mxu0
  %v709 = vadd.f32 %v135, %v708
  %710 = vdwg.mxu0
  %v711 = vtanh.pop %v709
  %712 = vset.pattern.permute.xlu0 16
  %713 = vperm.xlu0 %712, %v103
  %v714 = vpop.permute.xlu0 %713
  %v716 = vmul.f32 %v711, %v714
  %717 = vset.pattern.permute.xlu0 17
  %718 = vperm.xlu0 %717, %v103
  %v719 = vpop.permute.xlu0 %718
  %v721 = vmul.f32 %v711, %v719
  %723 = vrot.lane.b32.xlu0 %v721, 124
  %v724 = vpop.permute.xlu0 %723
  %v726 = vadd.f32 %v716, %v724
  %727 = vset.pattern.permute.xlu0 18
  %728 = vperm.xlu0 %727, %v103
  %v729 = vpop.permute.xlu0 %728
  %v731 = vmul.f32 %v711, %v729
  %733 = vrot.lane.b32.xlu0 %v731, 120
  %v734 = vpop.permute.xlu0 %733
  %v736 = vadd.f32 %v726, %v734
  %737 = vset.pattern.permute.xlu0 19
  %738 = vperm.xlu0 %737, %v103
  %v739 = vpop.permute.xlu0 %738
  %v741 = vmul.f32 %v711, %v739
  %743 = vrot.lane.b32.xlu0 %v741, 116
  %v744 = vpop.permute.xlu0 %743
  %v746 = vadd.f32 %v736, %v744
  %v747 = vadd.f32 %v593, %v662
  %v748 = vmul.f32 %v747, 2.0
  %v749 = vadd.f32 %v508, %v748
  %v750 = vadd.f32 %v749, %v746
  %v751 = vmul.f32 %v750, 0.16666667
  %v752 = vadd.f32 %v441, %v751
  %v754 = vsel %vm75, %v752, 0
  %756 = vmatpush.msra.mxu0 0.0
  %757 = vmatpush.msra.mxu0 0.0
  %758 = vmatpush.msra.mxu0 0.0
  %759 = vmatpush.msra.mxu0 0.0
  %760 = vmatpush.msra.mxu0 0.0
  %761 = vmatpush.msra.mxu0 0.0
  %762 = vmatpush.msra.mxu0 0.0
  %763 = vmatpush.msra.mxu0 0.0
  %764 = vmatpush.msra.mxu0 0.0
  %765 = vmatpush.msra.mxu0 0.0
  %766 = vmatpush.msra.mxu0 0.0
  %767 = vmatpush.msra.mxu0 0.0
  %768 = vmatpush.msra.mxu0 0.0
  %769 = vmatpush.msra.mxu0 0.0
  %770 = vmatpush.msra.mxu0 0.0
  %771 = vmatpush.msra.mxu0 %v111
  %772 = vmatmul.f32.gmra.mxu0 %v754
  %v773 = vpop.f32.mrf.mxu0
  %v774 = vadd.f32 %v105, %v773
  %775 = vdwg.mxu0
  %v776 = vmax.f32 %v774, 0.0
  %v778 = vsel %vm137, %v776, 0
  %780 = vmatpush.msra.mxu0 0.0
  %781 = vmatpush.msra.mxu0 0.0
  %782 = vmatpush.msra.mxu0 0.0
  %783 = vmatpush.msra.mxu0 0.0
  %784 = vmatpush.msra.mxu0 0.0
  %785 = vmatpush.msra.mxu0 0.0
  %786 = vmatpush.msra.mxu0 0.0
  %787 = vmatpush.msra.mxu0 0.0
  %788 = vmatpush.msra.mxu0 0.0
  %789 = vmatpush.msra.mxu0 0.0
  %790 = vmatpush.msra.mxu0 0.0
  %791 = vmatpush.msra.mxu0 0.0
  %792 = vmatpush.msra.mxu0 0.0
  %793 = vmatpush.msra.mxu0 0.0
  %794 = vmatpush.msra.mxu0 %v58
  %795 = vmatpush.msra.mxu0 %v57
  %796 = vmatmul.f32.gmra.mxu0 %v778
  %v797 = vpop.f32.mrf.mxu0
  %v798 = vadd.f32 %v135, %v797
  %799 = vdwg.mxu0
  %v800 = vtanh.pop %v798
  %v801 = vmul.f32 %v800, %v714
  %v802 = vmul.f32 %v800, %v719
  %804 = vrot.lane.b32.xlu0 %v802, 124
  %v805 = vpop.permute.xlu0 %804
  %v807 = vadd.f32 %v801, %v805
  %v808 = vmul.f32 %v800, %v729
  %810 = vrot.lane.b32.xlu0 %v808, 120
  %v811 = vpop.permute.xlu0 %810
  %v813 = vadd.f32 %v807, %v811
  %v814 = vmul.f32 %v800, %v739
  %816 = vrot.lane.b32.xlu0 %v814, 116
  %v817 = vpop.permute.xlu0 %816
  %v819 = vadd.f32 %v813, %v817
  %v820 = vmul.f32 %v819, 0.5
  %v821 = vadd.f32 %v752, %v820
  %v823 = vsel %vm75, %v821, 0
  %825 = vmatpush.msra.mxu0 0.0
  %826 = vmatpush.msra.mxu0 0.0
  %827 = vmatpush.msra.mxu0 0.0
  %828 = vmatpush.msra.mxu0 0.0
  %829 = vmatpush.msra.mxu0 0.0
  %830 = vmatpush.msra.mxu0 0.0
  %831 = vmatpush.msra.mxu0 0.0
  %832 = vmatpush.msra.mxu0 0.0
  %833 = vmatpush.msra.mxu0 0.0
  %834 = vmatpush.msra.mxu0 0.0
  %835 = vmatpush.msra.mxu0 0.0
  %836 = vmatpush.msra.mxu0 0.0
  %837 = vmatpush.msra.mxu0 0.0
  %838 = vmatpush.msra.mxu0 0.0
  %839 = vmatpush.msra.mxu0 0.0
  %840 = vmatpush.msra.mxu0 %v111
  %841 = vmatmul.f32.gmra.mxu0 %v823
  %v842 = vpop.f32.mrf.mxu0
  %v843 = vadd.f32 %v105, %v842
  %844 = vdwg.mxu0
  %v845 = vmax.f32 %v843, 0.0
  %v847 = vsel %vm137, %v845, 0
  %849 = vmatpush.msra.mxu0 0.0
  %850 = vmatpush.msra.mxu0 0.0
  %851 = vmatpush.msra.mxu0 0.0
  %852 = vmatpush.msra.mxu0 0.0
  %853 = vmatpush.msra.mxu0 0.0
  %854 = vmatpush.msra.mxu0 0.0
  %855 = vmatpush.msra.mxu0 0.0
  %856 = vmatpush.msra.mxu0 0.0
  %857 = vmatpush.msra.mxu0 0.0
  %858 = vmatpush.msra.mxu0 0.0
  %859 = vmatpush.msra.mxu0 0.0
  %860 = vmatpush.msra.mxu0 0.0
  %861 = vmatpush.msra.mxu0 0.0
  %862 = vmatpush.msra.mxu0 0.0
  %863 = vmatpush.msra.mxu0 %v58
  %864 = vmatpush.msra.mxu0 %v57
  %865 = vmatmul.f32.gmra.mxu0 %v847
  %v866 = vpop.f32.mrf.mxu0
  %v867 = vadd.f32 %v135, %v866
  %868 = vdwg.mxu0
  %v869 = vtanh.pop %v867
  %870 = vset.pattern.permute.xlu0 20
  %871 = vperm.xlu0 %870, %v103
  %v872 = vpop.permute.xlu0 %871
  %v874 = vmul.f32 %v869, %v872
  %875 = vset.pattern.permute.xlu0 21
  %876 = vperm.xlu0 %875, %v103
  %v877 = vpop.permute.xlu0 %876
  %v879 = vmul.f32 %v869, %v877
  %881 = vrot.lane.b32.xlu0 %v879, 124
  %v882 = vpop.permute.xlu0 %881
  %v884 = vadd.f32 %v874, %v882
  %885 = vset.pattern.permute.xlu0 22
  %886 = vperm.xlu0 %885, %v103
  %v887 = vpop.permute.xlu0 %886
  %v889 = vmul.f32 %v869, %v887
  %891 = vrot.lane.b32.xlu0 %v889, 120
  %v892 = vpop.permute.xlu0 %891
  %v894 = vadd.f32 %v884, %v892
  %895 = vset.pattern.permute.xlu0 23
  %896 = vperm.xlu0 %895, %v103
  %v897 = vpop.permute.xlu0 %896
  %v899 = vmul.f32 %v869, %v897
  %901 = vrot.lane.b32.xlu0 %v899, 116
  %v902 = vpop.permute.xlu0 %901
  %v904 = vadd.f32 %v894, %v902
  %v905 = vmul.f32 %v904, 0.5
  %v906 = vadd.f32 %v752, %v905
  %v908 = vsel %vm75, %v906, 0
  %910 = vmatpush.msra.mxu0 0.0
  %911 = vmatpush.msra.mxu0 0.0
  %912 = vmatpush.msra.mxu0 0.0
  %913 = vmatpush.msra.mxu0 0.0
  %914 = vmatpush.msra.mxu0 0.0
  %915 = vmatpush.msra.mxu0 0.0
  %916 = vmatpush.msra.mxu0 0.0
  %917 = vmatpush.msra.mxu0 0.0
  %918 = vmatpush.msra.mxu0 0.0
  %919 = vmatpush.msra.mxu0 0.0
  %920 = vmatpush.msra.mxu0 0.0
  %921 = vmatpush.msra.mxu0 0.0
  %922 = vmatpush.msra.mxu0 0.0
  %923 = vmatpush.msra.mxu0 0.0
  %924 = vmatpush.msra.mxu0 0.0
  %925 = vmatpush.msra.mxu0 %v111
  %926 = vmatmul.f32.gmra.mxu0 %v908
  %v927 = vpop.f32.mrf.mxu0
  %v928 = vadd.f32 %v105, %v927
  %929 = vdwg.mxu0
  %v930 = vmax.f32 %v928, 0.0
  %v932 = vsel %vm137, %v930, 0
  %934 = vmatpush.msra.mxu0 0.0
  %935 = vmatpush.msra.mxu0 0.0
  %936 = vmatpush.msra.mxu0 0.0
  %937 = vmatpush.msra.mxu0 0.0
  %938 = vmatpush.msra.mxu0 0.0
  %939 = vmatpush.msra.mxu0 0.0
  %940 = vmatpush.msra.mxu0 0.0
  %941 = vmatpush.msra.mxu0 0.0
  %942 = vmatpush.msra.mxu0 0.0
  %943 = vmatpush.msra.mxu0 0.0
  %944 = vmatpush.msra.mxu0 0.0
  %945 = vmatpush.msra.mxu0 0.0
  %946 = vmatpush.msra.mxu0 0.0
  %947 = vmatpush.msra.mxu0 0.0
  %948 = vmatpush.msra.mxu0 %v58
  %949 = vmatpush.msra.mxu0 %v57
  %950 = vmatmul.f32.gmra.mxu0 %v932
  %v951 = vpop.f32.mrf.mxu0
  %v952 = vadd.f32 %v135, %v951
  %953 = vdwg.mxu0
  %v954 = vtanh.pop %v952
  %v955 = vmul.f32 %v954, %v872
  %v956 = vmul.f32 %v954, %v877
  %958 = vrot.lane.b32.xlu0 %v956, 124
  %v959 = vpop.permute.xlu0 %958
  %v961 = vadd.f32 %v955, %v959
  %v962 = vmul.f32 %v954, %v887
  %964 = vrot.lane.b32.xlu0 %v962, 120
  %v965 = vpop.permute.xlu0 %964
  %v967 = vadd.f32 %v961, %v965
  %v968 = vmul.f32 %v954, %v897
  %970 = vrot.lane.b32.xlu0 %v968, 116
  %v971 = vpop.permute.xlu0 %970
  %v973 = vadd.f32 %v967, %v971
  %v974 = vadd.f32 %v752, %v973
  %v976 = vsel %vm75, %v974, 0
  %978 = vmatpush.msra.mxu0 0.0
  %979 = vmatpush.msra.mxu0 0.0
  %980 = vmatpush.msra.mxu0 0.0
  %981 = vmatpush.msra.mxu0 0.0
  %982 = vmatpush.msra.mxu0 0.0
  %983 = vmatpush.msra.mxu0 0.0
  %984 = vmatpush.msra.mxu0 0.0
  %985 = vmatpush.msra.mxu0 0.0
  %986 = vmatpush.msra.mxu0 0.0
  %987 = vmatpush.msra.mxu0 0.0
  %988 = vmatpush.msra.mxu0 0.0
  %989 = vmatpush.msra.mxu0 0.0
  %990 = vmatpush.msra.mxu0 0.0
  %991 = vmatpush.msra.mxu0 0.0
  %992 = vmatpush.msra.mxu0 0.0
  %993 = vmatpush.msra.mxu0 %v111
  %994 = vmatmul.f32.gmra.mxu0 %v976
  %v995 = vpop.f32.mrf.mxu0
  %v996 = vadd.f32 %v105, %v995
  %997 = vdwg.mxu0
  %v998 = vmax.f32 %v996, 0.0
  %v1000 = vsel %vm137, %v998, 0
  %1002 = vmatpush.msra.mxu0 0.0
  %1003 = vmatpush.msra.mxu0 0.0
  %1004 = vmatpush.msra.mxu0 0.0
  %1005 = vmatpush.msra.mxu0 0.0
  %1006 = vmatpush.msra.mxu0 0.0
  %1007 = vmatpush.msra.mxu0 0.0
  %1008 = vmatpush.msra.mxu0 0.0
  %1009 = vmatpush.msra.mxu0 0.0
  %1010 = vmatpush.msra.mxu0 0.0
  %1011 = vmatpush.msra.mxu0 0.0
  %1012 = vmatpush.msra.mxu0 0.0
  %1013 = vmatpush.msra.mxu0 0.0
  %1014 = vmatpush.msra.mxu0 0.0
  %1015 = vmatpush.msra.mxu0 0.0
  %1016 = vmatpush.msra.mxu0 %v58
  %1017 = vmatpush.msra.mxu0 %v57
  %1018 = vmatmul.f32.gmra.mxu0 %v1000
  %v1019 = vpop.f32.mrf.mxu0
  %v1020 = vadd.f32 %v135, %v1019
  %1021 = vdwg.mxu0
  %v1022 = vtanh.pop %v1020
  %1023 = vset.pattern.permute.xlu0 24
  %1024 = vperm.xlu0 %1023, %v103
  %v1025 = vpop.permute.xlu0 %1024
  %v1027 = vmul.f32 %v1022, %v1025
  %1028 = vset.pattern.permute.xlu0 25
  %1029 = vperm.xlu0 %1028, %v103
  %v1030 = vpop.permute.xlu0 %1029
  %v1032 = vmul.f32 %v1022, %v1030
  %1034 = vrot.lane.b32.xlu0 %v1032, 124
  %v1035 = vpop.permute.xlu0 %1034
  %v1037 = vadd.f32 %v1027, %v1035
  %1038 = vset.pattern.permute.xlu0 26
  %1039 = vperm.xlu0 %1038, %v103
  %v1040 = vpop.permute.xlu0 %1039
  %v1042 = vmul.f32 %v1022, %v1040
  %1044 = vrot.lane.b32.xlu0 %v1042, 120
  %v1045 = vpop.permute.xlu0 %1044
  %v1047 = vadd.f32 %v1037, %v1045
  %1048 = vset.pattern.permute.xlu0 27
  %1049 = vperm.xlu0 %1048, %v103
  %v1050 = vpop.permute.xlu0 %1049
  %v1052 = vmul.f32 %v1022, %v1050
  %1054 = vrot.lane.b32.xlu0 %v1052, 116
  %v1055 = vpop.permute.xlu0 %1054
  %v1057 = vadd.f32 %v1047, %v1055
  %v1058 = vadd.f32 %v904, %v973
  %v1059 = vmul.f32 %v1058, 2.0
  %v1060 = vadd.f32 %v819, %v1059
  %v1061 = vadd.f32 %v1060, %v1057
  %v1062 = vmul.f32 %v1061, 0.16666667
  %v1063 = vadd.f32 %v752, %v1062
  %v1065 = vsel %vm75, %v1063, 0
  %1067 = vmatpush.msra.mxu0 0.0
  %1068 = vmatpush.msra.mxu0 0.0
  %1069 = vmatpush.msra.mxu0 0.0
  %1070 = vmatpush.msra.mxu0 0.0
  %1071 = vmatpush.msra.mxu0 0.0
  %1072 = vmatpush.msra.mxu0 0.0
  %1073 = vmatpush.msra.mxu0 0.0
  %1074 = vmatpush.msra.mxu0 0.0
  %1075 = vmatpush.msra.mxu0 0.0
  %1076 = vmatpush.msra.mxu0 0.0
  %1077 = vmatpush.msra.mxu0 0.0
  %1078 = vmatpush.msra.mxu0 0.0
  %1079 = vmatpush.msra.mxu0 0.0
  %1080 = vmatpush.msra.mxu0 0.0
  %1081 = vmatpush.msra.mxu0 0.0
  %1082 = vmatpush.msra.mxu0 %v111
  %1083 = vmatmul.f32.gmra.mxu0 %v1065
  %v1084 = vpop.f32.mrf.mxu0
  %v1085 = vadd.f32 %v105, %v1084
  %1086 = vdwg.mxu0
  %v1087 = vmax.f32 %v1085, 0.0
  %v1089 = vsel %vm137, %v1087, 0
  %1091 = vmatpush.msra.mxu0 0.0
  %1092 = vmatpush.msra.mxu0 0.0
  %1093 = vmatpush.msra.mxu0 0.0
  %1094 = vmatpush.msra.mxu0 0.0
  %1095 = vmatpush.msra.mxu0 0.0
  %1096 = vmatpush.msra.mxu0 0.0
  %1097 = vmatpush.msra.mxu0 0.0
  %1098 = vmatpush.msra.mxu0 0.0
  %1099 = vmatpush.msra.mxu0 0.0
  %1100 = vmatpush.msra.mxu0 0.0
  %1101 = vmatpush.msra.mxu0 0.0
  %1102 = vmatpush.msra.mxu0 0.0
  %1103 = vmatpush.msra.mxu0 0.0
  %1104 = vmatpush.msra.mxu0 0.0
  %1105 = vmatpush.msra.mxu0 %v58
  %1106 = vmatpush.msra.mxu0 %v57
  %1107 = vmatmul.f32.gmra.mxu0 %v1089
  %v1108 = vpop.f32.mrf.mxu0
  %v1109 = vadd.f32 %v135, %v1108
  %1110 = vdwg.mxu0
  %v1111 = vtanh.pop %v1109
  %v1112 = vmul.f32 %v1111, %v1025
  %v1113 = vmul.f32 %v1111, %v1030
  %1115 = vrot.lane.b32.xlu0 %v1113, 124
  %v1116 = vpop.permute.xlu0 %1115
  %v1118 = vadd.f32 %v1112, %v1116
  %v1119 = vmul.f32 %v1111, %v1040
  %1121 = vrot.lane.b32.xlu0 %v1119, 120
  %v1122 = vpop.permute.xlu0 %1121
  %v1124 = vadd.f32 %v1118, %v1122
  %v1125 = vmul.f32 %v1111, %v1050
  %1127 = vrot.lane.b32.xlu0 %v1125, 116
  %v1128 = vpop.permute.xlu0 %1127
  %v1130 = vadd.f32 %v1124, %v1128
  %v1131 = vmul.f32 %v1130, 0.5
  %v1132 = vadd.f32 %v1063, %v1131
  %v1134 = vsel %vm75, %v1132, 0
  %1136 = vmatpush.msra.mxu0 0.0
  %1137 = vmatpush.msra.mxu0 0.0
  %1138 = vmatpush.msra.mxu0 0.0
  %1139 = vmatpush.msra.mxu0 0.0
  %1140 = vmatpush.msra.mxu0 0.0
  %1141 = vmatpush.msra.mxu0 0.0
  %1142 = vmatpush.msra.mxu0 0.0
  %1143 = vmatpush.msra.mxu0 0.0
  %1144 = vmatpush.msra.mxu0 0.0
  %1145 = vmatpush.msra.mxu0 0.0
  %1146 = vmatpush.msra.mxu0 0.0
  %1147 = vmatpush.msra.mxu0 0.0
  %1148 = vmatpush.msra.mxu0 0.0
  %1149 = vmatpush.msra.mxu0 0.0
  %1150 = vmatpush.msra.mxu0 0.0
  %1151 = vmatpush.msra.mxu0 %v111
  %1152 = vmatmul.f32.gmra.mxu0 %v1134
  %v1153 = vpop.f32.mrf.mxu0
  %v1154 = vadd.f32 %v105, %v1153
  %1155 = vdwg.mxu0
  %v1156 = vmax.f32 %v1154, 0.0
  %v1158 = vsel %vm137, %v1156, 0
  %1160 = vmatpush.msra.mxu0 0.0
  %1161 = vmatpush.msra.mxu0 0.0
  %1162 = vmatpush.msra.mxu0 0.0
  %1163 = vmatpush.msra.mxu0 0.0
  %1164 = vmatpush.msra.mxu0 0.0
  %1165 = vmatpush.msra.mxu0 0.0
  %1166 = vmatpush.msra.mxu0 0.0
  %1167 = vmatpush.msra.mxu0 0.0
  %1168 = vmatpush.msra.mxu0 0.0
  %1169 = vmatpush.msra.mxu0 0.0
  %1170 = vmatpush.msra.mxu0 0.0
  %1171 = vmatpush.msra.mxu0 0.0
  %1172 = vmatpush.msra.mxu0 0.0
  %1173 = vmatpush.msra.mxu0 0.0
  %1174 = vmatpush.msra.mxu0 %v58
  %1175 = vmatpush.msra.mxu0 %v57
  %1176 = vmatmul.f32.gmra.mxu0 %v1158
  %v1177 = vpop.f32.mrf.mxu0
  %v1178 = vadd.f32 %v135, %v1177
  %1179 = vdwg.mxu0
  %v1180 = vtanh.pop %v1178
  %1181 = vset.pattern.permute.xlu0 28
  %1182 = vperm.xlu0 %1181, %v103
  %v1183 = vpop.permute.xlu0 %1182
  %v1185 = vmul.f32 %v1180, %v1183
  %1186 = vset.pattern.permute.xlu0 29
  %1187 = vperm.xlu0 %1186, %v103
  %v1188 = vpop.permute.xlu0 %1187
  %v1190 = vmul.f32 %v1180, %v1188
  %1192 = vrot.lane.b32.xlu0 %v1190, 124
  %v1193 = vpop.permute.xlu0 %1192
  %v1195 = vadd.f32 %v1185, %v1193
  %1196 = vset.pattern.permute.xlu0 30
  %1197 = vperm.xlu0 %1196, %v103
  %v1198 = vpop.permute.xlu0 %1197
  %v1200 = vmul.f32 %v1180, %v1198
  %1202 = vrot.lane.b32.xlu0 %v1200, 120
  %v1203 = vpop.permute.xlu0 %1202
  %v1205 = vadd.f32 %v1195, %v1203
  %1206 = vset.pattern.permute.xlu0 31
  %1207 = vperm.xlu0 %1206, %v103
  %v1208 = vpop.permute.xlu0 %1207
  %v1210 = vmul.f32 %v1180, %v1208
  %1212 = vrot.lane.b32.xlu0 %v1210, 116
  %v1213 = vpop.permute.xlu0 %1212
  %v1215 = vadd.f32 %v1205, %v1213
  %v1216 = vmul.f32 %v1215, 0.5
  %v1217 = vadd.f32 %v1063, %v1216
  %v1219 = vsel %vm75, %v1217, 0
  %1221 = vmatpush.msra.mxu0 0.0
  %1222 = vmatpush.msra.mxu0 0.0
  %1223 = vmatpush.msra.mxu0 0.0
  %1224 = vmatpush.msra.mxu0 0.0
  %1225 = vmatpush.msra.mxu0 0.0
  %1226 = vmatpush.msra.mxu0 0.0
  %1227 = vmatpush.msra.mxu0 0.0
  %1228 = vmatpush.msra.mxu0 0.0
  %1229 = vmatpush.msra.mxu0 0.0
  %1230 = vmatpush.msra.mxu0 0.0
  %1231 = vmatpush.msra.mxu0 0.0
  %1232 = vmatpush.msra.mxu0 0.0
  %1233 = vmatpush.msra.mxu0 0.0
  %1234 = vmatpush.msra.mxu0 0.0
  %1235 = vmatpush.msra.mxu0 0.0
  %1236 = vmatpush.msra.mxu0 %v111
  %1237 = vmatmul.f32.gmra.mxu0 %v1219
  %v1238 = vpop.f32.mrf.mxu0
  %v1239 = vadd.f32 %v105, %v1238
  %1240 = vdwg.mxu0
  %v1241 = vmax.f32 %v1239, 0.0
  %v1243 = vsel %vm137, %v1241, 0
  %1245 = vmatpush.msra.mxu0 0.0
  %1246 = vmatpush.msra.mxu0 0.0
  %1247 = vmatpush.msra.mxu0 0.0
  %1248 = vmatpush.msra.mxu0 0.0
  %1249 = vmatpush.msra.mxu0 0.0
  %1250 = vmatpush.msra.mxu0 0.0
  %1251 = vmatpush.msra.mxu0 0.0
  %1252 = vmatpush.msra.mxu0 0.0
  %1253 = vmatpush.msra.mxu0 0.0
  %1254 = vmatpush.msra.mxu0 0.0
  %1255 = vmatpush.msra.mxu0 0.0
  %1256 = vmatpush.msra.mxu0 0.0
  %1257 = vmatpush.msra.mxu0 0.0
  %1258 = vmatpush.msra.mxu0 0.0
  %1259 = vmatpush.msra.mxu0 %v58
  %1260 = vmatpush.msra.mxu0 %v57
  %1261 = vmatmul.f32.gmra.mxu0 %v1243
  %v1262 = vpop.f32.mrf.mxu0
  %v1263 = vadd.f32 %v135, %v1262
  %1264 = vdwg.mxu0
  %v1265 = vtanh.pop %v1263
  %v1266 = vmul.f32 %v1265, %v1183
  %v1267 = vmul.f32 %v1265, %v1188
  %1269 = vrot.lane.b32.xlu0 %v1267, 124
  %v1270 = vpop.permute.xlu0 %1269
  %v1272 = vadd.f32 %v1266, %v1270
  %v1273 = vmul.f32 %v1265, %v1198
  %1275 = vrot.lane.b32.xlu0 %v1273, 120
  %v1276 = vpop.permute.xlu0 %1275
  %v1278 = vadd.f32 %v1272, %v1276
  %v1279 = vmul.f32 %v1265, %v1208
  %1281 = vrot.lane.b32.xlu0 %v1279, 116
  %v1282 = vpop.permute.xlu0 %1281
  %v1284 = vadd.f32 %v1278, %v1282
  %v1285 = vadd.f32 %v1063, %v1284
  %v1287 = vsel %vm75, %v1285, 0
  %1289 = vmatpush.msra.mxu0 0.0
  %1290 = vmatpush.msra.mxu0 0.0
  %1291 = vmatpush.msra.mxu0 0.0
  %1292 = vmatpush.msra.mxu0 0.0
  %1293 = vmatpush.msra.mxu0 0.0
  %1294 = vmatpush.msra.mxu0 0.0
  %1295 = vmatpush.msra.mxu0 0.0
  %1296 = vmatpush.msra.mxu0 0.0
  %1297 = vmatpush.msra.mxu0 0.0
  %1298 = vmatpush.msra.mxu0 0.0
  %1299 = vmatpush.msra.mxu0 0.0
  %1300 = vmatpush.msra.mxu0 0.0
  %1301 = vmatpush.msra.mxu0 0.0
  %1302 = vmatpush.msra.mxu0 0.0
  %1303 = vmatpush.msra.mxu0 0.0
  %1304 = vmatpush.msra.mxu0 %v111
  %1305 = vmatmul.f32.gmra.mxu0 %v1287
  %v1306 = vpop.f32.mrf.mxu0
  %v1307 = vadd.f32 %v105, %v1306
  %1308 = vdwg.mxu0
  %v1309 = vmax.f32 %v1307, 0.0
  %v1311 = vsel %vm137, %v1309, 0
  %1313 = vmatpush.msra.mxu0 0.0
  %1314 = vmatpush.msra.mxu0 0.0
  %1315 = vmatpush.msra.mxu0 0.0
  %1316 = vmatpush.msra.mxu0 0.0
  %1317 = vmatpush.msra.mxu0 0.0
  %1318 = vmatpush.msra.mxu0 0.0
  %1319 = vmatpush.msra.mxu0 0.0
  %1320 = vmatpush.msra.mxu0 0.0
  %1321 = vmatpush.msra.mxu0 0.0
  %1322 = vmatpush.msra.mxu0 0.0
  %1323 = vmatpush.msra.mxu0 0.0
  %1324 = vmatpush.msra.mxu0 0.0
  %1325 = vmatpush.msra.mxu0 0.0
  %1326 = vmatpush.msra.mxu0 0.0
  %1327 = vmatpush.msra.mxu0 %v58
  %1328 = vmatpush.msra.mxu0 %v57
  %1329 = vmatmul.f32.gmra.mxu0 %v1311
  %v1330 = vpop.f32.mrf.mxu0
  %v1331 = vadd.f32 %v135, %v1330
  %1332 = vdwg.mxu0
  %v1333 = vtanh.pop %v1331
  %1334 = vset.pattern.permute.xlu0 32
  %1335 = vperm.xlu0 %1334, %v103
  %v1336 = vpop.permute.xlu0 %1335
  %v1338 = vmul.f32 %v1333, %v1336
  %1339 = vset.pattern.permute.xlu0 33
  %1340 = vperm.xlu0 %1339, %v103
  %v1341 = vpop.permute.xlu0 %1340
  %v1343 = vmul.f32 %v1333, %v1341
  %1345 = vrot.lane.b32.xlu0 %v1343, 124
  %v1346 = vpop.permute.xlu0 %1345
  %v1348 = vadd.f32 %v1338, %v1346
  %1349 = vset.pattern.permute.xlu0 34
  %1350 = vperm.xlu0 %1349, %v103
  %v1351 = vpop.permute.xlu0 %1350
  %v1353 = vmul.f32 %v1333, %v1351
  %1355 = vrot.lane.b32.xlu0 %v1353, 120
  %v1356 = vpop.permute.xlu0 %1355
  %v1358 = vadd.f32 %v1348, %v1356
  %1359 = vset.pattern.permute.xlu0 35
  %1360 = vperm.xlu0 %1359, %v103
  %v1361 = vpop.permute.xlu0 %1360
  %v1363 = vmul.f32 %v1333, %v1361
  %1365 = vrot.lane.b32.xlu0 %v1363, 116
  %v1366 = vpop.permute.xlu0 %1365
  %v1368 = vadd.f32 %v1358, %v1366
  %v1369 = vadd.f32 %v1215, %v1284
  %v1370 = vmul.f32 %v1369, 2.0
  %v1371 = vadd.f32 %v1130, %v1370
  %v1372 = vadd.f32 %v1371, %v1368
  %v1373 = vmul.f32 %v1372, 0.16666667
  %v1374 = vadd.f32 %v1063, %v1373
  %v1376 = vsel %vm75, %v1374, 0
  %1378 = vmatpush.msra.mxu0 0.0
  %1379 = vmatpush.msra.mxu0 0.0
  %1380 = vmatpush.msra.mxu0 0.0
  %1381 = vmatpush.msra.mxu0 0.0
  %1382 = vmatpush.msra.mxu0 0.0
  %1383 = vmatpush.msra.mxu0 0.0
  %1384 = vmatpush.msra.mxu0 0.0
  %1385 = vmatpush.msra.mxu0 0.0
  %1386 = vmatpush.msra.mxu0 0.0
  %1387 = vmatpush.msra.mxu0 0.0
  %1388 = vmatpush.msra.mxu0 0.0
  %1389 = vmatpush.msra.mxu0 0.0
  %1390 = vmatpush.msra.mxu0 0.0
  %1391 = vmatpush.msra.mxu0 0.0
  %1392 = vmatpush.msra.mxu0 0.0
  %1393 = vmatpush.msra.mxu0 %v111
  %1394 = vmatmul.f32.gmra.mxu0 %v1376
  %v1395 = vpop.f32.mrf.mxu0
  %v1396 = vadd.f32 %v105, %v1395
  %1397 = vdwg.mxu0
  %v1398 = vmax.f32 %v1396, 0.0
  %v1400 = vsel %vm137, %v1398, 0
  %1402 = vmatpush.msra.mxu0 0.0
  %1403 = vmatpush.msra.mxu0 0.0
  %1404 = vmatpush.msra.mxu0 0.0
  %1405 = vmatpush.msra.mxu0 0.0
  %1406 = vmatpush.msra.mxu0 0.0
  %1407 = vmatpush.msra.mxu0 0.0
  %1408 = vmatpush.msra.mxu0 0.0
  %1409 = vmatpush.msra.mxu0 0.0
  %1410 = vmatpush.msra.mxu0 0.0
  %1411 = vmatpush.msra.mxu0 0.0
  %1412 = vmatpush.msra.mxu0 0.0
  %1413 = vmatpush.msra.mxu0 0.0
  %1414 = vmatpush.msra.mxu0 0.0
  %1415 = vmatpush.msra.mxu0 0.0
  %1416 = vmatpush.msra.mxu0 %v58
  %1417 = vmatpush.msra.mxu0 %v57
  %1418 = vmatmul.f32.gmra.mxu0 %v1400
  %v1419 = vpop.f32.mrf.mxu0
  %v1420 = vadd.f32 %v135, %v1419
  %1421 = vdwg.mxu0
  %v1422 = vtanh.pop %v1420
  %v1423 = vmul.f32 %v1422, %v1336
  %v1424 = vmul.f32 %v1422, %v1341
  %1426 = vrot.lane.b32.xlu0 %v1424, 124
  %v1427 = vpop.permute.xlu0 %1426
  %v1429 = vadd.f32 %v1423, %v1427
  %v1430 = vmul.f32 %v1422, %v1351
  %1432 = vrot.lane.b32.xlu0 %v1430, 120
  %v1433 = vpop.permute.xlu0 %1432
  %v1435 = vadd.f32 %v1429, %v1433
  %v1436 = vmul.f32 %v1422, %v1361
  %1438 = vrot.lane.b32.xlu0 %v1436, 116
  %v1439 = vpop.permute.xlu0 %1438
  %v1441 = vadd.f32 %v1435, %v1439
  %v1442 = vmul.f32 %v1441, 0.5
  %v1443 = vadd.f32 %v1374, %v1442
  %v1445 = vsel %vm75, %v1443, 0
  %1447 = vmatpush.msra.mxu0 0.0
  %1448 = vmatpush.msra.mxu0 0.0
  %1449 = vmatpush.msra.mxu0 0.0
  %1450 = vmatpush.msra.mxu0 0.0
  %1451 = vmatpush.msra.mxu0 0.0
  %1452 = vmatpush.msra.mxu0 0.0
  %1453 = vmatpush.msra.mxu0 0.0
  %1454 = vmatpush.msra.mxu0 0.0
  %1455 = vmatpush.msra.mxu0 0.0
  %1456 = vmatpush.msra.mxu0 0.0
  %1457 = vmatpush.msra.mxu0 0.0
  %1458 = vmatpush.msra.mxu0 0.0
  %1459 = vmatpush.msra.mxu0 0.0
  %1460 = vmatpush.msra.mxu0 0.0
  %1461 = vmatpush.msra.mxu0 0.0
  %1462 = vmatpush.msra.mxu0 %v111
  %1463 = vmatmul.f32.gmra.mxu0 %v1445
  %v1464 = vpop.f32.mrf.mxu0
  %v1465 = vadd.f32 %v105, %v1464
  %1466 = vdwg.mxu0
  %v1467 = vmax.f32 %v1465, 0.0
  %v1469 = vsel %vm137, %v1467, 0
  %1471 = vmatpush.msra.mxu0 0.0
  %1472 = vmatpush.msra.mxu0 0.0
  %1473 = vmatpush.msra.mxu0 0.0
  %1474 = vmatpush.msra.mxu0 0.0
  %1475 = vmatpush.msra.mxu0 0.0
  %1476 = vmatpush.msra.mxu0 0.0
  %1477 = vmatpush.msra.mxu0 0.0
  %1478 = vmatpush.msra.mxu0 0.0
  %1479 = vmatpush.msra.mxu0 0.0
  %1480 = vmatpush.msra.mxu0 0.0
  %1481 = vmatpush.msra.mxu0 0.0
  %1482 = vmatpush.msra.mxu0 0.0
  %1483 = vmatpush.msra.mxu0 0.0
  %1484 = vmatpush.msra.mxu0 0.0
  %1485 = vmatpush.msra.mxu0 %v58
  %1486 = vmatpush.msra.mxu0 %v57
  %1487 = vmatmul.f32.gmra.mxu0 %v1469
  %v1488 = vpop.f32.mrf.mxu0
  %v1489 = vadd.f32 %v135, %v1488
  %1490 = vdwg.mxu0
  %v1491 = vtanh.pop %v1489
  %1492 = vset.pattern.permute.xlu0 36
  %1493 = vperm.xlu0 %1492, %v103
  %v1494 = vpop.permute.xlu0 %1493
  %v1496 = vmul.f32 %v1491, %v1494
  %1497 = vset.pattern.permute.xlu0 37
  %1498 = vperm.xlu0 %1497, %v103
  %v1499 = vpop.permute.xlu0 %1498
  %v1501 = vmul.f32 %v1491, %v1499
  %1503 = vrot.lane.b32.xlu0 %v1501, 124
  %v1504 = vpop.permute.xlu0 %1503
  %v1506 = vadd.f32 %v1496, %v1504
  %1507 = vset.pattern.permute.xlu0 38
  %1508 = vperm.xlu0 %1507, %v103
  %v1509 = vpop.permute.xlu0 %1508
  %v1511 = vmul.f32 %v1491, %v1509
  %1513 = vrot.lane.b32.xlu0 %v1511, 120
  %v1514 = vpop.permute.xlu0 %1513
  %v1516 = vadd.f32 %v1506, %v1514
  %1517 = vset.pattern.permute.xlu0 39
  %1518 = vperm.xlu0 %1517, %v103
  %v1519 = vpop.permute.xlu0 %1518
  %v1521 = vmul.f32 %v1491, %v1519
  %1523 = vrot.lane.b32.xlu0 %v1521, 116
  %v1524 = vpop.permute.xlu0 %1523
  %v1526 = vadd.f32 %v1516, %v1524
  %v1527 = vmul.f32 %v1526, 0.5
  %v1528 = vadd.f32 %v1374, %v1527
  %v1530 = vsel %vm75, %v1528, 0
  %1532 = vmatpush.msra.mxu0 0.0
  %1533 = vmatpush.msra.mxu0 0.0
  %1534 = vmatpush.msra.mxu0 0.0
  %1535 = vmatpush.msra.mxu0 0.0
  %1536 = vmatpush.msra.mxu0 0.0
  %1537 = vmatpush.msra.mxu0 0.0
  %1538 = vmatpush.msra.mxu0 0.0
  %1539 = vmatpush.msra.mxu0 0.0
  %1540 = vmatpush.msra.mxu0 0.0
  %1541 = vmatpush.msra.mxu0 0.0
  %1542 = vmatpush.msra.mxu0 0.0
  %1543 = vmatpush.msra.mxu0 0.0
  %1544 = vmatpush.msra.mxu0 0.0
  %1545 = vmatpush.msra.mxu0 0.0
  %1546 = vmatpush.msra.mxu0 0.0
  %1547 = vmatpush.msra.mxu0 %v111
  %1548 = vmatmul.f32.gmra.mxu0 %v1530
  %v1549 = vpop.f32.mrf.mxu0
  %v1550 = vadd.f32 %v105, %v1549
  %1551 = vdwg.mxu0
  %v1552 = vmax.f32 %v1550, 0.0
  %v1554 = vsel %vm137, %v1552, 0
  %1556 = vmatpush.msra.mxu0 0.0
  %1557 = vmatpush.msra.mxu0 0.0
  %1558 = vmatpush.msra.mxu0 0.0
  %1559 = vmatpush.msra.mxu0 0.0
  %1560 = vmatpush.msra.mxu0 0.0
  %1561 = vmatpush.msra.mxu0 0.0
  %1562 = vmatpush.msra.mxu0 0.0
  %1563 = vmatpush.msra.mxu0 0.0
  %1564 = vmatpush.msra.mxu0 0.0
  %1565 = vmatpush.msra.mxu0 0.0
  %1566 = vmatpush.msra.mxu0 0.0
  %1567 = vmatpush.msra.mxu0 0.0
  %1568 = vmatpush.msra.mxu0 0.0
  %1569 = vmatpush.msra.mxu0 0.0
  %1570 = vmatpush.msra.mxu0 %v58
  %1571 = vmatpush.msra.mxu0 %v57
  %1572 = vmatmul.f32.gmra.mxu0 %v1554
  %v1573 = vpop.f32.mrf.mxu0
  %v1574 = vadd.f32 %v135, %v1573
  %1575 = vdwg.mxu0
  %v1576 = vtanh.pop %v1574
  %v1577 = vmul.f32 %v1576, %v1494
  %v1578 = vmul.f32 %v1576, %v1499
  %1580 = vrot.lane.b32.xlu0 %v1578, 124
  %v1581 = vpop.permute.xlu0 %1580
  %v1583 = vadd.f32 %v1577, %v1581
  %v1584 = vmul.f32 %v1576, %v1509
  %1586 = vrot.lane.b32.xlu0 %v1584, 120
  %v1587 = vpop.permute.xlu0 %1586
  %v1589 = vadd.f32 %v1583, %v1587
  %v1590 = vmul.f32 %v1576, %v1519
  %1592 = vrot.lane.b32.xlu0 %v1590, 116
  %v1593 = vpop.permute.xlu0 %1592
  %v1595 = vadd.f32 %v1589, %v1593
  %v1596 = vadd.f32 %v1374, %v1595
  %v1598 = vsel %vm75, %v1596, 0
  %1600 = vmatpush.msra.mxu0 0.0
  %1601 = vmatpush.msra.mxu0 0.0
  %1602 = vmatpush.msra.mxu0 0.0
  %1603 = vmatpush.msra.mxu0 0.0
  %1604 = vmatpush.msra.mxu0 0.0
  %1605 = vmatpush.msra.mxu0 0.0
  %1606 = vmatpush.msra.mxu0 0.0
  %1607 = vmatpush.msra.mxu0 0.0
  %1608 = vmatpush.msra.mxu0 0.0
  %1609 = vmatpush.msra.mxu0 0.0
  %1610 = vmatpush.msra.mxu0 0.0
  %1611 = vmatpush.msra.mxu0 0.0
  %1612 = vmatpush.msra.mxu0 0.0
  %1613 = vmatpush.msra.mxu0 0.0
  %1614 = vmatpush.msra.mxu0 0.0
  %1615 = vmatpush.msra.mxu0 %v111
  %1616 = vmatmul.f32.gmra.mxu0 %v1598
  %v1617 = vpop.f32.mrf.mxu0
  %v1618 = vadd.f32 %v105, %v1617
  %1619 = vdwg.mxu0
  %v1620 = vmax.f32 %v1618, 0.0
  %v1622 = vsel %vm137, %v1620, 0
  %1624 = vmatpush.msra.mxu0 0.0
  %1625 = vmatpush.msra.mxu0 0.0
  %1626 = vmatpush.msra.mxu0 0.0
  %1627 = vmatpush.msra.mxu0 0.0
  %1628 = vmatpush.msra.mxu0 0.0
  %1629 = vmatpush.msra.mxu0 0.0
  %1630 = vmatpush.msra.mxu0 0.0
  %1631 = vmatpush.msra.mxu0 0.0
  %1632 = vmatpush.msra.mxu0 0.0
  %1633 = vmatpush.msra.mxu0 0.0
  %1634 = vmatpush.msra.mxu0 0.0
  %1635 = vmatpush.msra.mxu0 0.0
  %1636 = vmatpush.msra.mxu0 0.0
  %1637 = vmatpush.msra.mxu0 0.0
  %1638 = vmatpush.msra.mxu0 %v58
  %1639 = vmatpush.msra.mxu0 %v57
  %1640 = vmatmul.f32.gmra.mxu0 %v1622
  %v1641 = vpop.f32.mrf.mxu0
  %v1642 = vadd.f32 %v135, %v1641
  %1643 = vdwg.mxu0
  %v1644 = vtanh.pop %v1642
  %1645 = vset.pattern.permute.xlu0 40
  %1646 = vperm.xlu0 %1645, %v103
  %v1647 = vpop.permute.xlu0 %1646
  %v1649 = vmul.f32 %v1644, %v1647
  %1650 = vset.pattern.permute.xlu0 41
  %1651 = vperm.xlu0 %1650, %v103
  %v1652 = vpop.permute.xlu0 %1651
  %v1654 = vmul.f32 %v1644, %v1652
  %1656 = vrot.lane.b32.xlu0 %v1654, 124
  %v1657 = vpop.permute.xlu0 %1656
  %v1659 = vadd.f32 %v1649, %v1657
  %1660 = vset.pattern.permute.xlu0 42
  %1661 = vperm.xlu0 %1660, %v103
  %v1662 = vpop.permute.xlu0 %1661
  %v1664 = vmul.f32 %v1644, %v1662
  %1666 = vrot.lane.b32.xlu0 %v1664, 120
  %v1667 = vpop.permute.xlu0 %1666
  %v1669 = vadd.f32 %v1659, %v1667
  %1670 = vset.pattern.permute.xlu0 43
  %1671 = vperm.xlu0 %1670, %v103
  %v1672 = vpop.permute.xlu0 %1671
  %v1674 = vmul.f32 %v1644, %v1672
  %1676 = vrot.lane.b32.xlu0 %v1674, 116
  %v1677 = vpop.permute.xlu0 %1676
  %v1679 = vadd.f32 %v1669, %v1677
  %v1680 = vadd.f32 %v1526, %v1595
  %v1681 = vmul.f32 %v1680, 2.0
  %v1682 = vadd.f32 %v1441, %v1681
  %v1683 = vadd.f32 %v1682, %v1679
  %v1684 = vmul.f32 %v1683, 0.16666667
  %v1685 = vadd.f32 %v1374, %v1684
  %v1687 = vsel %vm75, %v1685, 0
  %1689 = vmatpush.msra.mxu0 0.0
  %1690 = vmatpush.msra.mxu0 0.0
  %1691 = vmatpush.msra.mxu0 0.0
  %1692 = vmatpush.msra.mxu0 0.0
  %1693 = vmatpush.msra.mxu0 0.0
  %1694 = vmatpush.msra.mxu0 0.0
  %1695 = vmatpush.msra.mxu0 0.0
  %1696 = vmatpush.msra.mxu0 0.0
  %1697 = vmatpush.msra.mxu0 0.0
  %1698 = vmatpush.msra.mxu0 0.0
  %1699 = vmatpush.msra.mxu0 0.0
  %1700 = vmatpush.msra.mxu0 0.0
  %1701 = vmatpush.msra.mxu0 0.0
  %1702 = vmatpush.msra.mxu0 0.0
  %1703 = vmatpush.msra.mxu0 0.0
  %1704 = vmatpush.msra.mxu0 %v111
  %1705 = vmatmul.f32.gmra.mxu0 %v1687
  %v1706 = vpop.f32.mrf.mxu0
  %v1707 = vadd.f32 %v105, %v1706
  %1708 = vdwg.mxu0
  %v1709 = vmax.f32 %v1707, 0.0
  %v1711 = vsel %vm137, %v1709, 0
  %1713 = vmatpush.msra.mxu0 0.0
  %1714 = vmatpush.msra.mxu0 0.0
  %1715 = vmatpush.msra.mxu0 0.0
  %1716 = vmatpush.msra.mxu0 0.0
  %1717 = vmatpush.msra.mxu0 0.0
  %1718 = vmatpush.msra.mxu0 0.0
  %1719 = vmatpush.msra.mxu0 0.0
  %1720 = vmatpush.msra.mxu0 0.0
  %1721 = vmatpush.msra.mxu0 0.0
  %1722 = vmatpush.msra.mxu0 0.0
  %1723 = vmatpush.msra.mxu0 0.0
  %1724 = vmatpush.msra.mxu0 0.0
  %1725 = vmatpush.msra.mxu0 0.0
  %1726 = vmatpush.msra.mxu0 0.0
  %1727 = vmatpush.msra.mxu0 %v58
  %1728 = vmatpush.msra.mxu0 %v57
  %1729 = vmatmul.f32.gmra.mxu0 %v1711
  %v1730 = vpop.f32.mrf.mxu0
  %v1731 = vadd.f32 %v135, %v1730
  %1732 = vdwg.mxu0
  %v1733 = vtanh.pop %v1731
  %v1734 = vmul.f32 %v1733, %v1647
  %v1735 = vmul.f32 %v1733, %v1652
  %1737 = vrot.lane.b32.xlu0 %v1735, 124
  %v1738 = vpop.permute.xlu0 %1737
  %v1740 = vadd.f32 %v1734, %v1738
  %v1741 = vmul.f32 %v1733, %v1662
  %1743 = vrot.lane.b32.xlu0 %v1741, 120
  %v1744 = vpop.permute.xlu0 %1743
  %v1746 = vadd.f32 %v1740, %v1744
  %v1747 = vmul.f32 %v1733, %v1672
  %1749 = vrot.lane.b32.xlu0 %v1747, 116
  %v1750 = vpop.permute.xlu0 %1749
  %v1752 = vadd.f32 %v1746, %v1750
  %v1753 = vmul.f32 %v1752, 0.5
  %v1754 = vadd.f32 %v1685, %v1753
  %v1756 = vsel %vm75, %v1754, 0
  %1758 = vmatpush.msra.mxu0 0.0
  %1759 = vmatpush.msra.mxu0 0.0
  %1760 = vmatpush.msra.mxu0 0.0
  %1761 = vmatpush.msra.mxu0 0.0
  %1762 = vmatpush.msra.mxu0 0.0
  %1763 = vmatpush.msra.mxu0 0.0
  %1764 = vmatpush.msra.mxu0 0.0
  %1765 = vmatpush.msra.mxu0 0.0
  %1766 = vmatpush.msra.mxu0 0.0
  %1767 = vmatpush.msra.mxu0 0.0
  %1768 = vmatpush.msra.mxu0 0.0
  %1769 = vmatpush.msra.mxu0 0.0
  %1770 = vmatpush.msra.mxu0 0.0
  %1771 = vmatpush.msra.mxu0 0.0
  %1772 = vmatpush.msra.mxu0 0.0
  %1773 = vmatpush.msra.mxu0 %v111
  %1774 = vmatmul.f32.gmra.mxu0 %v1756
  %v1775 = vpop.f32.mrf.mxu0
  %v1776 = vadd.f32 %v105, %v1775
  %1777 = vdwg.mxu0
  %v1778 = vmax.f32 %v1776, 0.0
  %v1780 = vsel %vm137, %v1778, 0
  %1782 = vmatpush.msra.mxu0 0.0
  %1783 = vmatpush.msra.mxu0 0.0
  %1784 = vmatpush.msra.mxu0 0.0
  %1785 = vmatpush.msra.mxu0 0.0
  %1786 = vmatpush.msra.mxu0 0.0
  %1787 = vmatpush.msra.mxu0 0.0
  %1788 = vmatpush.msra.mxu0 0.0
  %1789 = vmatpush.msra.mxu0 0.0
  %1790 = vmatpush.msra.mxu0 0.0
  %1791 = vmatpush.msra.mxu0 0.0
  %1792 = vmatpush.msra.mxu0 0.0
  %1793 = vmatpush.msra.mxu0 0.0
  %1794 = vmatpush.msra.mxu0 0.0
  %1795 = vmatpush.msra.mxu0 0.0
  %1796 = vmatpush.msra.mxu0 %v58
  %1797 = vmatpush.msra.mxu0 %v57
  %1798 = vmatmul.f32.gmra.mxu0 %v1780
  %v1799 = vpop.f32.mrf.mxu0
  %v1800 = vadd.f32 %v135, %v1799
  %1801 = vdwg.mxu0
  %v1802 = vtanh.pop %v1800
  %1803 = vset.pattern.permute.xlu0 44
  %1804 = vperm.xlu0 %1803, %v103
  %v1805 = vpop.permute.xlu0 %1804
  %v1807 = vmul.f32 %v1802, %v1805
  %1808 = vset.pattern.permute.xlu0 45
  %1809 = vperm.xlu0 %1808, %v103
  %v1810 = vpop.permute.xlu0 %1809
  %v1812 = vmul.f32 %v1802, %v1810
  %1814 = vrot.lane.b32.xlu0 %v1812, 124
  %v1815 = vpop.permute.xlu0 %1814
  %v1817 = vadd.f32 %v1807, %v1815
  %1818 = vset.pattern.permute.xlu0 46
  %1819 = vperm.xlu0 %1818, %v103
  %v1820 = vpop.permute.xlu0 %1819
  %v1822 = vmul.f32 %v1802, %v1820
  %1824 = vrot.lane.b32.xlu0 %v1822, 120
  %v1825 = vpop.permute.xlu0 %1824
  %v1827 = vadd.f32 %v1817, %v1825
  %1828 = vset.pattern.permute.xlu0 47
  %1829 = vperm.xlu0 %1828, %v103
  %v1830 = vpop.permute.xlu0 %1829
  %v1832 = vmul.f32 %v1802, %v1830
  %1834 = vrot.lane.b32.xlu0 %v1832, 116
  %v1835 = vpop.permute.xlu0 %1834
  %v1837 = vadd.f32 %v1827, %v1835
  %v1838 = vmul.f32 %v1837, 0.5
  %v1839 = vadd.f32 %v1685, %v1838
  %v1841 = vsel %vm75, %v1839, 0
  %1843 = vmatpush.msra.mxu0 0.0
  %1844 = vmatpush.msra.mxu0 0.0
  %1845 = vmatpush.msra.mxu0 0.0
  %1846 = vmatpush.msra.mxu0 0.0
  %1847 = vmatpush.msra.mxu0 0.0
  %1848 = vmatpush.msra.mxu0 0.0
  %1849 = vmatpush.msra.mxu0 0.0
  %1850 = vmatpush.msra.mxu0 0.0
  %1851 = vmatpush.msra.mxu0 0.0
  %1852 = vmatpush.msra.mxu0 0.0
  %1853 = vmatpush.msra.mxu0 0.0
  %1854 = vmatpush.msra.mxu0 0.0
  %1855 = vmatpush.msra.mxu0 0.0
  %1856 = vmatpush.msra.mxu0 0.0
  %1857 = vmatpush.msra.mxu0 0.0
  %1858 = vmatpush.msra.mxu0 %v111
  %1859 = vmatmul.f32.gmra.mxu0 %v1841
  %v1860 = vpop.f32.mrf.mxu0
  %v1861 = vadd.f32 %v105, %v1860
  %1862 = vdwg.mxu0
  %v1863 = vmax.f32 %v1861, 0.0
  %v1865 = vsel %vm137, %v1863, 0
  %1867 = vmatpush.msra.mxu0 0.0
  %1868 = vmatpush.msra.mxu0 0.0
  %1869 = vmatpush.msra.mxu0 0.0
  %1870 = vmatpush.msra.mxu0 0.0
  %1871 = vmatpush.msra.mxu0 0.0
  %1872 = vmatpush.msra.mxu0 0.0
  %1873 = vmatpush.msra.mxu0 0.0
  %1874 = vmatpush.msra.mxu0 0.0
  %1875 = vmatpush.msra.mxu0 0.0
  %1876 = vmatpush.msra.mxu0 0.0
  %1877 = vmatpush.msra.mxu0 0.0
  %1878 = vmatpush.msra.mxu0 0.0
  %1879 = vmatpush.msra.mxu0 0.0
  %1880 = vmatpush.msra.mxu0 0.0
  %1881 = vmatpush.msra.mxu0 %v58
  %1882 = vmatpush.msra.mxu0 %v57
  %1883 = vmatmul.f32.gmra.mxu0 %v1865
  %v1884 = vpop.f32.mrf.mxu0
  %v1885 = vadd.f32 %v135, %v1884
  %1886 = vdwg.mxu0
  %v1887 = vtanh.pop %v1885
  %v1888 = vmul.f32 %v1887, %v1805
  %v1889 = vmul.f32 %v1887, %v1810
  %1891 = vrot.lane.b32.xlu0 %v1889, 124
  %v1892 = vpop.permute.xlu0 %1891
  %v1894 = vadd.f32 %v1888, %v1892
  %v1895 = vmul.f32 %v1887, %v1820
  %1897 = vrot.lane.b32.xlu0 %v1895, 120
  %v1898 = vpop.permute.xlu0 %1897
  %v1900 = vadd.f32 %v1894, %v1898
  %v1901 = vmul.f32 %v1887, %v1830
  %1903 = vrot.lane.b32.xlu0 %v1901, 116
  %v1904 = vpop.permute.xlu0 %1903
  %v1906 = vadd.f32 %v1900, %v1904
  %v1907 = vadd.f32 %v1685, %v1906
  %v1909 = vsel %vm75, %v1907, 0
  %1911 = vmatpush.msra.mxu0 0.0
  %1912 = vmatpush.msra.mxu0 0.0
  %1913 = vmatpush.msra.mxu0 0.0
  %1914 = vmatpush.msra.mxu0 0.0
  %1915 = vmatpush.msra.mxu0 0.0
  %1916 = vmatpush.msra.mxu0 0.0
  %1917 = vmatpush.msra.mxu0 0.0
  %1918 = vmatpush.msra.mxu0 0.0
  %1919 = vmatpush.msra.mxu0 0.0
  %1920 = vmatpush.msra.mxu0 0.0
  %1921 = vmatpush.msra.mxu0 0.0
  %1922 = vmatpush.msra.mxu0 0.0
  %1923 = vmatpush.msra.mxu0 0.0
  %1924 = vmatpush.msra.mxu0 0.0
  %1925 = vmatpush.msra.mxu0 0.0
  %1926 = vmatpush.msra.mxu0 %v111
  %1927 = vmatmul.f32.gmra.mxu0 %v1909
  %v1928 = vpop.f32.mrf.mxu0
  %v1929 = vadd.f32 %v105, %v1928
  %1930 = vdwg.mxu0
  %v1931 = vmax.f32 %v1929, 0.0
  %v1933 = vsel %vm137, %v1931, 0
  %1935 = vmatpush.msra.mxu0 0.0
  %1936 = vmatpush.msra.mxu0 0.0
  %1937 = vmatpush.msra.mxu0 0.0
  %1938 = vmatpush.msra.mxu0 0.0
  %1939 = vmatpush.msra.mxu0 0.0
  %1940 = vmatpush.msra.mxu0 0.0
  %1941 = vmatpush.msra.mxu0 0.0
  %1942 = vmatpush.msra.mxu0 0.0
  %1943 = vmatpush.msra.mxu0 0.0
  %1944 = vmatpush.msra.mxu0 0.0
  %1945 = vmatpush.msra.mxu0 0.0
  %1946 = vmatpush.msra.mxu0 0.0
  %1947 = vmatpush.msra.mxu0 0.0
  %1948 = vmatpush.msra.mxu0 0.0
  %1949 = vmatpush.msra.mxu0 %v58
  %1950 = vmatpush.msra.mxu0 %v57
  %1951 = vmatmul.f32.gmra.mxu0 %v1933
  %v1952 = vpop.f32.mrf.mxu0
  %v1953 = vadd.f32 %v135, %v1952
  %1954 = vdwg.mxu0
  %v1955 = vtanh.pop %v1953
  %1956 = vset.pattern.permute.xlu0 48
  %1957 = vperm.xlu0 %1956, %v103
  %v1958 = vpop.permute.xlu0 %1957
  %v1960 = vmul.f32 %v1955, %v1958
  %1961 = vset.pattern.permute.xlu0 49
  %1962 = vperm.xlu0 %1961, %v103
  %v1963 = vpop.permute.xlu0 %1962
  %v1965 = vmul.f32 %v1955, %v1963
  %1967 = vrot.lane.b32.xlu0 %v1965, 124
  %v1968 = vpop.permute.xlu0 %1967
  %v1970 = vadd.f32 %v1960, %v1968
  %1971 = vset.pattern.permute.xlu0 50
  %1972 = vperm.xlu0 %1971, %v103
  %v1973 = vpop.permute.xlu0 %1972
  %v1975 = vmul.f32 %v1955, %v1973
  %1977 = vrot.lane.b32.xlu0 %v1975, 120
  %v1978 = vpop.permute.xlu0 %1977
  %v1980 = vadd.f32 %v1970, %v1978
  %1981 = vset.pattern.permute.xlu0 51
  %1982 = vperm.xlu0 %1981, %v103
  %v1983 = vpop.permute.xlu0 %1982
  %v1985 = vmul.f32 %v1955, %v1983
  %1987 = vrot.lane.b32.xlu0 %v1985, 116
  %v1988 = vpop.permute.xlu0 %1987
  %v1990 = vadd.f32 %v1980, %v1988
  %v1991 = vadd.f32 %v1837, %v1906
  %v1992 = vmul.f32 %v1991, 2.0
  %v1993 = vadd.f32 %v1752, %v1992
  %v1994 = vadd.f32 %v1993, %v1990
  %v1995 = vmul.f32 %v1994, 0.16666667
  %v1996 = vadd.f32 %v1685, %v1995
  %v1998 = vsel %vm75, %v1996, 0
  %2000 = vmatpush.msra.mxu0 0.0
  %2001 = vmatpush.msra.mxu0 0.0
  %2002 = vmatpush.msra.mxu0 0.0
  %2003 = vmatpush.msra.mxu0 0.0
  %2004 = vmatpush.msra.mxu0 0.0
  %2005 = vmatpush.msra.mxu0 0.0
  %2006 = vmatpush.msra.mxu0 0.0
  %2007 = vmatpush.msra.mxu0 0.0
  %2008 = vmatpush.msra.mxu0 0.0
  %2009 = vmatpush.msra.mxu0 0.0
  %2010 = vmatpush.msra.mxu0 0.0
  %2011 = vmatpush.msra.mxu0 0.0
  %2012 = vmatpush.msra.mxu0 0.0
  %2013 = vmatpush.msra.mxu0 0.0
  %2014 = vmatpush.msra.mxu0 0.0
  %2015 = vmatpush.msra.mxu0 %v111
  %2016 = vmatmul.f32.gmra.mxu0 %v1998
  %v2017 = vpop.f32.mrf.mxu0
  %v2018 = vadd.f32 %v105, %v2017
  %2019 = vdwg.mxu0
  %v2020 = vmax.f32 %v2018, 0.0
  %v2022 = vsel %vm137, %v2020, 0
  %2024 = vmatpush.msra.mxu0 0.0
  %2025 = vmatpush.msra.mxu0 0.0
  %2026 = vmatpush.msra.mxu0 0.0
  %2027 = vmatpush.msra.mxu0 0.0
  %2028 = vmatpush.msra.mxu0 0.0
  %2029 = vmatpush.msra.mxu0 0.0
  %2030 = vmatpush.msra.mxu0 0.0
  %2031 = vmatpush.msra.mxu0 0.0
  %2032 = vmatpush.msra.mxu0 0.0
  %2033 = vmatpush.msra.mxu0 0.0
  %2034 = vmatpush.msra.mxu0 0.0
  %2035 = vmatpush.msra.mxu0 0.0
  %2036 = vmatpush.msra.mxu0 0.0
  %2037 = vmatpush.msra.mxu0 0.0
  %2038 = vmatpush.msra.mxu0 %v58
  %2039 = vmatpush.msra.mxu0 %v57
  %2040 = vmatmul.f32.gmra.mxu0 %v2022
  %v2041 = vpop.f32.mrf.mxu0
  %v2042 = vadd.f32 %v135, %v2041
  %2043 = vdwg.mxu0
  %v2044 = vtanh.pop %v2042
  %v2045 = vmul.f32 %v2044, %v1958
  %v2046 = vmul.f32 %v2044, %v1963
  %2048 = vrot.lane.b32.xlu0 %v2046, 124
  %v2049 = vpop.permute.xlu0 %2048
  %v2051 = vadd.f32 %v2045, %v2049
  %v2052 = vmul.f32 %v2044, %v1973
  %2054 = vrot.lane.b32.xlu0 %v2052, 120
  %v2055 = vpop.permute.xlu0 %2054
  %v2057 = vadd.f32 %v2051, %v2055
  %v2058 = vmul.f32 %v2044, %v1983
  %2060 = vrot.lane.b32.xlu0 %v2058, 116
  %v2061 = vpop.permute.xlu0 %2060
  %v2063 = vadd.f32 %v2057, %v2061
  %v2064 = vmul.f32 %v2063, 0.5
  %v2065 = vadd.f32 %v1996, %v2064
  %v2067 = vsel %vm75, %v2065, 0
  %2069 = vmatpush.msra.mxu0 0.0
  %2070 = vmatpush.msra.mxu0 0.0
  %2071 = vmatpush.msra.mxu0 0.0
  %2072 = vmatpush.msra.mxu0 0.0
  %2073 = vmatpush.msra.mxu0 0.0
  %2074 = vmatpush.msra.mxu0 0.0
  %2075 = vmatpush.msra.mxu0 0.0
  %2076 = vmatpush.msra.mxu0 0.0
  %2077 = vmatpush.msra.mxu0 0.0
  %2078 = vmatpush.msra.mxu0 0.0
  %2079 = vmatpush.msra.mxu0 0.0
  %2080 = vmatpush.msra.mxu0 0.0
  %2081 = vmatpush.msra.mxu0 0.0
  %2082 = vmatpush.msra.mxu0 0.0
  %2083 = vmatpush.msra.mxu0 0.0
  %2084 = vmatpush.msra.mxu0 %v111
  %2085 = vmatmul.f32.gmra.mxu0 %v2067
  %v2086 = vpop.f32.mrf.mxu0
  %v2087 = vadd.f32 %v105, %v2086
  %2088 = vdwg.mxu0
  %v2089 = vmax.f32 %v2087, 0.0
  %v2091 = vsel %vm137, %v2089, 0
  %2093 = vmatpush.msra.mxu0 0.0
  %2094 = vmatpush.msra.mxu0 0.0
  %2095 = vmatpush.msra.mxu0 0.0
  %2096 = vmatpush.msra.mxu0 0.0
  %2097 = vmatpush.msra.mxu0 0.0
  %2098 = vmatpush.msra.mxu0 0.0
  %2099 = vmatpush.msra.mxu0 0.0
  %2100 = vmatpush.msra.mxu0 0.0
  %2101 = vmatpush.msra.mxu0 0.0
  %2102 = vmatpush.msra.mxu0 0.0
  %2103 = vmatpush.msra.mxu0 0.0
  %2104 = vmatpush.msra.mxu0 0.0
  %2105 = vmatpush.msra.mxu0 0.0
  %2106 = vmatpush.msra.mxu0 0.0
  %2107 = vmatpush.msra.mxu0 %v58
  %2108 = vmatpush.msra.mxu0 %v57
  %2109 = vmatmul.f32.gmra.mxu0 %v2091
  %v2110 = vpop.f32.mrf.mxu0
  %v2111 = vadd.f32 %v135, %v2110
  %2112 = vdwg.mxu0
  %v2113 = vtanh.pop %v2111
  %2114 = vset.pattern.permute.xlu0 52
  %2115 = vperm.xlu0 %2114, %v103
  %v2116 = vpop.permute.xlu0 %2115
  %v2118 = vmul.f32 %v2113, %v2116
  %2119 = vset.pattern.permute.xlu0 53
  %2120 = vperm.xlu0 %2119, %v103
  %v2121 = vpop.permute.xlu0 %2120
  %v2123 = vmul.f32 %v2113, %v2121
  %2125 = vrot.lane.b32.xlu0 %v2123, 124
  %v2126 = vpop.permute.xlu0 %2125
  %v2128 = vadd.f32 %v2118, %v2126
  %2129 = vset.pattern.permute.xlu0 54
  %2130 = vperm.xlu0 %2129, %v103
  %v2131 = vpop.permute.xlu0 %2130
  %v2133 = vmul.f32 %v2113, %v2131
  %2135 = vrot.lane.b32.xlu0 %v2133, 120
  %v2136 = vpop.permute.xlu0 %2135
  %v2138 = vadd.f32 %v2128, %v2136
  %2139 = vset.pattern.permute.xlu0 55
  %2140 = vperm.xlu0 %2139, %v103
  %v2141 = vpop.permute.xlu0 %2140
  %v2143 = vmul.f32 %v2113, %v2141
  %2145 = vrot.lane.b32.xlu0 %v2143, 116
  %v2146 = vpop.permute.xlu0 %2145
  %v2148 = vadd.f32 %v2138, %v2146
  %v2149 = vmul.f32 %v2148, 0.5
  %v2150 = vadd.f32 %v1996, %v2149
  %v2152 = vsel %vm75, %v2150, 0
  %2154 = vmatpush.msra.mxu0 0.0
  %2155 = vmatpush.msra.mxu0 0.0
  %2156 = vmatpush.msra.mxu0 0.0
  %2157 = vmatpush.msra.mxu0 0.0
  %2158 = vmatpush.msra.mxu0 0.0
  %2159 = vmatpush.msra.mxu0 0.0
  %2160 = vmatpush.msra.mxu0 0.0
  %2161 = vmatpush.msra.mxu0 0.0
  %2162 = vmatpush.msra.mxu0 0.0
  %2163 = vmatpush.msra.mxu0 0.0
  %2164 = vmatpush.msra.mxu0 0.0
  %2165 = vmatpush.msra.mxu0 0.0
  %2166 = vmatpush.msra.mxu0 0.0
  %2167 = vmatpush.msra.mxu0 0.0
  %2168 = vmatpush.msra.mxu0 0.0
  %2169 = vmatpush.msra.mxu0 %v111
  %2170 = vmatmul.f32.gmra.mxu0 %v2152
  %v2171 = vpop.f32.mrf.mxu0
  %v2172 = vadd.f32 %v105, %v2171
  %2173 = vdwg.mxu0
  %v2174 = vmax.f32 %v2172, 0.0
  %v2176 = vsel %vm137, %v2174, 0
  %2178 = vmatpush.msra.mxu0 0.0
  %2179 = vmatpush.msra.mxu0 0.0
  %2180 = vmatpush.msra.mxu0 0.0
  %2181 = vmatpush.msra.mxu0 0.0
  %2182 = vmatpush.msra.mxu0 0.0
  %2183 = vmatpush.msra.mxu0 0.0
  %2184 = vmatpush.msra.mxu0 0.0
  %2185 = vmatpush.msra.mxu0 0.0
  %2186 = vmatpush.msra.mxu0 0.0
  %2187 = vmatpush.msra.mxu0 0.0
  %2188 = vmatpush.msra.mxu0 0.0
  %2189 = vmatpush.msra.mxu0 0.0
  %2190 = vmatpush.msra.mxu0 0.0
  %2191 = vmatpush.msra.mxu0 0.0
  %2192 = vmatpush.msra.mxu0 %v58
  %2193 = vmatpush.msra.mxu0 %v57
  %2194 = vmatmul.f32.gmra.mxu0 %v2176
  %v2195 = vpop.f32.mrf.mxu0
  %v2196 = vadd.f32 %v135, %v2195
  %2197 = vdwg.mxu0
  %v2198 = vtanh.pop %v2196
  %v2199 = vmul.f32 %v2198, %v2116
  %v2200 = vmul.f32 %v2198, %v2121
  %2202 = vrot.lane.b32.xlu0 %v2200, 124
  %v2203 = vpop.permute.xlu0 %2202
  %v2205 = vadd.f32 %v2199, %v2203
  %v2206 = vmul.f32 %v2198, %v2131
  %2208 = vrot.lane.b32.xlu0 %v2206, 120
  %v2209 = vpop.permute.xlu0 %2208
  %v2211 = vadd.f32 %v2205, %v2209
  %v2212 = vmul.f32 %v2198, %v2141
  %2214 = vrot.lane.b32.xlu0 %v2212, 116
  %v2215 = vpop.permute.xlu0 %2214
  %v2217 = vadd.f32 %v2211, %v2215
  %v2218 = vadd.f32 %v1996, %v2217
  %v2220 = vsel %vm75, %v2218, 0
  %2222 = vmatpush.msra.mxu0 0.0
  %2223 = vmatpush.msra.mxu0 0.0
  %2224 = vmatpush.msra.mxu0 0.0
  %2225 = vmatpush.msra.mxu0 0.0
  %2226 = vmatpush.msra.mxu0 0.0
  %2227 = vmatpush.msra.mxu0 0.0
  %2228 = vmatpush.msra.mxu0 0.0
  %2229 = vmatpush.msra.mxu0 0.0
  %2230 = vmatpush.msra.mxu0 0.0
  %2231 = vmatpush.msra.mxu0 0.0
  %2232 = vmatpush.msra.mxu0 0.0
  %2233 = vmatpush.msra.mxu0 0.0
  %2234 = vmatpush.msra.mxu0 0.0
  %2235 = vmatpush.msra.mxu0 0.0
  %2236 = vmatpush.msra.mxu0 0.0
  %2237 = vmatpush.msra.mxu0 %v111
  %2238 = vmatmul.f32.gmra.mxu0 %v2220
  %v2239 = vpop.f32.mrf.mxu0
  %v2240 = vadd.f32 %v105, %v2239
  %2241 = vdwg.mxu0
  %v2242 = vmax.f32 %v2240, 0.0
  %v2244 = vsel %vm137, %v2242, 0
  %2246 = vmatpush.msra.mxu0 0.0
  %2247 = vmatpush.msra.mxu0 0.0
  %2248 = vmatpush.msra.mxu0 0.0
  %2249 = vmatpush.msra.mxu0 0.0
  %2250 = vmatpush.msra.mxu0 0.0
  %2251 = vmatpush.msra.mxu0 0.0
  %2252 = vmatpush.msra.mxu0 0.0
  %2253 = vmatpush.msra.mxu0 0.0
  %2254 = vmatpush.msra.mxu0 0.0
  %2255 = vmatpush.msra.mxu0 0.0
  %2256 = vmatpush.msra.mxu0 0.0
  %2257 = vmatpush.msra.mxu0 0.0
  %2258 = vmatpush.msra.mxu0 0.0
  %2259 = vmatpush.msra.mxu0 0.0
  %2260 = vmatpush.msra.mxu0 %v58
  %2261 = vmatpush.msra.mxu0 %v57
  %2262 = vmatmul.f32.gmra.mxu0 %v2244
  %v2263 = vpop.f32.mrf.mxu0
  %v2264 = vadd.f32 %v135, %v2263
  %2265 = vdwg.mxu0
  %v2266 = vtanh.pop %v2264
  %2267 = vset.pattern.permute.xlu0 56
  %2268 = vperm.xlu0 %2267, %v103
  %v2269 = vpop.permute.xlu0 %2268
  %v2271 = vmul.f32 %v2266, %v2269
  %2272 = vset.pattern.permute.xlu0 57
  %2273 = vperm.xlu0 %2272, %v103
  %v2274 = vpop.permute.xlu0 %2273
  %v2276 = vmul.f32 %v2266, %v2274
  %2278 = vrot.lane.b32.xlu0 %v2276, 124
  %v2279 = vpop.permute.xlu0 %2278
  %v2281 = vadd.f32 %v2271, %v2279
  %2282 = vset.pattern.permute.xlu0 58
  %2283 = vperm.xlu0 %2282, %v103
  %v2284 = vpop.permute.xlu0 %2283
  %v2286 = vmul.f32 %v2266, %v2284
  %2288 = vrot.lane.b32.xlu0 %v2286, 120
  %v2289 = vpop.permute.xlu0 %2288
  %v2291 = vadd.f32 %v2281, %v2289
  %2292 = vset.pattern.permute.xlu0 59
  %2293 = vperm.xlu0 %2292, %v103
  %v2294 = vpop.permute.xlu0 %2293
  %v2296 = vmul.f32 %v2266, %v2294
  %2298 = vrot.lane.b32.xlu0 %v2296, 116
  %v2299 = vpop.permute.xlu0 %2298
  %v2301 = vadd.f32 %v2291, %v2299
  %v2302 = vadd.f32 %v2148, %v2217
  %v2303 = vmul.f32 %v2302, 2.0
  %v2304 = vadd.f32 %v2063, %v2303
  %v2305 = vadd.f32 %v2304, %v2301
  %v2306 = vmul.f32 %v2305, 0.16666667
  %v2307 = vadd.f32 %v1996, %v2306
  %v2309 = vsel %vm75, %v2307, 0
  %2311 = vmatpush.msra.mxu0 0.0
  %2312 = vmatpush.msra.mxu0 0.0
  %2313 = vmatpush.msra.mxu0 0.0
  %2314 = vmatpush.msra.mxu0 0.0
  %2315 = vmatpush.msra.mxu0 0.0
  %2316 = vmatpush.msra.mxu0 0.0
  %2317 = vmatpush.msra.mxu0 0.0
  %2318 = vmatpush.msra.mxu0 0.0
  %2319 = vmatpush.msra.mxu0 0.0
  %2320 = vmatpush.msra.mxu0 0.0
  %2321 = vmatpush.msra.mxu0 0.0
  %2322 = vmatpush.msra.mxu0 0.0
  %2323 = vmatpush.msra.mxu0 0.0
  %2324 = vmatpush.msra.mxu0 0.0
  %2325 = vmatpush.msra.mxu0 0.0
  %2326 = vmatpush.msra.mxu0 %v111
  %2327 = vmatmul.f32.gmra.mxu0 %v2309
  %v2328 = vpop.f32.mrf.mxu0
  %v2329 = vadd.f32 %v105, %v2328
  %2330 = vdwg.mxu0
  %v2331 = vmax.f32 %v2329, 0.0
  %v2333 = vsel %vm137, %v2331, 0
  %2335 = vmatpush.msra.mxu0 0.0
  %2336 = vmatpush.msra.mxu0 0.0
  %2337 = vmatpush.msra.mxu0 0.0
  %2338 = vmatpush.msra.mxu0 0.0
  %2339 = vmatpush.msra.mxu0 0.0
  %2340 = vmatpush.msra.mxu0 0.0
  %2341 = vmatpush.msra.mxu0 0.0
  %2342 = vmatpush.msra.mxu0 0.0
  %2343 = vmatpush.msra.mxu0 0.0
  %2344 = vmatpush.msra.mxu0 0.0
  %2345 = vmatpush.msra.mxu0 0.0
  %2346 = vmatpush.msra.mxu0 0.0
  %2347 = vmatpush.msra.mxu0 0.0
  %2348 = vmatpush.msra.mxu0 0.0
  %2349 = vmatpush.msra.mxu0 %v58
  %2350 = vmatpush.msra.mxu0 %v57
  %2351 = vmatmul.f32.gmra.mxu0 %v2333
  %v2352 = vpop.f32.mrf.mxu0
  %v2353 = vadd.f32 %v135, %v2352
  %2354 = vdwg.mxu0
  %v2355 = vtanh.pop %v2353
  %v2356 = vmul.f32 %v2355, %v2269
  %v2357 = vmul.f32 %v2355, %v2274
  %2359 = vrot.lane.b32.xlu0 %v2357, 124
  %v2360 = vpop.permute.xlu0 %2359
  %v2362 = vadd.f32 %v2356, %v2360
  %v2363 = vmul.f32 %v2355, %v2284
  %2365 = vrot.lane.b32.xlu0 %v2363, 120
  %v2366 = vpop.permute.xlu0 %2365
  %v2368 = vadd.f32 %v2362, %v2366
  %v2369 = vmul.f32 %v2355, %v2294
  %2371 = vrot.lane.b32.xlu0 %v2369, 116
  %v2372 = vpop.permute.xlu0 %2371
  %v2374 = vadd.f32 %v2368, %v2372
  %v2375 = vxor.u32 %v101, 2147483648
  %v2376 = vmul.f32 %v2375, 1.442695
  %v2377 = vpow.pop %v2376
  %v2378 = vadd.f32 %v2377, 1.0
  %v2379 = vrcp.pop %v2378
  %v2380 = vmul.f32 %v2378, %v2379
  %v2381 = vsub.f32 1.0, %v2380
  %v2382 = vmul.f32 %v2379, %v2381
  %v2383 = vadd.f32 %v2379, %v2382
  %vm2384 = vweird.f32 %v2378
  %vm2385 = vweird.f32 %v2379
  %vm2386 = vmor %vm2384, %vm2385
  %v2387 = vsel %vm2386, %v2379, %v2383
  %v2388 = vand.u32 2147483647, %v2378
  %vm2389 = vcmp.eq.f32.partialorder %v2388, 8.507059e+37
  %v2390 = vand.u32 %v2378, 2147483648
  %v2391 = vor.u32 1.1754944e-38, %v2390
  %v2392 = vsel %vm2389, %v2391, %v2387
  %v2393 = vmul.f32 1.0, %v2392
  %v2394 = vxor.u32 %v441, 2147483648
  %v2395 = vmul.f32 %v2394, 1.442695
  %v2396 = vpow.pop %v2395
  %v2397 = vadd.f32 %v2396, 1.0
  %v2398 = vrcp.pop %v2397
  %v2399 = vmul.f32 %v2397, %v2398
  %v2400 = vsub.f32 1.0, %v2399
  %v2401 = vmul.f32 %v2398, %v2400
  %v2402 = vadd.f32 %v2398, %v2401
  %vm2403 = vweird.f32 %v2397
  %vm2404 = vweird.f32 %v2398
  %vm2405 = vmor %vm2403, %vm2404
  %v2406 = vsel %vm2405, %v2398, %v2402
  %v2407 = vand.u32 2147483647, %v2397
  %vm2408 = vcmp.eq.f32.partialorder %v2407, 8.507059e+37
  %v2409 = vand.u32 %v2397, 2147483648
  %v2410 = vor.u32 1.1754944e-38, %v2409
  %v2411 = vsel %vm2408, %v2410, %v2406
  %v2412 = vmul.f32 1.0, %v2411
  %v2413 = vxor.u32 %v752, 2147483648
  %v2414 = vmul.f32 %v2413, 1.442695
  %v2415 = vpow.pop %v2414
  %v2416 = vadd.f32 %v2415, 1.0
  %v2417 = vrcp.pop %v2416
  %v2418 = vmul.f32 %v2416, %v2417
  %v2419 = vsub.f32 1.0, %v2418
  %v2420 = vmul.f32 %v2417, %v2419
  %v2421 = vadd.f32 %v2417, %v2420
  %vm2422 = vweird.f32 %v2416
  %vm2423 = vweird.f32 %v2417
  %vm2424 = vmor %vm2422, %vm2423
  %v2425 = vsel %vm2424, %v2417, %v2421
  %v2426 = vand.u32 2147483647, %v2416
  %vm2427 = vcmp.eq.f32.partialorder %v2426, 8.507059e+37
  %v2428 = vand.u32 %v2416, 2147483648
  %v2429 = vor.u32 1.1754944e-38, %v2428
  %v2430 = vsel %vm2427, %v2429, %v2425
  %v2431 = vmul.f32 1.0, %v2430
  %v2432 = vxor.u32 %v1063, 2147483648
  %v2433 = vmul.f32 %v2432, 1.442695
  %v2434 = vpow.pop %v2433
  %v2435 = vadd.f32 %v2434, 1.0
  %v2436 = vrcp.pop %v2435
  %v2437 = vmul.f32 %v2435, %v2436
  %v2438 = vsub.f32 1.0, %v2437
  %v2439 = vmul.f32 %v2436, %v2438
  %v2440 = vadd.f32 %v2436, %v2439
  %vm2441 = vweird.f32 %v2435
  %vm2442 = vweird.f32 %v2436
  %vm2443 = vmor %vm2441, %vm2442
  %v2444 = vsel %vm2443, %v2436, %v2440
  %v2445 = vand.u32 2147483647, %v2435
  %vm2446 = vcmp.eq.f32.partialorder %v2445, 8.507059e+37
  %v2447 = vand.u32 %v2435, 2147483648
  %v2448 = vor.u32 1.1754944e-38, %v2447
  %v2449 = vsel %vm2446, %v2448, %v2444
  %v2450 = vmul.f32 1.0, %v2449
  %v2451 = vxor.u32 %v1374, 2147483648
  %v2452 = vmul.f32 %v2451, 1.442695
  %v2453 = vpow.pop %v2452
  %v2454 = vadd.f32 %v2453, 1.0
  %v2455 = vrcp.pop %v2454
  %v2456 = vmul.f32 %v2454, %v2455
  %v2457 = vsub.f32 1.0, %v2456
  %v2458 = vmul.f32 %v2455, %v2457
  %v2459 = vadd.f32 %v2455, %v2458
  %vm2460 = vweird.f32 %v2454
  %vm2461 = vweird.f32 %v2455
  %vm2462 = vmor %vm2460, %vm2461
  %v2463 = vsel %vm2462, %v2455, %v2459
  %v2464 = vand.u32 2147483647, %v2454
  %vm2465 = vcmp.eq.f32.partialorder %v2464, 8.507059e+37
  %v2466 = vand.u32 %v2454, 2147483648
  %v2467 = vor.u32 1.1754944e-38, %v2466
  %v2468 = vsel %vm2465, %v2467, %v2463
  %v2469 = vmul.f32 1.0, %v2468
  %v2470 = vxor.u32 %v1685, 2147483648
  %v2471 = vmul.f32 %v2470, 1.442695
  %v2472 = vpow.pop %v2471
  %v2473 = vadd.f32 %v2472, 1.0
  %v2474 = vrcp.pop %v2473
  %v2475 = vmul.f32 %v2473, %v2474
  %v2476 = vsub.f32 1.0, %v2475
  %v2477 = vmul.f32 %v2474, %v2476
  %v2478 = vadd.f32 %v2474, %v2477
  %vm2479 = vweird.f32 %v2473
  %vm2480 = vweird.f32 %v2474
  %vm2481 = vmor %vm2479, %vm2480
  %v2482 = vsel %vm2481, %v2474, %v2478
  %v2483 = vand.u32 2147483647, %v2473
  %vm2484 = vcmp.eq.f32.partialorder %v2483, 8.507059e+37
  %v2485 = vand.u32 %v2473, 2147483648
  %v2486 = vor.u32 1.1754944e-38, %v2485
  %v2487 = vsel %vm2484, %v2486, %v2482
  %v2488 = vmul.f32 1.0, %v2487
  %v2489 = vxor.u32 %v1996, 2147483648
  %v2490 = vmul.f32 %v2489, 1.442695
  %v2491 = vpow.pop %v2490
  %v2492 = vadd.f32 %v2491, 1.0
  %v2493 = vrcp.pop %v2492
  %v2494 = vmul.f32 %v2492, %v2493
  %v2495 = vsub.f32 1.0, %v2494
  %v2496 = vmul.f32 %v2493, %v2495
  %v2497 = vadd.f32 %v2493, %v2496
  %vm2498 = vweird.f32 %v2492
  %vm2499 = vweird.f32 %v2493
  %vm2500 = vmor %vm2498, %vm2499
  %v2501 = vsel %vm2500, %v2493, %v2497
  %v2502 = vand.u32 2147483647, %v2492
  %vm2503 = vcmp.eq.f32.partialorder %v2502, 8.507059e+37
  %v2504 = vand.u32 %v2492, 2147483648
  %v2505 = vor.u32 1.1754944e-38, %v2504
  %v2506 = vsel %vm2503, %v2505, %v2501
  %v2507 = vmul.f32 1.0, %v2506
  %v2508 = vxor.u32 %v2307, 2147483648
  %v2509 = vmul.f32 %v2508, 1.442695
  %v2510 = vpow.pop %v2509
  %v2511 = vadd.f32 %v2510, 1.0
  %v2512 = vrcp.pop %v2511
  %v2513 = vmul.f32 %v2511, %v2512
  %v2514 = vsub.f32 1.0, %v2513
  %v2515 = vmul.f32 %v2512, %v2514
  %v2516 = vadd.f32 %v2512, %v2515
  %vm2517 = vweird.f32 %v2511
  %vm2518 = vweird.f32 %v2512
  %vm2519 = vmor %vm2517, %vm2518
  %v2520 = vsel %vm2519, %v2512, %v2516
  %v2521 = vand.u32 2147483647, %v2511
  %vm2522 = vcmp.eq.f32.partialorder %v2521, 8.507059e+37
  %v2523 = vand.u32 %v2511, 2147483648
  %v2524 = vor.u32 1.1754944e-38, %v2523
  %v2525 = vsel %vm2522, %v2524, %v2520
  %v2526 = vmul.f32 1.0, %v2525
  %v2527 = vmul.f32 %v71, %v2393
  %v2529 = vperm.slane %v61, 0
  %v2532 = vsel %vm75, %v2527, 0
  %v2535 = vsel %vm79, %v60, 0
  %2537 = vmatpush.msra.mxu0 0.0
  %2538 = vmatpush.msra.mxu0 0.0
  %2539 = vmatpush.msra.mxu0 0.0
  %2540 = vmatpush.msra.mxu0 0.0
  %2541 = vmatpush.msra.mxu0 0.0
  %2542 = vmatpush.msra.mxu0 0.0
  %2543 = vmatpush.msra.mxu0 0.0
  %2544 = vmatpush.msra.mxu0 0.0
  %2545 = vmatpush.msra.mxu0 0.0
  %2546 = vmatpush.msra.mxu0 0.0
  %2547 = vmatpush.msra.mxu0 0.0
  %2548 = vmatpush.msra.mxu0 0.0
  %2549 = vmatpush.msra.mxu0 0.0
  %2550 = vmatpush.msra.mxu0 0.0
  %2551 = vmatpush.msra.mxu0 0.0
  %2552 = vmatpush.msra.mxu0 %v2535
  %2553 = vmatmul.f32.gmra.mxu0 %v2532
  %v2554 = vpop.f32.mrf.mxu0
  %v2555 = vadd.f32 %v2529, %v2554
  %2556 = vdwg.mxu0
  %v2557 = vsub.f32 1.0, %v2393
  %v2558 = vmul.f32 %v2393, %v2557
  %v2559 = vmul.f32 %v2558, %v197
  %v2560 = vmul.f32 %v2393, %v103
  %v2561 = vmul.f32 %v71, %v2559
  %v2562 = vadd.f32 %v2560, %v2561
  %2563 = vrot.lane.b32.xlu0 %v103, 124
  %v2564 = vpop.permute.xlu0 %2563
  %v2566 = vmul.f32 %v2393, %v2564
  %2568 = vrot.lane.b32.xlu0 %v2559, 4
  %v2569 = vpop.permute.xlu0 %2568
  %v2571 = vmul.f32 %v71, %v2569
  %2573 = vrot.lane.b32.xlu0 %v2571, 124
  %v2574 = vpop.permute.xlu0 %2573
  %v2576 = vadd.f32 %v2566, %v2574
  %v2577 = vsub.f32 1.0, %v2412
  %v2578 = vmul.f32 %v2412, %v2577
  %v2579 = vmul.f32 %v2578, %v508
  %2580 = vrot.lane.b32.xlu0 %v103, 120
  %v2581 = vpop.permute.xlu0 %2580
  %v2583 = vmul.f32 %v2412, %v2581
  %2585 = vrot.lane.b32.xlu0 %v2579, 8
  %v2586 = vpop.permute.xlu0 %2585
  %v2588 = vmul.f32 %v71, %v2586
  %2590 = vrot.lane.b32.xlu0 %v2588, 120
  %v2591 = vpop.permute.xlu0 %2590
  %v2593 = vadd.f32 %v2583, %v2591
  %v2595 = vperm.slane %v64, 0
  %v2598 = vsel %vm137, %v2555, 0
  %2600 = vmatpush.msra.mxu0 0.0
  %2601 = vmatpush.msra.mxu0 0.0
  %2602 = vmatpush.msra.mxu0 0.0
  %2603 = vmatpush.msra.mxu0 0.0
  %2604 = vmatpush.msra.mxu0 0.0
  %2605 = vmatpush.msra.mxu0 0.0
  %2606 = vmatpush.msra.mxu0 0.0
  %2607 = vmatpush.msra.mxu0 0.0
  %2608 = vmatpush.msra.mxu0 0.0
  %2609 = vmatpush.msra.mxu0 0.0
  %2610 = vmatpush.msra.mxu0 0.0
  %2611 = vmatpush.msra.mxu0 0.0
  %2612 = vmatpush.msra.mxu0 0.0
  %2613 = vmatpush.msra.mxu0 0.0
  %2614 = vmatpush.msra.mxu0 %v63
  %2615 = vmatpush.msra.mxu0 %v62
  %2616 = vmatmul.f32.gmra.mxu0 %v2598
  %v2617 = vpop.f32.mrf.mxu0
  %v2618 = vadd.f32 %v2595, %v2617
  %2619 = vdwg.mxu0
  %v2620 = vmax.f32 %v2618, 0.0
  %v2622 = vperm.slane %v67, 0
  %v2625 = vsel %vm137, %v2620, 0
  %2627 = vmatpush.msra.mxu0 0.0
  %2628 = vmatpush.msra.mxu0 0.0
  %2629 = vmatpush.msra.mxu0 0.0
  %2630 = vmatpush.msra.mxu0 0.0
  %2631 = vmatpush.msra.mxu0 0.0
  %2632 = vmatpush.msra.mxu0 0.0
  %2633 = vmatpush.msra.mxu0 0.0
  %2634 = vmatpush.msra.mxu0 0.0
  %2635 = vmatpush.msra.mxu0 0.0
  %2636 = vmatpush.msra.mxu0 0.0
  %2637 = vmatpush.msra.mxu0 0.0
  %2638 = vmatpush.msra.mxu0 0.0
  %2639 = vmatpush.msra.mxu0 0.0
  %2640 = vmatpush.msra.mxu0 0.0
  %2641 = vmatpush.msra.mxu0 %v66
  %2642 = vmatpush.msra.mxu0 %v65
  %2643 = vmatmul.f32.gmra.mxu0 %v2625
  %v2644 = vpop.f32.mrf.mxu0
  %v2645 = vadd.f32 %v2622, %v2644
  %2646 = vdwg.mxu0
  %v2647 = vtanh.pop %v2645
  %2649 = vset.pattern.permute.xlu0 0
  %2650 = vperm.xlu0 %2649, %v2562
  %v2651 = vpop.permute.xlu0 %2650
  %v2653 = vmul.f32 %v2647, %v2651
  %2654 = vset.pattern.permute.xlu0 1
  %2655 = vperm.xlu0 %2654, %v2562
  %v2656 = vpop.permute.xlu0 %2655
  %v2658 = vmul.f32 %v2647, %v2656
  %2660 = vrot.lane.b32.xlu0 %v2658, 112
  %v2661 = vpop.permute.xlu0 %2660
  %v2663 = vadd.f32 %v2653, %v2661
  %2664 = vset.pattern.permute.xlu0 2
  %2665 = vperm.xlu0 %2664, %v2562
  %v2666 = vpop.permute.xlu0 %2665
  %v2668 = vmul.f32 %v2647, %v2666
  %2670 = vrot.lane.b32.xlu0 %v2668, 96
  %v2671 = vpop.permute.xlu0 %2670
  %v2673 = vadd.f32 %v2663, %v2671
  %2674 = vset.pattern.permute.xlu0 3
  %2675 = vperm.xlu0 %2674, %v2562
  %v2676 = vpop.permute.xlu0 %2675
  %v2678 = vmul.f32 %v2647, %v2676
  %2680 = vrot.lane.b32.xlu0 %v2678, 80
  %v2681 = vpop.permute.xlu0 %2680
  %v2683 = vadd.f32 %v2673, %v2681
  %v2684 = vmul.f32 %v2683, 0.5
  %v2685 = vadd.f32 %v2555, %v2684
  %v2687 = vsel %vm137, %v2685, 0
  %2689 = vmatpush.msra.mxu0 0.0
  %2690 = vmatpush.msra.mxu0 0.0
  %2691 = vmatpush.msra.mxu0 0.0
  %2692 = vmatpush.msra.mxu0 0.0
  %2693 = vmatpush.msra.mxu0 0.0
  %2694 = vmatpush.msra.mxu0 0.0
  %2695 = vmatpush.msra.mxu0 0.0
  %2696 = vmatpush.msra.mxu0 0.0
  %2697 = vmatpush.msra.mxu0 0.0
  %2698 = vmatpush.msra.mxu0 0.0
  %2699 = vmatpush.msra.mxu0 0.0
  %2700 = vmatpush.msra.mxu0 0.0
  %2701 = vmatpush.msra.mxu0 0.0
  %2702 = vmatpush.msra.mxu0 0.0
  %2703 = vmatpush.msra.mxu0 %v63
  %2704 = vmatpush.msra.mxu0 %v62
  %2705 = vmatmul.f32.gmra.mxu0 %v2687
  %v2706 = vpop.f32.mrf.mxu0
  %v2707 = vadd.f32 %v2595, %v2706
  %2708 = vdwg.mxu0
  %v2709 = vmax.f32 %v2707, 0.0
  %v2711 = vsel %vm137, %v2709, 0
  %2713 = vmatpush.msra.mxu0 0.0
  %2714 = vmatpush.msra.mxu0 0.0
  %2715 = vmatpush.msra.mxu0 0.0
  %2716 = vmatpush.msra.mxu0 0.0
  %2717 = vmatpush.msra.mxu0 0.0
  %2718 = vmatpush.msra.mxu0 0.0
  %2719 = vmatpush.msra.mxu0 0.0
  %2720 = vmatpush.msra.mxu0 0.0
  %2721 = vmatpush.msra.mxu0 0.0
  %2722 = vmatpush.msra.mxu0 0.0
  %2723 = vmatpush.msra.mxu0 0.0
  %2724 = vmatpush.msra.mxu0 0.0
  %2725 = vmatpush.msra.mxu0 0.0
  %2726 = vmatpush.msra.mxu0 0.0
  %2727 = vmatpush.msra.mxu0 %v66
  %2728 = vmatpush.msra.mxu0 %v65
  %2729 = vmatmul.f32.gmra.mxu0 %v2711
  %v2730 = vpop.f32.mrf.mxu0
  %v2731 = vadd.f32 %v2622, %v2730
  %2732 = vdwg.mxu0
  %v2733 = vtanh.pop %v2731
  %2735 = vset.pattern.permute.xlu0 0
  %2736 = vperm.xlu0 %2735, %v2576
  %v2737 = vpop.permute.xlu0 %2736
  %v2739 = vmul.f32 %v2733, %v2737
  %2740 = vset.pattern.permute.xlu0 1
  %2741 = vperm.xlu0 %2740, %v2576
  %v2742 = vpop.permute.xlu0 %2741
  %v2744 = vmul.f32 %v2733, %v2742
  %2746 = vrot.lane.b32.xlu0 %v2744, 112
  %v2747 = vpop.permute.xlu0 %2746
  %v2749 = vadd.f32 %v2739, %v2747
  %2750 = vset.pattern.permute.xlu0 2
  %2751 = vperm.xlu0 %2750, %v2576
  %v2752 = vpop.permute.xlu0 %2751
  %v2754 = vmul.f32 %v2733, %v2752
  %2756 = vrot.lane.b32.xlu0 %v2754, 96
  %v2757 = vpop.permute.xlu0 %2756
  %v2759 = vadd.f32 %v2749, %v2757
  %2760 = vset.pattern.permute.xlu0 3
  %2761 = vperm.xlu0 %2760, %v2576
  %v2762 = vpop.permute.xlu0 %2761
  %v2764 = vmul.f32 %v2733, %v2762
  %2766 = vrot.lane.b32.xlu0 %v2764, 80
  %v2767 = vpop.permute.xlu0 %2766
  %v2769 = vadd.f32 %v2759, %v2767
  %v2770 = vmul.f32 %v2769, 0.5
  %v2771 = vadd.f32 %v2555, %v2770
  %v2773 = vsel %vm137, %v2771, 0
  %2775 = vmatpush.msra.mxu0 0.0
  %2776 = vmatpush.msra.mxu0 0.0
  %2777 = vmatpush.msra.mxu0 0.0
  %2778 = vmatpush.msra.mxu0 0.0
  %2779 = vmatpush.msra.mxu0 0.0
  %2780 = vmatpush.msra.mxu0 0.0
  %2781 = vmatpush.msra.mxu0 0.0
  %2782 = vmatpush.msra.mxu0 0.0
  %2783 = vmatpush.msra.mxu0 0.0
  %2784 = vmatpush.msra.mxu0 0.0
  %2785 = vmatpush.msra.mxu0 0.0
  %2786 = vmatpush.msra.mxu0 0.0
  %2787 = vmatpush.msra.mxu0 0.0
  %2788 = vmatpush.msra.mxu0 0.0
  %2789 = vmatpush.msra.mxu0 %v63
  %2790 = vmatpush.msra.mxu0 %v62
  %2791 = vmatmul.f32.gmra.mxu0 %v2773
  %v2792 = vpop.f32.mrf.mxu0
  %v2793 = vadd.f32 %v2595, %v2792
  %2794 = vdwg.mxu0
  %v2795 = vmax.f32 %v2793, 0.0
  %v2797 = vsel %vm137, %v2795, 0
  %2799 = vmatpush.msra.mxu0 0.0
  %2800 = vmatpush.msra.mxu0 0.0
  %2801 = vmatpush.msra.mxu0 0.0
  %2802 = vmatpush.msra.mxu0 0.0
  %2803 = vmatpush.msra.mxu0 0.0
  %2804 = vmatpush.msra.mxu0 0.0
  %2805 = vmatpush.msra.mxu0 0.0
  %2806 = vmatpush.msra.mxu0 0.0
  %2807 = vmatpush.msra.mxu0 0.0
  %2808 = vmatpush.msra.mxu0 0.0
  %2809 = vmatpush.msra.mxu0 0.0
  %2810 = vmatpush.msra.mxu0 0.0
  %2811 = vmatpush.msra.mxu0 0.0
  %2812 = vmatpush.msra.mxu0 0.0
  %2813 = vmatpush.msra.mxu0 %v66
  %2814 = vmatpush.msra.mxu0 %v65
  %2815 = vmatmul.f32.gmra.mxu0 %v2797
  %v2816 = vpop.f32.mrf.mxu0
  %v2817 = vadd.f32 %v2622, %v2816
  %2818 = vdwg.mxu0
  %v2819 = vtanh.pop %v2817
  %v2820 = vmul.f32 %v2819, %v2737
  %v2821 = vmul.f32 %v2819, %v2742
  %2823 = vrot.lane.b32.xlu0 %v2821, 112
  %v2824 = vpop.permute.xlu0 %2823
  %v2826 = vadd.f32 %v2820, %v2824
  %v2827 = vmul.f32 %v2819, %v2752
  %2829 = vrot.lane.b32.xlu0 %v2827, 96
  %v2830 = vpop.permute.xlu0 %2829
  %v2832 = vadd.f32 %v2826, %v2830
  %v2833 = vmul.f32 %v2819, %v2762
  %2835 = vrot.lane.b32.xlu0 %v2833, 80
  %v2836 = vpop.permute.xlu0 %2835
  %v2838 = vadd.f32 %v2832, %v2836
  %v2839 = vadd.f32 %v2555, %v2838
  %v2841 = vsel %vm137, %v2839, 0
  %2843 = vmatpush.msra.mxu0 0.0
  %2844 = vmatpush.msra.mxu0 0.0
  %2845 = vmatpush.msra.mxu0 0.0
  %2846 = vmatpush.msra.mxu0 0.0
  %2847 = vmatpush.msra.mxu0 0.0
  %2848 = vmatpush.msra.mxu0 0.0
  %2849 = vmatpush.msra.mxu0 0.0
  %2850 = vmatpush.msra.mxu0 0.0
  %2851 = vmatpush.msra.mxu0 0.0
  %2852 = vmatpush.msra.mxu0 0.0
  %2853 = vmatpush.msra.mxu0 0.0
  %2854 = vmatpush.msra.mxu0 0.0
  %2855 = vmatpush.msra.mxu0 0.0
  %2856 = vmatpush.msra.mxu0 0.0
  %2857 = vmatpush.msra.mxu0 %v63
  %2858 = vmatpush.msra.mxu0 %v62
  %2859 = vmatmul.f32.gmra.mxu0 %v2841
  %v2860 = vpop.f32.mrf.mxu0
  %v2861 = vadd.f32 %v2595, %v2860
  %2862 = vdwg.mxu0
  %v2863 = vmax.f32 %v2861, 0.0
  %v2865 = vsel %vm137, %v2863, 0
  %2867 = vmatpush.msra.mxu0 0.0
  %2868 = vmatpush.msra.mxu0 0.0
  %2869 = vmatpush.msra.mxu0 0.0
  %2870 = vmatpush.msra.mxu0 0.0
  %2871 = vmatpush.msra.mxu0 0.0
  %2872 = vmatpush.msra.mxu0 0.0
  %2873 = vmatpush.msra.mxu0 0.0
  %2874 = vmatpush.msra.mxu0 0.0
  %2875 = vmatpush.msra.mxu0 0.0
  %2876 = vmatpush.msra.mxu0 0.0
  %2877 = vmatpush.msra.mxu0 0.0
  %2878 = vmatpush.msra.mxu0 0.0
  %2879 = vmatpush.msra.mxu0 0.0
  %2880 = vmatpush.msra.mxu0 0.0
  %2881 = vmatpush.msra.mxu0 %v66
  %2882 = vmatpush.msra.mxu0 %v65
  %2883 = vmatmul.f32.gmra.mxu0 %v2865
  %v2884 = vpop.f32.mrf.mxu0
  %v2885 = vadd.f32 %v2622, %v2884
  %2886 = vdwg.mxu0
  %v2887 = vtanh.pop %v2885
  %2889 = vset.pattern.permute.xlu0 0
  %2890 = vperm.xlu0 %2889, %v2593
  %v2891 = vpop.permute.xlu0 %2890
  %v2893 = vmul.f32 %v2887, %v2891
  %2894 = vset.pattern.permute.xlu0 1
  %2895 = vperm.xlu0 %2894, %v2593
  %v2896 = vpop.permute.xlu0 %2895
  %v2898 = vmul.f32 %v2887, %v2896
  %2900 = vrot.lane.b32.xlu0 %v2898, 112
  %v2901 = vpop.permute.xlu0 %2900
  %v2903 = vadd.f32 %v2893, %v2901
  %2904 = vset.pattern.permute.xlu0 2
  %2905 = vperm.xlu0 %2904, %v2593
  %v2906 = vpop.permute.xlu0 %2905
  %v2908 = vmul.f32 %v2887, %v2906
  %2910 = vrot.lane.b32.xlu0 %v2908, 96
  %v2911 = vpop.permute.xlu0 %2910
  %v2913 = vadd.f32 %v2903, %v2911
  %2914 = vset.pattern.permute.xlu0 3
  %2915 = vperm.xlu0 %2914, %v2593
  %v2916 = vpop.permute.xlu0 %2915
  %v2918 = vmul.f32 %v2887, %v2916
  %2920 = vrot.lane.b32.xlu0 %v2918, 80
  %v2921 = vpop.permute.xlu0 %2920
  %v2923 = vadd.f32 %v2913, %v2921
  %v2924 = vadd.f32 %v2769, %v2838
  %v2925 = vmul.f32 %v2924, 2.0
  %v2926 = vadd.f32 %v2683, %v2925
  %v2927 = vadd.f32 %v2926, %v2923
  %v2928 = vmul.f32 %v2927, 0.16666667
  %v2929 = vadd.f32 %v2555, %v2928
  %2930 = vrot.lane.b32.xlu0 %v103, 116
  %v2931 = vpop.permute.xlu0 %2930
  %v2933 = vmul.f32 %v2412, %v2931
  %2934 = vrot.lane.b32.xlu0 %v2579, 12
  %v2935 = vpop.permute.xlu0 %2934
  %v2937 = vmul.f32 %v71, %v2935
  %2939 = vrot.lane.b32.xlu0 %v2937, 116
  %v2940 = vpop.permute.xlu0 %2939
  %v2942 = vadd.f32 %v2933, %v2940
  %v2943 = vsub.f32 1.0, %v2431
  %v2944 = vmul.f32 %v2431, %v2943
  %v2945 = vmul.f32 %v2944, %v819
  %2946 = vrot.lane.b32.xlu0 %v103, 112
  %v2947 = vpop.permute.xlu0 %2946
  %v2949 = vmul.f32 %v2431, %v2947
  %2951 = vrot.lane.b32.xlu0 %v2945, 16
  %v2952 = vpop.permute.xlu0 %2951
  %v2954 = vmul.f32 %v71, %v2952
  %2956 = vrot.lane.b32.xlu0 %v2954, 112
  %v2957 = vpop.permute.xlu0 %2956
  %v2959 = vadd.f32 %v2949, %v2957
  %v2961 = vsel %vm137, %v2929, 0
  %2963 = vmatpush.msra.mxu0 0.0
  %2964 = vmatpush.msra.mxu0 0.0
  %2965 = vmatpush.msra.mxu0 0.0
  %2966 = vmatpush.msra.mxu0 0.0
  %2967 = vmatpush.msra.mxu0 0.0
  %2968 = vmatpush.msra.mxu0 0.0
  %2969 = vmatpush.msra.mxu0 0.0
  %2970 = vmatpush.msra.mxu0 0.0
  %2971 = vmatpush.msra.mxu0 0.0
  %2972 = vmatpush.msra.mxu0 0.0
  %2973 = vmatpush.msra.mxu0 0.0
  %2974 = vmatpush.msra.mxu0 0.0
  %2975 = vmatpush.msra.mxu0 0.0
  %2976 = vmatpush.msra.mxu0 0.0
  %2977 = vmatpush.msra.mxu0 %v63
  %2978 = vmatpush.msra.mxu0 %v62
  %2979 = vmatmul.f32.gmra.mxu0 %v2961
  %v2980 = vpop.f32.mrf.mxu0
  %v2981 = vadd.f32 %v2595, %v2980
  %2982 = vdwg.mxu0
  %v2983 = vmax.f32 %v2981, 0.0
  %v2985 = vsel %vm137, %v2983, 0
  %2987 = vmatpush.msra.mxu0 0.0
  %2988 = vmatpush.msra.mxu0 0.0
  %2989 = vmatpush.msra.mxu0 0.0
  %2990 = vmatpush.msra.mxu0 0.0
  %2991 = vmatpush.msra.mxu0 0.0
  %2992 = vmatpush.msra.mxu0 0.0
  %2993 = vmatpush.msra.mxu0 0.0
  %2994 = vmatpush.msra.mxu0 0.0
  %2995 = vmatpush.msra.mxu0 0.0
  %2996 = vmatpush.msra.mxu0 0.0
  %2997 = vmatpush.msra.mxu0 0.0
  %2998 = vmatpush.msra.mxu0 0.0
  %2999 = vmatpush.msra.mxu0 0.0
  %3000 = vmatpush.msra.mxu0 0.0
  %3001 = vmatpush.msra.mxu0 %v66
  %3002 = vmatpush.msra.mxu0 %v65
  %3003 = vmatmul.f32.gmra.mxu0 %v2985
  %v3004 = vpop.f32.mrf.mxu0
  %v3005 = vadd.f32 %v2622, %v3004
  %3006 = vdwg.mxu0
  %v3007 = vtanh.pop %v3005
  %v3008 = vmul.f32 %v3007, %v2891
  %v3009 = vmul.f32 %v3007, %v2896
  %3011 = vrot.lane.b32.xlu0 %v3009, 112
  %v3012 = vpop.permute.xlu0 %3011
  %v3014 = vadd.f32 %v3008, %v3012
  %v3015 = vmul.f32 %v3007, %v2906
  %3017 = vrot.lane.b32.xlu0 %v3015, 96
  %v3018 = vpop.permute.xlu0 %3017
  %v3020 = vadd.f32 %v3014, %v3018
  %v3021 = vmul.f32 %v3007, %v2916
  %3023 = vrot.lane.b32.xlu0 %v3021, 80
  %v3024 = vpop.permute.xlu0 %3023
  %v3026 = vadd.f32 %v3020, %v3024
  %v3027 = vmul.f32 %v3026, 0.5
  %v3028 = vadd.f32 %v2929, %v3027
  %v3030 = vsel %vm137, %v3028, 0
  %3032 = vmatpush.msra.mxu0 0.0
  %3033 = vmatpush.msra.mxu0 0.0
  %3034 = vmatpush.msra.mxu0 0.0
  %3035 = vmatpush.msra.mxu0 0.0
  %3036 = vmatpush.msra.mxu0 0.0
  %3037 = vmatpush.msra.mxu0 0.0
  %3038 = vmatpush.msra.mxu0 0.0
  %3039 = vmatpush.msra.mxu0 0.0
  %3040 = vmatpush.msra.mxu0 0.0
  %3041 = vmatpush.msra.mxu0 0.0
  %3042 = vmatpush.msra.mxu0 0.0
  %3043 = vmatpush.msra.mxu0 0.0
  %3044 = vmatpush.msra.mxu0 0.0
  %3045 = vmatpush.msra.mxu0 0.0
  %3046 = vmatpush.msra.mxu0 %v63
  %3047 = vmatpush.msra.mxu0 %v62
  %3048 = vmatmul.f32.gmra.mxu0 %v3030
  %v3049 = vpop.f32.mrf.mxu0
  %v3050 = vadd.f32 %v2595, %v3049
  %3051 = vdwg.mxu0
  %v3052 = vmax.f32 %v3050, 0.0
  %v3054 = vsel %vm137, %v3052, 0
  %3056 = vmatpush.msra.mxu0 0.0
  %3057 = vmatpush.msra.mxu0 0.0
  %3058 = vmatpush.msra.mxu0 0.0
  %3059 = vmatpush.msra.mxu0 0.0
  %3060 = vmatpush.msra.mxu0 0.0
  %3061 = vmatpush.msra.mxu0 0.0
  %3062 = vmatpush.msra.mxu0 0.0
  %3063 = vmatpush.msra.mxu0 0.0
  %3064 = vmatpush.msra.mxu0 0.0
  %3065 = vmatpush.msra.mxu0 0.0
  %3066 = vmatpush.msra.mxu0 0.0
  %3067 = vmatpush.msra.mxu0 0.0
  %3068 = vmatpush.msra.mxu0 0.0
  %3069 = vmatpush.msra.mxu0 0.0
  %3070 = vmatpush.msra.mxu0 %v66
  %3071 = vmatpush.msra.mxu0 %v65
  %3072 = vmatmul.f32.gmra.mxu0 %v3054
  %v3073 = vpop.f32.mrf.mxu0
  %v3074 = vadd.f32 %v2622, %v3073
  %3075 = vdwg.mxu0
  %v3076 = vtanh.pop %v3074
  %3078 = vset.pattern.permute.xlu0 0
  %3079 = vperm.xlu0 %3078, %v2942
  %v3080 = vpop.permute.xlu0 %3079
  %v3082 = vmul.f32 %v3076, %v3080
  %3083 = vset.pattern.permute.xlu0 1
  %3084 = vperm.xlu0 %3083, %v2942
  %v3085 = vpop.permute.xlu0 %3084
  %v3087 = vmul.f32 %v3076, %v3085
  %3089 = vrot.lane.b32.xlu0 %v3087, 112
  %v3090 = vpop.permute.xlu0 %3089
  %v3092 = vadd.f32 %v3082, %v3090
  %3093 = vset.pattern.permute.xlu0 2
  %3094 = vperm.xlu0 %3093, %v2942
  %v3095 = vpop.permute.xlu0 %3094
  %v3097 = vmul.f32 %v3076, %v3095
  %3099 = vrot.lane.b32.xlu0 %v3097, 96
  %v3100 = vpop.permute.xlu0 %3099
  %v3102 = vadd.f32 %v3092, %v3100
  %3103 = vset.pattern.permute.xlu0 3
  %3104 = vperm.xlu0 %3103, %v2942
  %v3105 = vpop.permute.xlu0 %3104
  %v3107 = vmul.f32 %v3076, %v3105
  %3109 = vrot.lane.b32.xlu0 %v3107, 80
  %v3110 = vpop.permute.xlu0 %3109
  %v3112 = vadd.f32 %v3102, %v3110
  %v3113 = vmul.f32 %v3112, 0.5
  %v3114 = vadd.f32 %v2929, %v3113
  %v3116 = vsel %vm137, %v3114, 0
  %3118 = vmatpush.msra.mxu0 0.0
  %3119 = vmatpush.msra.mxu0 0.0
  %3120 = vmatpush.msra.mxu0 0.0
  %3121 = vmatpush.msra.mxu0 0.0
  %3122 = vmatpush.msra.mxu0 0.0
  %3123 = vmatpush.msra.mxu0 0.0
  %3124 = vmatpush.msra.mxu0 0.0
  %3125 = vmatpush.msra.mxu0 0.0
  %3126 = vmatpush.msra.mxu0 0.0
  %3127 = vmatpush.msra.mxu0 0.0
  %3128 = vmatpush.msra.mxu0 0.0
  %3129 = vmatpush.msra.mxu0 0.0
  %3130 = vmatpush.msra.mxu0 0.0
  %3131 = vmatpush.msra.mxu0 0.0
  %3132 = vmatpush.msra.mxu0 %v63
  %3133 = vmatpush.msra.mxu0 %v62
  %3134 = vmatmul.f32.gmra.mxu0 %v3116
  %v3135 = vpop.f32.mrf.mxu0
  %v3136 = vadd.f32 %v2595, %v3135
  %3137 = vdwg.mxu0
  %v3138 = vmax.f32 %v3136, 0.0
  %v3140 = vsel %vm137, %v3138, 0
  %3142 = vmatpush.msra.mxu0 0.0
  %3143 = vmatpush.msra.mxu0 0.0
  %3144 = vmatpush.msra.mxu0 0.0
  %3145 = vmatpush.msra.mxu0 0.0
  %3146 = vmatpush.msra.mxu0 0.0
  %3147 = vmatpush.msra.mxu0 0.0
  %3148 = vmatpush.msra.mxu0 0.0
  %3149 = vmatpush.msra.mxu0 0.0
  %3150 = vmatpush.msra.mxu0 0.0
  %3151 = vmatpush.msra.mxu0 0.0
  %3152 = vmatpush.msra.mxu0 0.0
  %3153 = vmatpush.msra.mxu0 0.0
  %3154 = vmatpush.msra.mxu0 0.0
  %3155 = vmatpush.msra.mxu0 0.0
  %3156 = vmatpush.msra.mxu0 %v66
  %3157 = vmatpush.msra.mxu0 %v65
  %3158 = vmatmul.f32.gmra.mxu0 %v3140
  %v3159 = vpop.f32.mrf.mxu0
  %v3160 = vadd.f32 %v2622, %v3159
  %3161 = vdwg.mxu0
  %v3162 = vtanh.pop %v3160
  %v3163 = vmul.f32 %v3162, %v3080
  %v3164 = vmul.f32 %v3162, %v3085
  %3166 = vrot.lane.b32.xlu0 %v3164, 112
  %v3167 = vpop.permute.xlu0 %3166
  %v3169 = vadd.f32 %v3163, %v3167
  %v3170 = vmul.f32 %v3162, %v3095
  %3172 = vrot.lane.b32.xlu0 %v3170, 96
  %v3173 = vpop.permute.xlu0 %3172
  %v3175 = vadd.f32 %v3169, %v3173
  %v3176 = vmul.f32 %v3162, %v3105
  %3178 = vrot.lane.b32.xlu0 %v3176, 80
  %v3179 = vpop.permute.xlu0 %3178
  %v3181 = vadd.f32 %v3175, %v3179
  %v3182 = vadd.f32 %v2929, %v3181
  %v3184 = vsel %vm137, %v3182, 0
  %3186 = vmatpush.msra.mxu0 0.0
  %3187 = vmatpush.msra.mxu0 0.0
  %3188 = vmatpush.msra.mxu0 0.0
  %3189 = vmatpush.msra.mxu0 0.0
  %3190 = vmatpush.msra.mxu0 0.0
  %3191 = vmatpush.msra.mxu0 0.0
  %3192 = vmatpush.msra.mxu0 0.0
  %3193 = vmatpush.msra.mxu0 0.0
  %3194 = vmatpush.msra.mxu0 0.0
  %3195 = vmatpush.msra.mxu0 0.0
  %3196 = vmatpush.msra.mxu0 0.0
  %3197 = vmatpush.msra.mxu0 0.0
  %3198 = vmatpush.msra.mxu0 0.0
  %3199 = vmatpush.msra.mxu0 0.0
  %3200 = vmatpush.msra.mxu0 %v63
  %3201 = vmatpush.msra.mxu0 %v62
  %3202 = vmatmul.f32.gmra.mxu0 %v3184
  %v3203 = vpop.f32.mrf.mxu0
  %v3204 = vadd.f32 %v2595, %v3203
  %3205 = vdwg.mxu0
  %v3206 = vmax.f32 %v3204, 0.0
  %v3208 = vsel %vm137, %v3206, 0
  %3210 = vmatpush.msra.mxu0 0.0
  %3211 = vmatpush.msra.mxu0 0.0
  %3212 = vmatpush.msra.mxu0 0.0
  %3213 = vmatpush.msra.mxu0 0.0
  %3214 = vmatpush.msra.mxu0 0.0
  %3215 = vmatpush.msra.mxu0 0.0
  %3216 = vmatpush.msra.mxu0 0.0
  %3217 = vmatpush.msra.mxu0 0.0
  %3218 = vmatpush.msra.mxu0 0.0
  %3219 = vmatpush.msra.mxu0 0.0
  %3220 = vmatpush.msra.mxu0 0.0
  %3221 = vmatpush.msra.mxu0 0.0
  %3222 = vmatpush.msra.mxu0 0.0
  %3223 = vmatpush.msra.mxu0 0.0
  %3224 = vmatpush.msra.mxu0 %v66
  %3225 = vmatpush.msra.mxu0 %v65
  %3226 = vmatmul.f32.gmra.mxu0 %v3208
  %v3227 = vpop.f32.mrf.mxu0
  %v3228 = vadd.f32 %v2622, %v3227
  %3229 = vdwg.mxu0
  %v3230 = vtanh.pop %v3228
  %3232 = vset.pattern.permute.xlu0 0
  %3233 = vperm.xlu0 %3232, %v2959
  %v3234 = vpop.permute.xlu0 %3233
  %v3236 = vmul.f32 %v3230, %v3234
  %3237 = vset.pattern.permute.xlu0 1
  %3238 = vperm.xlu0 %3237, %v2959
  %v3239 = vpop.permute.xlu0 %3238
  %v3241 = vmul.f32 %v3230, %v3239
  %3243 = vrot.lane.b32.xlu0 %v3241, 112
  %v3244 = vpop.permute.xlu0 %3243
  %v3246 = vadd.f32 %v3236, %v3244
  %3247 = vset.pattern.permute.xlu0 2
  %3248 = vperm.xlu0 %3247, %v2959
  %v3249 = vpop.permute.xlu0 %3248
  %v3251 = vmul.f32 %v3230, %v3249
  %3253 = vrot.lane.b32.xlu0 %v3251, 96
  %v3254 = vpop.permute.xlu0 %3253
  %v3256 = vadd.f32 %v3246, %v3254
  %3257 = vset.pattern.permute.xlu0 3
  %3258 = vperm.xlu0 %3257, %v2959
  %v3259 = vpop.permute.xlu0 %3258
  %v3261 = vmul.f32 %v3230, %v3259
  %3263 = vrot.lane.b32.xlu0 %v3261, 80
  %v3264 = vpop.permute.xlu0 %3263
  %v3266 = vadd.f32 %v3256, %v3264
  %v3267 = vadd.f32 %v3112, %v3181
  %v3268 = vmul.f32 %v3267, 2.0
  %v3269 = vadd.f32 %v3026, %v3268
  %v3270 = vadd.f32 %v3269, %v3266
  %v3271 = vmul.f32 %v3270, 0.16666667
  %v3272 = vadd.f32 %v2929, %v3271
  %3273 = vrot.lane.b32.xlu0 %v103, 108
  %v3274 = vpop.permute.xlu0 %3273
  %v3276 = vmul.f32 %v2431, %v3274
  %3277 = vrot.lane.b32.xlu0 %v2945, 20
  %v3278 = vpop.permute.xlu0 %3277
  %v3280 = vmul.f32 %v71, %v3278
  %3282 = vrot.lane.b32.xlu0 %v3280, 108
  %v3283 = vpop.permute.xlu0 %3282
  %v3285 = vadd.f32 %v3276, %v3283
  %v3286 = vsub.f32 1.0, %v2450
  %v3287 = vmul.f32 %v2450, %v3286
  %v3288 = vmul.f32 %v3287, %v1130
  %3289 = vrot.lane.b32.xlu0 %v103, 104
  %v3290 = vpop.permute.xlu0 %3289
  %v3292 = vmul.f32 %v2450, %v3290
  %3294 = vrot.lane.b32.xlu0 %v3288, 24
  %v3295 = vpop.permute.xlu0 %3294
  %v3297 = vmul.f32 %v71, %v3295
  %3299 = vrot.lane.b32.xlu0 %v3297, 104
  %v3300 = vpop.permute.xlu0 %3299
  %v3302 = vadd.f32 %v3292, %v3300
  %v3304 = vsel %vm137, %v3272, 0
  %3306 = vmatpush.msra.mxu0 0.0
  %3307 = vmatpush.msra.mxu0 0.0
  %3308 = vmatpush.msra.mxu0 0.0
  %3309 = vmatpush.msra.mxu0 0.0
  %3310 = vmatpush.msra.mxu0 0.0
  %3311 = vmatpush.msra.mxu0 0.0
  %3312 = vmatpush.msra.mxu0 0.0
  %3313 = vmatpush.msra.mxu0 0.0
  %3314 = vmatpush.msra.mxu0 0.0
  %3315 = vmatpush.msra.mxu0 0.0
  %3316 = vmatpush.msra.mxu0 0.0
  %3317 = vmatpush.msra.mxu0 0.0
  %3318 = vmatpush.msra.mxu0 0.0
  %3319 = vmatpush.msra.mxu0 0.0
  %3320 = vmatpush.msra.mxu0 %v63
  %3321 = vmatpush.msra.mxu0 %v62
  %3322 = vmatmul.f32.gmra.mxu0 %v3304
  %v3323 = vpop.f32.mrf.mxu0
  %v3324 = vadd.f32 %v2595, %v3323
  %3325 = vdwg.mxu0
  %v3326 = vmax.f32 %v3324, 0.0
  %v3328 = vsel %vm137, %v3326, 0
  %3330 = vmatpush.msra.mxu0 0.0
  %3331 = vmatpush.msra.mxu0 0.0
  %3332 = vmatpush.msra.mxu0 0.0
  %3333 = vmatpush.msra.mxu0 0.0
  %3334 = vmatpush.msra.mxu0 0.0
  %3335 = vmatpush.msra.mxu0 0.0
  %3336 = vmatpush.msra.mxu0 0.0
  %3337 = vmatpush.msra.mxu0 0.0
  %3338 = vmatpush.msra.mxu0 0.0
  %3339 = vmatpush.msra.mxu0 0.0
  %3340 = vmatpush.msra.mxu0 0.0
  %3341 = vmatpush.msra.mxu0 0.0
  %3342 = vmatpush.msra.mxu0 0.0
  %3343 = vmatpush.msra.mxu0 0.0
  %3344 = vmatpush.msra.mxu0 %v66
  %3345 = vmatpush.msra.mxu0 %v65
  %3346 = vmatmul.f32.gmra.mxu0 %v3328
  %v3347 = vpop.f32.mrf.mxu0
  %v3348 = vadd.f32 %v2622, %v3347
  %3349 = vdwg.mxu0
  %v3350 = vtanh.pop %v3348
  %v3351 = vmul.f32 %v3350, %v3234
  %v3352 = vmul.f32 %v3350, %v3239
  %3354 = vrot.lane.b32.xlu0 %v3352, 112
  %v3355 = vpop.permute.xlu0 %3354
  %v3357 = vadd.f32 %v3351, %v3355
  %v3358 = vmul.f32 %v3350, %v3249
  %3360 = vrot.lane.b32.xlu0 %v3358, 96
  %v3361 = vpop.permute.xlu0 %3360
  %v3363 = vadd.f32 %v3357, %v3361
  %v3364 = vmul.f32 %v3350, %v3259
  %3366 = vrot.lane.b32.xlu0 %v3364, 80
  %v3367 = vpop.permute.xlu0 %3366
  %v3369 = vadd.f32 %v3363, %v3367
  %v3370 = vmul.f32 %v3369, 0.5
  %v3371 = vadd.f32 %v3272, %v3370
  %v3373 = vsel %vm137, %v3371, 0
  %3375 = vmatpush.msra.mxu0 0.0
  %3376 = vmatpush.msra.mxu0 0.0
  %3377 = vmatpush.msra.mxu0 0.0
  %3378 = vmatpush.msra.mxu0 0.0
  %3379 = vmatpush.msra.mxu0 0.0
  %3380 = vmatpush.msra.mxu0 0.0
  %3381 = vmatpush.msra.mxu0 0.0
  %3382 = vmatpush.msra.mxu0 0.0
  %3383 = vmatpush.msra.mxu0 0.0
  %3384 = vmatpush.msra.mxu0 0.0
  %3385 = vmatpush.msra.mxu0 0.0
  %3386 = vmatpush.msra.mxu0 0.0
  %3387 = vmatpush.msra.mxu0 0.0
  %3388 = vmatpush.msra.mxu0 0.0
  %3389 = vmatpush.msra.mxu0 %v63
  %3390 = vmatpush.msra.mxu0 %v62
  %3391 = vmatmul.f32.gmra.mxu0 %v3373
  %v3392 = vpop.f32.mrf.mxu0
  %v3393 = vadd.f32 %v2595, %v3392
  %3394 = vdwg.mxu0
  %v3395 = vmax.f32 %v3393, 0.0
  %v3397 = vsel %vm137, %v3395, 0
  %3399 = vmatpush.msra.mxu0 0.0
  %3400 = vmatpush.msra.mxu0 0.0
  %3401 = vmatpush.msra.mxu0 0.0
  %3402 = vmatpush.msra.mxu0 0.0
  %3403 = vmatpush.msra.mxu0 0.0
  %3404 = vmatpush.msra.mxu0 0.0
  %3405 = vmatpush.msra.mxu0 0.0
  %3406 = vmatpush.msra.mxu0 0.0
  %3407 = vmatpush.msra.mxu0 0.0
  %3408 = vmatpush.msra.mxu0 0.0
  %3409 = vmatpush.msra.mxu0 0.0
  %3410 = vmatpush.msra.mxu0 0.0
  %3411 = vmatpush.msra.mxu0 0.0
  %3412 = vmatpush.msra.mxu0 0.0
  %3413 = vmatpush.msra.mxu0 %v66
  %3414 = vmatpush.msra.mxu0 %v65
  %3415 = vmatmul.f32.gmra.mxu0 %v3397
  %v3416 = vpop.f32.mrf.mxu0
  %v3417 = vadd.f32 %v2622, %v3416
  %3418 = vdwg.mxu0
  %v3419 = vtanh.pop %v3417
  %3421 = vset.pattern.permute.xlu0 0
  %3422 = vperm.xlu0 %3421, %v3285
  %v3423 = vpop.permute.xlu0 %3422
  %v3425 = vmul.f32 %v3419, %v3423
  %3426 = vset.pattern.permute.xlu0 1
  %3427 = vperm.xlu0 %3426, %v3285
  %v3428 = vpop.permute.xlu0 %3427
  %v3430 = vmul.f32 %v3419, %v3428
  %3432 = vrot.lane.b32.xlu0 %v3430, 112
  %v3433 = vpop.permute.xlu0 %3432
  %v3435 = vadd.f32 %v3425, %v3433
  %3436 = vset.pattern.permute.xlu0 2
  %3437 = vperm.xlu0 %3436, %v3285
  %v3438 = vpop.permute.xlu0 %3437
  %v3440 = vmul.f32 %v3419, %v3438
  %3442 = vrot.lane.b32.xlu0 %v3440, 96
  %v3443 = vpop.permute.xlu0 %3442
  %v3445 = vadd.f32 %v3435, %v3443
  %3446 = vset.pattern.permute.xlu0 3
  %3447 = vperm.xlu0 %3446, %v3285
  %v3448 = vpop.permute.xlu0 %3447
  %v3450 = vmul.f32 %v3419, %v3448
  %3452 = vrot.lane.b32.xlu0 %v3450, 80
  %v3453 = vpop.permute.xlu0 %3452
  %v3455 = vadd.f32 %v3445, %v3453
  %v3456 = vmul.f32 %v3455, 0.5
  %v3457 = vadd.f32 %v3272, %v3456
  %v3459 = vsel %vm137, %v3457, 0
  %3461 = vmatpush.msra.mxu0 0.0
  %3462 = vmatpush.msra.mxu0 0.0
  %3463 = vmatpush.msra.mxu0 0.0
  %3464 = vmatpush.msra.mxu0 0.0
  %3465 = vmatpush.msra.mxu0 0.0
  %3466 = vmatpush.msra.mxu0 0.0
  %3467 = vmatpush.msra.mxu0 0.0
  %3468 = vmatpush.msra.mxu0 0.0
  %3469 = vmatpush.msra.mxu0 0.0
  %3470 = vmatpush.msra.mxu0 0.0
  %3471 = vmatpush.msra.mxu0 0.0
  %3472 = vmatpush.msra.mxu0 0.0
  %3473 = vmatpush.msra.mxu0 0.0
  %3474 = vmatpush.msra.mxu0 0.0
  %3475 = vmatpush.msra.mxu0 %v63
  %3476 = vmatpush.msra.mxu0 %v62
  %3477 = vmatmul.f32.gmra.mxu0 %v3459
  %v3478 = vpop.f32.mrf.mxu0
  %v3479 = vadd.f32 %v2595, %v3478
  %3480 = vdwg.mxu0
  %v3481 = vmax.f32 %v3479, 0.0
  %v3483 = vsel %vm137, %v3481, 0
  %3485 = vmatpush.msra.mxu0 0.0
  %3486 = vmatpush.msra.mxu0 0.0
  %3487 = vmatpush.msra.mxu0 0.0
  %3488 = vmatpush.msra.mxu0 0.0
  %3489 = vmatpush.msra.mxu0 0.0
  %3490 = vmatpush.msra.mxu0 0.0
  %3491 = vmatpush.msra.mxu0 0.0
  %3492 = vmatpush.msra.mxu0 0.0
  %3493 = vmatpush.msra.mxu0 0.0
  %3494 = vmatpush.msra.mxu0 0.0
  %3495 = vmatpush.msra.mxu0 0.0
  %3496 = vmatpush.msra.mxu0 0.0
  %3497 = vmatpush.msra.mxu0 0.0
  %3498 = vmatpush.msra.mxu0 0.0
  %3499 = vmatpush.msra.mxu0 %v66
  %3500 = vmatpush.msra.mxu0 %v65
  %3501 = vmatmul.f32.gmra.mxu0 %v3483
  %v3502 = vpop.f32.mrf.mxu0
  %v3503 = vadd.f32 %v2622, %v3502
  %3504 = vdwg.mxu0
  %v3505 = vtanh.pop %v3503
  %v3506 = vmul.f32 %v3505, %v3423
  %v3507 = vmul.f32 %v3505, %v3428
  %3509 = vrot.lane.b32.xlu0 %v3507, 112
  %v3510 = vpop.permute.xlu0 %3509
  %v3512 = vadd.f32 %v3506, %v3510
  %v3513 = vmul.f32 %v3505, %v3438
  %3515 = vrot.lane.b32.xlu0 %v3513, 96
  %v3516 = vpop.permute.xlu0 %3515
  %v3518 = vadd.f32 %v3512, %v3516
  %v3519 = vmul.f32 %v3505, %v3448
  %3521 = vrot.lane.b32.xlu0 %v3519, 80
  %v3522 = vpop.permute.xlu0 %3521
  %v3524 = vadd.f32 %v3518, %v3522
  %v3525 = vadd.f32 %v3272, %v3524
  %v3527 = vsel %vm137, %v3525, 0
  %3529 = vmatpush.msra.mxu0 0.0
  %3530 = vmatpush.msra.mxu0 0.0
  %3531 = vmatpush.msra.mxu0 0.0
  %3532 = vmatpush.msra.mxu0 0.0
  %3533 = vmatpush.msra.mxu0 0.0
  %3534 = vmatpush.msra.mxu0 0.0
  %3535 = vmatpush.msra.mxu0 0.0
  %3536 = vmatpush.msra.mxu0 0.0
  %3537 = vmatpush.msra.mxu0 0.0
  %3538 = vmatpush.msra.mxu0 0.0
  %3539 = vmatpush.msra.mxu0 0.0
  %3540 = vmatpush.msra.mxu0 0.0
  %3541 = vmatpush.msra.mxu0 0.0
  %3542 = vmatpush.msra.mxu0 0.0
  %3543 = vmatpush.msra.mxu0 %v63
  %3544 = vmatpush.msra.mxu0 %v62
  %3545 = vmatmul.f32.gmra.mxu0 %v3527
  %v3546 = vpop.f32.mrf.mxu0
  %v3547 = vadd.f32 %v2595, %v3546
  %3548 = vdwg.mxu0
  %v3549 = vmax.f32 %v3547, 0.0
  %v3551 = vsel %vm137, %v3549, 0
  %3553 = vmatpush.msra.mxu0 0.0
  %3554 = vmatpush.msra.mxu0 0.0
  %3555 = vmatpush.msra.mxu0 0.0
  %3556 = vmatpush.msra.mxu0 0.0
  %3557 = vmatpush.msra.mxu0 0.0
  %3558 = vmatpush.msra.mxu0 0.0
  %3559 = vmatpush.msra.mxu0 0.0
  %3560 = vmatpush.msra.mxu0 0.0
  %3561 = vmatpush.msra.mxu0 0.0
  %3562 = vmatpush.msra.mxu0 0.0
  %3563 = vmatpush.msra.mxu0 0.0
  %3564 = vmatpush.msra.mxu0 0.0
  %3565 = vmatpush.msra.mxu0 0.0
  %3566 = vmatpush.msra.mxu0 0.0
  %3567 = vmatpush.msra.mxu0 %v66
  %3568 = vmatpush.msra.mxu0 %v65
  %3569 = vmatmul.f32.gmra.mxu0 %v3551
  %v3570 = vpop.f32.mrf.mxu0
  %v3571 = vadd.f32 %v2622, %v3570
  %3572 = vdwg.mxu0
  %v3573 = vtanh.pop %v3571
  %3575 = vset.pattern.permute.xlu0 0
  %3576 = vperm.xlu0 %3575, %v3302
  %v3577 = vpop.permute.xlu0 %3576
  %v3579 = vmul.f32 %v3573, %v3577
  %3580 = vset.pattern.permute.xlu0 1
  %3581 = vperm.xlu0 %3580, %v3302
  %v3582 = vpop.permute.xlu0 %3581
  %v3584 = vmul.f32 %v3573, %v3582
  %3586 = vrot.lane.b32.xlu0 %v3584, 112
  %v3587 = vpop.permute.xlu0 %3586
  %v3589 = vadd.f32 %v3579, %v3587
  %3590 = vset.pattern.permute.xlu0 2
  %3591 = vperm.xlu0 %3590, %v3302
  %v3592 = vpop.permute.xlu0 %3591
  %v3594 = vmul.f32 %v3573, %v3592
  %3596 = vrot.lane.b32.xlu0 %v3594, 96
  %v3597 = vpop.permute.xlu0 %3596
  %v3599 = vadd.f32 %v3589, %v3597
  %3600 = vset.pattern.permute.xlu0 3
  %3601 = vperm.xlu0 %3600, %v3302
  %v3602 = vpop.permute.xlu0 %3601
  %v3604 = vmul.f32 %v3573, %v3602
  %3606 = vrot.lane.b32.xlu0 %v3604, 80
  %v3607 = vpop.permute.xlu0 %3606
  %v3609 = vadd.f32 %v3599, %v3607
  %v3610 = vadd.f32 %v3455, %v3524
  %v3611 = vmul.f32 %v3610, 2.0
  %v3612 = vadd.f32 %v3369, %v3611
  %v3613 = vadd.f32 %v3612, %v3609
  %v3614 = vmul.f32 %v3613, 0.16666667
  %v3615 = vadd.f32 %v3272, %v3614
  %3616 = vrot.lane.b32.xlu0 %v103, 100
  %v3617 = vpop.permute.xlu0 %3616
  %v3619 = vmul.f32 %v2450, %v3617
  %3620 = vrot.lane.b32.xlu0 %v3288, 28
  %v3621 = vpop.permute.xlu0 %3620
  %v3623 = vmul.f32 %v71, %v3621
  %3625 = vrot.lane.b32.xlu0 %v3623, 100
  %v3626 = vpop.permute.xlu0 %3625
  %v3628 = vadd.f32 %v3619, %v3626
  %v3629 = vsub.f32 1.0, %v2469
  %v3630 = vmul.f32 %v2469, %v3629
  %v3631 = vmul.f32 %v3630, %v1441
  %3632 = vrot.lane.b32.xlu0 %v103, 96
  %v3633 = vpop.permute.xlu0 %3632
  %v3635 = vmul.f32 %v2469, %v3633
  %3637 = vrot.lane.b32.xlu0 %v3631, 32
  %v3638 = vpop.permute.xlu0 %3637
  %v3640 = vmul.f32 %v71, %v3638
  %3642 = vrot.lane.b32.xlu0 %v3640, 96
  %v3643 = vpop.permute.xlu0 %3642
  %v3645 = vadd.f32 %v3635, %v3643
  %v3647 = vsel %vm137, %v3615, 0
  %3649 = vmatpush.msra.mxu0 0.0
  %3650 = vmatpush.msra.mxu0 0.0
  %3651 = vmatpush.msra.mxu0 0.0
  %3652 = vmatpush.msra.mxu0 0.0
  %3653 = vmatpush.msra.mxu0 0.0
  %3654 = vmatpush.msra.mxu0 0.0
  %3655 = vmatpush.msra.mxu0 0.0
  %3656 = vmatpush.msra.mxu0 0.0
  %3657 = vmatpush.msra.mxu0 0.0
  %3658 = vmatpush.msra.mxu0 0.0
  %3659 = vmatpush.msra.mxu0 0.0
  %3660 = vmatpush.msra.mxu0 0.0
  %3661 = vmatpush.msra.mxu0 0.0
  %3662 = vmatpush.msra.mxu0 0.0
  %3663 = vmatpush.msra.mxu0 %v63
  %3664 = vmatpush.msra.mxu0 %v62
  %3665 = vmatmul.f32.gmra.mxu0 %v3647
  %v3666 = vpop.f32.mrf.mxu0
  %v3667 = vadd.f32 %v2595, %v3666
  %3668 = vdwg.mxu0
  %v3669 = vmax.f32 %v3667, 0.0
  %v3671 = vsel %vm137, %v3669, 0
  %3673 = vmatpush.msra.mxu0 0.0
  %3674 = vmatpush.msra.mxu0 0.0
  %3675 = vmatpush.msra.mxu0 0.0
  %3676 = vmatpush.msra.mxu0 0.0
  %3677 = vmatpush.msra.mxu0 0.0
  %3678 = vmatpush.msra.mxu0 0.0
  %3679 = vmatpush.msra.mxu0 0.0
  %3680 = vmatpush.msra.mxu0 0.0
  %3681 = vmatpush.msra.mxu0 0.0
  %3682 = vmatpush.msra.mxu0 0.0
  %3683 = vmatpush.msra.mxu0 0.0
  %3684 = vmatpush.msra.mxu0 0.0
  %3685 = vmatpush.msra.mxu0 0.0
  %3686 = vmatpush.msra.mxu0 0.0
  %3687 = vmatpush.msra.mxu0 %v66
  %3688 = vmatpush.msra.mxu0 %v65
  %3689 = vmatmul.f32.gmra.mxu0 %v3671
  %v3690 = vpop.f32.mrf.mxu0
  %v3691 = vadd.f32 %v2622, %v3690
  %3692 = vdwg.mxu0
  %v3693 = vtanh.pop %v3691
  %v3694 = vmul.f32 %v3693, %v3577
  %v3695 = vmul.f32 %v3693, %v3582
  %3697 = vrot.lane.b32.xlu0 %v3695, 112
  %v3698 = vpop.permute.xlu0 %3697
  %v3700 = vadd.f32 %v3694, %v3698
  %v3701 = vmul.f32 %v3693, %v3592
  %3703 = vrot.lane.b32.xlu0 %v3701, 96
  %v3704 = vpop.permute.xlu0 %3703
  %v3706 = vadd.f32 %v3700, %v3704
  %v3707 = vmul.f32 %v3693, %v3602
  %3709 = vrot.lane.b32.xlu0 %v3707, 80
  %v3710 = vpop.permute.xlu0 %3709
  %v3712 = vadd.f32 %v3706, %v3710
  %v3713 = vmul.f32 %v3712, 0.5
  %v3714 = vadd.f32 %v3615, %v3713
  %v3716 = vsel %vm137, %v3714, 0
  %3718 = vmatpush.msra.mxu0 0.0
  %3719 = vmatpush.msra.mxu0 0.0
  %3720 = vmatpush.msra.mxu0 0.0
  %3721 = vmatpush.msra.mxu0 0.0
  %3722 = vmatpush.msra.mxu0 0.0
  %3723 = vmatpush.msra.mxu0 0.0
  %3724 = vmatpush.msra.mxu0 0.0
  %3725 = vmatpush.msra.mxu0 0.0
  %3726 = vmatpush.msra.mxu0 0.0
  %3727 = vmatpush.msra.mxu0 0.0
  %3728 = vmatpush.msra.mxu0 0.0
  %3729 = vmatpush.msra.mxu0 0.0
  %3730 = vmatpush.msra.mxu0 0.0
  %3731 = vmatpush.msra.mxu0 0.0
  %3732 = vmatpush.msra.mxu0 %v63
  %3733 = vmatpush.msra.mxu0 %v62
  %3734 = vmatmul.f32.gmra.mxu0 %v3716
  %v3735 = vpop.f32.mrf.mxu0
  %v3736 = vadd.f32 %v2595, %v3735
  %3737 = vdwg.mxu0
  %v3738 = vmax.f32 %v3736, 0.0
  %v3740 = vsel %vm137, %v3738, 0
  %3742 = vmatpush.msra.mxu0 0.0
  %3743 = vmatpush.msra.mxu0 0.0
  %3744 = vmatpush.msra.mxu0 0.0
  %3745 = vmatpush.msra.mxu0 0.0
  %3746 = vmatpush.msra.mxu0 0.0
  %3747 = vmatpush.msra.mxu0 0.0
  %3748 = vmatpush.msra.mxu0 0.0
  %3749 = vmatpush.msra.mxu0 0.0
  %3750 = vmatpush.msra.mxu0 0.0
  %3751 = vmatpush.msra.mxu0 0.0
  %3752 = vmatpush.msra.mxu0 0.0
  %3753 = vmatpush.msra.mxu0 0.0
  %3754 = vmatpush.msra.mxu0 0.0
  %3755 = vmatpush.msra.mxu0 0.0
  %3756 = vmatpush.msra.mxu0 %v66
  %3757 = vmatpush.msra.mxu0 %v65
  %3758 = vmatmul.f32.gmra.mxu0 %v3740
  %v3759 = vpop.f32.mrf.mxu0
  %v3760 = vadd.f32 %v2622, %v3759
  %3761 = vdwg.mxu0
  %v3762 = vtanh.pop %v3760
  %3764 = vset.pattern.permute.xlu0 0
  %3765 = vperm.xlu0 %3764, %v3628
  %v3766 = vpop.permute.xlu0 %3765
  %v3768 = vmul.f32 %v3762, %v3766
  %3769 = vset.pattern.permute.xlu0 1
  %3770 = vperm.xlu0 %3769, %v3628
  %v3771 = vpop.permute.xlu0 %3770
  %v3773 = vmul.f32 %v3762, %v3771
  %3775 = vrot.lane.b32.xlu0 %v3773, 112
  %v3776 = vpop.permute.xlu0 %3775
  %v3778 = vadd.f32 %v3768, %v3776
  %3779 = vset.pattern.permute.xlu0 2
  %3780 = vperm.xlu0 %3779, %v3628
  %v3781 = vpop.permute.xlu0 %3780
  %v3783 = vmul.f32 %v3762, %v3781
  %3785 = vrot.lane.b32.xlu0 %v3783, 96
  %v3786 = vpop.permute.xlu0 %3785
  %v3788 = vadd.f32 %v3778, %v3786
  %3789 = vset.pattern.permute.xlu0 3
  %3790 = vperm.xlu0 %3789, %v3628
  %v3791 = vpop.permute.xlu0 %3790
  %v3793 = vmul.f32 %v3762, %v3791
  %3795 = vrot.lane.b32.xlu0 %v3793, 80
  %v3796 = vpop.permute.xlu0 %3795
  %v3798 = vadd.f32 %v3788, %v3796
  %v3799 = vmul.f32 %v3798, 0.5
  %v3800 = vadd.f32 %v3615, %v3799
  %v3802 = vsel %vm137, %v3800, 0
  %3804 = vmatpush.msra.mxu0 0.0
  %3805 = vmatpush.msra.mxu0 0.0
  %3806 = vmatpush.msra.mxu0 0.0
  %3807 = vmatpush.msra.mxu0 0.0
  %3808 = vmatpush.msra.mxu0 0.0
  %3809 = vmatpush.msra.mxu0 0.0
  %3810 = vmatpush.msra.mxu0 0.0
  %3811 = vmatpush.msra.mxu0 0.0
  %3812 = vmatpush.msra.mxu0 0.0
  %3813 = vmatpush.msra.mxu0 0.0
  %3814 = vmatpush.msra.mxu0 0.0
  %3815 = vmatpush.msra.mxu0 0.0
  %3816 = vmatpush.msra.mxu0 0.0
  %3817 = vmatpush.msra.mxu0 0.0
  %3818 = vmatpush.msra.mxu0 %v63
  %3819 = vmatpush.msra.mxu0 %v62
  %3820 = vmatmul.f32.gmra.mxu0 %v3802
  %v3821 = vpop.f32.mrf.mxu0
  %v3822 = vadd.f32 %v2595, %v3821
  %3823 = vdwg.mxu0
  %v3824 = vmax.f32 %v3822, 0.0
  %v3826 = vsel %vm137, %v3824, 0
  %3828 = vmatpush.msra.mxu0 0.0
  %3829 = vmatpush.msra.mxu0 0.0
  %3830 = vmatpush.msra.mxu0 0.0
  %3831 = vmatpush.msra.mxu0 0.0
  %3832 = vmatpush.msra.mxu0 0.0
  %3833 = vmatpush.msra.mxu0 0.0
  %3834 = vmatpush.msra.mxu0 0.0
  %3835 = vmatpush.msra.mxu0 0.0
  %3836 = vmatpush.msra.mxu0 0.0
  %3837 = vmatpush.msra.mxu0 0.0
  %3838 = vmatpush.msra.mxu0 0.0
  %3839 = vmatpush.msra.mxu0 0.0
  %3840 = vmatpush.msra.mxu0 0.0
  %3841 = vmatpush.msra.mxu0 0.0
  %3842 = vmatpush.msra.mxu0 %v66
  %3843 = vmatpush.msra.mxu0 %v65
  %3844 = vmatmul.f32.gmra.mxu0 %v3826
  %v3845 = vpop.f32.mrf.mxu0
  %v3846 = vadd.f32 %v2622, %v3845
  %3847 = vdwg.mxu0
  %v3848 = vtanh.pop %v3846
  %v3849 = vmul.f32 %v3848, %v3766
  %v3850 = vmul.f32 %v3848, %v3771
  %3852 = vrot.lane.b32.xlu0 %v3850, 112
  %v3853 = vpop.permute.xlu0 %3852
  %v3855 = vadd.f32 %v3849, %v3853
  %v3856 = vmul.f32 %v3848, %v3781
  %3858 = vrot.lane.b32.xlu0 %v3856, 96
  %v3859 = vpop.permute.xlu0 %3858
  %v3861 = vadd.f32 %v3855, %v3859
  %v3862 = vmul.f32 %v3848, %v3791
  %3864 = vrot.lane.b32.xlu0 %v3862, 80
  %v3865 = vpop.permute.xlu0 %3864
  %v3867 = vadd.f32 %v3861, %v3865
  %v3868 = vadd.f32 %v3615, %v3867
  %v3870 = vsel %vm137, %v3868, 0
  %3872 = vmatpush.msra.mxu0 0.0
  %3873 = vmatpush.msra.mxu0 0.0
  %3874 = vmatpush.msra.mxu0 0.0
  %3875 = vmatpush.msra.mxu0 0.0
  %3876 = vmatpush.msra.mxu0 0.0
  %3877 = vmatpush.msra.mxu0 0.0
  %3878 = vmatpush.msra.mxu0 0.0
  %3879 = vmatpush.msra.mxu0 0.0
  %3880 = vmatpush.msra.mxu0 0.0
  %3881 = vmatpush.msra.mxu0 0.0
  %3882 = vmatpush.msra.mxu0 0.0
  %3883 = vmatpush.msra.mxu0 0.0
  %3884 = vmatpush.msra.mxu0 0.0
  %3885 = vmatpush.msra.mxu0 0.0
  %3886 = vmatpush.msra.mxu0 %v63
  %3887 = vmatpush.msra.mxu0 %v62
  %3888 = vmatmul.f32.gmra.mxu0 %v3870
  %v3889 = vpop.f32.mrf.mxu0
  %v3890 = vadd.f32 %v2595, %v3889
  %3891 = vdwg.mxu0
  %v3892 = vmax.f32 %v3890, 0.0
  %v3894 = vsel %vm137, %v3892, 0
  %3896 = vmatpush.msra.mxu0 0.0
  %3897 = vmatpush.msra.mxu0 0.0
  %3898 = vmatpush.msra.mxu0 0.0
  %3899 = vmatpush.msra.mxu0 0.0
  %3900 = vmatpush.msra.mxu0 0.0
  %3901 = vmatpush.msra.mxu0 0.0
  %3902 = vmatpush.msra.mxu0 0.0
  %3903 = vmatpush.msra.mxu0 0.0
  %3904 = vmatpush.msra.mxu0 0.0
  %3905 = vmatpush.msra.mxu0 0.0
  %3906 = vmatpush.msra.mxu0 0.0
  %3907 = vmatpush.msra.mxu0 0.0
  %3908 = vmatpush.msra.mxu0 0.0
  %3909 = vmatpush.msra.mxu0 0.0
  %3910 = vmatpush.msra.mxu0 %v66
  %3911 = vmatpush.msra.mxu0 %v65
  %3912 = vmatmul.f32.gmra.mxu0 %v3894
  %v3913 = vpop.f32.mrf.mxu0
  %v3914 = vadd.f32 %v2622, %v3913
  %3915 = vdwg.mxu0
  %v3916 = vtanh.pop %v3914
  %3918 = vset.pattern.permute.xlu0 0
  %3919 = vperm.xlu0 %3918, %v3645
  %v3920 = vpop.permute.xlu0 %3919
  %v3922 = vmul.f32 %v3916, %v3920
  %3923 = vset.pattern.permute.xlu0 1
  %3924 = vperm.xlu0 %3923, %v3645
  %v3925 = vpop.permute.xlu0 %3924
  %v3927 = vmul.f32 %v3916, %v3925
  %3929 = vrot.lane.b32.xlu0 %v3927, 112
  %v3930 = vpop.permute.xlu0 %3929
  %v3932 = vadd.f32 %v3922, %v3930
  %3933 = vset.pattern.permute.xlu0 2
  %3934 = vperm.xlu0 %3933, %v3645
  %v3935 = vpop.permute.xlu0 %3934
  %v3937 = vmul.f32 %v3916, %v3935
  %3939 = vrot.lane.b32.xlu0 %v3937, 96
  %v3940 = vpop.permute.xlu0 %3939
  %v3942 = vadd.f32 %v3932, %v3940
  %3943 = vset.pattern.permute.xlu0 3
  %3944 = vperm.xlu0 %3943, %v3645
  %v3945 = vpop.permute.xlu0 %3944
  %v3947 = vmul.f32 %v3916, %v3945
  %3949 = vrot.lane.b32.xlu0 %v3947, 80
  %v3950 = vpop.permute.xlu0 %3949
  %v3952 = vadd.f32 %v3942, %v3950
  %v3953 = vadd.f32 %v3798, %v3867
  %v3954 = vmul.f32 %v3953, 2.0
  %v3955 = vadd.f32 %v3712, %v3954
  %v3956 = vadd.f32 %v3955, %v3952
  %v3957 = vmul.f32 %v3956, 0.16666667
  %v3958 = vadd.f32 %v3615, %v3957
  %3959 = vrot.lane.b32.xlu0 %v103, 92
  %v3960 = vpop.permute.xlu0 %3959
  %v3962 = vmul.f32 %v2469, %v3960
  %3963 = vrot.lane.b32.xlu0 %v3631, 36
  %v3964 = vpop.permute.xlu0 %3963
  %v3966 = vmul.f32 %v71, %v3964
  %3968 = vrot.lane.b32.xlu0 %v3966, 92
  %v3969 = vpop.permute.xlu0 %3968
  %v3971 = vadd.f32 %v3962, %v3969
  %v3972 = vsub.f32 1.0, %v2488
  %v3973 = vmul.f32 %v2488, %v3972
  %v3974 = vmul.f32 %v3973, %v1752
  %3975 = vrot.lane.b32.xlu0 %v103, 88
  %v3976 = vpop.permute.xlu0 %3975
  %v3978 = vmul.f32 %v2488, %v3976
  %3980 = vrot.lane.b32.xlu0 %v3974, 40
  %v3981 = vpop.permute.xlu0 %3980
  %v3983 = vmul.f32 %v71, %v3981
  %3985 = vrot.lane.b32.xlu0 %v3983, 88
  %v3986 = vpop.permute.xlu0 %3985
  %v3988 = vadd.f32 %v3978, %v3986
  %v3990 = vsel %vm137, %v3958, 0
  %3992 = vmatpush.msra.mxu0 0.0
  %3993 = vmatpush.msra.mxu0 0.0
  %3994 = vmatpush.msra.mxu0 0.0
  %3995 = vmatpush.msra.mxu0 0.0
  %3996 = vmatpush.msra.mxu0 0.0
  %3997 = vmatpush.msra.mxu0 0.0
  %3998 = vmatpush.msra.mxu0 0.0
  %3999 = vmatpush.msra.mxu0 0.0
  %4000 = vmatpush.msra.mxu0 0.0
  %4001 = vmatpush.msra.mxu0 0.0
  %4002 = vmatpush.msra.mxu0 0.0
  %4003 = vmatpush.msra.mxu0 0.0
  %4004 = vmatpush.msra.mxu0 0.0
  %4005 = vmatpush.msra.mxu0 0.0
  %4006 = vmatpush.msra.mxu0 %v63
  %4007 = vmatpush.msra.mxu0 %v62
  %4008 = vmatmul.f32.gmra.mxu0 %v3990
  %v4009 = vpop.f32.mrf.mxu0
  %v4010 = vadd.f32 %v2595, %v4009
  %4011 = vdwg.mxu0
  %v4012 = vmax.f32 %v4010, 0.0
  %v4014 = vsel %vm137, %v4012, 0
  %4016 = vmatpush.msra.mxu0 0.0
  %4017 = vmatpush.msra.mxu0 0.0
  %4018 = vmatpush.msra.mxu0 0.0
  %4019 = vmatpush.msra.mxu0 0.0
  %4020 = vmatpush.msra.mxu0 0.0
  %4021 = vmatpush.msra.mxu0 0.0
  %4022 = vmatpush.msra.mxu0 0.0
  %4023 = vmatpush.msra.mxu0 0.0
  %4024 = vmatpush.msra.mxu0 0.0
  %4025 = vmatpush.msra.mxu0 0.0
  %4026 = vmatpush.msra.mxu0 0.0
  %4027 = vmatpush.msra.mxu0 0.0
  %4028 = vmatpush.msra.mxu0 0.0
  %4029 = vmatpush.msra.mxu0 0.0
  %4030 = vmatpush.msra.mxu0 %v66
  %4031 = vmatpush.msra.mxu0 %v65
  %4032 = vmatmul.f32.gmra.mxu0 %v4014
  %v4033 = vpop.f32.mrf.mxu0
  %v4034 = vadd.f32 %v2622, %v4033
  %4035 = vdwg.mxu0
  %v4036 = vtanh.pop %v4034
  %v4037 = vmul.f32 %v4036, %v3920
  %v4038 = vmul.f32 %v4036, %v3925
  %4040 = vrot.lane.b32.xlu0 %v4038, 112
  %v4041 = vpop.permute.xlu0 %4040
  %v4043 = vadd.f32 %v4037, %v4041
  %v4044 = vmul.f32 %v4036, %v3935
  %4046 = vrot.lane.b32.xlu0 %v4044, 96
  %v4047 = vpop.permute.xlu0 %4046
  %v4049 = vadd.f32 %v4043, %v4047
  %v4050 = vmul.f32 %v4036, %v3945
  %4052 = vrot.lane.b32.xlu0 %v4050, 80
  %v4053 = vpop.permute.xlu0 %4052
  %v4055 = vadd.f32 %v4049, %v4053
  %v4056 = vmul.f32 %v4055, 0.5
  %v4057 = vadd.f32 %v3958, %v4056
  %v4059 = vsel %vm137, %v4057, 0
  %4061 = vmatpush.msra.mxu0 0.0
  %4062 = vmatpush.msra.mxu0 0.0
  %4063 = vmatpush.msra.mxu0 0.0
  %4064 = vmatpush.msra.mxu0 0.0
  %4065 = vmatpush.msra.mxu0 0.0
  %4066 = vmatpush.msra.mxu0 0.0
  %4067 = vmatpush.msra.mxu0 0.0
  %4068 = vmatpush.msra.mxu0 0.0
  %4069 = vmatpush.msra.mxu0 0.0
  %4070 = vmatpush.msra.mxu0 0.0
  %4071 = vmatpush.msra.mxu0 0.0
  %4072 = vmatpush.msra.mxu0 0.0
  %4073 = vmatpush.msra.mxu0 0.0
  %4074 = vmatpush.msra.mxu0 0.0
  %4075 = vmatpush.msra.mxu0 %v63
  %4076 = vmatpush.msra.mxu0 %v62
  %4077 = vmatmul.f32.gmra.mxu0 %v4059
  %v4078 = vpop.f32.mrf.mxu0
  %v4079 = vadd.f32 %v2595, %v4078
  %4080 = vdwg.mxu0
  %v4081 = vmax.f32 %v4079, 0.0
  %v4083 = vsel %vm137, %v4081, 0
  %4085 = vmatpush.msra.mxu0 0.0
  %4086 = vmatpush.msra.mxu0 0.0
  %4087 = vmatpush.msra.mxu0 0.0
  %4088 = vmatpush.msra.mxu0 0.0
  %4089 = vmatpush.msra.mxu0 0.0
  %4090 = vmatpush.msra.mxu0 0.0
  %4091 = vmatpush.msra.mxu0 0.0
  %4092 = vmatpush.msra.mxu0 0.0
  %4093 = vmatpush.msra.mxu0 0.0
  %4094 = vmatpush.msra.mxu0 0.0
  %4095 = vmatpush.msra.mxu0 0.0
  %4096 = vmatpush.msra.mxu0 0.0
  %4097 = vmatpush.msra.mxu0 0.0
  %4098 = vmatpush.msra.mxu0 0.0
  %4099 = vmatpush.msra.mxu0 %v66
  %4100 = vmatpush.msra.mxu0 %v65
  %4101 = vmatmul.f32.gmra.mxu0 %v4083
  %v4102 = vpop.f32.mrf.mxu0
  %v4103 = vadd.f32 %v2622, %v4102
  %4104 = vdwg.mxu0
  %v4105 = vtanh.pop %v4103
  %4107 = vset.pattern.permute.xlu0 0
  %4108 = vperm.xlu0 %4107, %v3971
  %v4109 = vpop.permute.xlu0 %4108
  %v4111 = vmul.f32 %v4105, %v4109
  %4112 = vset.pattern.permute.xlu0 1
  %4113 = vperm.xlu0 %4112, %v3971
  %v4114 = vpop.permute.xlu0 %4113
  %v4116 = vmul.f32 %v4105, %v4114
  %4118 = vrot.lane.b32.xlu0 %v4116, 112
  %v4119 = vpop.permute.xlu0 %4118
  %v4121 = vadd.f32 %v4111, %v4119
  %4122 = vset.pattern.permute.xlu0 2
  %4123 = vperm.xlu0 %4122, %v3971
  %v4124 = vpop.permute.xlu0 %4123
  %v4126 = vmul.f32 %v4105, %v4124
  %4128 = vrot.lane.b32.xlu0 %v4126, 96
  %v4129 = vpop.permute.xlu0 %4128
  %v4131 = vadd.f32 %v4121, %v4129
  %4132 = vset.pattern.permute.xlu0 3
  %4133 = vperm.xlu0 %4132, %v3971
  %v4134 = vpop.permute.xlu0 %4133
  %v4136 = vmul.f32 %v4105, %v4134
  %4138 = vrot.lane.b32.xlu0 %v4136, 80
  %v4139 = vpop.permute.xlu0 %4138
  %v4141 = vadd.f32 %v4131, %v4139
  %v4142 = vmul.f32 %v4141, 0.5
  %v4143 = vadd.f32 %v3958, %v4142
  %v4145 = vsel %vm137, %v4143, 0
  %4147 = vmatpush.msra.mxu0 0.0
  %4148 = vmatpush.msra.mxu0 0.0
  %4149 = vmatpush.msra.mxu0 0.0
  %4150 = vmatpush.msra.mxu0 0.0
  %4151 = vmatpush.msra.mxu0 0.0
  %4152 = vmatpush.msra.mxu0 0.0
  %4153 = vmatpush.msra.mxu0 0.0
  %4154 = vmatpush.msra.mxu0 0.0
  %4155 = vmatpush.msra.mxu0 0.0
  %4156 = vmatpush.msra.mxu0 0.0
  %4157 = vmatpush.msra.mxu0 0.0
  %4158 = vmatpush.msra.mxu0 0.0
  %4159 = vmatpush.msra.mxu0 0.0
  %4160 = vmatpush.msra.mxu0 0.0
  %4161 = vmatpush.msra.mxu0 %v63
  %4162 = vmatpush.msra.mxu0 %v62
  %4163 = vmatmul.f32.gmra.mxu0 %v4145
  %v4164 = vpop.f32.mrf.mxu0
  %v4165 = vadd.f32 %v2595, %v4164
  %4166 = vdwg.mxu0
  %v4167 = vmax.f32 %v4165, 0.0
  %v4169 = vsel %vm137, %v4167, 0
  %4171 = vmatpush.msra.mxu0 0.0
  %4172 = vmatpush.msra.mxu0 0.0
  %4173 = vmatpush.msra.mxu0 0.0
  %4174 = vmatpush.msra.mxu0 0.0
  %4175 = vmatpush.msra.mxu0 0.0
  %4176 = vmatpush.msra.mxu0 0.0
  %4177 = vmatpush.msra.mxu0 0.0
  %4178 = vmatpush.msra.mxu0 0.0
  %4179 = vmatpush.msra.mxu0 0.0
  %4180 = vmatpush.msra.mxu0 0.0
  %4181 = vmatpush.msra.mxu0 0.0
  %4182 = vmatpush.msra.mxu0 0.0
  %4183 = vmatpush.msra.mxu0 0.0
  %4184 = vmatpush.msra.mxu0 0.0
  %4185 = vmatpush.msra.mxu0 %v66
  %4186 = vmatpush.msra.mxu0 %v65
  %4187 = vmatmul.f32.gmra.mxu0 %v4169
  %v4188 = vpop.f32.mrf.mxu0
  %v4189 = vadd.f32 %v2622, %v4188
  %4190 = vdwg.mxu0
  %v4191 = vtanh.pop %v4189
  %v4192 = vmul.f32 %v4191, %v4109
  %v4193 = vmul.f32 %v4191, %v4114
  %4195 = vrot.lane.b32.xlu0 %v4193, 112
  %v4196 = vpop.permute.xlu0 %4195
  %v4198 = vadd.f32 %v4192, %v4196
  %v4199 = vmul.f32 %v4191, %v4124
  %4201 = vrot.lane.b32.xlu0 %v4199, 96
  %v4202 = vpop.permute.xlu0 %4201
  %v4204 = vadd.f32 %v4198, %v4202
  %v4205 = vmul.f32 %v4191, %v4134
  %4207 = vrot.lane.b32.xlu0 %v4205, 80
  %v4208 = vpop.permute.xlu0 %4207
  %v4210 = vadd.f32 %v4204, %v4208
  %v4211 = vadd.f32 %v3958, %v4210
  %v4213 = vsel %vm137, %v4211, 0
  %4215 = vmatpush.msra.mxu0 0.0
  %4216 = vmatpush.msra.mxu0 0.0
  %4217 = vmatpush.msra.mxu0 0.0
  %4218 = vmatpush.msra.mxu0 0.0
  %4219 = vmatpush.msra.mxu0 0.0
  %4220 = vmatpush.msra.mxu0 0.0
  %4221 = vmatpush.msra.mxu0 0.0
  %4222 = vmatpush.msra.mxu0 0.0
  %4223 = vmatpush.msra.mxu0 0.0
  %4224 = vmatpush.msra.mxu0 0.0
  %4225 = vmatpush.msra.mxu0 0.0
  %4226 = vmatpush.msra.mxu0 0.0
  %4227 = vmatpush.msra.mxu0 0.0
  %4228 = vmatpush.msra.mxu0 0.0
  %4229 = vmatpush.msra.mxu0 %v63
  %4230 = vmatpush.msra.mxu0 %v62
  %4231 = vmatmul.f32.gmra.mxu0 %v4213
  %v4232 = vpop.f32.mrf.mxu0
  %v4233 = vadd.f32 %v2595, %v4232
  %4234 = vdwg.mxu0
  %v4235 = vmax.f32 %v4233, 0.0
  %v4237 = vsel %vm137, %v4235, 0
  %4239 = vmatpush.msra.mxu0 0.0
  %4240 = vmatpush.msra.mxu0 0.0
  %4241 = vmatpush.msra.mxu0 0.0
  %4242 = vmatpush.msra.mxu0 0.0
  %4243 = vmatpush.msra.mxu0 0.0
  %4244 = vmatpush.msra.mxu0 0.0
  %4245 = vmatpush.msra.mxu0 0.0
  %4246 = vmatpush.msra.mxu0 0.0
  %4247 = vmatpush.msra.mxu0 0.0
  %4248 = vmatpush.msra.mxu0 0.0
  %4249 = vmatpush.msra.mxu0 0.0
  %4250 = vmatpush.msra.mxu0 0.0
  %4251 = vmatpush.msra.mxu0 0.0
  %4252 = vmatpush.msra.mxu0 0.0
  %4253 = vmatpush.msra.mxu0 %v66
  %4254 = vmatpush.msra.mxu0 %v65
  %4255 = vmatmul.f32.gmra.mxu0 %v4237
  %v4256 = vpop.f32.mrf.mxu0
  %v4257 = vadd.f32 %v2622, %v4256
  %4258 = vdwg.mxu0
  %v4259 = vtanh.pop %v4257
  %4261 = vset.pattern.permute.xlu0 0
  %4262 = vperm.xlu0 %4261, %v3988
  %v4263 = vpop.permute.xlu0 %4262
  %v4265 = vmul.f32 %v4259, %v4263
  %4266 = vset.pattern.permute.xlu0 1
  %4267 = vperm.xlu0 %4266, %v3988
  %v4268 = vpop.permute.xlu0 %4267
  %v4270 = vmul.f32 %v4259, %v4268
  %4272 = vrot.lane.b32.xlu0 %v4270, 112
  %v4273 = vpop.permute.xlu0 %4272
  %v4275 = vadd.f32 %v4265, %v4273
  %4276 = vset.pattern.permute.xlu0 2
  %4277 = vperm.xlu0 %4276, %v3988
  %v4278 = vpop.permute.xlu0 %4277
  %v4280 = vmul.f32 %v4259, %v4278
  %4282 = vrot.lane.b32.xlu0 %v4280, 96
  %v4283 = vpop.permute.xlu0 %4282
  %v4285 = vadd.f32 %v4275, %v4283
  %4286 = vset.pattern.permute.xlu0 3
  %4287 = vperm.xlu0 %4286, %v3988
  %v4288 = vpop.permute.xlu0 %4287
  %v4290 = vmul.f32 %v4259, %v4288
  %4292 = vrot.lane.b32.xlu0 %v4290, 80
  %v4293 = vpop.permute.xlu0 %4292
  %v4295 = vadd.f32 %v4285, %v4293
  %v4296 = vadd.f32 %v4141, %v4210
  %v4297 = vmul.f32 %v4296, 2.0
  %v4298 = vadd.f32 %v4055, %v4297
  %v4299 = vadd.f32 %v4298, %v4295
  %v4300 = vmul.f32 %v4299, 0.16666667
  %v4301 = vadd.f32 %v3958, %v4300
  %4302 = vrot.lane.b32.xlu0 %v103, 84
  %v4303 = vpop.permute.xlu0 %4302
  %v4305 = vmul.f32 %v2488, %v4303
  %4306 = vrot.lane.b32.xlu0 %v3974, 44
  %v4307 = vpop.permute.xlu0 %4306
  %v4309 = vmul.f32 %v71, %v4307
  %4311 = vrot.lane.b32.xlu0 %v4309, 84
  %v4312 = vpop.permute.xlu0 %4311
  %v4314 = vadd.f32 %v4305, %v4312
  %v4315 = vsub.f32 1.0, %v2507
  %v4316 = vmul.f32 %v2507, %v4315
  %v4317 = vmul.f32 %v4316, %v2063
  %4318 = vrot.lane.b32.xlu0 %v103, 80
  %v4319 = vpop.permute.xlu0 %4318
  %v4321 = vmul.f32 %v2507, %v4319
  %4323 = vrot.lane.b32.xlu0 %v4317, 48
  %v4324 = vpop.permute.xlu0 %4323
  %v4326 = vmul.f32 %v71, %v4324
  %4328 = vrot.lane.b32.xlu0 %v4326, 80
  %v4329 = vpop.permute.xlu0 %4328
  %v4331 = vadd.f32 %v4321, %v4329
  %v4333 = vsel %vm137, %v4301, 0
  %4335 = vmatpush.msra.mxu0 0.0
  %4336 = vmatpush.msra.mxu0 0.0
  %4337 = vmatpush.msra.mxu0 0.0
  %4338 = vmatpush.msra.mxu0 0.0
  %4339 = vmatpush.msra.mxu0 0.0
  %4340 = vmatpush.msra.mxu0 0.0
  %4341 = vmatpush.msra.mxu0 0.0
  %4342 = vmatpush.msra.mxu0 0.0
  %4343 = vmatpush.msra.mxu0 0.0
  %4344 = vmatpush.msra.mxu0 0.0
  %4345 = vmatpush.msra.mxu0 0.0
  %4346 = vmatpush.msra.mxu0 0.0
  %4347 = vmatpush.msra.mxu0 0.0
  %4348 = vmatpush.msra.mxu0 0.0
  %4349 = vmatpush.msra.mxu0 %v63
  %4350 = vmatpush.msra.mxu0 %v62
  %4351 = vmatmul.f32.gmra.mxu0 %v4333
  %v4352 = vpop.f32.mrf.mxu0
  %v4353 = vadd.f32 %v2595, %v4352
  %4354 = vdwg.mxu0
  %v4355 = vmax.f32 %v4353, 0.0
  %v4357 = vsel %vm137, %v4355, 0
  %4359 = vmatpush.msra.mxu0 0.0
  %4360 = vmatpush.msra.mxu0 0.0
  %4361 = vmatpush.msra.mxu0 0.0
  %4362 = vmatpush.msra.mxu0 0.0
  %4363 = vmatpush.msra.mxu0 0.0
  %4364 = vmatpush.msra.mxu0 0.0
  %4365 = vmatpush.msra.mxu0 0.0
  %4366 = vmatpush.msra.mxu0 0.0
  %4367 = vmatpush.msra.mxu0 0.0
  %4368 = vmatpush.msra.mxu0 0.0
  %4369 = vmatpush.msra.mxu0 0.0
  %4370 = vmatpush.msra.mxu0 0.0
  %4371 = vmatpush.msra.mxu0 0.0
  %4372 = vmatpush.msra.mxu0 0.0
  %4373 = vmatpush.msra.mxu0 %v66
  %4374 = vmatpush.msra.mxu0 %v65
  %4375 = vmatmul.f32.gmra.mxu0 %v4357
  %v4376 = vpop.f32.mrf.mxu0
  %v4377 = vadd.f32 %v2622, %v4376
  %4378 = vdwg.mxu0
  %v4379 = vtanh.pop %v4377
  %v4380 = vmul.f32 %v4379, %v4263
  %v4381 = vmul.f32 %v4379, %v4268
  %4383 = vrot.lane.b32.xlu0 %v4381, 112
  %v4384 = vpop.permute.xlu0 %4383
  %v4386 = vadd.f32 %v4380, %v4384
  %v4387 = vmul.f32 %v4379, %v4278
  %4389 = vrot.lane.b32.xlu0 %v4387, 96
  %v4390 = vpop.permute.xlu0 %4389
  %v4392 = vadd.f32 %v4386, %v4390
  %v4393 = vmul.f32 %v4379, %v4288
  %4395 = vrot.lane.b32.xlu0 %v4393, 80
  %v4396 = vpop.permute.xlu0 %4395
  %v4398 = vadd.f32 %v4392, %v4396
  %v4399 = vmul.f32 %v4398, 0.5
  %v4400 = vadd.f32 %v4301, %v4399
  %v4402 = vsel %vm137, %v4400, 0
  %4404 = vmatpush.msra.mxu0 0.0
  %4405 = vmatpush.msra.mxu0 0.0
  %4406 = vmatpush.msra.mxu0 0.0
  %4407 = vmatpush.msra.mxu0 0.0
  %4408 = vmatpush.msra.mxu0 0.0
  %4409 = vmatpush.msra.mxu0 0.0
  %4410 = vmatpush.msra.mxu0 0.0
  %4411 = vmatpush.msra.mxu0 0.0
  %4412 = vmatpush.msra.mxu0 0.0
  %4413 = vmatpush.msra.mxu0 0.0
  %4414 = vmatpush.msra.mxu0 0.0
  %4415 = vmatpush.msra.mxu0 0.0
  %4416 = vmatpush.msra.mxu0 0.0
  %4417 = vmatpush.msra.mxu0 0.0
  %4418 = vmatpush.msra.mxu0 %v63
  %4419 = vmatpush.msra.mxu0 %v62
  %4420 = vmatmul.f32.gmra.mxu0 %v4402
  %v4421 = vpop.f32.mrf.mxu0
  %v4422 = vadd.f32 %v2595, %v4421
  %4423 = vdwg.mxu0
  %v4424 = vmax.f32 %v4422, 0.0
  %v4426 = vsel %vm137, %v4424, 0
  %4428 = vmatpush.msra.mxu0 0.0
  %4429 = vmatpush.msra.mxu0 0.0
  %4430 = vmatpush.msra.mxu0 0.0
  %4431 = vmatpush.msra.mxu0 0.0
  %4432 = vmatpush.msra.mxu0 0.0
  %4433 = vmatpush.msra.mxu0 0.0
  %4434 = vmatpush.msra.mxu0 0.0
  %4435 = vmatpush.msra.mxu0 0.0
  %4436 = vmatpush.msra.mxu0 0.0
  %4437 = vmatpush.msra.mxu0 0.0
  %4438 = vmatpush.msra.mxu0 0.0
  %4439 = vmatpush.msra.mxu0 0.0
  %4440 = vmatpush.msra.mxu0 0.0
  %4441 = vmatpush.msra.mxu0 0.0
  %4442 = vmatpush.msra.mxu0 %v66
  %4443 = vmatpush.msra.mxu0 %v65
  %4444 = vmatmul.f32.gmra.mxu0 %v4426
  %v4445 = vpop.f32.mrf.mxu0
  %v4446 = vadd.f32 %v2622, %v4445
  %4447 = vdwg.mxu0
  %v4448 = vtanh.pop %v4446
  %4450 = vset.pattern.permute.xlu0 0
  %4451 = vperm.xlu0 %4450, %v4314
  %v4452 = vpop.permute.xlu0 %4451
  %v4454 = vmul.f32 %v4448, %v4452
  %4455 = vset.pattern.permute.xlu0 1
  %4456 = vperm.xlu0 %4455, %v4314
  %v4457 = vpop.permute.xlu0 %4456
  %v4459 = vmul.f32 %v4448, %v4457
  %4461 = vrot.lane.b32.xlu0 %v4459, 112
  %v4462 = vpop.permute.xlu0 %4461
  %v4464 = vadd.f32 %v4454, %v4462
  %4465 = vset.pattern.permute.xlu0 2
  %4466 = vperm.xlu0 %4465, %v4314
  %v4467 = vpop.permute.xlu0 %4466
  %v4469 = vmul.f32 %v4448, %v4467
  %4471 = vrot.lane.b32.xlu0 %v4469, 96
  %v4472 = vpop.permute.xlu0 %4471
  %v4474 = vadd.f32 %v4464, %v4472
  %4475 = vset.pattern.permute.xlu0 3
  %4476 = vperm.xlu0 %4475, %v4314
  %v4477 = vpop.permute.xlu0 %4476
  %v4479 = vmul.f32 %v4448, %v4477
  %4481 = vrot.lane.b32.xlu0 %v4479, 80
  %v4482 = vpop.permute.xlu0 %4481
  %v4484 = vadd.f32 %v4474, %v4482
  %v4485 = vmul.f32 %v4484, 0.5
  %v4486 = vadd.f32 %v4301, %v4485
  %v4488 = vsel %vm137, %v4486, 0
  %4490 = vmatpush.msra.mxu0 0.0
  %4491 = vmatpush.msra.mxu0 0.0
  %4492 = vmatpush.msra.mxu0 0.0
  %4493 = vmatpush.msra.mxu0 0.0
  %4494 = vmatpush.msra.mxu0 0.0
  %4495 = vmatpush.msra.mxu0 0.0
  %4496 = vmatpush.msra.mxu0 0.0
  %4497 = vmatpush.msra.mxu0 0.0
  %4498 = vmatpush.msra.mxu0 0.0
  %4499 = vmatpush.msra.mxu0 0.0
  %4500 = vmatpush.msra.mxu0 0.0
  %4501 = vmatpush.msra.mxu0 0.0
  %4502 = vmatpush.msra.mxu0 0.0
  %4503 = vmatpush.msra.mxu0 0.0
  %4504 = vmatpush.msra.mxu0 %v63
  %4505 = vmatpush.msra.mxu0 %v62
  %4506 = vmatmul.f32.gmra.mxu0 %v4488
  %v4507 = vpop.f32.mrf.mxu0
  %v4508 = vadd.f32 %v2595, %v4507
  %4509 = vdwg.mxu0
  %v4510 = vmax.f32 %v4508, 0.0
  %v4512 = vsel %vm137, %v4510, 0
  %4514 = vmatpush.msra.mxu0 0.0
  %4515 = vmatpush.msra.mxu0 0.0
  %4516 = vmatpush.msra.mxu0 0.0
  %4517 = vmatpush.msra.mxu0 0.0
  %4518 = vmatpush.msra.mxu0 0.0
  %4519 = vmatpush.msra.mxu0 0.0
  %4520 = vmatpush.msra.mxu0 0.0
  %4521 = vmatpush.msra.mxu0 0.0
  %4522 = vmatpush.msra.mxu0 0.0
  %4523 = vmatpush.msra.mxu0 0.0
  %4524 = vmatpush.msra.mxu0 0.0
  %4525 = vmatpush.msra.mxu0 0.0
  %4526 = vmatpush.msra.mxu0 0.0
  %4527 = vmatpush.msra.mxu0 0.0
  %4528 = vmatpush.msra.mxu0 %v66
  %4529 = vmatpush.msra.mxu0 %v65
  %4530 = vmatmul.f32.gmra.mxu0 %v4512
  %v4531 = vpop.f32.mrf.mxu0
  %v4532 = vadd.f32 %v2622, %v4531
  %4533 = vdwg.mxu0
  %v4534 = vtanh.pop %v4532
  %v4535 = vmul.f32 %v4534, %v4452
  %v4536 = vmul.f32 %v4534, %v4457
  %4538 = vrot.lane.b32.xlu0 %v4536, 112
  %v4539 = vpop.permute.xlu0 %4538
  %v4541 = vadd.f32 %v4535, %v4539
  %v4542 = vmul.f32 %v4534, %v4467
  %4544 = vrot.lane.b32.xlu0 %v4542, 96
  %v4545 = vpop.permute.xlu0 %4544
  %v4547 = vadd.f32 %v4541, %v4545
  %v4548 = vmul.f32 %v4534, %v4477
  %4550 = vrot.lane.b32.xlu0 %v4548, 80
  %v4551 = vpop.permute.xlu0 %4550
  %v4553 = vadd.f32 %v4547, %v4551
  %v4554 = vadd.f32 %v4301, %v4553
  %v4556 = vsel %vm137, %v4554, 0
  %4558 = vmatpush.msra.mxu0 0.0
  %4559 = vmatpush.msra.mxu0 0.0
  %4560 = vmatpush.msra.mxu0 0.0
  %4561 = vmatpush.msra.mxu0 0.0
  %4562 = vmatpush.msra.mxu0 0.0
  %4563 = vmatpush.msra.mxu0 0.0
  %4564 = vmatpush.msra.mxu0 0.0
  %4565 = vmatpush.msra.mxu0 0.0
  %4566 = vmatpush.msra.mxu0 0.0
  %4567 = vmatpush.msra.mxu0 0.0
  %4568 = vmatpush.msra.mxu0 0.0
  %4569 = vmatpush.msra.mxu0 0.0
  %4570 = vmatpush.msra.mxu0 0.0
  %4571 = vmatpush.msra.mxu0 0.0
  %4572 = vmatpush.msra.mxu0 %v63
  %4573 = vmatpush.msra.mxu0 %v62
  %4574 = vmatmul.f32.gmra.mxu0 %v4556
  %v4575 = vpop.f32.mrf.mxu0
  %v4576 = vadd.f32 %v2595, %v4575
  %4577 = vdwg.mxu0
  %v4578 = vmax.f32 %v4576, 0.0
  %v4580 = vsel %vm137, %v4578, 0
  %4582 = vmatpush.msra.mxu0 0.0
  %4583 = vmatpush.msra.mxu0 0.0
  %4584 = vmatpush.msra.mxu0 0.0
  %4585 = vmatpush.msra.mxu0 0.0
  %4586 = vmatpush.msra.mxu0 0.0
  %4587 = vmatpush.msra.mxu0 0.0
  %4588 = vmatpush.msra.mxu0 0.0
  %4589 = vmatpush.msra.mxu0 0.0
  %4590 = vmatpush.msra.mxu0 0.0
  %4591 = vmatpush.msra.mxu0 0.0
  %4592 = vmatpush.msra.mxu0 0.0
  %4593 = vmatpush.msra.mxu0 0.0
  %4594 = vmatpush.msra.mxu0 0.0
  %4595 = vmatpush.msra.mxu0 0.0
  %4596 = vmatpush.msra.mxu0 %v66
  %4597 = vmatpush.msra.mxu0 %v65
  %4598 = vmatmul.f32.gmra.mxu0 %v4580
  %v4599 = vpop.f32.mrf.mxu0
  %v4600 = vadd.f32 %v2622, %v4599
  %4601 = vdwg.mxu0
  %v4602 = vtanh.pop %v4600
  %4604 = vset.pattern.permute.xlu0 0
  %4605 = vperm.xlu0 %4604, %v4331
  %v4606 = vpop.permute.xlu0 %4605
  %v4608 = vmul.f32 %v4602, %v4606
  %4609 = vset.pattern.permute.xlu0 1
  %4610 = vperm.xlu0 %4609, %v4331
  %v4611 = vpop.permute.xlu0 %4610
  %v4613 = vmul.f32 %v4602, %v4611
  %4615 = vrot.lane.b32.xlu0 %v4613, 112
  %v4616 = vpop.permute.xlu0 %4615
  %v4618 = vadd.f32 %v4608, %v4616
  %4619 = vset.pattern.permute.xlu0 2
  %4620 = vperm.xlu0 %4619, %v4331
  %v4621 = vpop.permute.xlu0 %4620
  %v4623 = vmul.f32 %v4602, %v4621
  %4625 = vrot.lane.b32.xlu0 %v4623, 96
  %v4626 = vpop.permute.xlu0 %4625
  %v4628 = vadd.f32 %v4618, %v4626
  %4629 = vset.pattern.permute.xlu0 3
  %4630 = vperm.xlu0 %4629, %v4331
  %v4631 = vpop.permute.xlu0 %4630
  %v4633 = vmul.f32 %v4602, %v4631
  %4635 = vrot.lane.b32.xlu0 %v4633, 80
  %v4636 = vpop.permute.xlu0 %4635
  %v4638 = vadd.f32 %v4628, %v4636
  %v4639 = vadd.f32 %v4484, %v4553
  %v4640 = vmul.f32 %v4639, 2.0
  %v4641 = vadd.f32 %v4398, %v4640
  %v4642 = vadd.f32 %v4641, %v4638
  %v4643 = vmul.f32 %v4642, 0.16666667
  %v4644 = vadd.f32 %v4301, %v4643
  %4645 = vrot.lane.b32.xlu0 %v103, 76
  %v4646 = vpop.permute.xlu0 %4645
  %v4648 = vmul.f32 %v2507, %v4646
  %4649 = vrot.lane.b32.xlu0 %v4317, 52
  %v4650 = vpop.permute.xlu0 %4649
  %v4652 = vmul.f32 %v71, %v4650
  %4654 = vrot.lane.b32.xlu0 %v4652, 76
  %v4655 = vpop.permute.xlu0 %4654
  %v4657 = vadd.f32 %v4648, %v4655
  %v4658 = vsub.f32 1.0, %v2526
  %v4659 = vmul.f32 %v2526, %v4658
  %v4660 = vmul.f32 %v4659, %v2374
  %4661 = vrot.lane.b32.xlu0 %v103, 72
  %v4662 = vpop.permute.xlu0 %4661
  %v4664 = vmul.f32 %v2526, %v4662
  %4666 = vrot.lane.b32.xlu0 %v4660, 56
  %v4667 = vpop.permute.xlu0 %4666
  %v4669 = vmul.f32 %v71, %v4667
  %4671 = vrot.lane.b32.xlu0 %v4669, 72
  %v4672 = vpop.permute.xlu0 %4671
  %v4674 = vadd.f32 %v4664, %v4672
  %v4676 = vsel %vm137, %v4644, 0
  %4678 = vmatpush.msra.mxu0 0.0
  %4679 = vmatpush.msra.mxu0 0.0
  %4680 = vmatpush.msra.mxu0 0.0
  %4681 = vmatpush.msra.mxu0 0.0
  %4682 = vmatpush.msra.mxu0 0.0
  %4683 = vmatpush.msra.mxu0 0.0
  %4684 = vmatpush.msra.mxu0 0.0
  %4685 = vmatpush.msra.mxu0 0.0
  %4686 = vmatpush.msra.mxu0 0.0
  %4687 = vmatpush.msra.mxu0 0.0
  %4688 = vmatpush.msra.mxu0 0.0
  %4689 = vmatpush.msra.mxu0 0.0
  %4690 = vmatpush.msra.mxu0 0.0
  %4691 = vmatpush.msra.mxu0 0.0
  %4692 = vmatpush.msra.mxu0 %v63
  %4693 = vmatpush.msra.mxu0 %v62
  %4694 = vmatmul.f32.gmra.mxu0 %v4676
  %v4695 = vpop.f32.mrf.mxu0
  %v4696 = vadd.f32 %v2595, %v4695
  %4697 = vdwg.mxu0
  %v4698 = vmax.f32 %v4696, 0.0
  %v4700 = vsel %vm137, %v4698, 0
  %4702 = vmatpush.msra.mxu0 0.0
  %4703 = vmatpush.msra.mxu0 0.0
  %4704 = vmatpush.msra.mxu0 0.0
  %4705 = vmatpush.msra.mxu0 0.0
  %4706 = vmatpush.msra.mxu0 0.0
  %4707 = vmatpush.msra.mxu0 0.0
  %4708 = vmatpush.msra.mxu0 0.0
  %4709 = vmatpush.msra.mxu0 0.0
  %4710 = vmatpush.msra.mxu0 0.0
  %4711 = vmatpush.msra.mxu0 0.0
  %4712 = vmatpush.msra.mxu0 0.0
  %4713 = vmatpush.msra.mxu0 0.0
  %4714 = vmatpush.msra.mxu0 0.0
  %4715 = vmatpush.msra.mxu0 0.0
  %4716 = vmatpush.msra.mxu0 %v66
  %4717 = vmatpush.msra.mxu0 %v65
  %4718 = vmatmul.f32.gmra.mxu0 %v4700
  %v4719 = vpop.f32.mrf.mxu0
  %v4720 = vadd.f32 %v2622, %v4719
  %4721 = vdwg.mxu0
  %v4722 = vtanh.pop %v4720
  %v4723 = vmul.f32 %v4722, %v4606
  %v4724 = vmul.f32 %v4722, %v4611
  %4726 = vrot.lane.b32.xlu0 %v4724, 112
  %v4727 = vpop.permute.xlu0 %4726
  %v4729 = vadd.f32 %v4723, %v4727
  %v4730 = vmul.f32 %v4722, %v4621
  %4732 = vrot.lane.b32.xlu0 %v4730, 96
  %v4733 = vpop.permute.xlu0 %4732
  %v4735 = vadd.f32 %v4729, %v4733
  %v4736 = vmul.f32 %v4722, %v4631
  %4738 = vrot.lane.b32.xlu0 %v4736, 80
  %v4739 = vpop.permute.xlu0 %4738
  %v4741 = vadd.f32 %v4735, %v4739
  %v4742 = vmul.f32 %v4741, 0.5
  %v4743 = vadd.f32 %v4644, %v4742
  %v4745 = vsel %vm137, %v4743, 0
  %4747 = vmatpush.msra.mxu0 0.0
  %4748 = vmatpush.msra.mxu0 0.0
  %4749 = vmatpush.msra.mxu0 0.0
  %4750 = vmatpush.msra.mxu0 0.0
  %4751 = vmatpush.msra.mxu0 0.0
  %4752 = vmatpush.msra.mxu0 0.0
  %4753 = vmatpush.msra.mxu0 0.0
  %4754 = vmatpush.msra.mxu0 0.0
  %4755 = vmatpush.msra.mxu0 0.0
  %4756 = vmatpush.msra.mxu0 0.0
  %4757 = vmatpush.msra.mxu0 0.0
  %4758 = vmatpush.msra.mxu0 0.0
  %4759 = vmatpush.msra.mxu0 0.0
  %4760 = vmatpush.msra.mxu0 0.0
  %4761 = vmatpush.msra.mxu0 %v63
  %4762 = vmatpush.msra.mxu0 %v62
  %4763 = vmatmul.f32.gmra.mxu0 %v4745
  %v4764 = vpop.f32.mrf.mxu0
  %v4765 = vadd.f32 %v2595, %v4764
  %4766 = vdwg.mxu0
  %v4767 = vmax.f32 %v4765, 0.0
  %v4769 = vsel %vm137, %v4767, 0
  %4771 = vmatpush.msra.mxu0 0.0
  %4772 = vmatpush.msra.mxu0 0.0
  %4773 = vmatpush.msra.mxu0 0.0
  %4774 = vmatpush.msra.mxu0 0.0
  %4775 = vmatpush.msra.mxu0 0.0
  %4776 = vmatpush.msra.mxu0 0.0
  %4777 = vmatpush.msra.mxu0 0.0
  %4778 = vmatpush.msra.mxu0 0.0
  %4779 = vmatpush.msra.mxu0 0.0
  %4780 = vmatpush.msra.mxu0 0.0
  %4781 = vmatpush.msra.mxu0 0.0
  %4782 = vmatpush.msra.mxu0 0.0
  %4783 = vmatpush.msra.mxu0 0.0
  %4784 = vmatpush.msra.mxu0 0.0
  %4785 = vmatpush.msra.mxu0 %v66
  %4786 = vmatpush.msra.mxu0 %v65
  %4787 = vmatmul.f32.gmra.mxu0 %v4769
  %v4788 = vpop.f32.mrf.mxu0
  %v4789 = vadd.f32 %v2622, %v4788
  %4790 = vdwg.mxu0
  %v4791 = vtanh.pop %v4789
  %4793 = vset.pattern.permute.xlu0 0
  %4794 = vperm.xlu0 %4793, %v4657
  %v4795 = vpop.permute.xlu0 %4794
  %v4797 = vmul.f32 %v4791, %v4795
  %4798 = vset.pattern.permute.xlu0 1
  %4799 = vperm.xlu0 %4798, %v4657
  %v4800 = vpop.permute.xlu0 %4799
  %v4802 = vmul.f32 %v4791, %v4800
  %4804 = vrot.lane.b32.xlu0 %v4802, 112
  %v4805 = vpop.permute.xlu0 %4804
  %v4807 = vadd.f32 %v4797, %v4805
  %4808 = vset.pattern.permute.xlu0 2
  %4809 = vperm.xlu0 %4808, %v4657
  %v4810 = vpop.permute.xlu0 %4809
  %v4812 = vmul.f32 %v4791, %v4810
  %4814 = vrot.lane.b32.xlu0 %v4812, 96
  %v4815 = vpop.permute.xlu0 %4814
  %v4817 = vadd.f32 %v4807, %v4815
  %4818 = vset.pattern.permute.xlu0 3
  %4819 = vperm.xlu0 %4818, %v4657
  %v4820 = vpop.permute.xlu0 %4819
  %v4822 = vmul.f32 %v4791, %v4820
  %4824 = vrot.lane.b32.xlu0 %v4822, 80
  %v4825 = vpop.permute.xlu0 %4824
  %v4827 = vadd.f32 %v4817, %v4825
  %v4828 = vmul.f32 %v4827, 0.5
  %v4829 = vadd.f32 %v4644, %v4828
  %v4831 = vsel %vm137, %v4829, 0
  %4833 = vmatpush.msra.mxu0 0.0
  %4834 = vmatpush.msra.mxu0 0.0
  %4835 = vmatpush.msra.mxu0 0.0
  %4836 = vmatpush.msra.mxu0 0.0
  %4837 = vmatpush.msra.mxu0 0.0
  %4838 = vmatpush.msra.mxu0 0.0
  %4839 = vmatpush.msra.mxu0 0.0
  %4840 = vmatpush.msra.mxu0 0.0
  %4841 = vmatpush.msra.mxu0 0.0
  %4842 = vmatpush.msra.mxu0 0.0
  %4843 = vmatpush.msra.mxu0 0.0
  %4844 = vmatpush.msra.mxu0 0.0
  %4845 = vmatpush.msra.mxu0 0.0
  %4846 = vmatpush.msra.mxu0 0.0
  %4847 = vmatpush.msra.mxu0 %v63
  %4848 = vmatpush.msra.mxu0 %v62
  %4849 = vmatmul.f32.gmra.mxu0 %v4831
  %v4850 = vpop.f32.mrf.mxu0
  %v4851 = vadd.f32 %v2595, %v4850
  %4852 = vdwg.mxu0
  %v4853 = vmax.f32 %v4851, 0.0
  %v4855 = vsel %vm137, %v4853, 0
  %4857 = vmatpush.msra.mxu0 0.0
  %4858 = vmatpush.msra.mxu0 0.0
  %4859 = vmatpush.msra.mxu0 0.0
  %4860 = vmatpush.msra.mxu0 0.0
  %4861 = vmatpush.msra.mxu0 0.0
  %4862 = vmatpush.msra.mxu0 0.0
  %4863 = vmatpush.msra.mxu0 0.0
  %4864 = vmatpush.msra.mxu0 0.0
  %4865 = vmatpush.msra.mxu0 0.0
  %4866 = vmatpush.msra.mxu0 0.0
  %4867 = vmatpush.msra.mxu0 0.0
  %4868 = vmatpush.msra.mxu0 0.0
  %4869 = vmatpush.msra.mxu0 0.0
  %4870 = vmatpush.msra.mxu0 0.0
  %4871 = vmatpush.msra.mxu0 %v66
  %4872 = vmatpush.msra.mxu0 %v65
  %4873 = vmatmul.f32.gmra.mxu0 %v4855
  %v4874 = vpop.f32.mrf.mxu0
  %v4875 = vadd.f32 %v2622, %v4874
  %4876 = vdwg.mxu0
  %v4877 = vtanh.pop %v4875
  %v4878 = vmul.f32 %v4877, %v4795
  %v4879 = vmul.f32 %v4877, %v4800
  %4881 = vrot.lane.b32.xlu0 %v4879, 112
  %v4882 = vpop.permute.xlu0 %4881
  %v4884 = vadd.f32 %v4878, %v4882
  %v4885 = vmul.f32 %v4877, %v4810
  %4887 = vrot.lane.b32.xlu0 %v4885, 96
  %v4888 = vpop.permute.xlu0 %4887
  %v4890 = vadd.f32 %v4884, %v4888
  %v4891 = vmul.f32 %v4877, %v4820
  %4893 = vrot.lane.b32.xlu0 %v4891, 80
  %v4894 = vpop.permute.xlu0 %4893
  %v4896 = vadd.f32 %v4890, %v4894
  %v4897 = vadd.f32 %v4644, %v4896
  %v4899 = vsel %vm137, %v4897, 0
  %4901 = vmatpush.msra.mxu0 0.0
  %4902 = vmatpush.msra.mxu0 0.0
  %4903 = vmatpush.msra.mxu0 0.0
  %4904 = vmatpush.msra.mxu0 0.0
  %4905 = vmatpush.msra.mxu0 0.0
  %4906 = vmatpush.msra.mxu0 0.0
  %4907 = vmatpush.msra.mxu0 0.0
  %4908 = vmatpush.msra.mxu0 0.0
  %4909 = vmatpush.msra.mxu0 0.0
  %4910 = vmatpush.msra.mxu0 0.0
  %4911 = vmatpush.msra.mxu0 0.0
  %4912 = vmatpush.msra.mxu0 0.0
  %4913 = vmatpush.msra.mxu0 0.0
  %4914 = vmatpush.msra.mxu0 0.0
  %4915 = vmatpush.msra.mxu0 %v63
  %4916 = vmatpush.msra.mxu0 %v62
  %4917 = vmatmul.f32.gmra.mxu0 %v4899
  %v4918 = vpop.f32.mrf.mxu0
  %v4919 = vadd.f32 %v2595, %v4918
  %4920 = vdwg.mxu0
  %v4921 = vmax.f32 %v4919, 0.0
  %v4923 = vsel %vm137, %v4921, 0
  %4925 = vmatpush.msra.mxu0 0.0
  %4926 = vmatpush.msra.mxu0 0.0
  %4927 = vmatpush.msra.mxu0 0.0
  %4928 = vmatpush.msra.mxu0 0.0
  %4929 = vmatpush.msra.mxu0 0.0
  %4930 = vmatpush.msra.mxu0 0.0
  %4931 = vmatpush.msra.mxu0 0.0
  %4932 = vmatpush.msra.mxu0 0.0
  %4933 = vmatpush.msra.mxu0 0.0
  %4934 = vmatpush.msra.mxu0 0.0
  %4935 = vmatpush.msra.mxu0 0.0
  %4936 = vmatpush.msra.mxu0 0.0
  %4937 = vmatpush.msra.mxu0 0.0
  %4938 = vmatpush.msra.mxu0 0.0
  %4939 = vmatpush.msra.mxu0 %v66
  %4940 = vmatpush.msra.mxu0 %v65
  %4941 = vmatmul.f32.gmra.mxu0 %v4923
  %v4942 = vpop.f32.mrf.mxu0
  %v4943 = vadd.f32 %v2622, %v4942
  %4944 = vdwg.mxu0
  %v4945 = vtanh.pop %v4943
  %4947 = vset.pattern.permute.xlu0 0
  %4948 = vperm.xlu0 %4947, %v4674
  %v4949 = vpop.permute.xlu0 %4948
  %v4951 = vmul.f32 %v4945, %v4949
  %4952 = vset.pattern.permute.xlu0 1
  %4953 = vperm.xlu0 %4952, %v4674
  %v4954 = vpop.permute.xlu0 %4953
  %v4956 = vmul.f32 %v4945, %v4954
  %4958 = vrot.lane.b32.xlu0 %v4956, 112
  %v4959 = vpop.permute.xlu0 %4958
  %v4961 = vadd.f32 %v4951, %v4959
  %4962 = vset.pattern.permute.xlu0 2
  %4963 = vperm.xlu0 %4962, %v4674
  %v4964 = vpop.permute.xlu0 %4963
  %v4966 = vmul.f32 %v4945, %v4964
  %4968 = vrot.lane.b32.xlu0 %v4966, 96
  %v4969 = vpop.permute.xlu0 %4968
  %v4971 = vadd.f32 %v4961, %v4969
  %4972 = vset.pattern.permute.xlu0 3
  %4973 = vperm.xlu0 %4972, %v4674
  %v4974 = vpop.permute.xlu0 %4973
  %v4976 = vmul.f32 %v4945, %v4974
  %4978 = vrot.lane.b32.xlu0 %v4976, 80
  %v4979 = vpop.permute.xlu0 %4978
  %v4981 = vadd.f32 %v4971, %v4979
  %v4982 = vadd.f32 %v4827, %v4896
  %v4983 = vmul.f32 %v4982, 2.0
  %v4984 = vadd.f32 %v4741, %v4983
  %v4985 = vadd.f32 %v4984, %v4981
  %v4986 = vmul.f32 %v4985, 0.16666667
  %v4987 = vadd.f32 %v4644, %v4986
  %v4989 = vperm.slane %v70, 0
  %4991 = vmatpush.msra.mxu0 0.0
  %4992 = vmatpush.msra.mxu0 0.0
  %4993 = vmatpush.msra.mxu0 0.0
  %4994 = vmatpush.msra.mxu0 0.0
  %4995 = vmatpush.msra.mxu0 0.0
  %4996 = vmatpush.msra.mxu0 0.0
  %4997 = vmatpush.msra.mxu0 0.0
  %4998 = vmatpush.msra.mxu0 0.0
  %4999 = vmatpush.msra.mxu0 0.0
  %5000 = vmatpush.msra.mxu0 0.0
  %5001 = vmatpush.msra.mxu0 0.0
  %5002 = vmatpush.msra.mxu0 0.0
  %5003 = vmatpush.msra.mxu0 0.0
  %5004 = vmatpush.msra.mxu0 0.0
  %5005 = vmatpush.msra.mxu0 %v69
  %5006 = vmatpush.msra.mxu0 %v68
  %5007 = vmatmul.f32.gmra.mxu0 %v3990
  %v5008 = vpop.f32.mrf.mxu0
  %v5009 = vadd.f32 %v4989, %v5008
  %5010 = vdwg.mxu0
  %5011 = vmatpush.msra.mxu0 0.0
  %5012 = vmatpush.msra.mxu0 0.0
  %5013 = vmatpush.msra.mxu0 0.0
  %5014 = vmatpush.msra.mxu0 0.0
  %5015 = vmatpush.msra.mxu0 0.0
  %5016 = vmatpush.msra.mxu0 0.0
  %5017 = vmatpush.msra.mxu0 0.0
  %5018 = vmatpush.msra.mxu0 0.0
  %5019 = vmatpush.msra.mxu0 0.0
  %5020 = vmatpush.msra.mxu0 0.0
  %5021 = vmatpush.msra.mxu0 0.0
  %5022 = vmatpush.msra.mxu0 0.0
  %5023 = vmatpush.msra.mxu0 0.0
  %5024 = vmatpush.msra.mxu0 0.0
  %5025 = vmatpush.msra.mxu0 %v69
  %5026 = vmatpush.msra.mxu0 %v68
  %5027 = vmatmul.f32.gmra.mxu0 %v4333
  %v5028 = vpop.f32.mrf.mxu0
  %v5029 = vadd.f32 %v4989, %v5028
  %5030 = vdwg.mxu0
  %5031 = vmatpush.msra.mxu0 0.0
  %5032 = vmatpush.msra.mxu0 0.0
  %5033 = vmatpush.msra.mxu0 0.0
  %5034 = vmatpush.msra.mxu0 0.0
  %5035 = vmatpush.msra.mxu0 0.0
  %5036 = vmatpush.msra.mxu0 0.0
  %5037 = vmatpush.msra.mxu0 0.0
  %5038 = vmatpush.msra.mxu0 0.0
  %5039 = vmatpush.msra.mxu0 0.0
  %5040 = vmatpush.msra.mxu0 0.0
  %5041 = vmatpush.msra.mxu0 0.0
  %5042 = vmatpush.msra.mxu0 0.0
  %5043 = vmatpush.msra.mxu0 0.0
  %5044 = vmatpush.msra.mxu0 0.0
  %5045 = vmatpush.msra.mxu0 %v69
  %5046 = vmatpush.msra.mxu0 %v68
  %5047 = vmatmul.f32.gmra.mxu0 %v4676
  %v5048 = vpop.f32.mrf.mxu0
  %v5049 = vadd.f32 %v4989, %v5048
  %5050 = vdwg.mxu0
  %v5052 = vsel %vm137, %v4987, 0
  %5054 = vmatpush.msra.mxu0 0.0
  %5055 = vmatpush.msra.mxu0 0.0
  %5056 = vmatpush.msra.mxu0 0.0
  %5057 = vmatpush.msra.mxu0 0.0
  %5058 = vmatpush.msra.mxu0 0.0
  %5059 = vmatpush.msra.mxu0 0.0
  %5060 = vmatpush.msra.mxu0 0.0
  %5061 = vmatpush.msra.mxu0 0.0
  %5062 = vmatpush.msra.mxu0 0.0
  %5063 = vmatpush.msra.mxu0 0.0
  %5064 = vmatpush.msra.mxu0 0.0
  %5065 = vmatpush.msra.mxu0 0.0
  %5066 = vmatpush.msra.mxu0 0.0
  %5067 = vmatpush.msra.mxu0 0.0
  %5068 = vmatpush.msra.mxu0 %v69
  %5069 = vmatpush.msra.mxu0 %v68
  %5070 = vmatmul.f32.gmra.mxu0 %v5052
  %v5071 = vpop.f32.mrf.mxu0
  %v5072 = vadd.f32 %v4989, %v5071
  %5073 = vdwg.mxu0
  %5075 = vrot.lane.b32.xlu0 %v5029, 4
  %v5076 = vpop.permute.xlu0 %5075
  %5079 = vrot.lane.b32.xlu0 %v5049, 8
  %v5080 = vpop.permute.xlu0 %5079
  %5083 = vrot.lane.b32.xlu0 %v5072, 12
  %v5084 = vpop.permute.xlu0 %5083
  %v5086 = vsel %vm75, %v5009, %v5076
  %vm5087 = vcmask 64512
  %v5088 = vsel %vm5087, %v5086, %v5080
  %vm5089 = vcmask 97280
  %v5090 = vsel %vm5089, %v5088, %v5084
  %vm5091 = vcmask 123904
  %5092 = vst.msk [vmem:[%s16] sm:$0x3] %vm5091, %v5090
  // Predicated region
  $region66: #{ancde_forecasting_forward.1} parent=0 // pred_check
    _
  $region67: #{ancde_forecasting_forward.1} parent=0 // pred_check_branch
    %5094 = sbr.rel (0) target = $region69
  $region68: #{ancde_forecasting_forward.1} parent=0 // pred_region
    _
  $region69: #{ancde_forecasting_forward.1} parent=0 // pred_fallthru
    _
  // Predicated region
  $region70: #{ancde_forecasting_forward.1} parent=0 // pred_check
    _
  $region71: #{ancde_forecasting_forward.1} parent=0 // pred_check_branch
    %5096 = sbr.rel (0) target = $region73
  $region72: #{ancde_forecasting_forward.1} parent=0 // pred_region
    _
  $region73: #{ancde_forecasting_forward.1} parent=0 // pred_fallthru
    _

</llo_original>
